<compile_context>
chip_gen: v7x
topology: tpu7x:2x2x1
jax: 0.10.0
libtpu: 0.0.40
codegen_flags: <defaults>
</compile_context>

<pallas_src>
import functools

import jax
import jax.numpy as jnp
from jax.experimental import pallas as pl
from jax.experimental.pallas import tpu as pltpu


_VMEM_LIMIT = 48 * 1024 * 1024      # above the 16/32 MiB scoped defaults,
                                    # below v7x's 64 MiB physical VMEM
_VMEM_BUDGET = 20 * 1024 * 1024     # target per-grid-step working set


# ----------------------------------------------------------------------------
# tiling helpers
# ----------------------------------------------------------------------------
def _pick_strip_height(H, W, C, budget_bytes=_VMEM_BUDGET):
    """Row-strip height for K1: a divisor of H that is a multiple of 8 (so the
    bottom halo can be a narrow 8-row block), as large as the budget allows."""
    c4 = 4 * C
    wp = W + 6
    per_row = (2 * wp * C * 4          # double-buffered input strip (f32)
               + 2 * W * c4 * 2        # double-buffered bf16 h1 output
               + 3 * wp * C * 4        # rows / shifted / acc temporaries
               + 2 * W * c4 * 4)       # f32 pwconv1 activation temporaries
    cap = max(8, budget_bytes // max(per_row, 1))
    pref = [t for t in range(8, H + 1, 8) if H % t == 0 and t <= cap]
    if pref:
        return max(pref)
    return H                           # single-strip fallback (small / odd H)


def _pick_row_tile(n, C, budget_bytes=_VMEM_BUDGET):
    """Pixel-row tile for K2: a divisor of n (=H*W), preferring multiples of
    256 (fills the 256-wide MXU on v6e/v7x), sized to the VMEM budget."""
    c4 = 4 * C
    per_row = (2 * c4 * 2              # double-buffered bf16 h1 input
               + 2 * C * 4 * 2         # double-buffered residual + output
               + 2 * c4 * 4            # f32 GRN temporaries
               + C * 4)
    cap = max(8, min(n, budget_bytes // max(per_row, 1), 4096))
    for m in (256, 128, 8):
        cands = [t for t in range(m, cap + 1, m) if n % t == 0]
        if cands:
            return max(cands)
    return n


# ----------------------------------------------------------------------------
# Pallas kernels
# ----------------------------------------------------------------------------
def _dwconv_ln_pw1_kernel(xa_ref, xb_ref, w_ref, b_ref, g_ref, beta_ref,
                          w1_ref, b1_ref, gg_ref, h_ref, sc_ref, ss_ref,
                          *, TH, W, eps):
    # xa: (1, TH, Wp, C)   body rows [s*TH, (s+1)*TH) of the padded input
    # xb: (1, HALO, Wp, C) rows directly below the body block (first 6 used)
    # w:  (49, C) depthwise taps; b: (1, C) conv bias
    # g/beta: (1, C) LayerNorm affine; w1: (C, 4C) bf16; b1: (1, 4C)
    # gg: (1, 4C) GRN gamma
    # h:  (1, TH*W, 4C) bf16 out; sc: (1, 1, 4C) f32 out; ss: (1, 4C) scratch
    s = pl.program_id(1)

    rows = jnp.concatenate([xa_ref[0], xb_ref[0][:6]],
                           axis=0).astype(jnp.float32)        # (TH+6, Wp, C)
    w = w_ref[...].astype(jnp.float32)                         # (49, C)

    # 7x7 depthwise conv. The dx (sublane) shift is hoisted out of the tap
    # loop -> 7 shifted copies instead of 49 misaligned slices.
    acc = jnp.zeros((TH, W, rows.shape[-1]), jnp.float32)
    for dx in range(7):
        sh = rows[:, dx:dx + W, :]                             # (TH+6, W, C)
        for dy in range(7):
            acc = acc + sh[dy:dy + TH] * w[dy * 7 + dx]
    acc = acc + b_ref[...]

    # channel LayerNorm (fused epilogue)
    mean = jnp.mean(acc, axis=-1, keepdims=True)
    var = jnp.mean((acc - mean) ** 2, axis=-1, keepdims=True)
    y = (acc - mean) * jax.lax.rsqrt(var + eps)
    y = y * g_ref[...] + beta_ref[...]

    # pwconv1 + SiLU (bf16 MXU operands, f32 accumulate)
    y2 = y.reshape(TH * W, y.shape[-1]).astype(jnp.bfloat16)
    h = jnp.dot(y2, w1_ref[...], preferred_element_type=jnp.float32)
    h = h + b1_ref[...]
    h = h * jax.nn.sigmoid(h)                                  # SiLU
    h_ref[0] = h.astype(h_ref.dtype)                           # bf16 to HBM

    # GRN global sum-of-squares, accumulated across row strips (VMEM scratch).
    @pl.when(s == 0)
    def _():
        ss_ref[...] = jnp.zeros_like(ss_ref)

    ss_ref[...] = ss_ref[...] + jnp.sum(h * h, axis=0, keepdims=True)

    # Per-batch GRN scale vector; only the value written at the last strip of
    # each batch survives the writeback of this (revisited) output block.
    gx = jnp.sqrt(ss_ref[...])                                 # (1, 4C)
    nx = gx / (jnp.mean(gx, axis=-1, keepdims=True) + eps)
    sc_ref[0] = 1.0 + gg_ref[...] * nx


def _grn_pw2_res_kernel(h_ref, sc_ref, gb_ref, w2_ref, b2_ref, res_ref, o_ref):
    # h: (1, TR, 4C) bf16; sc: (1, 1, 4C); gb: (1, 4C); w2: (4C, C) bf16
    # b2: (1, C); res: (1, TR, C)
    hg = h_ref[0].astype(jnp.float32) * sc_ref[0] + gb_ref[...]   # GRN
    y = jnp.dot(hg.astype(jnp.bfloat16), w2_ref[...],
                preferred_element_type=jnp.float32) + b2_ref[...]
    o_ref[0] = (res_ref[0] + y).astype(o_ref.dtype)               # residual


# ----------------------------------------------------------------------------
# Pallas wrappers
# ----------------------------------------------------------------------------
def dwconv_ln_pw1_silu(x, dw_w, dw_b, ln_g, ln_b, pw1_w, pw1_b, grn_g,
                       eps=1e-6):
    """K1. x: (B, H, W, C) NHWC -> h1 (B, H*W, 4C) bf16, scale (B, 1, 4C)."""
    B, H, W, C = x.shape
    C4 = pw1_w.shape[1]
    assert H >= 6, f"H={H} too small for 7x7 strip tiling"
    TH = _pick_strip_height(H, W, C)
    n_strips = H // TH
    HALO = 8 if TH % 8 == 0 else TH
    halo_per_strip = TH // HALO
    Wp = W + 6

    # 3 rows/cols of zero padding for the conv; HALO-3 extra bottom rows so
    # the narrow halo view of the last strip stays in range.
    xp = jnp.pad(x, ((0, 0), (3, HALO - 3), (3, 3), (0, 0)))

    kern = functools.partial(_dwconv_ln_pw1_kernel, TH=TH, W=W, eps=eps)
    return pl.pallas_call(
        kern,
        out_shape=(jax.ShapeDtypeStruct((B, H * W, C4), jnp.bfloat16),
                   jax.ShapeDtypeStruct((B, 1, C4), jnp.float32)),
        grid=(B, n_strips),
        in_specs=[
            pl.BlockSpec((1, TH, Wp, C), lambda b, s: (b, s, 0, 0)),       # body
            pl.BlockSpec((1, HALO, Wp, C),
                         lambda b, s: (b, (s + 1) * halo_per_strip, 0, 0)),  # halo
            pl.BlockSpec((49, C), lambda b, s: (0, 0)),
            pl.BlockSpec((1, C), lambda b, s: (0, 0)),       # dwconv bias
            pl.BlockSpec((1, C), lambda b, s: (0, 0)),       # LN gamma
            pl.BlockSpec((1, C), lambda b, s: (0, 0)),       # LN beta
            pl.BlockSpec((C, C4), lambda b, s: (0, 0)),      # pwconv1 W (bf16)
            pl.BlockSpec((1, C4), lambda b, s: (0, 0)),      # pwconv1 bias
            pl.BlockSpec((1, C4), lambda b, s: (0, 0)),      # GRN gamma
        ],
        out_specs=(
            pl.BlockSpec((1, TH * W, C4), lambda b, s: (b, s, 0)),
            pl.BlockSpec((1, 1, C4), lambda b, s: (b, 0, 0)),
        ),
        scratch_shapes=[pltpu.VMEM((1, C4), jnp.float32)],
        compiler_params=pltpu.CompilerParams(
            dimension_semantics=("parallel", "arbitrary"),
            vmem_limit_bytes=_VMEM_LIMIT),
    )(xp, xp,
      dw_w, dw_b.reshape(1, C), ln_g.reshape(1, C), ln_b.reshape(1, C),
      pw1_w.astype(jnp.bfloat16), pw1_b.reshape(1, C4), grn_g.reshape(1, C4))


def grn_pw2_residual(h1, scale, grn_b, pw2_w, pw2_b, res3):
    """K2: GRN (precomputed scale) + pwconv2 + residual add."""
    B, HW, C4 = h1.shape
    C = pw2_w.shape[1]
    TR = _pick_row_tile(HW, C)
    n_tiles = HW // TR
    return pl.pallas_call(
        _grn_pw2_res_kernel,
        out_shape=jax.ShapeDtypeStruct((B, HW, C), res3.dtype),
        grid=(B, n_tiles),
        in_specs=[
            pl.BlockSpec((1, TR, C4), lambda b, r: (b, r, 0)),      # h1 (bf16)
            pl.BlockSpec((1, 1, C4), lambda b, r: (b, 0, 0)),       # GRN scale
            pl.BlockSpec((1, C4), lambda b, r: (0, 0)),             # GRN beta
            pl.BlockSpec((C4, C), lambda b, r: (0, 0)),             # pwconv2 W
            pl.BlockSpec((1, C), lambda b, r: (0, 0)),              # pwconv2 b
            pl.BlockSpec((1, TR, C), lambda b, r: (b, r, 0)),       # residual
        ],
        out_specs=pl.BlockSpec((1, TR, C), lambda b, r: (b, r, 0)),
        input_output_aliases={5: 0},   # residual buffer reused for the output
        compiler_params=pltpu.CompilerParams(
            dimension_semantics=("parallel", "parallel"),
            vmem_limit_bytes=_VMEM_LIMIT),
    )(h1, scale, grn_b.reshape(1, C4), pw2_w.astype(jnp.bfloat16),
      pw2_b.reshape(1, C), res3)


# ----------------------------------------------------------------------------
# ConvNeXtV2 block forward (NCHW in/out)
# ----------------------------------------------------------------------------
def convnext_v2_block(params, x_nchw):
    x = jnp.transpose(x_nchw, (0, 2, 3, 1))          # NHWC
    B, H, W, C = x.shape
    h1, scale = dwconv_ln_pw1_silu(
        x, params["dw_w"], params["dw_b"], params["ln_g"], params["ln_b"],
        params["pw1_w"], params["pw1_b"], params["grn_g"], eps=1e-6)
    y = grn_pw2_residual(h1, scale, params["grn_b"], params["pw2_w"],
                         params["pw2_b"], x.reshape(B, H * W, C))
    # Dropout(0.1) -> identity (eval mode).
    return jnp.transpose(y.reshape(B, H, W, C), (0, 3, 1, 2))


# ----------------------------------------------------------------------------
# Pure-JAX reference (matches the PyTorch module semantics)
# ----------------------------------------------------------------------------
def convnext_v2_block_ref(params, x_nchw):
    x = jnp.transpose(x_nchw, (0, 2, 3, 1)).astype(jnp.float32)
    B, H, W, C = x.shape
    res = x
    xp = jnp.pad(x, ((0, 0), (3, 3), (3, 3), (0, 0)))
    acc = jnp.zeros_like(x)
    for dy in range(7):
        for dx in range(7):
            acc = acc + xp[:, dy:dy + H, dx:dx + W, :] * params["dw_w"][dy * 7 + dx]
    acc = acc + params["dw_b"]
    mean = jnp.mean(acc, axis=-1, keepdims=True)
    var = jnp.mean((acc - mean) ** 2, axis=-1, keepdims=True)
    h = (acc - mean) * jax.lax.rsqrt(var + 1e-6) * params["ln_g"] + params["ln_b"]
    h = jnp.dot(h, params["pw1_w"],
                precision=jax.lax.Precision.HIGHEST) + params["pw1_b"]
    h = h * jax.nn.sigmoid(h)                                  # SiLU
    gx = jnp.sqrt(jnp.sum(h * h, axis=(1, 2), keepdims=True))  # (B,1,1,4C)
    nx = gx / (jnp.mean(gx, axis=-1, keepdims=True) + 1e-6)
    h = params["grn_g"] * h * nx + params["grn_b"] + h
    h = jnp.dot(h, params["pw2_w"],
                precision=jax.lax.Precision.HIGHEST) + params["pw2_b"]
    return jnp.transpose(res + h, (0, 3, 1, 2))


# ----------------------------------------------------------------------------
if __name__ == "__main__":
    B, C, H, W = 2, 32, 16, 16        # small shapes; 4*C = 128 (lane-dense)
    C4 = 4 * C

    key = jax.random.PRNGKey(0)
    ks = jax.random.split(key, 12)
    params = dict(
        dw_w=jax.random.normal(ks[0], (49, C), jnp.float32) * 0.05,
        dw_b=jax.random.normal(ks[1], (C,), jnp.float32) * 0.05,
        ln_g=1.0 + jax.random.normal(ks[2], (C,), jnp.float32) * 0.05,
        ln_b=jax.random.normal(ks[3], (C,), jnp.float32) * 0.05,
        pw1_w=jax.random.normal(ks[4], (C, C4), jnp.float32) * 0.05,
        pw1_b=jax.random.normal(ks[5], (C4,), jnp.float32) * 0.05,
        grn_g=jax.random.normal(ks[6], (C4,), jnp.float32) * 0.05,
        grn_b=jax.random.normal(ks[7], (C4,), jnp.float32) * 0.05,
        pw2_w=jax.random.normal(ks[8], (C4, C), jnp.float32) * 0.05,
        pw2_b=jax.random.normal(ks[9], (C,), jnp.float32) * 0.05,
    )
    x = jax.random.normal(ks[10], (B, C, H, W), jnp.float32)   # NCHW

    fwd = jax.jit(convnext_v2_block)
    out = jax.block_until_ready(fwd(params, x))

    assert out.shape == (B, C, H, W), out.shape
    assert bool(jnp.all(jnp.isfinite(out)))

    ref = convnext_v2_block_ref(params, x)
    err = float(jnp.max(jnp.abs(out - ref)))
    # bf16 MXU operands + bf16 h1 storage vs the f32 HIGHEST-precision reference
    assert err < 1e-2, f"max abs error vs reference: {err}"

    print("KERNEL_OK")
</pallas_src>

<mosaic_0001>
module attributes {stable_mosaic.version = 11 : i64} {
  func.func @_grn_pw2_res_kernel(%arg0: i32, %arg1: i32, %arg2: memref<1x256x128xbf16, #tpu.memory_space<vmem>>, %arg3: memref<1x1x128xf32, #tpu.memory_space<vmem>>, %arg4: memref<1x128xf32, #tpu.memory_space<vmem>>, %arg5: memref<128x32xbf16, #tpu.memory_space<vmem>>, %arg6: memref<1x32xf32, #tpu.memory_space<vmem>>, %arg7: memref<1x256x32xf32, #tpu.memory_space<vmem>>, %arg8: memref<1x256x32xf32, #tpu.memory_space<vmem>>) attributes {dimension_semantics = [#tpu.dimension_semantics<parallel>, #tpu.dimension_semantics<parallel>], iteration_bounds = array<i64: 2, 1>, scalar_prefetch = 0 : i64, scratch_operands = 0 : i64, tpu.core_type = #tpu.core_type<tc>, window_params = [{transform_indices = @transform_0, window_bounds = array<i64: 1, 256, 128>}, {transform_indices = @transform_1, window_bounds = array<i64: 1, 1, 128>}, {pipeline_mode = #tpu.pipeline_mode<synchronous>, transform_indices = @transform_2, window_bounds = array<i64: 1, 128>}, {pipeline_mode = #tpu.pipeline_mode<synchronous>, transform_indices = @transform_3, window_bounds = array<i64: 128, 32>}, {pipeline_mode = #tpu.pipeline_mode<synchronous>, transform_indices = @transform_4, window_bounds = array<i64: 1, 32>}, {transform_indices = @transform_5, window_bounds = array<i64: 1, 256, 32>}, {transform_indices = @transform_6, window_bounds = array<i64: 1, 256, 32>}]} {
    %c0 = arith.constant 0 : index
    %c0_0 = arith.constant 0 : index
    %c0_1 = arith.constant 0 : index
    %0 = vector.load %arg2[%c0, %c0_0, %c0_1] : memref<1x256x128xbf16, #tpu.memory_space<vmem>>, vector<1x256x128xbf16>
    %1 = vector.shape_cast %0 : vector<1x256x128xbf16> to vector<256x128xbf16>
    %2 = arith.extf %1 : vector<256x128xbf16> to vector<256x128xf32>
    %c0_2 = arith.constant 0 : index
    %c0_3 = arith.constant 0 : index
    %c0_4 = arith.constant 0 : index
    %3 = vector.load %arg3[%c0_2, %c0_3, %c0_4] : memref<1x1x128xf32, #tpu.memory_space<vmem>>, vector<1x1x128xf32>
    %4 = vector.shape_cast %3 : vector<1x1x128xf32> to vector<1x128xf32>
    %5 = vector.broadcast %4 : vector<1x128xf32> to vector<256x128xf32>
    %6 = arith.mulf %2, %5 : vector<256x128xf32>
    %c0_5 = arith.constant 0 : index
    %c0_6 = arith.constant 0 : index
    %7 = vector.load %arg4[%c0_5, %c0_6] : memref<1x128xf32, #tpu.memory_space<vmem>>, vector<1x128xf32>
    %8 = vector.broadcast %7 : vector<1x128xf32> to vector<256x128xf32>
    %9 = arith.addf %6, %8 : vector<256x128xf32>
    %10 = arith.truncf %9 : vector<256x128xf32> to vector<256x128xbf16>
    %c0_7 = arith.constant 0 : index
    %c0_8 = arith.constant 0 : index
    %11 = vector.load %arg5[%c0_7, %c0_8] : memref<128x32xbf16, #tpu.memory_space<vmem>>, vector<128x32xbf16>
    %cst = arith.constant dense<0.000000e+00> : vector<256x32xf32>
    %12 = tpu.matmul %10, %11, %cst {dimension_numbers = #tpu.dot_dimension_numbers<[1], [0], [0], [1], [0, 0, 1, 1], [], []>} : vector<256x128xbf16>, vector<128x32xbf16>, vector<256x32xf32> -> vector<256x32xf32>
    %c0_9 = arith.constant 0 : index
    %c0_10 = arith.constant 0 : index
    %13 = vector.load %arg6[%c0_9, %c0_10] : memref<1x32xf32, #tpu.memory_space<vmem>>, vector<1x32xf32>
    %14 = vector.broadcast %13 : vector<1x32xf32> to vector<256x32xf32>
    %15 = arith.addf %12, %14 : vector<256x32xf32>
    %c0_11 = arith.constant 0 : index
    %c0_12 = arith.constant 0 : index
    %c0_13 = arith.constant 0 : index
    %16 = vector.load %arg7[%c0_11, %c0_12, %c0_13] : memref<1x256x32xf32, #tpu.memory_space<vmem>>, vector<1x256x32xf32>
    %17 = vector.shape_cast %16 : vector<1x256x32xf32> to vector<256x32xf32>
    %18 = arith.addf %17, %15 : vector<256x32xf32>
    %c0_14 = arith.constant 0 : index
    %c0_15 = arith.constant 0 : index
    %c0_16 = arith.constant 0 : index
    %19 = vector.load %arg8[%c0_14, %c0_15, %c0_16] : memref<1x256x32xf32, #tpu.memory_space<vmem>>, vector<1x256x32xf32>
    %20 = vector.shape_cast %19 : vector<1x256x32xf32> to vector<256x32xf32>
    %21 = vector.shape_cast %18 : vector<256x32xf32> to vector<1x256x32xf32>
    tpu.vector_store %arg8[%c0_14, %c0_15, %c0_16], %21 {strides = array<i32>} : memref<1x256x32xf32, #tpu.memory_space<vmem>>, vector<1x256x32xf32>,
    return
  }
  func.func @transform_0(%arg0: i32, %arg1: i32) -> (i32, i32, i32) {
    %c0_i32 = arith.constant 0 : i32
    %c0_i32_0 = arith.constant 0 : i32
    return %arg0, %arg1, %c0_i32 : i32, i32, i32
  }
  func.func @transform_1(%arg0: i32, %arg1: i32) -> (i32, i32, i32) {
    %c0_i32 = arith.constant 0 : i32
    %c0_i32_0 = arith.constant 0 : i32
    %c0_i32_1 = arith.constant 0 : i32
    return %arg0, %c0_i32, %c0_i32_0 : i32, i32, i32
  }
  func.func @transform_2(%arg0: i32, %arg1: i32) -> (i32, i32) {
    %c0_i32 = arith.constant 0 : i32
    %c0_i32_0 = arith.constant 0 : i32
    %c0_i32_1 = arith.constant 0 : i32
    return %c0_i32, %c0_i32_0 : i32, i32
  }
  func.func @transform_3(%arg0: i32, %arg1: i32) -> (i32, i32) {
    %c0_i32 = arith.constant 0 : i32
    %c0_i32_0 = arith.constant 0 : i32
    %c0_i32_1 = arith.constant 0 : i32
    return %c0_i32, %c0_i32_0 : i32, i32
  }
  func.func @transform_4(%arg0: i32, %arg1: i32) -> (i32, i32) {
    %c0_i32 = arith.constant 0 : i32
    %c0_i32_0 = arith.constant 0 : i32
    %c0_i32_1 = arith.constant 0 : i32
    return %c0_i32, %c0_i32_0 : i32, i32
  }
  func.func @transform_5(%arg0: i32, %arg1: i32) -> (i32, i32, i32) {
    %c0_i32 = arith.constant 0 : i32
    %c0_i32_0 = arith.constant 0 : i32
    return %arg0, %arg1, %c0_i32 : i32, i32, i32
  }
  func.func @transform_6(%arg0: i32, %arg1: i32) -> (i32, i32, i32) {
    %c0_i32 = arith.constant 0 : i32
    %c0_i32_0 = arith.constant 0 : i32
    return %arg0, %arg1, %c0_i32 : i32, i32, i32
  }
}

module attributes {stable_mosaic.version = 11 : i64} {
  func.func @_dwconv_ln_pw1_kernel(%arg0: i32, %arg1: i32, %arg2: memref<1x16x22x32xf32, #tpu.memory_space<vmem>>, %arg3: memref<1x8x22x32xf32, #tpu.memory_space<vmem>>, %arg4: memref<49x32xf32, #tpu.memory_space<vmem>>, %arg5: memref<1x32xf32, #tpu.memory_space<vmem>>, %arg6: memref<1x32xf32, #tpu.memory_space<vmem>>, %arg7: memref<1x32xf32, #tpu.memory_space<vmem>>, %arg8: memref<32x128xbf16, #tpu.memory_space<vmem>>, %arg9: memref<1x128xf32, #tpu.memory_space<vmem>>, %arg10: memref<1x128xf32, #tpu.memory_space<vmem>>, %arg11: memref<1x256x128xbf16, #tpu.memory_space<vmem>>, %arg12: memref<1x1x128xf32, #tpu.memory_space<vmem>>, %arg13: memref<1x128xf32, #tpu.memory_space<vmem>>) attributes {dimension_semantics = [#tpu.dimension_semantics<parallel>, #tpu.dimension_semantics<arbitrary>], iteration_bounds = array<i64: 2, 1>, scalar_prefetch = 0 : i64, scratch_operands = 1 : i64, tpu.core_type = #tpu.core_type<tc>, window_params = [{transform_indices = @transform_0, window_bounds = array<i64: 1, 16, 22, 32>}, {transform_indices = @transform_1, window_bounds = array<i64: 1, 8, 22, 32>}, {pipeline_mode = #tpu.pipeline_mode<synchronous>, transform_indices = @transform_2, window_bounds = array<i64: 49, 32>}, {pipeline_mode = #tpu.pipeline_mode<synchronous>, transform_indices = @transform_3, window_bounds = array<i64: 1, 32>}, {pipeline_mode = #tpu.pipeline_mode<synchronous>, transform_indices = @transform_4, window_bounds = array<i64: 1, 32>}, {pipeline_mode = #tpu.pipeline_mode<synchronous>, transform_indices = @transform_5, window_bounds = array<i64: 1, 32>}, {pipeline_mode = #tpu.pipeline_mode<synchronous>, transform_indices = @transform_6, window_bounds = array<i64: 32, 128>}, {pipeline_mode = #tpu.pipeline_mode<synchronous>, transform_indices = @transform_7, window_bounds = array<i64: 1, 128>}, {pipeline_mode = #tpu.pipeline_mode<synchronous>, transform_indices = @transform_8, window_bounds = array<i64: 1, 128>}, {transform_indices = @transform_9, window_bounds = array<i64: 1, 256, 128>}, {transform_indices = @transform_10, window_bounds = array<i64: 1, 1, 128>}]} {
    %c0 = arith.constant 0 : index
    %c0_0 = arith.constant 0 : index
    %c0_1 = arith.constant 0 : index
    %c0_2 = arith.constant 0 : index
    %0 = vector.load %arg2[%c0, %c0_0, %c0_1, %c0_2] : memref<1x16x22x32xf32, #tpu.memory_space<vmem>>, vector<1x16x22x32xf32>
    %1 = vector.shape_cast %0 : vector<1x16x22x32xf32> to vector<16x22x32xf32>
    %c0_3 = arith.constant 0 : index
    %c0_4 = arith.constant 0 : index
    %c0_5 = arith.constant 0 : index
    %c0_6 = arith.constant 0 : index
    %2 = vector.load %arg3[%c0_3, %c0_4, %c0_5, %c0_6] : memref<1x8x22x32xf32, #tpu.memory_space<vmem>>, vector<1x8x22x32xf32>
    %3 = vector.shape_cast %2 : vector<1x8x22x32xf32> to vector<8x22x32xf32>
    %4 = vector.extract_strided_slice %3 {offsets = [0, 0, 0], sizes = [6, 22, 32], strides = [1, 1, 1]} : vector<8x22x32xf32> to vector<6x22x32xf32>
    %5 = tpu.concatenate %1, %4 in 0 : vector<16x22x32xf32>, vector<6x22x32xf32> -> vector<22x22x32xf32>
    %c0_7 = arith.constant 0 : index
    %c0_8 = arith.constant 0 : index
    %6 = vector.load %arg4[%c0_7, %c0_8] : memref<49x32xf32, #tpu.memory_space<vmem>>, vector<49x32xf32>
    %cst = arith.constant 0.000000e+00 : f32
    %7 = vector.broadcast %cst : f32 to vector<16x16x32xf32>
    %8 = vector.extract_strided_slice %5 {offsets = [0, 0, 0], sizes = [22, 16, 32], strides = [1, 1, 1]} : vector<22x22x32xf32> to vector<22x16x32xf32>
    %9 = vector.extract_strided_slice %8 {offsets = [0, 0, 0], sizes = [16, 16, 32], strides = [1, 1, 1]} : vector<22x16x32xf32> to vector<16x16x32xf32>
    %10 = vector.extract_strided_slice %6 {offsets = [0, 0], sizes = [1, 32], strides = [1, 1]} : vector<49x32xf32> to vector<1x32xf32>
    %11 = vector.shape_cast %10 : vector<1x32xf32> to vector<32xf32>
    %12 = vector.shape_cast %11 : vector<32xf32> to vector<1x1x32xf32>
    %13 = vector.broadcast %12 : vector<1x1x32xf32> to vector<16x16x32xf32>
    %14 = arith.mulf %9, %13 : vector<16x16x32xf32>
    %15 = arith.addf %7, %14 : vector<16x16x32xf32>
    %16 = vector.extract_strided_slice %8 {offsets = [1, 0, 0], sizes = [16, 16, 32], strides = [1, 1, 1]} : vector<22x16x32xf32> to vector<16x16x32xf32>
    %17 = vector.extract_strided_slice %6 {offsets = [7, 0], sizes = [1, 32], strides = [1, 1]} : vector<49x32xf32> to vector<1x32xf32>
    %18 = vector.shape_cast %17 : vector<1x32xf32> to vector<32xf32>
    %19 = vector.shape_cast %18 : vector<32xf32> to vector<1x1x32xf32>
    %20 = vector.broadcast %19 : vector<1x1x32xf32> to vector<16x16x32xf32>
    %21 = arith.mulf %16, %20 : vector<16x16x32xf32>
    %22 = arith.addf %15, %21 : vector<16x16x32xf32>
    %23 = vector.extract_strided_slice %8 {offsets = [2, 0, 0], sizes = [16, 16, 32], strides = [1, 1, 1]} : vector<22x16x32xf32> to vector<16x16x32xf32>
    %24 = vector.extract_strided_slice %6 {offsets = [14, 0], sizes = [1, 32], strides = [1, 1]} : vector<49x32xf32> to vector<1x32xf32>
    %25 = vector.shape_cast %24 : vector<1x32xf32> to vector<32xf32>
    %26 = vector.shape_cast %25 : vector<32xf32> to vector<1x1x32xf32>
    %27 = vector.broadcast %26 : vector<1x1x32xf32> to vector<16x16x32xf32>
    %28 = arith.mulf %23, %27 : vector<16x16x32xf32>
    %29 = arith.addf %22, %28 : vector<16x16x32xf32>
    %30 = vector.extract_strided_slice %8 {offsets = [3, 0, 0], sizes = [16, 16, 32], strides = [1, 1, 1]} : vector<22x16x32xf32> to vector<16x16x32xf32>
    %31 = vector.extract_strided_slice %6 {offsets = [21, 0], sizes = [1, 32], strides = [1, 1]} : vector<49x32xf32> to vector<1x32xf32>
    %32 = vector.shape_cast %31 : vector<1x32xf32> to vector<32xf32>
    %33 = vector.shape_cast %32 : vector<32xf32> to vector<1x1x32xf32>
    %34 = vector.broadcast %33 : vector<1x1x32xf32> to vector<16x16x32xf32>
    %35 = arith.mulf %30, %34 : vector<16x16x32xf32>
    %36 = arith.addf %29, %35 : vector<16x16x32xf32>
    %37 = vector.extract_strided_slice %8 {offsets = [4, 0, 0], sizes = [16, 16, 32], strides = [1, 1, 1]} : vector<22x16x32xf32> to vector<16x16x32xf32>
    %38 = vector.extract_strided_slice %6 {offsets = [28, 0], sizes = [1, 32], strides = [1, 1]} : vector<49x32xf32> to vector<1x32xf32>
    %39 = vector.shape_cast %38 : vector<1x32xf32> to vector<32xf32>
    %40 = vector.shape_cast %39 : vector<32xf32> to vector<1x1x32xf32>
    %41 = vector.broadcast %40 : vector<1x1x32xf32> to vector<16x16x32xf32>
    %42 = arith.mulf %37, %41 : vector<16x16x32xf32>
    %43 = arith.addf %36, %42 : vector<16x16x32xf32>
    %44 = vector.extract_strided_slice %8 {offsets = [5, 0, 0], sizes = [16, 16, 32], strides = [1, 1, 1]} : vector<22x16x32xf32> to vector<16x16x32xf32>
    %45 = vector.extract_strided_slice %6 {offsets = [35, 0], sizes = [1, 32], strides = [1, 1]} : vector<49x32xf32> to vector<1x32xf32>
    %46 = vector.shape_cast %45 : vector<1x32xf32> to vector<32xf32>
    %47 = vector.shape_cast %46 : vector<32xf32> to vector<1x1x32xf32>
    %48 = vector.broadcast %47 : vector<1x1x32xf32> to vector<16x16x32xf32>
    %49 = arith.mulf %44, %48 : vector<16x16x32xf32>
    %50 = arith.addf %43, %49 : vector<16x16x32xf32>
    %51 = vector.extract_strided_slice %8 {offsets = [6, 0, 0], sizes = [16, 16, 32], strides = [1, 1, 1]} : vector<22x16x32xf32> to vector<16x16x32xf32>
    %52 = vector.extract_strided_slice %6 {offsets = [42, 0], sizes = [1, 32], strides = [1, 1]} : vector<49x32xf32> to vector<1x32xf32>
    %53 = vector.shape_cast %52 : vector<1x32xf32> to vector<32xf32>
    %54 = vector.shape_cast %53 : vector<32xf32> to vector<1x1x32xf32>
    %55 = vector.broadcast %54 : vector<1x1x32xf32> to vector<16x16x32xf32>
    %56 = arith.mulf %51, %55 : vector<16x16x32xf32>
    %57 = arith.addf %50, %56 : vector<16x16x32xf32>
    %58 = vector.extract_strided_slice %5 {offsets = [0, 1, 0], sizes = [22, 16, 32], strides = [1, 1, 1]} : vector<22x22x32xf32> to vector<22x16x32xf32>
    %59 = vector.extract_strided_slice %58 {offsets = [0, 0, 0], sizes = [16, 16, 32], strides = [1, 1, 1]} : vector<22x16x32xf32> to vector<16x16x32xf32>
    %60 = vector.extract_strided_slice %6 {offsets = [1, 0], sizes = [1, 32], strides = [1, 1]} : vector<49x32xf32> to vector<1x32xf32>
    %61 = vector.shape_cast %60 : vector<1x32xf32> to vector<32xf32>
    %62 = vector.shape_cast %61 : vector<32xf32> to vector<1x1x32xf32>
    %63 = vector.broadcast %62 : vector<1x1x32xf32> to vector<16x16x32xf32>
    %64 = arith.mulf %59, %63 : vector<16x16x32xf32>
    %65 = arith.addf %57, %64 : vector<16x16x32xf32>
    %66 = vector.extract_strided_slice %58 {offsets = [1, 0, 0], sizes = [16, 16, 32], strides = [1, 1, 1]} : vector<22x16x32xf32> to vector<16x16x32xf32>
    %67 = vector.extract_strided_slice %6 {offsets = [8, 0], sizes = [1, 32], strides = [1, 1]} : vector<49x32xf32> to vector<1x32xf32>
    %68 = vector.shape_cast %67 : vector<1x32xf32> to vector<32xf32>
    %69 = vector.shape_cast %68 : vector<32xf32> to vector<1x1x32xf32>
    %70 = vector.broadcast %69 : vector<1x1x32xf32> to vector<16x16x32xf32>
    %71 = arith.mulf %66, %70 : vector<16x16x32xf32>
    %72 = arith.addf %65, %71 : vector<16x16x32xf32>
    %73 = vector.extract_strided_slice %58 {offsets = [2, 0, 0], sizes = [16, 16, 32], strides = [1, 1, 1]} : vector<22x16x32xf32> to vector<16x16x32xf32>
    %74 = vector.extract_strided_slice %6 {offsets = [15, 0], sizes = [1, 32], strides = [1, 1]} : vector<49x32xf32> to vector<1x32xf32>
    %75 = vector.shape_cast %74 : vector<1x32xf32> to vector<32xf32>
    %76 = vector.shape_cast %75 : vector<32xf32> to vector<1x1x32xf32>
    %77 = vector.broadcast %76 : vector<1x1x32xf32> to vector<16x16x32xf32>
    %78 = arith.mulf %73, %77 : vector<16x16x32xf32>
    %79 = arith.addf %72, %78 : vector<16x16x32xf32>
    %80 = vector.extract_strided_slice %58 {offsets = [3, 0, 0], sizes = [16, 16, 32], strides = [1, 1, 1]} : vector<22x16x32xf32> to vector<16x16x32xf32>
    %81 = vector.extract_strided_slice %6 {offsets = [22, 0], sizes = [1, 32], strides = [1, 1]} : vector<49x32xf32> to vector<1x32xf32>
    %82 = vector.shape_cast %81 : vector<1x32xf32> to vector<32xf32>
    %83 = vector.shape_cast %82 : vector<32xf32> to vector<1x1x32xf32>
    %84 = vector.broadcast %83 : vector<1x1x32xf32> to vector<16x16x32xf32>
    %85 = arith.mulf %80, %84 : vector<16x16x32xf32>
    %86 = arith.addf %79, %85 : vector<16x16x32xf32>
    %87 = vector.extract_strided_slice %58 {offsets = [4, 0, 0], sizes = [16, 16, 32], strides = [1, 1, 1]} : vector<22x16x32xf32> to vector<16x16x32xf32>
    %88 = vector.extract_strided_slice %6 {offsets = [29, 0], sizes = [1, 32], strides = [1, 1]} : vector<49x32xf32> to vector<1x32xf32>
    %89 = vector.shape_cast %88 : vector<1x32xf32> to vector<32xf32>
    %90 = vector.shape_cast %89 : vector<32xf32> to vector<1x1x32xf32>
    %91 = vector.broadcast %90 : vector<1x1x32xf32> to vector<16x16x32xf32>
    %92 = arith.mulf %87, %91 : vector<16x16x32xf32>
    %93 = arith.addf %86, %92 : vector<16x16x32xf32>
    %94 = vector.extract_strided_slice %58 {offsets = [5, 0, 0], sizes = [16, 16, 32], strides = [1, 1, 1]} : vector<22x16x32xf32> to vector<16x16x32xf32>
    %95 = vector.extract_strided_slice %6 {offsets = [36, 0], sizes = [1, 32], strides = [1, 1]} : vector<49x32xf32> to vector<1x32xf32>
    %96 = vector.shape_cast %95 : vector<1x32xf32> to vector<32xf32>
    %97 = vector.shape_cast %96 : vector<32xf32> to vector<1x1x32xf32>
    %98 = vector.broadcast %97 : vector<1x1x32xf32> to vector<16x16x32xf32>
    %99 = arith.mulf %94, %98 : vector<16x16x32xf32>
    %100 = arith.addf %93, %99 : vector<16x16x32xf32>
    %101 = vector.extract_strided_slice %58 {offsets = [6, 0, 0], sizes = [16, 16, 32], strides = [1, 1, 1]} : vector<22x16x32xf32> to vector<16x16x32xf32>
    %102 = vector.extract_strided_slice %6 {offsets = [43, 0], sizes = [1, 32], strides = [1, 1]} : vector<49x32xf32> to vector<1x32xf32>
    %103 = vector.shape_cast %102 : vector<1x32xf32> to vector<32xf32>
    %104 = vector.shape_cast %103 : vector<32xf32> to vector<1x1x32xf32>
    %105 = vector.broadcast %104 : vector<1x1x32xf32> to vector<16x16x32xf32>
    %106 = arith.mulf %101, %105 : vector<16x16x32xf32>
    %107 = arith.addf %100, %106 : vector<16x16x32xf32>
    %108 = vector.extract_strided_slice %5 {offsets = [0, 2, 0], sizes = [22, 16, 32], strides = [1, 1, 1]} : vector<22x22x32xf32> to vector<22x16x32xf32>
    %109 = vector.extract_strided_slice %108 {offsets = [0, 0, 0], sizes = [16, 16, 32], strides = [1, 1, 1]} : vector<22x16x32xf32> to vector<16x16x32xf32>
    %110 = vector.extract_strided_slice %6 {offsets = [2, 0], sizes = [1, 32], strides = [1, 1]} : vector<49x32xf32> to vector<1x32xf32>
    %111 = vector.shape_cast %110 : vector<1x32xf32> to vector<32xf32>
    %112 = vector.shape_cast %111 : vector<32xf32> to vector<1x1x32xf32>
    %113 = vector.broadcast %112 : vector<1x1x32xf32> to vector<16x16x32xf32>
    %114 = arith.mulf %109, %113 : vector<16x16x32xf32>
    %115 = arith.addf %107, %114 : vector<16x16x32xf32>
    %116 = vector.extract_strided_slice %108 {offsets = [1, 0, 0], sizes = [16, 16, 32], strides = [1, 1, 1]} : vector<22x16x32xf32> to vector<16x16x32xf32>
    %117 = vector.extract_strided_slice %6 {offsets = [9, 0], sizes = [1, 32], strides = [1, 1]} : vector<49x32xf32> to vector<1x32xf32>
    %118 = vector.shape_cast %117 : vector<1x32xf32> to vector<32xf32>
    %119 = vector.shape_cast %118 : vector<32xf32> to vector<1x1x32xf32>
    %120 = vector.broadcast %119 : vector<1x1x32xf32> to vector<16x16x32xf32>
    %121 = arith.mulf %116, %120 : vector<16x16x32xf32>
    %122 = arith.addf %115, %121 : vector<16x16x32xf32>
    %123 = vector.extract_strided_slice %108 {offsets = [2, 0, 0], sizes = [16, 16, 32], strides = [1, 1, 1]} : vector<22x16x32xf32> to vector<16x16x32xf32>
    %124 = vector.extract_strided_slice %6 {offsets = [16, 0], sizes = [1, 32], strides = [1, 1]} : vector<49x32xf32> to vector<1x32xf32>
    %125 = vector.shape_cast %124 : vector<1x32xf32> to vector<32xf32>
    %126 = vector.shape_cast %125 : vector<32xf32> to vector<1x1x32xf32>
    %127 = vector.broadcast %126 : vector<1x1x32xf32> to vector<16x16x32xf32>
    %128 = arith.mulf %123, %127 : vector<16x16x32xf32>
    %129 = arith.addf %122, %128 : vector<16x16x32xf32>
    %130 = vector.extract_strided_slice %108 {offsets = [3, 0, 0], sizes = [16, 16, 32], strides = [1, 1, 1]} : vector<22x16x32xf32> to vector<16x16x32xf32>
    %131 = vector.extract_strided_slice %6 {offsets = [23, 0], sizes = [1, 32], strides = [1, 1]} : vector<49x32xf32> to vector<1x32xf32>
    %132 = vector.shape_cast %131 : vector<1x32xf32> to vector<32xf32>
    %133 = vector.shape_cast %132 : vector<32xf32> to vector<1x1x32xf32>
    %134 = vector.broadcast %133 : vector<1x1x32xf32> to vector<16x16x32xf32>
    %135 = arith.mulf %130, %134 : vector<16x16x32xf32>
    %136 = arith.addf %129, %135 : vector<16x16x32xf32>
    %137 = vector.extract_strided_slice %108 {offsets = [4, 0, 0], sizes = [16, 16, 32], strides = [1, 1, 1]} : vector<22x16x32xf32> to vector<16x16x32xf32>
    %138 = vector.extract_strided_slice %6 {offsets = [30, 0], sizes = [1, 32], strides = [1, 1]} : vector<49x32xf32> to vector<1x32xf32>
    %139 = vector.shape_cast %138 : vector<1x32xf32> to vector<32xf32>
    %140 = vector.shape_cast %139 : vector<32xf32> to vector<1x1x32xf32>
    %141 = vector.broadcast %140 : vector<1x1x32xf32> to vector<16x16x32xf32>
    %142 = arith.mulf %137, %141 : vector<16x16x32xf32>
    %143 = arith.addf %136, %142 : vector<16x16x32xf32>
    %144 = vector.extract_strided_slice %108 {offsets = [5, 0, 0], sizes = [16, 16, 32], strides = [1, 1, 1]} : vector<22x16x32xf32> to vector<16x16x32xf32>
    %145 = vector.extract_strided_slice %6 {offsets = [37, 0], sizes = [1, 32], strides = [1, 1]} : vector<49x32xf32> to vector<1x32xf32>
    %146 = vector.shape_cast %145 : vector<1x32xf32> to vector<32xf32>
    %147 = vector.shape_cast %146 : vector<32xf32> to vector<1x1x32xf32>
    %148 = vector.broadcast %147 : vector<1x1x32xf32> to vector<16x16x32xf32>
    %149 = arith.mulf %144, %148 : vector<16x16x32xf32>
    %150 = arith.addf %143, %149 : vector<16x16x32xf32>
    %151 = vector.extract_strided_slice %108 {offsets = [6, 0, 0], sizes = [16, 16, 32], strides = [1, 1, 1]} : vector<22x16x32xf32> to vector<16x16x32xf32>
    %152 = vector.extract_strided_slice %6 {offsets = [44, 0], sizes = [1, 32], strides = [1, 1]} : vector<49x32xf32> to vector<1x32xf32>
    %153 = vector.shape_cast %152 : vector<1x32xf32> to vector<32xf32>
    %154 = vector.shape_cast %153 : vector<32xf32> to vector<1x1x32xf32>
    %155 = vector.broadcast %154 : vector<1x1x32xf32> to vector<16x16x32xf32>
    %156 = arith.mulf %151, %155 : vector<16x16x32xf32>
    %157 = arith.addf %150, %156 : vector<16x16x32xf32>
    %158 = vector.extract_strided_slice %5 {offsets = [0, 3, 0], sizes = [22, 16, 32], strides = [1, 1, 1]} : vector<22x22x32xf32> to vector<22x16x32xf32>
    %159 = vector.extract_strided_slice %158 {offsets = [0, 0, 0], sizes = [16, 16, 32], strides = [1, 1, 1]} : vector<22x16x32xf32> to vector<16x16x32xf32>
    %160 = vector.extract_strided_slice %6 {offsets = [3, 0], sizes = [1, 32], strides = [1, 1]} : vector<49x32xf32> to vector<1x32xf32>
    %161 = vector.shape_cast %160 : vector<1x32xf32> to vector<32xf32>
    %162 = vector.shape_cast %161 : vector<32xf32> to vector<1x1x32xf32>
    %163 = vector.broadcast %162 : vector<1x1x32xf32> to vector<16x16x32xf32>
    %164 = arith.mulf %159, %163 : vector<16x16x32xf32>
    %165 = arith.addf %157, %164 : vector<16x16x32xf32>
    %166 = vector.extract_strided_slice %158 {offsets = [1, 0, 0], sizes = [16, 16, 32], strides = [1, 1, 1]} : vector<22x16x32xf32> to vector<16x16x32xf32>
    %167 = vector.extract_strided_slice %6 {offsets = [10, 0], sizes = [1, 32], strides = [1, 1]} : vector<49x32xf32> to vector<1x32xf32>
    %168 = vector.shape_cast %167 : vector<1x32xf32> to vector<32xf32>
    %169 = vector.shape_cast %168 : vector<32xf32> to vector<1x1x32xf32>
    %170 = vector.broadcast %169 : vector<1x1x32xf32> to vector<16x16x32xf32>
    %171 = arith.mulf %166, %170 : vector<16x16x32xf32>
    %172 = arith.addf %165, %171 : vector<16x16x32xf32>
    %173 = vector.extract_strided_slice %158 {offsets = [2, 0, 0], sizes = [16, 16, 32], strides = [1, 1, 1]} : vector<22x16x32xf32> to vector<16x16x32xf32>
    %174 = vector.extract_strided_slice %6 {offsets = [17, 0], sizes = [1, 32], strides = [1, 1]} : vector<49x32xf32> to vector<1x32xf32>
    %175 = vector.shape_cast %174 : vector<1x32xf32> to vector<32xf32>
    %176 = vector.shape_cast %175 : vector<32xf32> to vector<1x1x32xf32>
    %177 = vector.broadcast %176 : vector<1x1x32xf32> to vector<16x16x32xf32>
    %178 = arith.mulf %173, %177 : vector<16x16x32xf32>
    %179 = arith.addf %172, %178 : vector<16x16x32xf32>
    %180 = vector.extract_strided_slice %158 {offsets = [3, 0, 0], sizes = [16, 16, 32], strides = [1, 1, 1]} : vector<22x16x32xf32> to vector<16x16x32xf32>
    %181 = vector.extract_strided_slice %6 {offsets = [24, 0], sizes = [1, 32], strides = [1, 1]} : vector<49x32xf32> to vector<1x32xf32>
    %182 = vector.shape_cast %181 : vector<1x32xf32> to vector<32xf32>
    %183 = vector.shape_cast %182 : vector<32xf32> to vector<1x1x32xf32>
    %184 = vector.broadcast %183 : vector<1x1x32xf32> to vector<16x16x32xf32>
    %185 = arith.mulf %180, %184 : vector<16x16x32xf32>
    %186 = arith.addf %179, %185 : vector<16x16x32xf32>
    %187 = vector.extract_strided_slice %158 {offsets = [4, 0, 0], sizes = [16, 16, 32], strides = [1, 1, 1]} : vector<22x16x32xf32> to vector<16x16x32xf32>
    %188 = vector.extract_strided_slice %6 {offsets = [31, 0], sizes = [1, 32], strides = [1, 1]} : vector<49x32xf32> to vector<1x32xf32>
    %189 = vector.shape_cast %188 : vector<1x32xf32> to vector<32xf32>
    %190 = vector.shape_cast %189 : vector<32xf32> to vector<1x1x32xf32>
    %191 = vector.broadcast %190 : vector<1x1x32xf32> to vector<16x16x32xf32>
    %192 = arith.mulf %187, %191 : vector<16x16x32xf32>
    %193 = arith.addf %186, %192 : vector<16x16x32xf32>
    %194 = vector.extract_strided_slice %158 {offsets = [5, 0, 0], sizes = [16, 16, 32], strides = [1, 1, 1]} : vector<22x16x32xf32> to vector<16x16x32xf32>
    %195 = vector.extract_strided_slice %6 {offsets = [38, 0], sizes = [1, 32], strides = [1, 1]} : vector<49x32xf32> to vector<1x32xf32>
    %196 = vector.shape_cast %195 : vector<1x32xf32> to vector<32xf32>
    %197 = vector.shape_cast %196 : vector<32xf32> to vector<1x1x32xf32>
    %198 = vector.broadcast %197 : vector<1x1x32xf32> to vector<16x16x32xf32>
    %199 = arith.mulf %194, %198 : vector<16x16x32xf32>
    %200 = arith.addf %193, %199 : vector<16x16x32xf32>
    %201 = vector.extract_strided_slice %158 {offsets = [6, 0, 0], sizes = [16, 16, 32], strides = [1, 1, 1]} : vector<22x16x32xf32> to vector<16x16x32xf32>
    %202 = vector.extract_strided_slice %6 {offsets = [45, 0], sizes = [1, 32], strides = [1, 1]} : vector<49x32xf32> to vector<1x32xf32>
    %203 = vector.shape_cast %202 : vector<1x32xf32> to vector<32xf32>
    %204 = vector.shape_cast %203 : vector<32xf32> to vector<1x1x32xf32>
    %205 = vector.broadcast %204 : vector<1x1x32xf32> to vector<16x16x32xf32>
    %206 = arith.mulf %201, %205 : vector<16x16x32xf32>
    %207 = arith.addf %200, %206 : vector<16x16x32xf32>
    %208 = vector.extract_strided_slice %5 {offsets = [0, 4, 0], sizes = [22, 16, 32], strides = [1, 1, 1]} : vector<22x22x32xf32> to vector<22x16x32xf32>
    %209 = vector.extract_strided_slice %208 {offsets = [0, 0, 0], sizes = [16, 16, 32], strides = [1, 1, 1]} : vector<22x16x32xf32> to vector<16x16x32xf32>
    %210 = vector.extract_strided_slice %6 {offsets = [4, 0], sizes = [1, 32], strides = [1, 1]} : vector<49x32xf32> to vector<1x32xf32>
    %211 = vector.shape_cast %210 : vector<1x32xf32> to vector<32xf32>
    %212 = vector.shape_cast %211 : vector<32xf32> to vector<1x1x32xf32>
    %213 = vector.broadcast %212 : vector<1x1x32xf32> to vector<16x16x32xf32>
    %214 = arith.mulf %209, %213 : vector<16x16x32xf32>
    %215 = arith.addf %207, %214 : vector<16x16x32xf32>
    %216 = vector.extract_strided_slice %208 {offsets = [1, 0, 0], sizes = [16, 16, 32], strides = [1, 1, 1]} : vector<22x16x32xf32> to vector<16x16x32xf32>
    %217 = vector.extract_strided_slice %6 {offsets = [11, 0], sizes = [1, 32], strides = [1, 1]} : vector<49x32xf32> to vector<1x32xf32>
    %218 = vector.shape_cast %217 : vector<1x32xf32> to vector<32xf32>
    %219 = vector.shape_cast %218 : vector<32xf32> to vector<1x1x32xf32>
    %220 = vector.broadcast %219 : vector<1x1x32xf32> to vector<16x16x32xf32>
    %221 = arith.mulf %216, %220 : vector<16x16x32xf32>
    %222 = arith.addf %215, %221 : vector<16x16x32xf32>
    %223 = vector.extract_strided_slice %208 {offsets = [2, 0, 0], sizes = [16, 16, 32], strides = [1, 1, 1]} : vector<22x16x32xf32> to vector<16x16x32xf32>
    %224 = vector.extract_strided_slice %6 {offsets = [18, 0], sizes = [1, 32], strides = [1, 1]} : vector<49x32xf32> to vector<1x32xf32>
    %225 = vector.shape_cast %224 : vector<1x32xf32> to vector<32xf32>
    %226 = vector.shape_cast %225 : vector<32xf32> to vector<1x1x32xf32>
    %227 = vector.broadcast %226 : vector<1x1x32xf32> to vector<16x16x32xf32>
    %228 = arith.mulf %223, %227 : vector<16x16x32xf32>
    %229 = arith.addf %222, %228 : vector<16x16x32xf32>
    %230 = vector.extract_strided_slice %208 {offsets = [3, 0, 0], sizes = [16, 16, 32], strides = [1, 1, 1]} : vector<22x16x32xf32> to vector<16x16x32xf32>
    %231 = vector.extract_strided_slice %6 {offsets = [25, 0], sizes = [1, 32], strides = [1, 1]} : vector<49x32xf32> to vector<1x32xf32>
    %232 = vector.shape_cast %231 : vector<1x32xf32> to vector<32xf32>
    %233 = vector.shape_cast %232 : vector<32xf32> to vector<1x1x32xf32>
    %234 = vector.broadcast %233 : vector<1x1x32xf32> to vector<16x16x32xf32>
    %235 = arith.mulf %230, %234 : vector<16x16x32xf32>
    %236 = arith.addf %229, %235 : vector<16x16x32xf32>
    %237 = vector.extract_strided_slice %208 {offsets = [4, 0, 0], sizes = [16, 16, 32], strides = [1, 1, 1]} : vector<22x16x32xf32> to vector<16x16x32xf32>
    %238 = vector.extract_strided_slice %6 {offsets = [32, 0], sizes = [1, 32], strides = [1, 1]} : vector<49x32xf32> to vector<1x32xf32>
    %239 = vector.shape_cast %238 : vector<1x32xf32> to vector<32xf32>
    %240 = vector.shape_cast %239 : vector<32xf32> to vector<1x1x32xf32>
    %241 = vector.broadcast %240 : vector<1x1x32xf32> to vector<16x16x32xf32>
    %242 = arith.mulf %237, %241 : vector<16x16x32xf32>
    %243 = arith.addf %236, %242 : vector<16x16x32xf32>
    %244 = vector.extract_strided_slice %208 {offsets = [5, 0, 0], sizes = [16, 16, 32], strides = [1, 1, 1]} : vector<22x16x32xf32> to vector<16x16x32xf32>
    %245 = vector.extract_strided_slice %6 {offsets = [39, 0], sizes = [1, 32], strides = [1, 1]} : vector<49x32xf32> to vector<1x32xf32>
    %246 = vector.shape_cast %245 : vector<1x32xf32> to vector<32xf32>
    %247 = vector.shape_cast %246 : vector<32xf32> to vector<1x1x32xf32>
    %248 = vector.broadcast %247 : vector<1x1x32xf32> to vector<16x16x32xf32>
    %249 = arith.mulf %244, %248 : vector<16x16x32xf32>
    %250 = arith.addf %243, %249 : vector<16x16x32xf32>
    %251 = vector.extract_strided_slice %208 {offsets = [6, 0, 0], sizes = [16, 16, 32], strides = [1, 1, 1]} : vector<22x16x32xf32> to vector<16x16x32xf32>
    %252 = vector.extract_strided_slice %6 {offsets = [46, 0], sizes = [1, 32], strides = [1, 1]} : vector<49x32xf32> to vector<1x32xf32>
    %253 = vector.shape_cast %252 : vector<1x32xf32> to vector<32xf32>
    %254 = vector.shape_cast %253 : vector<32xf32> to vector<1x1x32xf32>
    %255 = vector.broadcast %254 : vector<1x1x32xf32> to vector<16x16x32xf32>
    %256 = arith.mulf %251, %255 : vector<16x16x32xf32>
    %257 = arith.addf %250, %256 : vector<16x16x32xf32>
    %258 = vector.extract_strided_slice %5 {offsets = [0, 5, 0], sizes = [22, 16, 32], strides = [1, 1, 1]} : vector<22x22x32xf32> to vector<22x16x32xf32>
    %259 = vector.extract_strided_slice %258 {offsets = [0, 0, 0], sizes = [16, 16, 32], strides = [1, 1, 1]} : vector<22x16x32xf32> to vector<16x16x32xf32>
    %260 = vector.extract_strided_slice %6 {offsets = [5, 0], sizes = [1, 32], strides = [1, 1]} : vector<49x32xf32> to vector<1x32xf32>
    %261 = vector.shape_cast %260 : vector<1x32xf32> to vector<32xf32>
    %262 = vector.shape_cast %261 : vector<32xf32> to vector<1x1x32xf32>
    %263 = vector.broadcast %262 : vector<1x1x32xf32> to vector<16x16x32xf32>
    %264 = arith.mulf %259, %263 : vector<16x16x32xf32>
    %265 = arith.addf %257, %264 : vector<16x16x32xf32>
    %266 = vector.extract_strided_slice %258 {offsets = [1, 0, 0], sizes = [16, 16, 32], strides = [1, 1, 1]} : vector<22x16x32xf32> to vector<16x16x32xf32>
    %267 = vector.extract_strided_slice %6 {offsets = [12, 0], sizes = [1, 32], strides = [1, 1]} : vector<49x32xf32> to vector<1x32xf32>
    %268 = vector.shape_cast %267 : vector<1x32xf32> to vector<32xf32>
    %269 = vector.shape_cast %268 : vector<32xf32> to vector<1x1x32xf32>
    %270 = vector.broadcast %269 : vector<1x1x32xf32> to vector<16x16x32xf32>
    %271 = arith.mulf %266, %270 : vector<16x16x32xf32>
    %272 = arith.addf %265, %271 : vector<16x16x32xf32>
    %273 = vector.extract_strided_slice %258 {offsets = [2, 0, 0], sizes = [16, 16, 32], strides = [1, 1, 1]} : vector<22x16x32xf32> to vector<16x16x32xf32>
    %274 = vector.extract_strided_slice %6 {offsets = [19, 0], sizes = [1, 32], strides = [1, 1]} : vector<49x32xf32> to vector<1x32xf32>
    %275 = vector.shape_cast %274 : vector<1x32xf32> to vector<32xf32>
    %276 = vector.shape_cast %275 : vector<32xf32> to vector<1x1x32xf32>
    %277 = vector.broadcast %276 : vector<1x1x32xf32> to vector<16x16x32xf32>
    %278 = arith.mulf %273, %277 : vector<16x16x32xf32>
    %279 = arith.addf %272, %278 : vector<16x16x32xf32>
    %280 = vector.extract_strided_slice %258 {offsets = [3, 0, 0], sizes = [16, 16, 32], strides = [1, 1, 1]} : vector<22x16x32xf32> to vector<16x16x32xf32>
    %281 = vector.extract_strided_slice %6 {offsets = [26, 0], sizes = [1, 32], strides = [1, 1]} : vector<49x32xf32> to vector<1x32xf32>
    %282 = vector.shape_cast %281 : vector<1x32xf32> to vector<32xf32>
    %283 = vector.shape_cast %282 : vector<32xf32> to vector<1x1x32xf32>
    %284 = vector.broadcast %283 : vector<1x1x32xf32> to vector<16x16x32xf32>
    %285 = arith.mulf %280, %284 : vector<16x16x32xf32>
    %286 = arith.addf %279, %285 : vector<16x16x32xf32>
    %287 = vector.extract_strided_slice %258 {offsets = [4, 0, 0], sizes = [16, 16, 32], strides = [1, 1, 1]} : vector<22x16x32xf32> to vector<16x16x32xf32>
    %288 = vector.extract_strided_slice %6 {offsets = [33, 0], sizes = [1, 32], strides = [1, 1]} : vector<49x32xf32> to vector<1x32xf32>
    %289 = vector.shape_cast %288 : vector<1x32xf32> to vector<32xf32>
    %290 = vector.shape_cast %289 : vector<32xf32> to vector<1x1x32xf32>
    %291 = vector.broadcast %290 : vector<1x1x32xf32> to vector<16x16x32xf32>
    %292 = arith.mulf %287, %291 : vector<16x16x32xf32>
    %293 = arith.addf %286, %292 : vector<16x16x32xf32>
    %294 = vector.extract_strided_slice %258 {offsets = [5, 0, 0], sizes = [16, 16, 32], strides = [1, 1, 1]} : vector<22x16x32xf32> to vector<16x16x32xf32>
    %295 = vector.extract_strided_slice %6 {offsets = [40, 0], sizes = [1, 32], strides = [1, 1]} : vector<49x32xf32> to vector<1x32xf32>
    %296 = vector.shape_cast %295 : vector<1x32xf32> to vector<32xf32>
    %297 = vector.shape_cast %296 : vector<32xf32> to vector<1x1x32xf32>
    %298 = vector.broadcast %297 : vector<1x1x32xf32> to vector<16x16x32xf32>
    %299 = arith.mulf %294, %298 : vector<16x16x32xf32>
    %300 = arith.addf %293, %299 : vector<16x16x32xf32>
    %301 = vector.extract_strided_slice %258 {offsets = [6, 0, 0], sizes = [16, 16, 32], strides = [1, 1, 1]} : vector<22x16x32xf32> to vector<16x16x32xf32>
    %302 = vector.extract_strided_slice %6 {offsets = [47, 0], sizes = [1, 32], strides = [1, 1]} : vector<49x32xf32> to vector<1x32xf32>
    %303 = vector.shape_cast %302 : vector<1x32xf32> to vector<32xf32>
    %304 = vector.shape_cast %303 : vector<32xf32> to vector<1x1x32xf32>
    %305 = vector.broadcast %304 : vector<1x1x32xf32> to vector<16x16x32xf32>
    %306 = arith.mulf %301, %305 : vector<16x16x32xf32>
    %307 = arith.addf %300, %306 : vector<16x16x32xf32>
    %308 = vector.extract_strided_slice %5 {offsets = [0, 6, 0], sizes = [22, 16, 32], strides = [1, 1, 1]} : vector<22x22x32xf32> to vector<22x16x32xf32>
    %309 = vector.extract_strided_slice %308 {offsets = [0, 0, 0], sizes = [16, 16, 32], strides = [1, 1, 1]} : vector<22x16x32xf32> to vector<16x16x32xf32>
    %310 = vector.extract_strided_slice %6 {offsets = [6, 0], sizes = [1, 32], strides = [1, 1]} : vector<49x32xf32> to vector<1x32xf32>
    %311 = vector.shape_cast %310 : vector<1x32xf32> to vector<32xf32>
    %312 = vector.shape_cast %311 : vector<32xf32> to vector<1x1x32xf32>
    %313 = vector.broadcast %312 : vector<1x1x32xf32> to vector<16x16x32xf32>
    %314 = arith.mulf %309, %313 : vector<16x16x32xf32>
    %315 = arith.addf %307, %314 : vector<16x16x32xf32>
    %316 = vector.extract_strided_slice %308 {offsets = [1, 0, 0], sizes = [16, 16, 32], strides = [1, 1, 1]} : vector<22x16x32xf32> to vector<16x16x32xf32>
    %317 = vector.extract_strided_slice %6 {offsets = [13, 0], sizes = [1, 32], strides = [1, 1]} : vector<49x32xf32> to vector<1x32xf32>
    %318 = vector.shape_cast %317 : vector<1x32xf32> to vector<32xf32>
    %319 = vector.shape_cast %318 : vector<32xf32> to vector<1x1x32xf32>
    %320 = vector.broadcast %319 : vector<1x1x32xf32> to vector<16x16x32xf32>
    %321 = arith.mulf %316, %320 : vector<16x16x32xf32>
    %322 = arith.addf %315, %321 : vector<16x16x32xf32>
    %323 = vector.extract_strided_slice %308 {offsets = [2, 0, 0], sizes = [16, 16, 32], strides = [1, 1, 1]} : vector<22x16x32xf32> to vector<16x16x32xf32>
    %324 = vector.extract_strided_slice %6 {offsets = [20, 0], sizes = [1, 32], strides = [1, 1]} : vector<49x32xf32> to vector<1x32xf32>
    %325 = vector.shape_cast %324 : vector<1x32xf32> to vector<32xf32>
    %326 = vector.shape_cast %325 : vector<32xf32> to vector<1x1x32xf32>
    %327 = vector.broadcast %326 : vector<1x1x32xf32> to vector<16x16x32xf32>
    %328 = arith.mulf %323, %327 : vector<16x16x32xf32>
    %329 = arith.addf %322, %328 : vector<16x16x32xf32>
    %330 = vector.extract_strided_slice %308 {offsets = [3, 0, 0], sizes = [16, 16, 32], strides = [1, 1, 1]} : vector<22x16x32xf32> to vector<16x16x32xf32>
    %331 = vector.extract_strided_slice %6 {offsets = [27, 0], sizes = [1, 32], strides = [1, 1]} : vector<49x32xf32> to vector<1x32xf32>
    %332 = vector.shape_cast %331 : vector<1x32xf32> to vector<32xf32>
    %333 = vector.shape_cast %332 : vector<32xf32> to vector<1x1x32xf32>
    %334 = vector.broadcast %333 : vector<1x1x32xf32> to vector<16x16x32xf32>
    %335 = arith.mulf %330, %334 : vector<16x16x32xf32>
    %336 = arith.addf %329, %335 : vector<16x16x32xf32>
    %337 = vector.extract_strided_slice %308 {offsets = [4, 0, 0], sizes = [16, 16, 32], strides = [1, 1, 1]} : vector<22x16x32xf32> to vector<16x16x32xf32>
    %338 = vector.extract_strided_slice %6 {offsets = [34, 0], sizes = [1, 32], strides = [1, 1]} : vector<49x32xf32> to vector<1x32xf32>
    %339 = vector.shape_cast %338 : vector<1x32xf32> to vector<32xf32>
    %340 = vector.shape_cast %339 : vector<32xf32> to vector<1x1x32xf32>
    %341 = vector.broadcast %340 : vector<1x1x32xf32> to vector<16x16x32xf32>
    %342 = arith.mulf %337, %341 : vector<16x16x32xf32>
    %343 = arith.addf %336, %342 : vector<16x16x32xf32>
    %344 = vector.extract_strided_slice %308 {offsets = [5, 0, 0], sizes = [16, 16, 32], strides = [1, 1, 1]} : vector<22x16x32xf32> to vector<16x16x32xf32>
    %345 = vector.extract_strided_slice %6 {offsets = [41, 0], sizes = [1, 32], strides = [1, 1]} : vector<49x32xf32> to vector<1x32xf32>
    %346 = vector.shape_cast %345 : vector<1x32xf32> to vector<32xf32>
    %347 = vector.shape_cast %346 : vector<32xf32> to vector<1x1x32xf32>
    %348 = vector.broadcast %347 : vector<1x1x32xf32> to vector<16x16x32xf32>
    %349 = arith.mulf %344, %348 : vector<16x16x32xf32>
    %350 = arith.addf %343, %349 : vector<16x16x32xf32>
    %351 = vector.extract_strided_slice %308 {offsets = [6, 0, 0], sizes = [16, 16, 32], strides = [1, 1, 1]} : vector<22x16x32xf32> to vector<16x16x32xf32>
    %352 = vector.extract_strided_slice %6 {offsets = [48, 0], sizes = [1, 32], strides = [1, 1]} : vector<49x32xf32> to vector<1x32xf32>
    %353 = vector.shape_cast %352 : vector<1x32xf32> to vector<32xf32>
    %354 = vector.shape_cast %353 : vector<32xf32> to vector<1x1x32xf32>
    %355 = vector.broadcast %354 : vector<1x1x32xf32> to vector<16x16x32xf32>
    %356 = arith.mulf %351, %355 : vector<16x16x32xf32>
    %357 = arith.addf %350, %356 : vector<16x16x32xf32>
    %c0_9 = arith.constant 0 : index
    %c0_10 = arith.constant 0 : index
    %358 = vector.load %arg5[%c0_9, %c0_10] : memref<1x32xf32, #tpu.memory_space<vmem>>, vector<1x32xf32>
    %359 = vector.shape_cast %358 : vector<1x32xf32> to vector<1x1x32xf32>
    %360 = vector.broadcast %359 : vector<1x1x32xf32> to vector<16x16x32xf32>
    %361 = arith.addf %357, %360 : vector<16x16x32xf32>
    %cst_11 = arith.constant dense<0.000000e+00> : vector<16x16xf32>
    %362 = vector.multi_reduction <add>, %361, %cst_11 [2] : vector<16x16x32xf32> to vector<16x16xf32>
    %363 = vector.shape_cast %362 : vector<16x16xf32> to vector<16x16x1xf32>
    %cst_12 = arith.constant 3.200000e+01 : f32
    %364 = vector.broadcast %cst_12 : f32 to vector<16x16x1xf32>
    %365 = arith.divf %363, %364 : vector<16x16x1xf32>
    %366 = vector.broadcast %365 : vector<16x16x1xf32> to vector<16x16x32xf32>
    %367 = arith.subf %361, %366 : vector<16x16x32xf32>
    %368 = arith.mulf %367, %367 : vector<16x16x32xf32>
    %cst_13 = arith.constant dense<0.000000e+00> : vector<16x16xf32>
    %369 = vector.multi_reduction <add>, %368, %cst_13 [2] : vector<16x16x32xf32> to vector<16x16xf32>
    %370 = vector.shape_cast %369 : vector<16x16xf32> to vector<16x16x1xf32>
    %cst_14 = arith.constant 3.200000e+01 : f32
    %371 = vector.broadcast %cst_14 : f32 to vector<16x16x1xf32>
    %372 = arith.divf %370, %371 : vector<16x16x1xf32>
    %373 = vector.broadcast %365 : vector<16x16x1xf32> to vector<16x16x32xf32>
    %374 = arith.subf %361, %373 : vector<16x16x32xf32>
    %cst_15 = arith.constant 9.99999997E-7 : f32
    %375 = vector.broadcast %cst_15 : f32 to vector<16x16x1xf32>
    %376 = arith.addf %372, %375 : vector<16x16x1xf32>
    %377 = math.rsqrt %376 : vector<16x16x1xf32>
    %378 = vector.broadcast %377 : vector<16x16x1xf32> to vector<16x16x32xf32>
    %379 = arith.mulf %374, %378 : vector<16x16x32xf32>
    %c0_16 = arith.constant 0 : index
    %c0_17 = arith.constant 0 : index
    %380 = vector.load %arg6[%c0_16, %c0_17] : memref<1x32xf32, #tpu.memory_space<vmem>>, vector<1x32xf32>
    %381 = vector.shape_cast %380 : vector<1x32xf32> to vector<1x1x32xf32>
    %382 = vector.broadcast %381 : vector<1x1x32xf32> to vector<16x16x32xf32>
    %383 = arith.mulf %379, %382 : vector<16x16x32xf32>
    %c0_18 = arith.constant 0 : index
    %c0_19 = arith.constant 0 : index
    %384 = vector.load %arg7[%c0_18, %c0_19] : memref<1x32xf32, #tpu.memory_space<vmem>>, vector<1x32xf32>
    %385 = vector.shape_cast %384 : vector<1x32xf32> to vector<1x1x32xf32>
    %386 = vector.broadcast %385 : vector<1x1x32xf32> to vector<16x16x32xf32>
    %387 = arith.addf %383, %386 : vector<16x16x32xf32>
    %388 = vector.shape_cast %387 : vector<16x16x32xf32> to vector<256x32xf32>
    %389 = arith.truncf %388 : vector<256x32xf32> to vector<256x32xbf16>
    %c0_20 = arith.constant 0 : index
    %c0_21 = arith.constant 0 : index
    %390 = vector.load %arg8[%c0_20, %c0_21] : memref<32x128xbf16, #tpu.memory_space<vmem>>, vector<32x128xbf16>
    %cst_22 = arith.constant dense<0.000000e+00> : vector<256x128xf32>
    %391 = tpu.matmul %389, %390, %cst_22 {dimension_numbers = #tpu.dot_dimension_numbers<[1], [0], [0], [1], [0, 0, 1, 1], [], []>} : vector<256x32xbf16>, vector<32x128xbf16>, vector<256x128xf32> -> vector<256x128xf32>
    %c0_23 = arith.constant 0 : index
    %c0_24 = arith.constant 0 : index
    %392 = vector.load %arg9[%c0_23, %c0_24] : memref<1x128xf32, #tpu.memory_space<vmem>>, vector<1x128xf32>
    %393 = vector.broadcast %392 : vector<1x128xf32> to vector<256x128xf32>
    %394 = arith.addf %391, %393 : vector<256x128xf32>
    %395 = arith.negf %394 : vector<256x128xf32>
    %396 = math.exp %395 : vector<256x128xf32>
    %cst_25 = arith.constant 1.000000e+00 : f32
    %397 = vector.broadcast %cst_25 : f32 to vector<256x128xf32>
    %398 = arith.addf %397, %396 : vector<256x128xf32>
    %399 = arith.divf %397, %398 : vector<256x128xf32>
    %400 = arith.mulf %394, %399 : vector<256x128xf32>
    %401 = arith.truncf %400 : vector<256x128xf32> to vector<256x128xbf16>
    %c0_26 = arith.constant 0 : index
    %c0_27 = arith.constant 0 : index
    %c0_28 = arith.constant 0 : index
    %402 = vector.load %arg11[%c0_26, %c0_27, %c0_28] : memref<1x256x128xbf16, #tpu.memory_space<vmem>>, vector<1x256x128xbf16>
    %403 = vector.shape_cast %402 : vector<1x256x128xbf16> to vector<256x128xbf16>
    %404 = vector.shape_cast %401 : vector<256x128xbf16> to vector<1x256x128xbf16>
    tpu.vector_store %arg11[%c0_26, %c0_27, %c0_28], %404 {strides = array<i32>} : memref<1x256x128xbf16, #tpu.memory_space<vmem>>, vector<1x256x128xbf16>,
    %c0_i32 = arith.constant 0 : i32
    %405 = arith.cmpi eq, %arg1, %c0_i32 : i32
    %406 = arith.extui %405 : i1 to i32
    %c0_i32_29 = arith.constant 0 : i32
    %407 = arith.cmpi ne, %406, %c0_i32_29 : i32
    scf.if %407 {
      %cst_46 = arith.constant 0.000000e+00 : f32
      %431 = vector.broadcast %cst_46 : f32 to vector<1x128xf32>
      %c0_47 = arith.constant 0 : index
      %c0_48 = arith.constant 0 : index
      %432 = vector.load %arg13[%c0_47, %c0_48] : memref<1x128xf32, #tpu.memory_space<vmem>>, vector<1x128xf32>
      tpu.vector_store %arg13[%c0_47, %c0_48], %431 {strides = array<i32>} : memref<1x128xf32, #tpu.memory_space<vmem>>, vector<1x128xf32>,
    } else {
    }
    %c0_30 = arith.constant 0 : index
    %c0_31 = arith.constant 0 : index
    %408 = vector.load %arg13[%c0_30, %c0_31] : memref<1x128xf32, #tpu.memory_space<vmem>>, vector<1x128xf32>
    %409 = arith.mulf %400, %400 : vector<256x128xf32>
    %cst_32 = arith.constant dense<0.000000e+00> : vector<128xf32>
    %410 = vector.multi_reduction <add>, %409, %cst_32 [0] : vector<256x128xf32> to vector<128xf32>
    %411 = vector.shape_cast %410 : vector<128xf32> to vector<1x128xf32>
    %412 = arith.addf %408, %411 : vector<1x128xf32>
    %c0_33 = arith.constant 0 : index
    %c0_34 = arith.constant 0 : index
    %413 = vector.load %arg13[%c0_33, %c0_34] : memref<1x128xf32, #tpu.memory_space<vmem>>, vector<1x128xf32>
    tpu.vector_store %arg13[%c0_33, %c0_34], %412 {strides = array<i32>} : memref<1x128xf32, #tpu.memory_space<vmem>>, vector<1x128xf32>,
    %c0_35 = arith.constant 0 : index
    %c0_36 = arith.constant 0 : index
    %414 = vector.load %arg13[%c0_35, %c0_36] : memref<1x128xf32, #tpu.memory_space<vmem>>, vector<1x128xf32>
    %415 = math.sqrt %414 : vector<1x128xf32>
    %cst_37 = arith.constant dense<0.000000e+00> : vector<1xf32>
    %416 = vector.multi_reduction <add>, %415, %cst_37 [1] : vector<1x128xf32> to vector<1xf32>
    %417 = vector.shape_cast %416 : vector<1xf32> to vector<1x1xf32>
    %cst_38 = arith.constant 1.280000e+02 : f32
    %418 = vector.broadcast %cst_38 : f32 to vector<1x1xf32>
    %419 = arith.divf %417, %418 : vector<1x1xf32>
    %cst_39 = arith.constant 9.99999997E-7 : f32
    %420 = vector.broadcast %cst_39 : f32 to vector<1x1xf32>
    %421 = arith.addf %419, %420 : vector<1x1xf32>
    %422 = vector.broadcast %421 : vector<1x1xf32> to vector<1x128xf32>
    %423 = arith.divf %415, %422 : vector<1x128xf32>
    %c0_40 = arith.constant 0 : index
    %c0_41 = arith.constant 0 : index
    %424 = vector.load %arg10[%c0_40, %c0_41] : memref<1x128xf32, #tpu.memory_space<vmem>>, vector<1x128xf32>
    %425 = arith.mulf %424, %423 : vector<1x128xf32>
    %cst_42 = arith.constant 1.000000e+00 : f32
    %426 = vector.broadcast %cst_42 : f32 to vector<1x128xf32>
    %427 = arith.addf %426, %425 : vector<1x128xf32>
    %c0_43 = arith.constant 0 : index
    %c0_44 = arith.constant 0 : index
    %c0_45 = arith.constant 0 : index
    %428 = vector.load %arg12[%c0_43, %c0_44, %c0_45] : memref<1x1x128xf32, #tpu.memory_space<vmem>>, vector<1x1x128xf32>
    %429 = vector.shape_cast %428 : vector<1x1x128xf32> to vector<1x128xf32>
    %430 = vector.shape_cast %427 : vector<1x128xf32> to vector<1x1x128xf32>
    tpu.vector_store %arg12[%c0_43, %c0_44, %c0_45], %430 {strides = array<i32>} : memref<1x1x128xf32, #tpu.memory_space<vmem>>, vector<1x1x128xf32>,
    return
  }
  func.func @transform_0(%arg0: i32, %arg1: i32) -> (i32, i32, i32, i32) {
    %c0_i32 = arith.constant 0 : i32
    %c0_i32_0 = arith.constant 0 : i32
    %c0_i32_1 = arith.constant 0 : i32
    return %arg0, %arg1, %c0_i32, %c0_i32_0 : i32, i32, i32, i32
  }
  func.func @transform_1(%arg0: i32, %arg1: i32) -> (i32, i32, i32, i32) {
    %c1_i32 = arith.constant 1 : i32
    %0 = arith.addi %arg1, %c1_i32 : i32
    %c2_i32 = arith.constant 2 : i32
    %1 = arith.muli %0, %c2_i32 : i32
    %c0_i32 = arith.constant 0 : i32
    %c0_i32_0 = arith.constant 0 : i32
    %c0_i32_1 = arith.constant 0 : i32
    return %arg0, %1, %c0_i32, %c0_i32_0 : i32, i32, i32, i32
  }
  func.func @transform_2(%arg0: i32, %arg1: i32) -> (i32, i32) {
    %c0_i32 = arith.constant 0 : i32
    %c0_i32_0 = arith.constant 0 : i32
    %c0_i32_1 = arith.constant 0 : i32
    return %c0_i32, %c0_i32_0 : i32, i32
  }
  func.func @transform_3(%arg0: i32, %arg1: i32) -> (i32, i32) {
    %c0_i32 = arith.constant 0 : i32
    %c0_i32_0 = arith.constant 0 : i32
    %c0_i32_1 = arith.constant 0 : i32
    return %c0_i32, %c0_i32_0 : i32, i32
  }
  func.func @transform_4(%arg0: i32, %arg1: i32) -> (i32, i32) {
    %c0_i32 = arith.constant 0 : i32
    %c0_i32_0 = arith.constant 0 : i32
    %c0_i32_1 = arith.constant 0 : i32
    return %c0_i32, %c0_i32_0 : i32, i32
  }
  func.func @transform_5(%arg0: i32, %arg1: i32) -> (i32, i32) {
    %c0_i32 = arith.constant 0 : i32
    %c0_i32_0 = arith.constant 0 : i32
    %c0_i32_1 = arith.constant 0 : i32
    return %c0_i32, %c0_i32_0 : i32, i32
  }
  func.func @transform_6(%arg0: i32, %arg1: i32) -> (i32, i32) {
    %c0_i32 = arith.constant 0 : i32
    %c0_i32_0 = arith.constant 0 : i32
    %c0_i32_1 = arith.constant 0 : i32
    return %c0_i32, %c0_i32_0 : i32, i32
  }
  func.func @transform_7(%arg0: i32, %arg1: i32) -> (i32, i32) {
    %c0_i32 = arith.constant 0 : i32
    %c0_i32_0 = arith.constant 0 : i32
    %c0_i32_1 = arith.constant 0 : i32
    return %c0_i32, %c0_i32_0 : i32, i32
  }
  func.func @transform_8(%arg0: i32, %arg1: i32) -> (i32, i32) {
    %c0_i32 = arith.constant 0 : i32
    %c0_i32_0 = arith.constant 0 : i32
    %c0_i32_1 = arith.constant 0 : i32
    return %c0_i32, %c0_i32_0 : i32, i32
  }
  func.func @transform_9(%arg0: i32, %arg1: i32) -> (i32, i32, i32) {
    %c0_i32 = arith.constant 0 : i32
    %c0_i32_0 = arith.constant 0 : i32
    return %arg0, %arg1, %c0_i32 : i32, i32, i32
  }
  func.func @transform_10(%arg0: i32, %arg1: i32) -> (i32, i32, i32) {
    %c0_i32 = arith.constant 0 : i32
    %c0_i32_0 = arith.constant 0 : i32
    %c0_i32_1 = arith.constant 0 : i32
    return %arg0, %c0_i32, %c0_i32_0 : i32, i32, i32
  }
}

</mosaic_0001>

<llo_original>
// kernel: convnext_v2_block.3
$region0: #{convnext_v2_block.3}
  #allocation0 [shape = 'u32[]', space=smem, size = 0x4, offset = 0x4, fixed_abs, tag = 'smem constant byte address 0x4 - core index']
  #allocation1 [shape = 'u32[144,128]{1,0:T(1,128)}', space=vmem, size = 0x12000, scoped, tag = 'internal scratch']
  %s0 = inlined_call_operand.vmem [shape: bf16[2,256,128], index: 0, kind: input, shape index: {}]
  %s1 = inlined_call_operand.vmem [shape: f32[2,1,128], index: 1, kind: input, shape index: {}]
  %s2 = inlined_call_operand.vmem [shape: f32[1,128], index: 2, kind: input, shape index: {}]
  %s3 = inlined_call_operand.vmem [shape: bf16[128,32], index: 3, kind: input, shape index: {}]
  %s4 = inlined_call_operand.vmem [shape: f32[1,32], index: 4, kind: input, shape index: {}]
  %s5 = inlined_call_operand.vmem [shape: f32[2,256,32], index: 5, kind: input, shape index: {}, may-alias: {5,6}]
  %s6 = inlined_call_operand.vmem [shape: f32[2,256,32], index: 6, kind: output, shape index: {}, may-alias: {5,6}]
  %s7 = sld [smem:[#allocation0]]
  $region57: #{convnext_v2_block.3} parent=0
    _
  %s9 = ssub.s32 1, %s7
  %s10 = scalar_select 0, %s9, %s7
  loop: start=0, step=1, limit=4
  $region2: #{convnext_v2_block.3} parent=0 // loop_pre_header
    _
  $region3: #{convnext_v2_block.3} parent=0 // loop_header
    %s12 = sphi 0, %s16
    %p13 = scmp.ge.s32.totalorder %s12, 4
    %s19 = sphi 0, %s31
    %s20 = sphi 0, %s27
    %s21 = sphi 0, %s19
    %s22 = sphi 0, %s20
    %s23 = sphi 0, %s21
    %s24 = sphi 0, %s22
    %s36 = sphi 0, %s38
    %s39 = sphi 0, %s36
    %s40 = sphi 0, %s39
    %s56 = sphi 0, %s40
    %s62 = sphi 0, %s64
    %s65 = sphi 0, %s62
    %s66 = sphi 0, %s65
    %s82 = sphi 0, %s66
    %s86 = sphi 0, %s86
    %s88 = sphi 0, %s86
    %s89 = sphi 0, %s88
    %s103 = sphi 0, %s89
    %s107 = sphi 0, %s107
    %s109 = sphi 0, %s107
    %s110 = sphi 0, %s109
    %s124 = sphi 0, %s110
    %s128 = sphi 0, %s128
    %s130 = sphi 0, %s128
    %s131 = sphi 0, %s130
    %s145 = sphi 0, %s131
    %s153 = sphi 0, %s155
    %s156 = sphi 0, %s153
    %s157 = sphi 0, %s156
    %s173 = sphi 0, %s157
    %s181 = sphi 0, %s183
    %s184 = sphi 0, %s181
    %s185 = sphi 0, %s184
    %s201 = sphi 0, %s185
  $region4: #{convnext_v2_block.3} parent=0 // loop_header_branch
    %15 = sbr.rel (%p13) target = $region8
  $region5: #{convnext_v2_block.3} parent=0 // loop_body
    %s17 = ssub.s32 %s12, 1
    %s18 = ssub.s32 %s12, 2
    %s25 = sadd.s32 1, %s20
    %p26 = scmp.ge.s32.totalorder %s25, 1
    %s27 = scalar_select %p26, 0, %s25
    %s28 = sadd.s32 1, %s19
    %s29 = scalar_select %p26, %s28, %s19
    %p30 = scmp.ge.s32.totalorder %s29, 2
    %s31 = scalar_select %p30, 0, %s29
    %s32 = ssub.s32 %s19, %s31
    %s33 = ssub.s32 %s20, %s27
    %s34 = sor.u32 %s32, %s33
    %p35 = scmp.eq.s32.totalorder %s34, 0
    %s37 = sadd.s32 %s36, 1
    %s38 = scalar_select %p35, %s36, %s37
    %p41 = pneg %p35
    %p42 = scmp.eq.s32.totalorder %s12, 1
    %p43 = por %p41, %p42
    %p44 = scmp.ne.s32.totalorder %s36, %s39
    %p45 = scmp.eq.s32.totalorder %s12, 0
    %p46 = por %p44, %p45
    %p47 = scmp.ne.s32.totalorder %s36, %s39
    %p48 = scmp.eq.s32.totalorder %s17, 1
    %p49 = por %p47, %p48
    %p50 = scmp.ne.s32.totalorder %s39, %s40
    %p51 = scmp.eq.s32.totalorder %s17, 0
    %p52 = por %p50, %p51
    %p53 = scmp.ne.s32.totalorder %s39, %s40
    %p54 = scmp.eq.s32.totalorder %s18, 1
    %p55 = por %p53, %p54
    %p57 = scmp.ne.s32.totalorder %s40, %s56
    %p58 = scmp.eq.s32.totalorder %s18, 0
    %p59 = por %p57, %p58
    %s60 = ssub.s32 %s19, %s31
    %p61 = scmp.eq.s32.totalorder %s60, 0
    %s63 = sadd.s32 %s62, 1
    %s64 = scalar_select %p61, %s62, %s63
    %p67 = pneg %p61
    %p68 = scmp.eq.s32.totalorder %s12, 1
    %p69 = por %p67, %p68
    %p70 = scmp.ne.s32.totalorder %s62, %s65
    %p71 = scmp.eq.s32.totalorder %s12, 0
    %p72 = por %p70, %p71
    %p73 = scmp.ne.s32.totalorder %s62, %s65
    %p74 = scmp.eq.s32.totalorder %s17, 1
    %p75 = por %p73, %p74
    %p76 = scmp.ne.s32.totalorder %s65, %s66
    %p77 = scmp.eq.s32.totalorder %s17, 0
    %p78 = por %p76, %p77
    %p79 = scmp.ne.s32.totalorder %s65, %s66
    %p80 = scmp.eq.s32.totalorder %s18, 1
    %p81 = por %p79, %p80
    %p83 = scmp.ne.s32.totalorder %s66, %s82
    %p84 = scmp.eq.s32.totalorder %s18, 0
    %p85 = por %p83, %p84
    %s87 = sadd.s32 %s86, 1
    %p90 = scmp.eq.s32.totalorder %s12, 1
    %p91 = scmp.ne.s32.totalorder %s86, %s88
    %p92 = scmp.eq.s32.totalorder %s12, 0
    %p93 = por %p91, %p92
    %p94 = scmp.ne.s32.totalorder %s86, %s88
    %p95 = scmp.eq.s32.totalorder %s17, 1
    %p96 = por %p94, %p95
    %p97 = scmp.ne.s32.totalorder %s88, %s89
    %p98 = scmp.eq.s32.totalorder %s17, 0
    %p99 = por %p97, %p98
    %p100 = scmp.ne.s32.totalorder %s88, %s89
    %p101 = scmp.eq.s32.totalorder %s18, 1
    %p102 = por %p100, %p101
    %p104 = scmp.ne.s32.totalorder %s89, %s103
    %p105 = scmp.eq.s32.totalorder %s18, 0
    %p106 = por %p104, %p105
    %s108 = sadd.s32 %s107, 1
    %p111 = scmp.eq.s32.totalorder %s12, 1
    %p112 = scmp.ne.s32.totalorder %s107, %s109
    %p113 = scmp.eq.s32.totalorder %s12, 0
    %p114 = por %p112, %p113
    %p115 = scmp.ne.s32.totalorder %s107, %s109
    %p116 = scmp.eq.s32.totalorder %s17, 1
    %p117 = por %p115, %p116
    %p118 = scmp.ne.s32.totalorder %s109, %s110
    %p119 = scmp.eq.s32.totalorder %s17, 0
    %p120 = por %p118, %p119
    %p121 = scmp.ne.s32.totalorder %s109, %s110
    %p122 = scmp.eq.s32.totalorder %s18, 1
    %p123 = por %p121, %p122
    %p125 = scmp.ne.s32.totalorder %s110, %s124
    %p126 = scmp.eq.s32.totalorder %s18, 0
    %p127 = por %p125, %p126
    %s129 = sadd.s32 %s128, 1
    %p132 = scmp.eq.s32.totalorder %s12, 1
    %p133 = scmp.ne.s32.totalorder %s128, %s130
    %p134 = scmp.eq.s32.totalorder %s12, 0
    %p135 = por %p133, %p134
    %p136 = scmp.ne.s32.totalorder %s128, %s130
    %p137 = scmp.eq.s32.totalorder %s17, 1
    %p138 = por %p136, %p137
    %p139 = scmp.ne.s32.totalorder %s130, %s131
    %p140 = scmp.eq.s32.totalorder %s17, 0
    %p141 = por %p139, %p140
    %p142 = scmp.ne.s32.totalorder %s130, %s131
    %p143 = scmp.eq.s32.totalorder %s18, 1
    %p144 = por %p142, %p143
    %p146 = scmp.ne.s32.totalorder %s131, %s145
    %p147 = scmp.eq.s32.totalorder %s18, 0
    %p148 = por %p146, %p147
    %s149 = ssub.s32 %s19, %s31
    %s150 = ssub.s32 %s20, %s27
    %s151 = sor.u32 %s149, %s150
    %p152 = scmp.eq.s32.totalorder %s151, 0
    %s154 = sadd.s32 %s153, 1
    %s155 = scalar_select %p152, %s153, %s154
    %p158 = pneg %p152
    %p159 = scmp.eq.s32.totalorder %s12, 1
    %p160 = por %p158, %p159
    %p161 = scmp.ne.s32.totalorder %s153, %s156
    %p162 = scmp.eq.s32.totalorder %s12, 0
    %p163 = por %p161, %p162
    %p164 = scmp.ne.s32.totalorder %s153, %s156
    %p165 = scmp.eq.s32.totalorder %s17, 1
    %p166 = por %p164, %p165
    %p167 = scmp.ne.s32.totalorder %s156, %s157
    %p168 = scmp.eq.s32.totalorder %s17, 0
    %p169 = por %p167, %p168
    %p170 = scmp.ne.s32.totalorder %s156, %s157
    %p171 = scmp.eq.s32.totalorder %s18, 1
    %p172 = por %p170, %p171
    %p174 = scmp.ne.s32.totalorder %s157, %s173
    %p175 = scmp.eq.s32.totalorder %s18, 0
    %p176 = por %p174, %p175
    %s177 = ssub.s32 %s19, %s31
    %s178 = ssub.s32 %s20, %s27
    %s179 = sor.u32 %s177, %s178
    %p180 = scmp.eq.s32.totalorder %s179, 0
    %s182 = sadd.s32 %s181, 1
    %s183 = scalar_select %p180, %s181, %s182
    %p186 = pneg %p180
    %p187 = scmp.eq.s32.totalorder %s12, 1
    %p188 = por %p186, %p187
    %p189 = scmp.ne.s32.totalorder %s181, %s184
    %p190 = scmp.eq.s32.totalorder %s12, 0
    %p191 = por %p189, %p190
    %p192 = scmp.ne.s32.totalorder %s181, %s184
    %p193 = scmp.eq.s32.totalorder %s17, 1
    %p194 = por %p192, %p193
    %p195 = scmp.ne.s32.totalorder %s184, %s185
    %p196 = scmp.eq.s32.totalorder %s17, 0
    %p197 = por %p195, %p196
    %p198 = scmp.ne.s32.totalorder %s184, %s185
    %p199 = scmp.eq.s32.totalorder %s18, 1
    %p200 = por %p198, %p199
    %p202 = scmp.ne.s32.totalorder %s185, %s201
    %p203 = scmp.eq.s32.totalorder %s18, 0
    %p204 = por %p202, %p203
    %p205 = scmp.le.s32.totalorder 1, %s12
    %p206 = scmp.lt.s32.totalorder %s12, 3
    %p207 = pnand %p205, %p206
    %p208 = pneg %p207
    // Predicated region
    $region9: #{convnext_v2_block.3} parent=5 // pred_check
      _
    $region10: #{convnext_v2_block.3} parent=5 // pred_check_branch
      %210 = sbr.rel (%p207) target = $region12
    $region11: #{convnext_v2_block.3} parent=5 // pred_region
      %s211 = ssub.s32 %s12, 1
      // Predicated region
      $region13: #{convnext_v2_block.3} parent=11 // pred_check
        %p212 = pneg %p99
      $region14: #{convnext_v2_block.3} parent=11 // pred_check_branch
        %214 = sbr.rel (%p212) target = $region16
      $region15: #{convnext_v2_block.3} parent=11 // pred_region
        _
      $region16: #{convnext_v2_block.3} parent=11 // pred_fallthru
        _
      // Predicated region
      $region17: #{convnext_v2_block.3} parent=11 // pred_check
        %p215 = pneg %p120
      $region18: #{convnext_v2_block.3} parent=11 // pred_check_branch
        %217 = sbr.rel (%p215) target = $region20
      $region19: #{convnext_v2_block.3} parent=11 // pred_region
        _
      $region20: #{convnext_v2_block.3} parent=11 // pred_fallthru
        _
      // Predicated region
      $region21: #{convnext_v2_block.3} parent=11 // pred_check
        %p218 = pneg %p141
      $region22: #{convnext_v2_block.3} parent=11 // pred_check_branch
        %220 = sbr.rel (%p218) target = $region24
      $region23: #{convnext_v2_block.3} parent=11 // pred_region
        _
      $region24: #{convnext_v2_block.3} parent=11 // pred_fallthru
        _
    $region12: #{convnext_v2_block.3} parent=5 // pred_fallthru
      _
    %p221 = scmp.lt.s32.totalorder %s12, 2
    // Predicated region
    $region25: #{convnext_v2_block.3} parent=5 // pred_check
      %p222 = pneg %p221
    $region26: #{convnext_v2_block.3} parent=5 // pred_check_branch
      %224 = sbr.rel (%p222) target = $region28
    $region27: #{convnext_v2_block.3} parent=5 // pred_region
      // Predicated region
      $region29: #{convnext_v2_block.3} parent=27 // pred_check
        %p225 = pneg %p46
      $region30: #{convnext_v2_block.3} parent=27 // pred_check_branch
        %227 = sbr.rel (%p225) target = $region32
      $region31: #{convnext_v2_block.3} parent=27 // pred_region
        %s228 = smul.u32 32, %s20
        %p229 = scmp.lt.s32.totalorder %s19, 1
        %s230 = scalar_select %p229, %s19, 1
        %p231 = scmp.lt.s32.totalorder %s228, 31
        %s232 = scalar_select %p231, %s228, 31
        %s233 = smul.addr %s230, 32
        %s234 = sadd.s32 %s232, %s233
        %s235 = smul.addr %s234, 4
        %s236 = scalar_lea.vmem %s0, %s235
        %s237 = smul.u32 32, %s20
      $region32: #{convnext_v2_block.3} parent=27 // pred_fallthru
        _
      // Predicated region
      $region33: #{convnext_v2_block.3} parent=27 // pred_check
        %p238 = pneg %p72
      $region34: #{convnext_v2_block.3} parent=27 // pred_check_branch
        %240 = sbr.rel (%p238) target = $region36
      $region35: #{convnext_v2_block.3} parent=27 // pred_region
        %p241 = scmp.lt.s32.totalorder %s19, 1
        %s242 = scalar_select %p241, %s19, 1
        %s243 = scalar_lea.vmem %s1, %s242
      $region36: #{convnext_v2_block.3} parent=27 // pred_fallthru
        _
      // Predicated region
      $region37: #{convnext_v2_block.3} parent=27 // pred_check
        %p244 = pneg %p163
      $region38: #{convnext_v2_block.3} parent=27 // pred_check_branch
        %246 = sbr.rel (%p244) target = $region40
      $region39: #{convnext_v2_block.3} parent=27 // pred_region
        %s247 = smul.u32 32, %s20
        %p248 = scmp.lt.s32.totalorder %s19, 1
        %s249 = scalar_select %p248, %s19, 1
        %p250 = scmp.lt.s32.totalorder %s247, 31
        %s251 = scalar_select %p250, %s247, 31
        %s252 = smul.addr %s249, 32
        %s253 = sadd.s32 %s251, %s252
        %s254 = smul.addr %s253, 8
        %s255 = scalar_lea.vmem %s5, %s254
        %s256 = smul.u32 32, %s20
      $region40: #{convnext_v2_block.3} parent=27 // pred_fallthru
        _
    $region28: #{convnext_v2_block.3} parent=5 // pred_fallthru
      _
    %p257 = scmp.le.s32.totalorder 1, %s12
    %p258 = scmp.lt.s32.totalorder %s12, 3
    %p259 = pnand %p257, %p258
    %p260 = pneg %p259
    // Predicated region
    $region41: #{convnext_v2_block.3} parent=5 // pred_check
      _
    $region42: #{convnext_v2_block.3} parent=5 // pred_check_branch
      %262 = sbr.rel (%p259) target = $region44
    $region43: #{convnext_v2_block.3} parent=5 // pred_region
      %s263 = ssub.s32 %s12, 1
      %s264 = smul.u32 32, %s22
      %p265 = scmp.lt.s32.totalorder %s21, 1
      %s266 = scalar_select %p265, %s21, 1
      %p267 = scmp.lt.s32.totalorder %s264, 31
      %s268 = scalar_select %p267, %s264, 31
      %s269 = smul.addr %s266, 32
      %s270 = sadd.s32 %s268, %s269
      %s271 = smul.addr %s270, 4
      %s272 = scalar_lea.vmem %s0, %s271
      %p273 = pneg %p52
      %p274 = pneg %p49
      %p275 = scmp.lt.s32.totalorder %s21, 1
      %s276 = scalar_select %p275, %s21, 1
      %s277 = scalar_lea.vmem %s1, %s276
      %p278 = pneg %p78
      %p279 = pneg %p75
      %p280 = pneg %p99
      %p281 = pneg %p96
      %p282 = pneg %p120
      %p283 = pneg %p117
      %p284 = pneg %p141
      %p285 = pneg %p138
      %s286 = smul.u32 32, %s22
      %p287 = scmp.lt.s32.totalorder %s21, 1
      %s288 = scalar_select %p287, %s21, 1
      %p289 = scmp.lt.s32.totalorder %s286, 31
      %s290 = scalar_select %p289, %s286, 31
      %s291 = smul.addr %s288, 32
      %s292 = sadd.s32 %s290, %s291
      %s293 = smul.addr %s292, 8
      %s294 = scalar_lea.vmem %s5, %s293
      %p295 = pneg %p169
      %p296 = pneg %p166
      %p297 = pneg %p197
      %p298 = pneg %p194
      %s299 = smul.u32 32, %s22
      %p300 = scmp.lt.s32.totalorder %s21, 1
      %s301 = scalar_select %p300, %s21, 1
      %p302 = scmp.lt.s32.totalorder %s299, 31
      %s303 = scalar_select %p302, %s299, 31
      %s304 = smul.addr %s301, 32
      %s305 = sadd.s32 %s303, %s304
      %s306 = smul.addr %s305, 8
      %s307 = scalar_lea.vmem %s6, %s306
      %s308 = smul.u32 32, %s22
      %p309 = scmp.lt.s32.totalorder %s21, 1
      %s310 = scalar_select %p309, %s21, 1
      %p311 = scmp.lt.s32.totalorder %s308, 31
      %s312 = scalar_select %p311, %s308, 31
      %s313 = smul.addr %s310, 32
      %s314 = sadd.s32 %s312, %s313
      %s315 = smul.addr %s314, 4
      %s316 = scalar_lea.vmem %s0, %s315
      %s317 = smul.u32 32, %s22
      %p318 = scmp.lt.s32.totalorder %s21, 1
      %s319 = scalar_select %p318, %s21, 1
      %s320 = scalar_lea.vmem %s1, %s319
      %s321 = smul.u32 32, %s22
      %p322 = scmp.lt.s32.totalorder %s21, 1
      %s323 = scalar_select %p322, %s21, 1
      %p324 = scmp.lt.s32.totalorder %s321, 31
      %s325 = scalar_select %p324, %s321, 31
      %s326 = smul.addr %s323, 32
      %s327 = sadd.s32 %s325, %s326
      %s328 = smul.addr %s327, 8
      %s329 = scalar_lea.vmem %s5, %s328
      %s330 = smul.u32 32, %s22
      %s331 = smul.u32 32, %s22
      %p332 = scmp.lt.s32.totalorder %s21, 1
      %s333 = scalar_select %p332, %s21, 1
      %p334 = scmp.lt.s32.totalorder %s331, 31
      %s335 = scalar_select %p334, %s331, 31
      %s336 = smul.addr %s333, 32
      %s337 = sadd.s32 %s335, %s336
      %s338 = smul.addr %s337, 8
      %s339 = scalar_lea.vmem %s6, %s338
      %s340 = smul.u32 32, %s22
      %v342 = vld [vmem:[%s316] sm:$0xf]
      %v343 = vld [vmem:[%s316 + $0x4] sm:$0xf]
      %v344 = vld [vmem:[%s316 + $0x8] sm:$0xf]
      %v345 = vld [vmem:[%s316 + $0xc] sm:$0xf]
      %v346 = vld [vmem:[%s316 + $0x10] sm:$0xf]
      %v347 = vld [vmem:[%s316 + $0x14] sm:$0xf]
      %v348 = vld [vmem:[%s316 + $0x18] sm:$0xf]
      %v349 = vld [vmem:[%s316 + $0x1c] sm:$0xf]
      %v350 = vld [vmem:[%s316 + $0x20] sm:$0xf]
      %v351 = vld [vmem:[%s316 + $0x24] sm:$0xf]
      %v352 = vld [vmem:[%s316 + $0x28] sm:$0xf]
      %v353 = vld [vmem:[%s316 + $0x2c] sm:$0xf]
      %v354 = vld [vmem:[%s316 + $0x30] sm:$0xf]
      %v355 = vld [vmem:[%s316 + $0x34] sm:$0xf]
      %v356 = vld [vmem:[%s316 + $0x38] sm:$0xf]
      %v357 = vld [vmem:[%s316 + $0x3c] sm:$0xf]
      %v358 = vld [vmem:[%s316 + $0x40] sm:$0xf]
      %v359 = vld [vmem:[%s316 + $0x44] sm:$0xf]
      %v360 = vld [vmem:[%s316 + $0x48] sm:$0xf]
      %v361 = vld [vmem:[%s316 + $0x4c] sm:$0xf]
      %v362 = vld [vmem:[%s316 + $0x50] sm:$0xf]
      %v363 = vld [vmem:[%s316 + $0x54] sm:$0xf]
      %v364 = vld [vmem:[%s316 + $0x58] sm:$0xf]
      %v365 = vld [vmem:[%s316 + $0x5c] sm:$0xf]
      %v366 = vld [vmem:[%s316 + $0x60] sm:$0xf]
      %v367 = vld [vmem:[%s316 + $0x64] sm:$0xf]
      %v368 = vld [vmem:[%s316 + $0x68] sm:$0xf]
      %v369 = vld [vmem:[%s316 + $0x6c] sm:$0xf]
      %v370 = vld [vmem:[%s316 + $0x70] sm:$0xf]
      %v371 = vld [vmem:[%s316 + $0x74] sm:$0xf]
      %v372 = vld [vmem:[%s316 + $0x78] sm:$0xf]
      %v373 = vld [vmem:[%s316 + $0x7c] sm:$0xf]
      %v374 = vunpack.c.l.bf16 %v342
      %v375 = vunpack.c.l.bf16 %v343
      %v376 = vunpack.c.l.bf16 %v344
      %v377 = vunpack.c.l.bf16 %v345
      %v378 = vunpack.c.l.bf16 %v346
      %v379 = vunpack.c.l.bf16 %v347
      %v380 = vunpack.c.l.bf16 %v348
      %v381 = vunpack.c.l.bf16 %v349
      %v382 = vunpack.c.l.bf16 %v350
      %v383 = vunpack.c.l.bf16 %v351
      %v384 = vunpack.c.l.bf16 %v352
      %v385 = vunpack.c.l.bf16 %v353
      %v386 = vunpack.c.l.bf16 %v354
      %v387 = vunpack.c.l.bf16 %v355
      %v388 = vunpack.c.l.bf16 %v356
      %v389 = vunpack.c.l.bf16 %v357
      %v390 = vunpack.c.l.bf16 %v358
      %v391 = vunpack.c.l.bf16 %v359
      %v392 = vunpack.c.l.bf16 %v360
      %v393 = vunpack.c.l.bf16 %v361
      %v394 = vunpack.c.l.bf16 %v362
      %v395 = vunpack.c.l.bf16 %v363
      %v396 = vunpack.c.l.bf16 %v364
      %v397 = vunpack.c.l.bf16 %v365
      %v398 = vunpack.c.l.bf16 %v366
      %v399 = vunpack.c.l.bf16 %v367
      %v400 = vunpack.c.l.bf16 %v368
      %v401 = vunpack.c.l.bf16 %v369
      %v402 = vunpack.c.l.bf16 %v370
      %v403 = vunpack.c.l.bf16 %v371
      %v404 = vunpack.c.l.bf16 %v372
      %v405 = vunpack.c.l.bf16 %v373
      %v406 = vld [vmem:[%s320] sm:$0x1]
      %v408 = vlaneseq
      %v409 = vshrl.u32 %v408, 7
      %v410 = vsub.s32 0, %v409
      %v411 = vrot.slane %v406, %v410
      %v413 = vmul.f32 %v374, %v411
      %v414 = vmul.f32 %v375, %v411
      %v415 = vmul.f32 %v376, %v411
      %v416 = vmul.f32 %v377, %v411
      %v417 = vmul.f32 %v378, %v411
      %v418 = vmul.f32 %v379, %v411
      %v419 = vmul.f32 %v380, %v411
      %v420 = vmul.f32 %v381, %v411
      %v421 = vmul.f32 %v382, %v411
      %v422 = vmul.f32 %v383, %v411
      %v423 = vmul.f32 %v384, %v411
      %v424 = vmul.f32 %v385, %v411
      %v425 = vmul.f32 %v386, %v411
      %v426 = vmul.f32 %v387, %v411
      %v427 = vmul.f32 %v388, %v411
      %v428 = vmul.f32 %v389, %v411
      %v429 = vmul.f32 %v390, %v411
      %v430 = vmul.f32 %v391, %v411
      %v431 = vmul.f32 %v392, %v411
      %v432 = vmul.f32 %v393, %v411
      %v433 = vmul.f32 %v394, %v411
      %v434 = vmul.f32 %v395, %v411
      %v435 = vmul.f32 %v396, %v411
      %v436 = vmul.f32 %v397, %v411
      %v437 = vmul.f32 %v398, %v411
      %v438 = vmul.f32 %v399, %v411
      %v439 = vmul.f32 %v400, %v411
      %v440 = vmul.f32 %v401, %v411
      %v441 = vmul.f32 %v402, %v411
      %v442 = vmul.f32 %v403, %v411
      %v443 = vmul.f32 %v404, %v411
      %v444 = vmul.f32 %v405, %v411
      %v445 = vld [vmem:[%s2] sm:$0x1]
      %v447 = vlaneseq
      %v448 = vshrl.u32 %v447, 7
      %v449 = vsub.s32 0, %v448
      %v450 = vrot.slane %v445, %v449
      %v452 = vadd.f32 %v413, %v450
      %v453 = vadd.f32 %v414, %v450
      %v454 = vadd.f32 %v415, %v450
      %v455 = vadd.f32 %v416, %v450
      %v456 = vadd.f32 %v417, %v450
      %v457 = vadd.f32 %v418, %v450
      %v458 = vadd.f32 %v419, %v450
      %v459 = vadd.f32 %v420, %v450
      %v460 = vadd.f32 %v421, %v450
      %v461 = vadd.f32 %v422, %v450
      %v462 = vadd.f32 %v423, %v450
      %v463 = vadd.f32 %v424, %v450
      %v464 = vadd.f32 %v425, %v450
      %v465 = vadd.f32 %v426, %v450
      %v466 = vadd.f32 %v427, %v450
      %v467 = vadd.f32 %v428, %v450
      %v468 = vadd.f32 %v429, %v450
      %v469 = vadd.f32 %v430, %v450
      %v470 = vadd.f32 %v431, %v450
      %v471 = vadd.f32 %v432, %v450
      %v472 = vadd.f32 %v433, %v450
      %v473 = vadd.f32 %v434, %v450
      %v474 = vadd.f32 %v435, %v450
      %v475 = vadd.f32 %v436, %v450
      %v476 = vadd.f32 %v437, %v450
      %v477 = vadd.f32 %v438, %v450
      %v478 = vadd.f32 %v439, %v450
      %v479 = vadd.f32 %v440, %v450
      %v480 = vadd.f32 %v441, %v450
      %v481 = vadd.f32 %v442, %v450
      %v482 = vadd.f32 %v443, %v450
      %v483 = vadd.f32 %v444, %v450
      %v484 = vpack.c.bf16 %v453, %v452
      %v485 = vpack.c.bf16 %v455, %v454
      %v486 = vpack.c.bf16 %v457, %v456
      %v487 = vpack.c.bf16 %v459, %v458
      %v488 = vpack.c.bf16 %v461, %v460
      %v489 = vpack.c.bf16 %v463, %v462
      %v490 = vpack.c.bf16 %v465, %v464
      %v491 = vpack.c.bf16 %v467, %v466
      %v492 = vpack.c.bf16 %v469, %v468
      %v493 = vpack.c.bf16 %v471, %v470
      %v494 = vpack.c.bf16 %v473, %v472
      %v495 = vpack.c.bf16 %v475, %v474
      %v496 = vpack.c.bf16 %v477, %v476
      %v497 = vpack.c.bf16 %v479, %v478
      %v498 = vpack.c.bf16 %v481, %v480
      %v499 = vpack.c.bf16 %v483, %v482
      %v500 = vld [vmem:[%s3] sm:$0xf]
      %v501 = vld [vmem:[%s3 + $0x4] sm:$0xf]
      %v502 = vld [vmem:[%s3 + $0x8] sm:$0xf]
      %v503 = vld [vmem:[%s3 + $0xc] sm:$0xf]
      %v504 = vld [vmem:[%s3 + $0x10] sm:$0xf]
      %v505 = vld [vmem:[%s3 + $0x14] sm:$0xf]
      %v506 = vld [vmem:[%s3 + $0x18] sm:$0xf]
      %v507 = vld [vmem:[%s3 + $0x1c] sm:$0xf]
      %v508 = vld [vmem:[%s3 + $0x20] sm:$0xf]
      %v509 = vld [vmem:[%s3 + $0x24] sm:$0xf]
      %v510 = vld [vmem:[%s3 + $0x28] sm:$0xf]
      %v511 = vld [vmem:[%s3 + $0x2c] sm:$0xf]
      %v512 = vld [vmem:[%s3 + $0x30] sm:$0xf]
      %v513 = vld [vmem:[%s3 + $0x34] sm:$0xf]
      %v514 = vld [vmem:[%s3 + $0x38] sm:$0xf]
      %v515 = vld [vmem:[%s3 + $0x3c] sm:$0xf]
      %v516 = vld [vmem:[%s4] sm:$0x1]
      %v518 = vlaneseq
      %v519 = vshrl.u32 %v518, 7
      %v520 = vsub.s32 0, %v519
      %v521 = vrot.slane %v516, %v520
      %v539 = vunpack.c.l.b16 %v500
      %v540 = vunpack.c.l.b16 %v501
      %v541 = vunpack.c.l.b16 %v502
      %v542 = vunpack.c.l.b16 %v503
      %v543 = vunpack.c.l.b16 %v504
      %v544 = vunpack.c.l.b16 %v505
      %v545 = vunpack.c.l.b16 %v506
      %v546 = vunpack.c.l.b16 %v507
      %v547 = vunpack.c.l.b16 %v508
      %v548 = vunpack.c.l.b16 %v509
      %v549 = vunpack.c.l.b16 %v510
      %v550 = vunpack.c.l.b16 %v511
      %v551 = vunpack.c.l.b16 %v512
      %v552 = vunpack.c.l.b16 %v513
      %v553 = vunpack.c.l.b16 %v514
      %v554 = vunpack.c.l.b16 %v515
      %v555 = vpack.c.b16 %v540, %v539
      %v556 = vpack.c.b16 %v542, %v541
      %v557 = vpack.c.b16 %v544, %v543
      %v558 = vpack.c.b16 %v546, %v545
      %v559 = vpack.c.b16 %v548, %v547
      %v560 = vpack.c.b16 %v550, %v549
      %v561 = vpack.c.b16 %v552, %v551
      %v562 = vpack.c.b16 %v554, %v553
      %571 = vmatprep.subr.bf16.mxu0 0
      %572 = vmatpush1.bf16.msra.mxu0 %v555
      %573 = vmatprep.subr.bf16.mxu0 0
      %574 = vmatpush1.bf16.msra.mxu0 %v556
      %575 = vmatprep.subr.bf16.mxu0 0
      %576 = vmatpush1.bf16.msra.mxu0 %v557
      %577 = vmatprep.subr.bf16.mxu0 0
      %578 = vmatpush1.bf16.msra.mxu0 %v558
      %579 = vmatprep.subr.bf16.mxu0 0
      %580 = vmatpush1.bf16.msra.mxu0 %v559
      %581 = vmatprep.subr.bf16.mxu0 0
      %582 = vmatpush1.bf16.msra.mxu0 %v560
      %583 = vmatprep.subr.bf16.mxu0 0
      %584 = vmatpush1.bf16.msra.mxu0 %v561
      %585 = vmatprep.subr.bf16.mxu0 0
      %586 = vmatpush1.bf16.msra.mxu0 %v562
      %587 = vmatprep.subr.bf16.mxu0 0
      %588 = vmatpush1.bf16.msra.mxu0 0
      %589 = vmatprep.subr.bf16.mxu0 0
      %590 = vmatpush1.bf16.msra.mxu0 0
      %591 = vmatprep.subr.bf16.mxu0 0
      %592 = vmatpush1.bf16.msra.mxu0 0
      %593 = vmatprep.subr.bf16.mxu0 0
      %594 = vmatpush1.bf16.msra.mxu0 0
      %595 = vmatprep.subr.bf16.mxu0 0
      %596 = vmatpush1.bf16.msra.mxu0 0
      %597 = vmatprep.subr.bf16.mxu0 0
      %598 = vmatpush1.bf16.msra.mxu0 0
      %599 = vmatprep.subr.bf16.mxu0 0
      %600 = vmatpush1.bf16.msra.mxu0 0
      %601 = vmatprep.subr.bf16.mxu0 0
      %602 = vmatpush1.bf16.msra.mxu0 0
      %603 = vmatprep.mubr.bf16.mxu0 0
      %604 = vmatmul.mubr.bf16.gmra.mrb[0].mxu0 %v484
      %v605 = vpop.f32.mrb[0].mxu0
      %v606 = vadd.f32 %v521, %v605
      %v607 = vpop.f32.mrb[0].mxu0
      %v608 = vpop.f32.mrb[0].mxu0
      %v609 = vadd.f32 %v521, %v608
      %v610 = vpop.f32.mrb[0].mxu0
      %611 = vmatprep.mubr.bf16.mxu0 0
      %612 = vmatmul.mubr.bf16.gmra.mrb[0].mxu0 %v485
      %v613 = vpop.f32.mrb[0].mxu0
      %v614 = vadd.f32 %v521, %v613
      %v615 = vpop.f32.mrb[0].mxu0
      %v616 = vpop.f32.mrb[0].mxu0
      %v617 = vadd.f32 %v521, %v616
      %v618 = vpop.f32.mrb[0].mxu0
      %619 = vmatprep.mubr.bf16.mxu0 0
      %620 = vmatmul.mubr.bf16.gmra.mrb[0].mxu0 %v486
      %v621 = vpop.f32.mrb[0].mxu0
      %v622 = vadd.f32 %v521, %v621
      %v623 = vpop.f32.mrb[0].mxu0
      %v624 = vpop.f32.mrb[0].mxu0
      %v625 = vadd.f32 %v521, %v624
      %v626 = vpop.f32.mrb[0].mxu0
      %627 = vmatprep.mubr.bf16.mxu0 0
      %628 = vmatmul.mubr.bf16.gmra.mrb[0].mxu0 %v487
      %v629 = vpop.f32.mrb[0].mxu0
      %v630 = vadd.f32 %v521, %v629
      %v631 = vpop.f32.mrb[0].mxu0
      %v632 = vpop.f32.mrb[0].mxu0
      %v633 = vadd.f32 %v521, %v632
      %v634 = vpop.f32.mrb[0].mxu0
      %635 = vmatprep.mubr.bf16.mxu0 0
      %636 = vmatmul.mubr.bf16.gmra.mrb[0].mxu0 %v488
      %v637 = vpop.f32.mrb[0].mxu0
      %v638 = vadd.f32 %v521, %v637
      %v639 = vpop.f32.mrb[0].mxu0
      %v640 = vpop.f32.mrb[0].mxu0
      %v641 = vadd.f32 %v521, %v640
      %v642 = vpop.f32.mrb[0].mxu0
      %643 = vmatprep.mubr.bf16.mxu0 0
      %644 = vmatmul.mubr.bf16.gmra.mrb[0].mxu0 %v489
      %v645 = vpop.f32.mrb[0].mxu0
      %v646 = vadd.f32 %v521, %v645
      %v647 = vpop.f32.mrb[0].mxu0
      %v648 = vpop.f32.mrb[0].mxu0
      %v649 = vadd.f32 %v521, %v648
      %v650 = vpop.f32.mrb[0].mxu0
      %651 = vmatprep.mubr.bf16.mxu0 0
      %652 = vmatmul.mubr.bf16.gmra.mrb[0].mxu0 %v490
      %v653 = vpop.f32.mrb[0].mxu0
      %v654 = vadd.f32 %v521, %v653
      %v655 = vpop.f32.mrb[0].mxu0
      %v656 = vpop.f32.mrb[0].mxu0
      %v657 = vadd.f32 %v521, %v656
      %v658 = vpop.f32.mrb[0].mxu0
      %659 = vmatprep.mubr.bf16.mxu0 0
      %660 = vmatmul.mubr.bf16.gmra.mrb[0].mxu0 %v491
      %v661 = vpop.f32.mrb[0].mxu0
      %v662 = vadd.f32 %v521, %v661
      %v663 = vpop.f32.mrb[0].mxu0
      %v664 = vpop.f32.mrb[0].mxu0
      %v665 = vadd.f32 %v521, %v664
      %v666 = vpop.f32.mrb[0].mxu0
      %667 = vmatprep.mubr.bf16.mxu0 0
      %668 = vmatmul.mubr.bf16.gmra.mrb[0].mxu0 %v492
      %v669 = vpop.f32.mrb[0].mxu0
      %v670 = vadd.f32 %v521, %v669
      %v671 = vpop.f32.mrb[0].mxu0
      %v672 = vpop.f32.mrb[0].mxu0
      %v673 = vadd.f32 %v521, %v672
      %v674 = vpop.f32.mrb[0].mxu0
      %675 = vmatprep.mubr.bf16.mxu0 0
      %676 = vmatmul.mubr.bf16.gmra.mrb[0].mxu0 %v493
      %v677 = vpop.f32.mrb[0].mxu0
      %v678 = vadd.f32 %v521, %v677
      %v679 = vpop.f32.mrb[0].mxu0
      %v680 = vpop.f32.mrb[0].mxu0
      %v681 = vadd.f32 %v521, %v680
      %v682 = vpop.f32.mrb[0].mxu0
      %683 = vmatprep.mubr.bf16.mxu0 0
      %684 = vmatmul.mubr.bf16.gmra.mrb[0].mxu0 %v494
      %v685 = vpop.f32.mrb[0].mxu0
      %v686 = vadd.f32 %v521, %v685
      %v687 = vpop.f32.mrb[0].mxu0
      %v688 = vpop.f32.mrb[0].mxu0
      %v689 = vadd.f32 %v521, %v688
      %v690 = vpop.f32.mrb[0].mxu0
      %691 = vmatprep.mubr.bf16.mxu0 0
      %692 = vmatmul.mubr.bf16.gmra.mrb[0].mxu0 %v495
      %v693 = vpop.f32.mrb[0].mxu0
      %v694 = vadd.f32 %v521, %v693
      %v695 = vpop.f32.mrb[0].mxu0
      %v696 = vpop.f32.mrb[0].mxu0
      %v697 = vadd.f32 %v521, %v696
      %v698 = vpop.f32.mrb[0].mxu0
      %699 = vmatprep.mubr.bf16.mxu0 0
      %700 = vmatmul.mubr.bf16.gmra.mrb[0].mxu0 %v496
      %v701 = vpop.f32.mrb[0].mxu0
      %v702 = vadd.f32 %v521, %v701
      %v703 = vpop.f32.mrb[0].mxu0
      %v704 = vpop.f32.mrb[0].mxu0
      %v705 = vadd.f32 %v521, %v704
      %v706 = vpop.f32.mrb[0].mxu0
      %707 = vmatprep.mubr.bf16.mxu0 0
      %708 = vmatmul.mubr.bf16.gmra.mrb[0].mxu0 %v497
      %v709 = vpop.f32.mrb[0].mxu0
      %v710 = vadd.f32 %v521, %v709
      %v711 = vpop.f32.mrb[0].mxu0
      %v712 = vpop.f32.mrb[0].mxu0
      %v713 = vadd.f32 %v521, %v712
      %v714 = vpop.f32.mrb[0].mxu0
      %715 = vmatprep.mubr.bf16.mxu0 0
      %716 = vmatmul.mubr.bf16.gmra.mrb[0].mxu0 %v498
      %v717 = vpop.f32.mrb[0].mxu0
      %v718 = vadd.f32 %v521, %v717
      %v719 = vpop.f32.mrb[0].mxu0
      %v720 = vpop.f32.mrb[0].mxu0
      %v721 = vadd.f32 %v521, %v720
      %v722 = vpop.f32.mrb[0].mxu0
      %723 = vmatprep.mubr.bf16.mxu0 0
      %724 = vmatmul.mubr.bf16.gmra.mrb[0].mxu0 %v499
      %v725 = vpop.f32.mrb[0].mxu0
      %v726 = vadd.f32 %v521, %v725
      %v727 = vpop.f32.mrb[0].mxu0
      %v728 = vpop.f32.mrb[0].mxu0
      %v729 = vadd.f32 %v521, %v728
      %v730 = vpop.f32.mrb[0].mxu0
      %731 = vdwg.mxu0
      %v732 = vld [vmem:[%s329] sm:$0xff]
      %v733 = vld [vmem:[%s329 + $0x8] sm:$0xff]
      %v734 = vld [vmem:[%s329 + $0x10] sm:$0xff]
      %v735 = vld [vmem:[%s329 + $0x18] sm:$0xff]
      %v736 = vld [vmem:[%s329 + $0x20] sm:$0xff]
      %v737 = vld [vmem:[%s329 + $0x28] sm:$0xff]
      %v738 = vld [vmem:[%s329 + $0x30] sm:$0xff]
      %v739 = vld [vmem:[%s329 + $0x38] sm:$0xff]
      %v740 = vld [vmem:[%s329 + $0x40] sm:$0xff]
      %v741 = vld [vmem:[%s329 + $0x48] sm:$0xff]
      %v742 = vld [vmem:[%s329 + $0x50] sm:$0xff]
      %v743 = vld [vmem:[%s329 + $0x58] sm:$0xff]
      %v744 = vld [vmem:[%s329 + $0x60] sm:$0xff]
      %v745 = vld [vmem:[%s329 + $0x68] sm:$0xff]
      %v746 = vld [vmem:[%s329 + $0x70] sm:$0xff]
      %v747 = vld [vmem:[%s329 + $0x78] sm:$0xff]
      %v748 = vld [vmem:[%s329 + $0x80] sm:$0xff]
      %v749 = vld [vmem:[%s329 + $0x88] sm:$0xff]
      %v750 = vld [vmem:[%s329 + $0x90] sm:$0xff]
      %v751 = vld [vmem:[%s329 + $0x98] sm:$0xff]
      %v752 = vld [vmem:[%s329 + $0xa0] sm:$0xff]
      %v753 = vld [vmem:[%s329 + $0xa8] sm:$0xff]
      %v754 = vld [vmem:[%s329 + $0xb0] sm:$0xff]
      %v755 = vld [vmem:[%s329 + $0xb8] sm:$0xff]
      %v756 = vld [vmem:[%s329 + $0xc0] sm:$0xff]
      %v757 = vld [vmem:[%s329 + $0xc8] sm:$0xff]
      %v758 = vld [vmem:[%s329 + $0xd0] sm:$0xff]
      %v759 = vld [vmem:[%s329 + $0xd8] sm:$0xff]
      %v760 = vld [vmem:[%s329 + $0xe0] sm:$0xff]
      %v761 = vld [vmem:[%s329 + $0xe8] sm:$0xff]
      %v762 = vld [vmem:[%s329 + $0xf0] sm:$0xff]
      %v763 = vld [vmem:[%s329 + $0xf8] sm:$0xff]
      %v764 = vadd.f32 %v732, %v606
      %v765 = vadd.f32 %v733, %v609
      %v766 = vadd.f32 %v734, %v614
      %v767 = vadd.f32 %v735, %v617
      %v768 = vadd.f32 %v736, %v622
      %v769 = vadd.f32 %v737, %v625
      %v770 = vadd.f32 %v738, %v630
      %v771 = vadd.f32 %v739, %v633
      %v772 = vadd.f32 %v740, %v638
      %v773 = vadd.f32 %v741, %v641
      %v774 = vadd.f32 %v742, %v646
      %v775 = vadd.f32 %v743, %v649
      %v776 = vadd.f32 %v744, %v654
      %v777 = vadd.f32 %v745, %v657
      %v778 = vadd.f32 %v746, %v662
      %v779 = vadd.f32 %v747, %v665
      %v780 = vadd.f32 %v748, %v670
      %v781 = vadd.f32 %v749, %v673
      %v782 = vadd.f32 %v750, %v678
      %v783 = vadd.f32 %v751, %v681
      %v784 = vadd.f32 %v752, %v686
      %v785 = vadd.f32 %v753, %v689
      %v786 = vadd.f32 %v754, %v694
      %v787 = vadd.f32 %v755, %v697
      %v788 = vadd.f32 %v756, %v702
      %v789 = vadd.f32 %v757, %v705
      %v790 = vadd.f32 %v758, %v710
      %v791 = vadd.f32 %v759, %v713
      %v792 = vadd.f32 %v760, %v718
      %v793 = vadd.f32 %v761, %v721
      %v794 = vadd.f32 %v762, %v726
      %v795 = vadd.f32 %v763, %v729
      %vm796 = vcmask 261120
      %797 = vst.msk [vmem:[%s339] sm:$0xff] %vm796, %v764
      %798 = vst.msk [vmem:[%s339 + $0x8] sm:$0xff] %vm796, %v765
      %799 = vst.msk [vmem:[%s339 + $0x10] sm:$0xff] %vm796, %v766
      %800 = vst.msk [vmem:[%s339 + $0x18] sm:$0xff] %vm796, %v767
      %801 = vst.msk [vmem:[%s339 + $0x20] sm:$0xff] %vm796, %v768
      %802 = vst.msk [vmem:[%s339 + $0x28] sm:$0xff] %vm796, %v769
      %803 = vst.msk [vmem:[%s339 + $0x30] sm:$0xff] %vm796, %v770
      %804 = vst.msk [vmem:[%s339 + $0x38] sm:$0xff] %vm796, %v771
      %805 = vst.msk [vmem:[%s339 + $0x40] sm:$0xff] %vm796, %v772
      %806 = vst.msk [vmem:[%s339 + $0x48] sm:$0xff] %vm796, %v773
      %807 = vst.msk [vmem:[%s339 + $0x50] sm:$0xff] %vm796, %v774
      %808 = vst.msk [vmem:[%s339 + $0x58] sm:$0xff] %vm796, %v775
      %809 = vst.msk [vmem:[%s339 + $0x60] sm:$0xff] %vm796, %v776
      %810 = vst.msk [vmem:[%s339 + $0x68] sm:$0xff] %vm796, %v777
      %811 = vst.msk [vmem:[%s339 + $0x70] sm:$0xff] %vm796, %v778
      %812 = vst.msk [vmem:[%s339 + $0x78] sm:$0xff] %vm796, %v779
      %813 = vst.msk [vmem:[%s339 + $0x80] sm:$0xff] %vm796, %v780
      %814 = vst.msk [vmem:[%s339 + $0x88] sm:$0xff] %vm796, %v781
      %815 = vst.msk [vmem:[%s339 + $0x90] sm:$0xff] %vm796, %v782
      %816 = vst.msk [vmem:[%s339 + $0x98] sm:$0xff] %vm796, %v783
      %817 = vst.msk [vmem:[%s339 + $0xa0] sm:$0xff] %vm796, %v784
      %818 = vst.msk [vmem:[%s339 + $0xa8] sm:$0xff] %vm796, %v785
      %819 = vst.msk [vmem:[%s339 + $0xb0] sm:$0xff] %vm796, %v786
      %820 = vst.msk [vmem:[%s339 + $0xb8] sm:$0xff] %vm796, %v787
      %821 = vst.msk [vmem:[%s339 + $0xc0] sm:$0xff] %vm796, %v788
      %822 = vst.msk [vmem:[%s339 + $0xc8] sm:$0xff] %vm796, %v789
      %823 = vst.msk [vmem:[%s339 + $0xd0] sm:$0xff] %vm796, %v790
      %824 = vst.msk [vmem:[%s339 + $0xd8] sm:$0xff] %vm796, %v791
      %825 = vst.msk [vmem:[%s339 + $0xe0] sm:$0xff] %vm796, %v792
      %826 = vst.msk [vmem:[%s339 + $0xe8] sm:$0xff] %vm796, %v793
      %827 = vst.msk [vmem:[%s339 + $0xf0] sm:$0xff] %vm796, %v794
      %828 = vst.msk [vmem:[%s339 + $0xf8] sm:$0xff] %vm796, %v795
      %s829 = smul.u32 32, %s22
      %p830 = scmp.lt.s32.totalorder %s21, 1
      %s831 = scalar_select %p830, %s21, 1
      %p832 = scmp.lt.s32.totalorder %s829, 31
      %s833 = scalar_select %p832, %s829, 31
      %s834 = smul.addr %s831, 32
      %s835 = sadd.s32 %s833, %s834
      %s836 = smul.addr %s835, 8
      %s837 = scalar_lea.vmem %s6, %s836
      // Predicated region
      $region45: #{convnext_v2_block.3} parent=43 // pred_check
        %p838 = pneg %p194
      $region46: #{convnext_v2_block.3} parent=43 // pred_check_branch
        %840 = sbr.rel (%p838) target = $region48
      $region47: #{convnext_v2_block.3} parent=43 // pred_region
        %s841 = smul.u32 32, %s22
      $region48: #{convnext_v2_block.3} parent=43 // pred_fallthru
        _
    $region44: #{convnext_v2_block.3} parent=5 // pred_fallthru
      _
    %p842 = scmp.le.s32.totalorder 2, %s12
    // Predicated region
    $region49: #{convnext_v2_block.3} parent=5 // pred_check
      %p843 = pneg %p842
    $region50: #{convnext_v2_block.3} parent=5 // pred_check_branch
      %845 = sbr.rel (%p843) target = $region52
    $region51: #{convnext_v2_block.3} parent=5 // pred_region
      %s846 = ssub.s32 %s12, 2
      // Predicated region
      $region53: #{convnext_v2_block.3} parent=51 // pred_check
        %p847 = pneg %p200
      $region54: #{convnext_v2_block.3} parent=51 // pred_check_branch
        %849 = sbr.rel (%p847) target = $region56
      $region55: #{convnext_v2_block.3} parent=51 // pred_region
        %s850 = smul.u32 32, %s24
        %p851 = scmp.lt.s32.totalorder %s23, 1
        %s852 = scalar_select %p851, %s23, 1
        %p853 = scmp.lt.s32.totalorder %s850, 31
        %s854 = scalar_select %p853, %s850, 31
        %s855 = smul.addr %s852, 32
        %s856 = sadd.s32 %s854, %s855
        %s857 = smul.addr %s856, 8
        %s858 = scalar_lea.vmem %s6, %s857
      $region56: #{convnext_v2_block.3} parent=51 // pred_fallthru
        _
    $region52: #{convnext_v2_block.3} parent=5 // pred_fallthru
      _
  $region6: #{convnext_v2_block.3} parent=0 // loop_footer
    %s16 = sadd.s32 1, %s12
  $region7: #{convnext_v2_block.3} parent=0 // loop_footer_branch
    %11 = sbr.rel target = $region3
  $region8: #{convnext_v2_block.3} parent=0 // loop_exit
    _

// kernel: convnext_v2_block.2
$region0: #{convnext_v2_block.2}
  #allocation0 [shape = 'u32[]', space=smem, size = 0x4, offset = 0x4, fixed_abs, tag = 'smem constant byte address 0x4 - core index']
  #allocation1 [shape = 'u32[144,128]{1,0:T(1,128)}', space=vmem, size = 0x12000, scoped, tag = 'internal scratch']
  #allocation2 [shape = 'f32[1,128]{1,0:T(1,128)}', space=vmem, size = 0x200, scoped, tag = 'scratch operand']
  %s0 = inlined_call_operand.vmem [shape: f32[2,24,22,32], index: 0, kind: input, shape index: {}, may-alias: {0,1}]
  %s1 = inlined_call_operand.vmem [shape: f32[2,24,22,32], index: 1, kind: input, shape index: {}, may-alias: {0,1}]
  %s2 = inlined_call_operand.vmem [shape: f32[49,32], index: 2, kind: input, shape index: {}]
  %s3 = inlined_call_operand.vmem [shape: f32[1,32], index: 3, kind: input, shape index: {}]
  %s4 = inlined_call_operand.vmem [shape: f32[1,32], index: 4, kind: input, shape index: {}]
  %s5 = inlined_call_operand.vmem [shape: f32[1,32], index: 5, kind: input, shape index: {}]
  %s6 = inlined_call_operand.vmem [shape: bf16[32,128], index: 6, kind: input, shape index: {}]
  %s7 = inlined_call_operand.vmem [shape: f32[1,128], index: 7, kind: input, shape index: {}]
  %s8 = inlined_call_operand.vmem [shape: f32[1,128], index: 8, kind: input, shape index: {}]
  %s9 = inlined_call_operand.vmem [shape: bf16[2,256,128], index: 9, kind: output, shape index: {0}]
  %s10 = inlined_call_operand.vmem [shape: f32[2,1,128], index: 10, kind: output, shape index: {1}]
  %11 = xla_tuple %s9, %s10
  %s12 = sld [smem:[#allocation0]]
  $region81: #{convnext_v2_block.2} parent=0
    _
  %s14 = ssub.s32 1, %s12
  %s15 = scalar_select 0, %s14, %s12
  loop: start=0, step=1, limit=4
  $region2: #{convnext_v2_block.2} parent=0 // loop_pre_header
    _
  $region3: #{convnext_v2_block.2} parent=0 // loop_header
    %s17 = sphi 0, %s21
    %p18 = scmp.ge.s32.totalorder %s17, 4
    %s24 = sphi 0, %s36
    %s25 = sphi 0, %s32
    %s26 = sphi 0, %s24
    %s27 = sphi 0, %s25
    %s28 = sphi 0, %s26
    %s29 = sphi 0, %s27
    %s41 = sphi 0, %s43
    %s44 = sphi 0, %s41
    %s45 = sphi 0, %s44
    %s61 = sphi 0, %s45
    %s73 = sphi 0, %s75
    %s76 = sphi 0, %s73
    %s77 = sphi 0, %s76
    %s93 = sphi 0, %s77
    %s97 = sphi 0, %s97
    %s99 = sphi 0, %s97
    %s100 = sphi 0, %s99
    %s114 = sphi 0, %s100
    %s118 = sphi 0, %s118
    %s120 = sphi 0, %s118
    %s121 = sphi 0, %s120
    %s135 = sphi 0, %s121
    %s139 = sphi 0, %s139
    %s141 = sphi 0, %s139
    %s142 = sphi 0, %s141
    %s156 = sphi 0, %s142
    %s160 = sphi 0, %s160
    %s162 = sphi 0, %s160
    %s163 = sphi 0, %s162
    %s177 = sphi 0, %s163
    %s181 = sphi 0, %s181
    %s183 = sphi 0, %s181
    %s184 = sphi 0, %s183
    %s198 = sphi 0, %s184
    %s202 = sphi 0, %s202
    %s204 = sphi 0, %s202
    %s205 = sphi 0, %s204
    %s219 = sphi 0, %s205
    %s223 = sphi 0, %s223
    %s225 = sphi 0, %s223
    %s226 = sphi 0, %s225
    %s240 = sphi 0, %s226
    %s248 = sphi 0, %s250
    %s251 = sphi 0, %s248
    %s252 = sphi 0, %s251
    %s268 = sphi 0, %s252
    %s274 = sphi 0, %s276
    %s277 = sphi 0, %s274
    %s278 = sphi 0, %s277
    %s294 = sphi 0, %s278
  $region4: #{convnext_v2_block.2} parent=0 // loop_header_branch
    %20 = sbr.rel (%p18) target = $region8
  $region5: #{convnext_v2_block.2} parent=0 // loop_body
    %s22 = ssub.s32 %s17, 1
    %s23 = ssub.s32 %s17, 2
    %s30 = sadd.s32 1, %s25
    %p31 = scmp.ge.s32.totalorder %s30, 1
    %s32 = scalar_select %p31, 0, %s30
    %s33 = sadd.s32 1, %s24
    %s34 = scalar_select %p31, %s33, %s24
    %p35 = scmp.ge.s32.totalorder %s34, 2
    %s36 = scalar_select %p35, 0, %s34
    %s37 = ssub.s32 %s24, %s36
    %s38 = ssub.s32 %s25, %s32
    %s39 = sor.u32 %s37, %s38
    %p40 = scmp.eq.s32.totalorder %s39, 0
    %s42 = sadd.s32 %s41, 1
    %s43 = scalar_select %p40, %s41, %s42
    %p46 = pneg %p40
    %p47 = scmp.eq.s32.totalorder %s17, 1
    %p48 = por %p46, %p47
    %p49 = scmp.ne.s32.totalorder %s41, %s44
    %p50 = scmp.eq.s32.totalorder %s17, 0
    %p51 = por %p49, %p50
    %p52 = scmp.ne.s32.totalorder %s41, %s44
    %p53 = scmp.eq.s32.totalorder %s22, 1
    %p54 = por %p52, %p53
    %p55 = scmp.ne.s32.totalorder %s44, %s45
    %p56 = scmp.eq.s32.totalorder %s22, 0
    %p57 = por %p55, %p56
    %p58 = scmp.ne.s32.totalorder %s44, %s45
    %p59 = scmp.eq.s32.totalorder %s23, 1
    %p60 = por %p58, %p59
    %p62 = scmp.ne.s32.totalorder %s45, %s61
    %p63 = scmp.eq.s32.totalorder %s23, 0
    %p64 = por %p62, %p63
    %s65 = sadd.s32 %s25, 1
    %s66 = smul.u32 %s65, 2
    %s67 = sadd.s32 %s32, 1
    %s68 = smul.u32 %s67, 2
    %s69 = ssub.s32 %s24, %s36
    %s70 = ssub.s32 %s66, %s68
    %s71 = sor.u32 %s69, %s70
    %p72 = scmp.eq.s32.totalorder %s71, 0
    %s74 = sadd.s32 %s73, 1
    %s75 = scalar_select %p72, %s73, %s74
    %p78 = pneg %p72
    %p79 = scmp.eq.s32.totalorder %s17, 1
    %p80 = por %p78, %p79
    %p81 = scmp.ne.s32.totalorder %s73, %s76
    %p82 = scmp.eq.s32.totalorder %s17, 0
    %p83 = por %p81, %p82
    %p84 = scmp.ne.s32.totalorder %s73, %s76
    %p85 = scmp.eq.s32.totalorder %s22, 1
    %p86 = por %p84, %p85
    %p87 = scmp.ne.s32.totalorder %s76, %s77
    %p88 = scmp.eq.s32.totalorder %s22, 0
    %p89 = por %p87, %p88
    %p90 = scmp.ne.s32.totalorder %s76, %s77
    %p91 = scmp.eq.s32.totalorder %s23, 1
    %p92 = por %p90, %p91
    %p94 = scmp.ne.s32.totalorder %s77, %s93
    %p95 = scmp.eq.s32.totalorder %s23, 0
    %p96 = por %p94, %p95
    %s98 = sadd.s32 %s97, 1
    %p101 = scmp.eq.s32.totalorder %s17, 1
    %p102 = scmp.ne.s32.totalorder %s97, %s99
    %p103 = scmp.eq.s32.totalorder %s17, 0
    %p104 = por %p102, %p103
    %p105 = scmp.ne.s32.totalorder %s97, %s99
    %p106 = scmp.eq.s32.totalorder %s22, 1
    %p107 = por %p105, %p106
    %p108 = scmp.ne.s32.totalorder %s99, %s100
    %p109 = scmp.eq.s32.totalorder %s22, 0
    %p110 = por %p108, %p109
    %p111 = scmp.ne.s32.totalorder %s99, %s100
    %p112 = scmp.eq.s32.totalorder %s23, 1
    %p113 = por %p111, %p112
    %p115 = scmp.ne.s32.totalorder %s100, %s114
    %p116 = scmp.eq.s32.totalorder %s23, 0
    %p117 = por %p115, %p116
    %s119 = sadd.s32 %s118, 1
    %p122 = scmp.eq.s32.totalorder %s17, 1
    %p123 = scmp.ne.s32.totalorder %s118, %s120
    %p124 = scmp.eq.s32.totalorder %s17, 0
    %p125 = por %p123, %p124
    %p126 = scmp.ne.s32.totalorder %s118, %s120
    %p127 = scmp.eq.s32.totalorder %s22, 1
    %p128 = por %p126, %p127
    %p129 = scmp.ne.s32.totalorder %s120, %s121
    %p130 = scmp.eq.s32.totalorder %s22, 0
    %p131 = por %p129, %p130
    %p132 = scmp.ne.s32.totalorder %s120, %s121
    %p133 = scmp.eq.s32.totalorder %s23, 1
    %p134 = por %p132, %p133
    %p136 = scmp.ne.s32.totalorder %s121, %s135
    %p137 = scmp.eq.s32.totalorder %s23, 0
    %p138 = por %p136, %p137
    %s140 = sadd.s32 %s139, 1
    %p143 = scmp.eq.s32.totalorder %s17, 1
    %p144 = scmp.ne.s32.totalorder %s139, %s141
    %p145 = scmp.eq.s32.totalorder %s17, 0
    %p146 = por %p144, %p145
    %p147 = scmp.ne.s32.totalorder %s139, %s141
    %p148 = scmp.eq.s32.totalorder %s22, 1
    %p149 = por %p147, %p148
    %p150 = scmp.ne.s32.totalorder %s141, %s142
    %p151 = scmp.eq.s32.totalorder %s22, 0
    %p152 = por %p150, %p151
    %p153 = scmp.ne.s32.totalorder %s141, %s142
    %p154 = scmp.eq.s32.totalorder %s23, 1
    %p155 = por %p153, %p154
    %p157 = scmp.ne.s32.totalorder %s142, %s156
    %p158 = scmp.eq.s32.totalorder %s23, 0
    %p159 = por %p157, %p158
    %s161 = sadd.s32 %s160, 1
    %p164 = scmp.eq.s32.totalorder %s17, 1
    %p165 = scmp.ne.s32.totalorder %s160, %s162
    %p166 = scmp.eq.s32.totalorder %s17, 0
    %p167 = por %p165, %p166
    %p168 = scmp.ne.s32.totalorder %s160, %s162
    %p169 = scmp.eq.s32.totalorder %s22, 1
    %p170 = por %p168, %p169
    %p171 = scmp.ne.s32.totalorder %s162, %s163
    %p172 = scmp.eq.s32.totalorder %s22, 0
    %p173 = por %p171, %p172
    %p174 = scmp.ne.s32.totalorder %s162, %s163
    %p175 = scmp.eq.s32.totalorder %s23, 1
    %p176 = por %p174, %p175
    %p178 = scmp.ne.s32.totalorder %s163, %s177
    %p179 = scmp.eq.s32.totalorder %s23, 0
    %p180 = por %p178, %p179
    %s182 = sadd.s32 %s181, 1
    %p185 = scmp.eq.s32.totalorder %s17, 1
    %p186 = scmp.ne.s32.totalorder %s181, %s183
    %p187 = scmp.eq.s32.totalorder %s17, 0
    %p188 = por %p186, %p187
    %p189 = scmp.ne.s32.totalorder %s181, %s183
    %p190 = scmp.eq.s32.totalorder %s22, 1
    %p191 = por %p189, %p190
    %p192 = scmp.ne.s32.totalorder %s183, %s184
    %p193 = scmp.eq.s32.totalorder %s22, 0
    %p194 = por %p192, %p193
    %p195 = scmp.ne.s32.totalorder %s183, %s184
    %p196 = scmp.eq.s32.totalorder %s23, 1
    %p197 = por %p195, %p196
    %p199 = scmp.ne.s32.totalorder %s184, %s198
    %p200 = scmp.eq.s32.totalorder %s23, 0
    %p201 = por %p199, %p200
    %s203 = sadd.s32 %s202, 1
    %p206 = scmp.eq.s32.totalorder %s17, 1
    %p207 = scmp.ne.s32.totalorder %s202, %s204
    %p208 = scmp.eq.s32.totalorder %s17, 0
    %p209 = por %p207, %p208
    %p210 = scmp.ne.s32.totalorder %s202, %s204
    %p211 = scmp.eq.s32.totalorder %s22, 1
    %p212 = por %p210, %p211
    %p213 = scmp.ne.s32.totalorder %s204, %s205
    %p214 = scmp.eq.s32.totalorder %s22, 0
    %p215 = por %p213, %p214
    %p216 = scmp.ne.s32.totalorder %s204, %s205
    %p217 = scmp.eq.s32.totalorder %s23, 1
    %p218 = por %p216, %p217
    %p220 = scmp.ne.s32.totalorder %s205, %s219
    %p221 = scmp.eq.s32.totalorder %s23, 0
    %p222 = por %p220, %p221
    %s224 = sadd.s32 %s223, 1
    %p227 = scmp.eq.s32.totalorder %s17, 1
    %p228 = scmp.ne.s32.totalorder %s223, %s225
    %p229 = scmp.eq.s32.totalorder %s17, 0
    %p230 = por %p228, %p229
    %p231 = scmp.ne.s32.totalorder %s223, %s225
    %p232 = scmp.eq.s32.totalorder %s22, 1
    %p233 = por %p231, %p232
    %p234 = scmp.ne.s32.totalorder %s225, %s226
    %p235 = scmp.eq.s32.totalorder %s22, 0
    %p236 = por %p234, %p235
    %p237 = scmp.ne.s32.totalorder %s225, %s226
    %p238 = scmp.eq.s32.totalorder %s23, 1
    %p239 = por %p237, %p238
    %p241 = scmp.ne.s32.totalorder %s226, %s240
    %p242 = scmp.eq.s32.totalorder %s23, 0
    %p243 = por %p241, %p242
    %s244 = ssub.s32 %s24, %s36
    %s245 = ssub.s32 %s25, %s32
    %s246 = sor.u32 %s244, %s245
    %p247 = scmp.eq.s32.totalorder %s246, 0
    %s249 = sadd.s32 %s248, 1
    %s250 = scalar_select %p247, %s248, %s249
    %p253 = pneg %p247
    %p254 = scmp.eq.s32.totalorder %s17, 1
    %p255 = por %p253, %p254
    %p256 = scmp.ne.s32.totalorder %s248, %s251
    %p257 = scmp.eq.s32.totalorder %s17, 0
    %p258 = por %p256, %p257
    %p259 = scmp.ne.s32.totalorder %s248, %s251
    %p260 = scmp.eq.s32.totalorder %s22, 1
    %p261 = por %p259, %p260
    %p262 = scmp.ne.s32.totalorder %s251, %s252
    %p263 = scmp.eq.s32.totalorder %s22, 0
    %p264 = por %p262, %p263
    %p265 = scmp.ne.s32.totalorder %s251, %s252
    %p266 = scmp.eq.s32.totalorder %s23, 1
    %p267 = por %p265, %p266
    %p269 = scmp.ne.s32.totalorder %s252, %s268
    %p270 = scmp.eq.s32.totalorder %s23, 0
    %p271 = por %p269, %p270
    %s272 = ssub.s32 %s24, %s36
    %p273 = scmp.eq.s32.totalorder %s272, 0
    %s275 = sadd.s32 %s274, 1
    %s276 = scalar_select %p273, %s274, %s275
    %p279 = pneg %p273
    %p280 = scmp.eq.s32.totalorder %s17, 1
    %p281 = por %p279, %p280
    %p282 = scmp.ne.s32.totalorder %s274, %s277
    %p283 = scmp.eq.s32.totalorder %s17, 0
    %p284 = por %p282, %p283
    %p285 = scmp.ne.s32.totalorder %s274, %s277
    %p286 = scmp.eq.s32.totalorder %s22, 1
    %p287 = por %p285, %p286
    %p288 = scmp.ne.s32.totalorder %s277, %s278
    %p289 = scmp.eq.s32.totalorder %s22, 0
    %p290 = por %p288, %p289
    %p291 = scmp.ne.s32.totalorder %s277, %s278
    %p292 = scmp.eq.s32.totalorder %s23, 1
    %p293 = por %p291, %p292
    %p295 = scmp.ne.s32.totalorder %s278, %s294
    %p296 = scmp.eq.s32.totalorder %s23, 0
    %p297 = por %p295, %p296
    %p298 = scmp.le.s32.totalorder 1, %s17
    %p299 = scmp.lt.s32.totalorder %s17, 3
    %p300 = pnand %p298, %p299
    %p301 = pneg %p300
    // Predicated region
    $region9: #{convnext_v2_block.2} parent=5 // pred_check
      _
    $region10: #{convnext_v2_block.2} parent=5 // pred_check_branch
      %303 = sbr.rel (%p300) target = $region12
    $region11: #{convnext_v2_block.2} parent=5 // pred_region
      %s304 = ssub.s32 %s17, 1
      // Predicated region
      $region13: #{convnext_v2_block.2} parent=11 // pred_check
        %p305 = pneg %p110
      $region14: #{convnext_v2_block.2} parent=11 // pred_check_branch
        %307 = sbr.rel (%p305) target = $region16
      $region15: #{convnext_v2_block.2} parent=11 // pred_region
        _
      $region16: #{convnext_v2_block.2} parent=11 // pred_fallthru
        _
      // Predicated region
      $region17: #{convnext_v2_block.2} parent=11 // pred_check
        %p308 = pneg %p131
      $region18: #{convnext_v2_block.2} parent=11 // pred_check_branch
        %310 = sbr.rel (%p308) target = $region20
      $region19: #{convnext_v2_block.2} parent=11 // pred_region
        _
      $region20: #{convnext_v2_block.2} parent=11 // pred_fallthru
        _
      // Predicated region
      $region21: #{convnext_v2_block.2} parent=11 // pred_check
        %p311 = pneg %p152
      $region22: #{convnext_v2_block.2} parent=11 // pred_check_branch
        %313 = sbr.rel (%p311) target = $region24
      $region23: #{convnext_v2_block.2} parent=11 // pred_region
        _
      $region24: #{convnext_v2_block.2} parent=11 // pred_fallthru
        _
      // Predicated region
      $region25: #{convnext_v2_block.2} parent=11 // pred_check
        %p314 = pneg %p173
      $region26: #{convnext_v2_block.2} parent=11 // pred_check_branch
        %316 = sbr.rel (%p314) target = $region28
      $region27: #{convnext_v2_block.2} parent=11 // pred_region
        _
      $region28: #{convnext_v2_block.2} parent=11 // pred_fallthru
        _
      // Predicated region
      $region29: #{convnext_v2_block.2} parent=11 // pred_check
        %p317 = pneg %p194
      $region30: #{convnext_v2_block.2} parent=11 // pred_check_branch
        %319 = sbr.rel (%p317) target = $region32
      $region31: #{convnext_v2_block.2} parent=11 // pred_region
        _
      $region32: #{convnext_v2_block.2} parent=11 // pred_fallthru
        _
      // Predicated region
      $region33: #{convnext_v2_block.2} parent=11 // pred_check
        %p320 = pneg %p215
      $region34: #{convnext_v2_block.2} parent=11 // pred_check_branch
        %322 = sbr.rel (%p320) target = $region36
      $region35: #{convnext_v2_block.2} parent=11 // pred_region
        _
      $region36: #{convnext_v2_block.2} parent=11 // pred_fallthru
        _
      // Predicated region
      $region37: #{convnext_v2_block.2} parent=11 // pred_check
        %p323 = pneg %p236
      $region38: #{convnext_v2_block.2} parent=11 // pred_check_branch
        %325 = sbr.rel (%p323) target = $region40
      $region39: #{convnext_v2_block.2} parent=11 // pred_region
        _
      $region40: #{convnext_v2_block.2} parent=11 // pred_fallthru
        _
    $region12: #{convnext_v2_block.2} parent=5 // pred_fallthru
      _
    %p326 = scmp.lt.s32.totalorder %s17, 2
    // Predicated region
    $region41: #{convnext_v2_block.2} parent=5 // pred_check
      %p327 = pneg %p326
    $region42: #{convnext_v2_block.2} parent=5 // pred_check_branch
      %329 = sbr.rel (%p327) target = $region44
    $region43: #{convnext_v2_block.2} parent=5 // pred_region
      // Predicated region
      $region45: #{convnext_v2_block.2} parent=43 // pred_check
        %p330 = pneg %p51
      $region46: #{convnext_v2_block.2} parent=43 // pred_check_branch
        %332 = sbr.rel (%p330) target = $region48
      $region47: #{convnext_v2_block.2} parent=43 // pred_region
        %s333 = smul.u32 16, %s25
        %s334 = ssub.s32 24, %s333
        %p335 = scmp.lt.s32.totalorder %s334, 16
        %s336 = scalar_select %p335, %s334, 16
        %s337 = smul.u32 128, %s336
        %s338 = smul.u32 %s337, 3
        %p339 = scmp.lt.s32.totalorder %s24, 1
        %s340 = scalar_select %p339, %s24, 1
        %p341 = scmp.lt.s32.totalorder %s333, 23
        %s342 = scalar_select %p341, %s333, 23
        %s343 = smul.addr %s342, 3
        %s344 = smul.addr %s340, 72
        %s345 = sadd.s32 %s343, %s344
        %s346 = smul.addr %s345, 8
        %s347 = scalar_lea.vmem %s0, %s346
        %s348 = smul.u32 16, %s25
        %s349 = ssub.s32 24, %s348
        %p350 = scmp.lt.s32.totalorder %s349, 16
        %s351 = scalar_select %p350, %s349, 16
        %s352 = smul.u32 128, %s351
        %s353 = smul.u32 %s352, 3
      $region48: #{convnext_v2_block.2} parent=43 // pred_fallthru
        _
      // Predicated region
      $region49: #{convnext_v2_block.2} parent=43 // pred_check
        %p354 = pneg %p83
      $region50: #{convnext_v2_block.2} parent=43 // pred_check_branch
        %356 = sbr.rel (%p354) target = $region52
      $region51: #{convnext_v2_block.2} parent=43 // pred_region
        %s357 = sadd.s32 %s25, 1
        %s358 = smul.u32 %s357, 2
        %s359 = smul.u32 8, %s358
        %p360 = scmp.lt.s32.totalorder %s24, 1
        %s361 = scalar_select %p360, %s24, 1
        %p362 = scmp.lt.s32.totalorder %s359, 23
        %s363 = scalar_select %p362, %s359, 23
        %s364 = smul.addr %s363, 3
        %s365 = smul.addr %s361, 72
        %s366 = sadd.s32 %s364, %s365
        %s367 = smul.addr %s366, 8
        %s368 = scalar_lea.vmem %s1, %s367
        %s369 = sadd.s32 %s25, 1
        %s370 = smul.u32 %s369, 2
        %s371 = smul.u32 8, %s370
      $region52: #{convnext_v2_block.2} parent=43 // pred_fallthru
        _
    $region44: #{convnext_v2_block.2} parent=5 // pred_fallthru
      _
    %p372 = scmp.le.s32.totalorder 1, %s17
    %p373 = scmp.lt.s32.totalorder %s17, 3
    %p374 = pnand %p372, %p373
    %p375 = pneg %p374
    // Predicated region
    $region53: #{convnext_v2_block.2} parent=5 // pred_check
      _
    $region54: #{convnext_v2_block.2} parent=5 // pred_check_branch
      %377 = sbr.rel (%p374) target = $region56
    $region55: #{convnext_v2_block.2} parent=5 // pred_region
      %s378 = ssub.s32 %s17, 1
      %s379 = smul.u32 16, %s27
      %s380 = ssub.s32 24, %s379
      %p381 = scmp.lt.s32.totalorder %s380, 16
      %s382 = scalar_select %p381, %s380, 16
      %s383 = smul.u32 128, %s382
      %s384 = smul.u32 %s383, 3
      %p385 = scmp.lt.s32.totalorder %s26, 1
      %s386 = scalar_select %p385, %s26, 1
      %p387 = scmp.lt.s32.totalorder %s379, 23
      %s388 = scalar_select %p387, %s379, 23
      %s389 = smul.addr %s388, 3
      %s390 = smul.addr %s386, 72
      %s391 = sadd.s32 %s389, %s390
      %s392 = smul.addr %s391, 8
      %s393 = scalar_lea.vmem %s0, %s392
      %p394 = pneg %p57
      %p395 = pneg %p54
      %s396 = sadd.s32 %s27, 1
      %s397 = smul.u32 %s396, 2
      %s398 = smul.u32 8, %s397
      %p399 = scmp.lt.s32.totalorder %s26, 1
      %s400 = scalar_select %p399, %s26, 1
      %p401 = scmp.lt.s32.totalorder %s398, 23
      %s402 = scalar_select %p401, %s398, 23
      %s403 = smul.addr %s402, 3
      %s404 = smul.addr %s400, 72
      %s405 = sadd.s32 %s403, %s404
      %s406 = smul.addr %s405, 8
      %s407 = scalar_lea.vmem %s1, %s406
      %p408 = pneg %p89
      %p409 = pneg %p86
      %p410 = pneg %p110
      %p411 = pneg %p107
      %p412 = pneg %p131
      %p413 = pneg %p128
      %p414 = pneg %p152
      %p415 = pneg %p149
      %p416 = pneg %p173
      %p417 = pneg %p170
      %p418 = pneg %p194
      %p419 = pneg %p191
      %p420 = pneg %p215
      %p421 = pneg %p212
      %p422 = pneg %p236
      %p423 = pneg %p233
      %p424 = pneg %p264
      %p425 = pneg %p261
      %s426 = smul.u32 32, %s27
      %p427 = scmp.lt.s32.totalorder %s26, 1
      %s428 = scalar_select %p427, %s26, 1
      %p429 = scmp.lt.s32.totalorder %s426, 31
      %s430 = scalar_select %p429, %s426, 31
      %s431 = smul.addr %s428, 32
      %s432 = sadd.s32 %s430, %s431
      %s433 = smul.addr %s432, 4
      %s434 = scalar_lea.vmem %s9, %s433
      %p435 = pneg %p290
      %p436 = pneg %p287
      %p437 = scmp.lt.s32.totalorder %s26, 1
      %s438 = scalar_select %p437, %s26, 1
      %s439 = scalar_lea.vmem %s10, %s438
      %s440 = smul.u32 16, %s27
      %s441 = ssub.s32 24, %s440
      %p442 = scmp.lt.s32.totalorder %s441, 16
      %s443 = scalar_select %p442, %s441, 16
      %s444 = smul.u32 128, %s443
      %s445 = smul.u32 %s444, 3
      %p446 = scmp.lt.s32.totalorder %s26, 1
      %s447 = scalar_select %p446, %s26, 1
      %p448 = scmp.lt.s32.totalorder %s440, 23
      %s449 = scalar_select %p448, %s440, 23
      %s450 = smul.addr %s449, 3
      %s451 = smul.addr %s447, 72
      %s452 = sadd.s32 %s450, %s451
      %s453 = smul.addr %s452, 8
      %s454 = scalar_lea.vmem %s0, %s453
      %s455 = smul.u32 16, %s27
      %s456 = ssub.s32 24, %s455
      %p457 = scmp.lt.s32.totalorder %s456, 16
      %s458 = scalar_select %p457, %s456, 16
      %s459 = smul.u32 128, %s458
      %s460 = smul.u32 %s459, 3
      %s461 = sadd.s32 %s27, 1
      %s462 = smul.u32 %s461, 2
      %s463 = smul.u32 8, %s462
      %p464 = scmp.lt.s32.totalorder %s26, 1
      %s465 = scalar_select %p464, %s26, 1
      %p466 = scmp.lt.s32.totalorder %s463, 23
      %s467 = scalar_select %p466, %s463, 23
      %s468 = smul.addr %s467, 3
      %s469 = smul.addr %s465, 72
      %s470 = sadd.s32 %s468, %s469
      %s471 = smul.addr %s470, 8
      %s472 = scalar_lea.vmem %s1, %s471
      %s473 = sadd.s32 %s27, 1
      %s474 = smul.u32 %s473, 2
      %s475 = smul.u32 8, %s474
      %s476 = smul.u32 32, %s27
      %p477 = scmp.lt.s32.totalorder %s26, 1
      %s478 = scalar_select %p477, %s26, 1
      %p479 = scmp.lt.s32.totalorder %s476, 31
      %s480 = scalar_select %p479, %s476, 31
      %s481 = smul.addr %s478, 32
      %s482 = sadd.s32 %s480, %s481
      %s483 = smul.addr %s482, 4
      %s484 = scalar_lea.vmem %s9, %s483
      %s485 = smul.u32 32, %s27
      %p486 = scmp.lt.s32.totalorder %s26, 1
      %s487 = scalar_select %p486, %s26, 1
      %s488 = scalar_lea.vmem %s10, %s487
      %v490 = vld [vmem:[%s454] sm:$0xff]
      %v491 = vld [vmem:[%s454 + $0x8] sm:$0xff]
      %v492 = vld [vmem:[%s454 + $0x10] sm:$0x3f]
      %v493 = vld [vmem:[%s454 + $0x18] sm:$0xff]
      %v494 = vld [vmem:[%s454 + $0x20] sm:$0xff]
      %v495 = vld [vmem:[%s454 + $0x28] sm:$0x3f]
      %v496 = vld [vmem:[%s454 + $0x30] sm:$0xff]
      %v497 = vld [vmem:[%s454 + $0x38] sm:$0xff]
      %v498 = vld [vmem:[%s454 + $0x40] sm:$0x3f]
      %v499 = vld [vmem:[%s454 + $0x48] sm:$0xff]
      %v500 = vld [vmem:[%s454 + $0x50] sm:$0xff]
      %v501 = vld [vmem:[%s454 + $0x58] sm:$0x3f]
      %v502 = vld [vmem:[%s454 + $0x60] sm:$0xff]
      %v503 = vld [vmem:[%s454 + $0x68] sm:$0xff]
      %v504 = vld [vmem:[%s454 + $0x70] sm:$0x3f]
      %v505 = vld [vmem:[%s454 + $0x78] sm:$0xff]
      %v506 = vld [vmem:[%s454 + $0x80] sm:$0xff]
      %v507 = vld [vmem:[%s454 + $0x88] sm:$0x3f]
      %v508 = vld [vmem:[%s454 + $0x90] sm:$0xff]
      %v509 = vld [vmem:[%s454 + $0x98] sm:$0xff]
      %v510 = vld [vmem:[%s454 + $0xa0] sm:$0x3f]
      %v511 = vld [vmem:[%s454 + $0xa8] sm:$0xff]
      %v512 = vld [vmem:[%s454 + $0xb0] sm:$0xff]
      %v513 = vld [vmem:[%s454 + $0xb8] sm:$0x3f]
      %v514 = vld [vmem:[%s454 + $0xc0] sm:$0xff]
      %v515 = vld [vmem:[%s454 + $0xc8] sm:$0xff]
      %v516 = vld [vmem:[%s454 + $0xd0] sm:$0x3f]
      %v517 = vld [vmem:[%s454 + $0xd8] sm:$0xff]
      %v518 = vld [vmem:[%s454 + $0xe0] sm:$0xff]
      %v519 = vld [vmem:[%s454 + $0xe8] sm:$0x3f]
      %v520 = vld [vmem:[%s454 + $0xf0] sm:$0xff]
      %v521 = vld [vmem:[%s454 + $0xf8] sm:$0xff]
      %v522 = vld [vmem:[%s454 + $0x100] sm:$0x3f]
      %v523 = vld [vmem:[%s454 + $0x108] sm:$0xff]
      %v524 = vld [vmem:[%s454 + $0x110] sm:$0xff]
      %v525 = vld [vmem:[%s454 + $0x118] sm:$0x3f]
      %v526 = vld [vmem:[%s454 + $0x120] sm:$0xff]
      %v527 = vld [vmem:[%s454 + $0x128] sm:$0xff]
      %v528 = vld [vmem:[%s454 + $0x130] sm:$0x3f]
      %v529 = vld [vmem:[%s454 + $0x138] sm:$0xff]
      %v530 = vld [vmem:[%s454 + $0x140] sm:$0xff]
      %v531 = vld [vmem:[%s454 + $0x148] sm:$0x3f]
      %v532 = vld [vmem:[%s454 + $0x150] sm:$0xff]
      %v533 = vld [vmem:[%s454 + $0x158] sm:$0xff]
      %v534 = vld [vmem:[%s454 + $0x160] sm:$0x3f]
      %v535 = vld [vmem:[%s454 + $0x168] sm:$0xff]
      %v536 = vld [vmem:[%s454 + $0x170] sm:$0xff]
      %v537 = vld [vmem:[%s454 + $0x178] sm:$0x3f]
      %v538 = vld [vmem:[%s472] sm:$0xff]
      %v539 = vld [vmem:[%s472 + $0x8] sm:$0xff]
      %v540 = vld [vmem:[%s472 + $0x10] sm:$0x3f]
      %v541 = vld [vmem:[%s472 + $0x18] sm:$0xff]
      %v542 = vld [vmem:[%s472 + $0x20] sm:$0xff]
      %v543 = vld [vmem:[%s472 + $0x28] sm:$0x3f]
      %v544 = vld [vmem:[%s472 + $0x30] sm:$0xff]
      %v545 = vld [vmem:[%s472 + $0x38] sm:$0xff]
      %v546 = vld [vmem:[%s472 + $0x40] sm:$0x3f]
      %v547 = vld [vmem:[%s472 + $0x48] sm:$0xff]
      %v548 = vld [vmem:[%s472 + $0x50] sm:$0xff]
      %v549 = vld [vmem:[%s472 + $0x58] sm:$0x3f]
      %v550 = vld [vmem:[%s472 + $0x60] sm:$0xff]
      %v551 = vld [vmem:[%s472 + $0x68] sm:$0xff]
      %v552 = vld [vmem:[%s472 + $0x70] sm:$0x3f]
      %v553 = vld [vmem:[%s472 + $0x78] sm:$0xff]
      %v554 = vld [vmem:[%s472 + $0x80] sm:$0xff]
      %v555 = vld [vmem:[%s472 + $0x88] sm:$0x3f]
      %v556 = vld [vmem:[%s2] sm:$0xff]
      %v557 = vld [vmem:[%s2 + $0x8] sm:$0xff]
      %v558 = vld [vmem:[%s2 + $0x10] sm:$0xff]
      %v559 = vld [vmem:[%s2 + $0x18] sm:$0xff]
      %v560 = vld [vmem:[%s2 + $0x20] sm:$0xff]
      %v561 = vld [vmem:[%s2 + $0x28] sm:$0xff]
      %v562 = vld [vmem:[%s2 + $0x30] sm:$0x1]
      %v563 = vlaneseq
      %v564 = vshrl.u32 %v563, 7
      %v565 = vsub.s32 0, %v564
      %v566 = vrot.slane %v556, %v565
      %v567 = vmul.f32 %v490, %v566
      %v568 = vmul.f32 %v491, %v566
      %v569 = vmul.f32 %v493, %v566
      %v570 = vmul.f32 %v494, %v566
      %v571 = vmul.f32 %v496, %v566
      %v572 = vmul.f32 %v497, %v566
      %v573 = vmul.f32 %v499, %v566
      %v574 = vmul.f32 %v500, %v566
      %v575 = vmul.f32 %v502, %v566
      %v576 = vmul.f32 %v503, %v566
      %v577 = vmul.f32 %v505, %v566
      %v578 = vmul.f32 %v506, %v566
      %v579 = vmul.f32 %v508, %v566
      %v580 = vmul.f32 %v509, %v566
      %v581 = vmul.f32 %v511, %v566
      %v582 = vmul.f32 %v512, %v566
      %v583 = vmul.f32 %v514, %v566
      %v584 = vmul.f32 %v515, %v566
      %v585 = vmul.f32 %v517, %v566
      %v586 = vmul.f32 %v518, %v566
      %v587 = vmul.f32 %v520, %v566
      %v588 = vmul.f32 %v521, %v566
      %v589 = vmul.f32 %v523, %v566
      %v590 = vmul.f32 %v524, %v566
      %v591 = vmul.f32 %v526, %v566
      %v592 = vmul.f32 %v527, %v566
      %v593 = vmul.f32 %v529, %v566
      %v594 = vmul.f32 %v530, %v566
      %v595 = vmul.f32 %v532, %v566
      %v596 = vmul.f32 %v533, %v566
      %v597 = vmul.f32 %v535, %v566
      %v598 = vmul.f32 %v536, %v566
      %v599 = vadd.f32 %v567, 0.0
      %v600 = vadd.f32 %v568, 0.0
      %v601 = vadd.f32 %v569, 0.0
      %v602 = vadd.f32 %v570, 0.0
      %v603 = vadd.f32 %v571, 0.0
      %v604 = vadd.f32 %v572, 0.0
      %v605 = vadd.f32 %v573, 0.0
      %v606 = vadd.f32 %v574, 0.0
      %v607 = vadd.f32 %v575, 0.0
      %v608 = vadd.f32 %v576, 0.0
      %v609 = vadd.f32 %v577, 0.0
      %v610 = vadd.f32 %v578, 0.0
      %v611 = vadd.f32 %v579, 0.0
      %v612 = vadd.f32 %v580, 0.0
      %v613 = vadd.f32 %v581, 0.0
      %v614 = vadd.f32 %v582, 0.0
      %v615 = vadd.f32 %v583, 0.0
      %v616 = vadd.f32 %v584, 0.0
      %v617 = vadd.f32 %v585, 0.0
      %v618 = vadd.f32 %v586, 0.0
      %v619 = vadd.f32 %v587, 0.0
      %v620 = vadd.f32 %v588, 0.0
      %v621 = vadd.f32 %v589, 0.0
      %v622 = vadd.f32 %v590, 0.0
      %v623 = vadd.f32 %v591, 0.0
      %v624 = vadd.f32 %v592, 0.0
      %v625 = vadd.f32 %v593, 0.0
      %v626 = vadd.f32 %v594, 0.0
      %v627 = vadd.f32 %v595, 0.0
      %v628 = vadd.f32 %v596, 0.0
      %v629 = vadd.f32 %v597, 0.0
      %v630 = vadd.f32 %v598, 0.0
      %v631 = vlaneseq
      %v632 = vshrl.u32 %v631, 7
      %v633 = vsub.s32 7, %v632
      %v634 = vrot.slane %v556, %v633
      %v635 = vmul.f32 %v493, %v634
      %v636 = vmul.f32 %v494, %v634
      %v637 = vmul.f32 %v496, %v634
      %v638 = vmul.f32 %v497, %v634
      %v639 = vmul.f32 %v499, %v634
      %v640 = vmul.f32 %v500, %v634
      %v641 = vmul.f32 %v502, %v634
      %v642 = vmul.f32 %v503, %v634
      %v643 = vmul.f32 %v505, %v634
      %v644 = vmul.f32 %v506, %v634
      %v645 = vmul.f32 %v508, %v634
      %v646 = vmul.f32 %v509, %v634
      %v647 = vmul.f32 %v511, %v634
      %v648 = vmul.f32 %v512, %v634
      %v649 = vmul.f32 %v514, %v634
      %v650 = vmul.f32 %v515, %v634
      %v651 = vmul.f32 %v517, %v634
      %v652 = vmul.f32 %v518, %v634
      %v653 = vmul.f32 %v520, %v634
      %v654 = vmul.f32 %v521, %v634
      %v655 = vmul.f32 %v523, %v634
      %v656 = vmul.f32 %v524, %v634
      %v657 = vmul.f32 %v526, %v634
      %v658 = vmul.f32 %v527, %v634
      %v659 = vmul.f32 %v529, %v634
      %v660 = vmul.f32 %v530, %v634
      %v661 = vmul.f32 %v532, %v634
      %v662 = vmul.f32 %v533, %v634
      %v663 = vmul.f32 %v535, %v634
      %v664 = vmul.f32 %v536, %v634
      %v665 = vmul.f32 %v538, %v634
      %v666 = vmul.f32 %v539, %v634
      %v667 = vadd.f32 %v599, %v635
      %v668 = vadd.f32 %v600, %v636
      %v669 = vadd.f32 %v601, %v637
      %v670 = vadd.f32 %v602, %v638
      %v671 = vadd.f32 %v603, %v639
      %v672 = vadd.f32 %v604, %v640
      %v673 = vadd.f32 %v605, %v641
      %v674 = vadd.f32 %v606, %v642
      %v675 = vadd.f32 %v607, %v643
      %v676 = vadd.f32 %v608, %v644
      %v677 = vadd.f32 %v609, %v645
      %v678 = vadd.f32 %v610, %v646
      %v679 = vadd.f32 %v611, %v647
      %v680 = vadd.f32 %v612, %v648
      %v681 = vadd.f32 %v613, %v649
      %v682 = vadd.f32 %v614, %v650
      %v683 = vadd.f32 %v615, %v651
      %v684 = vadd.f32 %v616, %v652
      %v685 = vadd.f32 %v617, %v653
      %v686 = vadd.f32 %v618, %v654
      %v687 = vadd.f32 %v619, %v655
      %v688 = vadd.f32 %v620, %v656
      %v689 = vadd.f32 %v621, %v657
      %v690 = vadd.f32 %v622, %v658
      %v691 = vadd.f32 %v623, %v659
      %v692 = vadd.f32 %v624, %v660
      %v693 = vadd.f32 %v625, %v661
      %v694 = vadd.f32 %v626, %v662
      %v695 = vadd.f32 %v627, %v663
      %v696 = vadd.f32 %v628, %v664
      %v697 = vadd.f32 %v629, %v665
      %v698 = vadd.f32 %v630, %v666
      %v699 = vlaneseq
      %v700 = vshrl.u32 %v699, 7
      %v701 = vsub.s32 6, %v700
      %v702 = vrot.slane %v557, %v701
      %v703 = vmul.f32 %v496, %v702
      %v704 = vmul.f32 %v497, %v702
      %v705 = vmul.f32 %v499, %v702
      %v706 = vmul.f32 %v500, %v702
      %v707 = vmul.f32 %v502, %v702
      %v708 = vmul.f32 %v503, %v702
      %v709 = vmul.f32 %v505, %v702
      %v710 = vmul.f32 %v506, %v702
      %v711 = vmul.f32 %v508, %v702
      %v712 = vmul.f32 %v509, %v702
      %v713 = vmul.f32 %v511, %v702
      %v714 = vmul.f32 %v512, %v702
      %v715 = vmul.f32 %v514, %v702
      %v716 = vmul.f32 %v515, %v702
      %v717 = vmul.f32 %v517, %v702
      %v718 = vmul.f32 %v518, %v702
      %v719 = vmul.f32 %v520, %v702
      %v720 = vmul.f32 %v521, %v702
      %v721 = vmul.f32 %v523, %v702
      %v722 = vmul.f32 %v524, %v702
      %v723 = vmul.f32 %v526, %v702
      %v724 = vmul.f32 %v527, %v702
      %v725 = vmul.f32 %v529, %v702
      %v726 = vmul.f32 %v530, %v702
      %v727 = vmul.f32 %v532, %v702
      %v728 = vmul.f32 %v533, %v702
      %v729 = vmul.f32 %v535, %v702
      %v730 = vmul.f32 %v536, %v702
      %v731 = vmul.f32 %v538, %v702
      %v732 = vmul.f32 %v539, %v702
      %v733 = vmul.f32 %v541, %v702
      %v734 = vmul.f32 %v542, %v702
      %v735 = vadd.f32 %v667, %v703
      %v736 = vadd.f32 %v668, %v704
      %v737 = vadd.f32 %v669, %v705
      %v738 = vadd.f32 %v670, %v706
      %v739 = vadd.f32 %v671, %v707
      %v740 = vadd.f32 %v672, %v708
      %v741 = vadd.f32 %v673, %v709
      %v742 = vadd.f32 %v674, %v710
      %v743 = vadd.f32 %v675, %v711
      %v744 = vadd.f32 %v676, %v712
      %v745 = vadd.f32 %v677, %v713
      %v746 = vadd.f32 %v678, %v714
      %v747 = vadd.f32 %v679, %v715
      %v748 = vadd.f32 %v680, %v716
      %v749 = vadd.f32 %v681, %v717
      %v750 = vadd.f32 %v682, %v718
      %v751 = vadd.f32 %v683, %v719
      %v752 = vadd.f32 %v684, %v720
      %v753 = vadd.f32 %v685, %v721
      %v754 = vadd.f32 %v686, %v722
      %v755 = vadd.f32 %v687, %v723
      %v756 = vadd.f32 %v688, %v724
      %v757 = vadd.f32 %v689, %v725
      %v758 = vadd.f32 %v690, %v726
      %v759 = vadd.f32 %v691, %v727
      %v760 = vadd.f32 %v692, %v728
      %v761 = vadd.f32 %v693, %v729
      %v762 = vadd.f32 %v694, %v730
      %v763 = vadd.f32 %v695, %v731
      %v764 = vadd.f32 %v696, %v732
      %v765 = vadd.f32 %v697, %v733
      %v766 = vadd.f32 %v698, %v734
      %v767 = vlaneseq
      %v768 = vshrl.u32 %v767, 7
      %v769 = vsub.s32 5, %v768
      %v770 = vrot.slane %v558, %v769
      %v771 = vmul.f32 %v499, %v770
      %v772 = vmul.f32 %v500, %v770
      %v773 = vmul.f32 %v502, %v770
      %v774 = vmul.f32 %v503, %v770
      %v775 = vmul.f32 %v505, %v770
      %v776 = vmul.f32 %v506, %v770
      %v777 = vmul.f32 %v508, %v770
      %v778 = vmul.f32 %v509, %v770
      %v779 = vmul.f32 %v511, %v770
      %v780 = vmul.f32 %v512, %v770
      %v781 = vmul.f32 %v514, %v770
      %v782 = vmul.f32 %v515, %v770
      %v783 = vmul.f32 %v517, %v770
      %v784 = vmul.f32 %v518, %v770
      %v785 = vmul.f32 %v520, %v770
      %v786 = vmul.f32 %v521, %v770
      %v787 = vmul.f32 %v523, %v770
      %v788 = vmul.f32 %v524, %v770
      %v789 = vmul.f32 %v526, %v770
      %v790 = vmul.f32 %v527, %v770
      %v791 = vmul.f32 %v529, %v770
      %v792 = vmul.f32 %v530, %v770
      %v793 = vmul.f32 %v532, %v770
      %v794 = vmul.f32 %v533, %v770
      %v795 = vmul.f32 %v535, %v770
      %v796 = vmul.f32 %v536, %v770
      %v797 = vmul.f32 %v538, %v770
      %v798 = vmul.f32 %v539, %v770
      %v799 = vmul.f32 %v541, %v770
      %v800 = vmul.f32 %v542, %v770
      %v801 = vmul.f32 %v544, %v770
      %v802 = vmul.f32 %v545, %v770
      %v803 = vadd.f32 %v735, %v771
      %v804 = vadd.f32 %v736, %v772
      %v805 = vadd.f32 %v737, %v773
      %v806 = vadd.f32 %v738, %v774
      %v807 = vadd.f32 %v739, %v775
      %v808 = vadd.f32 %v740, %v776
      %v809 = vadd.f32 %v741, %v777
      %v810 = vadd.f32 %v742, %v778
      %v811 = vadd.f32 %v743, %v779
      %v812 = vadd.f32 %v744, %v780
      %v813 = vadd.f32 %v745, %v781
      %v814 = vadd.f32 %v746, %v782
      %v815 = vadd.f32 %v747, %v783
      %v816 = vadd.f32 %v748, %v784
      %v817 = vadd.f32 %v749, %v785
      %v818 = vadd.f32 %v750, %v786
      %v819 = vadd.f32 %v751, %v787
      %v820 = vadd.f32 %v752, %v788
      %v821 = vadd.f32 %v753, %v789
      %v822 = vadd.f32 %v754, %v790
      %v823 = vadd.f32 %v755, %v791
      %v824 = vadd.f32 %v756, %v792
      %v825 = vadd.f32 %v757, %v793
      %v826 = vadd.f32 %v758, %v794
      %v827 = vadd.f32 %v759, %v795
      %v828 = vadd.f32 %v760, %v796
      %v829 = vadd.f32 %v761, %v797
      %v830 = vadd.f32 %v762, %v798
      %v831 = vadd.f32 %v763, %v799
      %v832 = vadd.f32 %v764, %v800
      %v833 = vadd.f32 %v765, %v801
      %v834 = vadd.f32 %v766, %v802
      %v835 = vlaneseq
      %v836 = vshrl.u32 %v835, 7
      %v837 = vsub.s32 4, %v836
      %v838 = vrot.slane %v559, %v837
      %v839 = vmul.f32 %v502, %v838
      %v840 = vmul.f32 %v503, %v838
      %v841 = vmul.f32 %v505, %v838
      %v842 = vmul.f32 %v506, %v838
      %v843 = vmul.f32 %v508, %v838
      %v844 = vmul.f32 %v509, %v838
      %v845 = vmul.f32 %v511, %v838
      %v846 = vmul.f32 %v512, %v838
      %v847 = vmul.f32 %v514, %v838
      %v848 = vmul.f32 %v515, %v838
      %v849 = vmul.f32 %v517, %v838
      %v850 = vmul.f32 %v518, %v838
      %v851 = vmul.f32 %v520, %v838
      %v852 = vmul.f32 %v521, %v838
      %v853 = vmul.f32 %v523, %v838
      %v854 = vmul.f32 %v524, %v838
      %v855 = vmul.f32 %v526, %v838
      %v856 = vmul.f32 %v527, %v838
      %v857 = vmul.f32 %v529, %v838
      %v858 = vmul.f32 %v530, %v838
      %v859 = vmul.f32 %v532, %v838
      %v860 = vmul.f32 %v533, %v838
      %v861 = vmul.f32 %v535, %v838
      %v862 = vmul.f32 %v536, %v838
      %v863 = vmul.f32 %v538, %v838
      %v864 = vmul.f32 %v539, %v838
      %v865 = vmul.f32 %v541, %v838
      %v866 = vmul.f32 %v542, %v838
      %v867 = vmul.f32 %v544, %v838
      %v868 = vmul.f32 %v545, %v838
      %v869 = vmul.f32 %v547, %v838
      %v870 = vmul.f32 %v548, %v838
      %v871 = vadd.f32 %v803, %v839
      %v872 = vadd.f32 %v804, %v840
      %v873 = vadd.f32 %v805, %v841
      %v874 = vadd.f32 %v806, %v842
      %v875 = vadd.f32 %v807, %v843
      %v876 = vadd.f32 %v808, %v844
      %v877 = vadd.f32 %v809, %v845
      %v878 = vadd.f32 %v810, %v846
      %v879 = vadd.f32 %v811, %v847
      %v880 = vadd.f32 %v812, %v848
      %v881 = vadd.f32 %v813, %v849
      %v882 = vadd.f32 %v814, %v850
      %v883 = vadd.f32 %v815, %v851
      %v884 = vadd.f32 %v816, %v852
      %v885 = vadd.f32 %v817, %v853
      %v886 = vadd.f32 %v818, %v854
      %v887 = vadd.f32 %v819, %v855
      %v888 = vadd.f32 %v820, %v856
      %v889 = vadd.f32 %v821, %v857
      %v890 = vadd.f32 %v822, %v858
      %v891 = vadd.f32 %v823, %v859
      %v892 = vadd.f32 %v824, %v860
      %v893 = vadd.f32 %v825, %v861
      %v894 = vadd.f32 %v826, %v862
      %v895 = vadd.f32 %v827, %v863
      %v896 = vadd.f32 %v828, %v864
      %v897 = vadd.f32 %v829, %v865
      %v898 = vadd.f32 %v830, %v866
      %v899 = vadd.f32 %v831, %v867
      %v900 = vadd.f32 %v832, %v868
      %v901 = vadd.f32 %v833, %v869
      %v902 = vadd.f32 %v834, %v870
      %v903 = vlaneseq
      %v904 = vshrl.u32 %v903, 7
      %v905 = vsub.s32 3, %v904
      %v906 = vrot.slane %v560, %v905
      %v907 = vmul.f32 %v505, %v906
      %v908 = vmul.f32 %v506, %v906
      %v909 = vmul.f32 %v508, %v906
      %v910 = vmul.f32 %v509, %v906
      %v911 = vmul.f32 %v511, %v906
      %v912 = vmul.f32 %v512, %v906
      %v913 = vmul.f32 %v514, %v906
      %v914 = vmul.f32 %v515, %v906
      %v915 = vmul.f32 %v517, %v906
      %v916 = vmul.f32 %v518, %v906
      %v917 = vmul.f32 %v520, %v906
      %v918 = vmul.f32 %v521, %v906
      %v919 = vmul.f32 %v523, %v906
      %v920 = vmul.f32 %v524, %v906
      %v921 = vmul.f32 %v526, %v906
      %v922 = vmul.f32 %v527, %v906
      %v923 = vmul.f32 %v529, %v906
      %v924 = vmul.f32 %v530, %v906
      %v925 = vmul.f32 %v532, %v906
      %v926 = vmul.f32 %v533, %v906
      %v927 = vmul.f32 %v535, %v906
      %v928 = vmul.f32 %v536, %v906
      %v929 = vmul.f32 %v538, %v906
      %v930 = vmul.f32 %v539, %v906
      %v931 = vmul.f32 %v541, %v906
      %v932 = vmul.f32 %v542, %v906
      %v933 = vmul.f32 %v544, %v906
      %v934 = vmul.f32 %v545, %v906
      %v935 = vmul.f32 %v547, %v906
      %v936 = vmul.f32 %v548, %v906
      %v937 = vmul.f32 %v550, %v906
      %v938 = vmul.f32 %v551, %v906
      %v939 = vadd.f32 %v871, %v907
      %v940 = vadd.f32 %v872, %v908
      %v941 = vadd.f32 %v873, %v909
      %v942 = vadd.f32 %v874, %v910
      %v943 = vadd.f32 %v875, %v911
      %v944 = vadd.f32 %v876, %v912
      %v945 = vadd.f32 %v877, %v913
      %v946 = vadd.f32 %v878, %v914
      %v947 = vadd.f32 %v879, %v915
      %v948 = vadd.f32 %v880, %v916
      %v949 = vadd.f32 %v881, %v917
      %v950 = vadd.f32 %v882, %v918
      %v951 = vadd.f32 %v883, %v919
      %v952 = vadd.f32 %v884, %v920
      %v953 = vadd.f32 %v885, %v921
      %v954 = vadd.f32 %v886, %v922
      %v955 = vadd.f32 %v887, %v923
      %v956 = vadd.f32 %v888, %v924
      %v957 = vadd.f32 %v889, %v925
      %v958 = vadd.f32 %v890, %v926
      %v959 = vadd.f32 %v891, %v927
      %v960 = vadd.f32 %v892, %v928
      %v961 = vadd.f32 %v893, %v929
      %v962 = vadd.f32 %v894, %v930
      %v963 = vadd.f32 %v895, %v931
      %v964 = vadd.f32 %v896, %v932
      %v965 = vadd.f32 %v897, %v933
      %v966 = vadd.f32 %v898, %v934
      %v967 = vadd.f32 %v899, %v935
      %v968 = vadd.f32 %v900, %v936
      %v969 = vadd.f32 %v901, %v937
      %v970 = vadd.f32 %v902, %v938
      %v971 = vlaneseq
      %v972 = vshrl.u32 %v971, 7
      %v973 = vsub.s32 2, %v972
      %v974 = vrot.slane %v561, %v973
      %v975 = vmul.f32 %v508, %v974
      %v976 = vmul.f32 %v509, %v974
      %v977 = vmul.f32 %v511, %v974
      %v978 = vmul.f32 %v512, %v974
      %v979 = vmul.f32 %v514, %v974
      %v980 = vmul.f32 %v515, %v974
      %v981 = vmul.f32 %v517, %v974
      %v982 = vmul.f32 %v518, %v974
      %v983 = vmul.f32 %v520, %v974
      %v984 = vmul.f32 %v521, %v974
      %v985 = vmul.f32 %v523, %v974
      %v986 = vmul.f32 %v524, %v974
      %v987 = vmul.f32 %v526, %v974
      %v988 = vmul.f32 %v527, %v974
      %v989 = vmul.f32 %v529, %v974
      %v990 = vmul.f32 %v530, %v974
      %v991 = vmul.f32 %v532, %v974
      %v992 = vmul.f32 %v533, %v974
      %v993 = vmul.f32 %v535, %v974
      %v994 = vmul.f32 %v536, %v974
      %v995 = vmul.f32 %v538, %v974
      %v996 = vmul.f32 %v539, %v974
      %v997 = vmul.f32 %v541, %v974
      %v998 = vmul.f32 %v542, %v974
      %v999 = vmul.f32 %v544, %v974
      %v1000 = vmul.f32 %v545, %v974
      %v1001 = vmul.f32 %v547, %v974
      %v1002 = vmul.f32 %v548, %v974
      %v1003 = vmul.f32 %v550, %v974
      %v1004 = vmul.f32 %v551, %v974
      %v1005 = vmul.f32 %v553, %v974
      %v1006 = vmul.f32 %v554, %v974
      %v1007 = vadd.f32 %v939, %v975
      %v1008 = vadd.f32 %v940, %v976
      %v1009 = vadd.f32 %v941, %v977
      %v1010 = vadd.f32 %v942, %v978
      %v1011 = vadd.f32 %v943, %v979
      %v1012 = vadd.f32 %v944, %v980
      %v1013 = vadd.f32 %v945, %v981
      %v1014 = vadd.f32 %v946, %v982
      %v1015 = vadd.f32 %v947, %v983
      %v1016 = vadd.f32 %v948, %v984
      %v1017 = vadd.f32 %v949, %v985
      %v1018 = vadd.f32 %v950, %v986
      %v1019 = vadd.f32 %v951, %v987
      %v1020 = vadd.f32 %v952, %v988
      %v1021 = vadd.f32 %v953, %v989
      %v1022 = vadd.f32 %v954, %v990
      %v1023 = vadd.f32 %v955, %v991
      %v1024 = vadd.f32 %v956, %v992
      %v1025 = vadd.f32 %v957, %v993
      %v1026 = vadd.f32 %v958, %v994
      %v1027 = vadd.f32 %v959, %v995
      %v1028 = vadd.f32 %v960, %v996
      %v1029 = vadd.f32 %v961, %v997
      %v1030 = vadd.f32 %v962, %v998
      %v1031 = vadd.f32 %v963, %v999
      %v1032 = vadd.f32 %v964, %v1000
      %v1033 = vadd.f32 %v965, %v1001
      %v1034 = vadd.f32 %v966, %v1002
      %v1035 = vadd.f32 %v967, %v1003
      %v1036 = vadd.f32 %v968, %v1004
      %v1037 = vadd.f32 %v969, %v1005
      %v1038 = vadd.f32 %v970, %v1006
      %v1039 = vlaneseq
      %v1040 = vshrl.u32 %v1039, 7
      %v1041 = vsub.s32 1, %v1040
      %v1042 = vrot.slane %v556, %v1041
      %v1043 = vmul.f32 %v490, %v1042
      %v1044 = vmul.f32 %v491, %v1042
      %v1045 = vmul.f32 %v492, %v1042
      %v1046 = vmul.f32 %v493, %v1042
      %v1047 = vmul.f32 %v494, %v1042
      %v1048 = vmul.f32 %v495, %v1042
      %v1049 = vmul.f32 %v496, %v1042
      %v1050 = vmul.f32 %v497, %v1042
      %v1051 = vmul.f32 %v498, %v1042
      %v1052 = vmul.f32 %v499, %v1042
      %v1053 = vmul.f32 %v500, %v1042
      %v1054 = vmul.f32 %v501, %v1042
      %v1055 = vmul.f32 %v502, %v1042
      %v1056 = vmul.f32 %v503, %v1042
      %v1057 = vmul.f32 %v504, %v1042
      %v1058 = vmul.f32 %v505, %v1042
      %v1059 = vmul.f32 %v506, %v1042
      %v1060 = vmul.f32 %v507, %v1042
      %v1061 = vmul.f32 %v508, %v1042
      %v1062 = vmul.f32 %v509, %v1042
      %v1063 = vmul.f32 %v510, %v1042
      %v1064 = vmul.f32 %v511, %v1042
      %v1065 = vmul.f32 %v512, %v1042
      %v1066 = vmul.f32 %v513, %v1042
      %v1067 = vmul.f32 %v514, %v1042
      %v1068 = vmul.f32 %v515, %v1042
      %v1069 = vmul.f32 %v516, %v1042
      %v1070 = vmul.f32 %v517, %v1042
      %v1071 = vmul.f32 %v518, %v1042
      %v1072 = vmul.f32 %v519, %v1042
      %v1073 = vmul.f32 %v520, %v1042
      %v1074 = vmul.f32 %v521, %v1042
      %v1075 = vmul.f32 %v522, %v1042
      %v1076 = vmul.f32 %v523, %v1042
      %v1077 = vmul.f32 %v524, %v1042
      %v1078 = vmul.f32 %v525, %v1042
      %v1079 = vmul.f32 %v526, %v1042
      %v1080 = vmul.f32 %v527, %v1042
      %v1081 = vmul.f32 %v528, %v1042
      %v1082 = vmul.f32 %v529, %v1042
      %v1083 = vmul.f32 %v530, %v1042
      %v1084 = vmul.f32 %v531, %v1042
      %v1085 = vmul.f32 %v532, %v1042
      %v1086 = vmul.f32 %v533, %v1042
      %v1087 = vmul.f32 %v534, %v1042
      %v1088 = vmul.f32 %v535, %v1042
      %v1089 = vmul.f32 %v536, %v1042
      %v1090 = vmul.f32 %v537, %v1042
      %vm1139 = vcmask 1046528
      %v1140 = vrot.slane %v1043, 1
      %v1141 = vrot.slane %v1044, 1
      %v1142 = vsel %vm1139, %v1140, %v1141
      %v1143 = vrot.slane %v1045, 1
      %v1144 = vsel %vm1139, %v1141, %v1143
      %v1145 = vrot.slane %v1046, 1
      %v1146 = vrot.slane %v1047, 1
      %v1147 = vsel %vm1139, %v1145, %v1146
      %v1148 = vrot.slane %v1048, 1
      %v1149 = vsel %vm1139, %v1146, %v1148
      %v1150 = vrot.slane %v1049, 1
      %v1151 = vrot.slane %v1050, 1
      %v1152 = vsel %vm1139, %v1150, %v1151
      %v1153 = vrot.slane %v1051, 1
      %v1154 = vsel %vm1139, %v1151, %v1153
      %v1155 = vrot.slane %v1052, 1
      %v1156 = vrot.slane %v1053, 1
      %v1157 = vsel %vm1139, %v1155, %v1156
      %v1158 = vrot.slane %v1054, 1
      %v1159 = vsel %vm1139, %v1156, %v1158
      %v1160 = vrot.slane %v1055, 1
      %v1161 = vrot.slane %v1056, 1
      %v1162 = vsel %vm1139, %v1160, %v1161
      %v1163 = vrot.slane %v1057, 1
      %v1164 = vsel %vm1139, %v1161, %v1163
      %v1165 = vrot.slane %v1058, 1
      %v1166 = vrot.slane %v1059, 1
      %v1167 = vsel %vm1139, %v1165, %v1166
      %v1168 = vrot.slane %v1060, 1
      %v1169 = vsel %vm1139, %v1166, %v1168
      %v1170 = vrot.slane %v1061, 1
      %v1171 = vrot.slane %v1062, 1
      %v1172 = vsel %vm1139, %v1170, %v1171
      %v1173 = vrot.slane %v1063, 1
      %v1174 = vsel %vm1139, %v1171, %v1173
      %v1175 = vrot.slane %v1064, 1
      %v1176 = vrot.slane %v1065, 1
      %v1177 = vsel %vm1139, %v1175, %v1176
      %v1178 = vrot.slane %v1066, 1
      %v1179 = vsel %vm1139, %v1176, %v1178
      %v1180 = vrot.slane %v1067, 1
      %v1181 = vrot.slane %v1068, 1
      %v1182 = vsel %vm1139, %v1180, %v1181
      %v1183 = vrot.slane %v1069, 1
      %v1184 = vsel %vm1139, %v1181, %v1183
      %v1185 = vrot.slane %v1070, 1
      %v1186 = vrot.slane %v1071, 1
      %v1187 = vsel %vm1139, %v1185, %v1186
      %v1188 = vrot.slane %v1072, 1
      %v1189 = vsel %vm1139, %v1186, %v1188
      %v1190 = vrot.slane %v1073, 1
      %v1191 = vrot.slane %v1074, 1
      %v1192 = vsel %vm1139, %v1190, %v1191
      %v1193 = vrot.slane %v1075, 1
      %v1194 = vsel %vm1139, %v1191, %v1193
      %v1195 = vrot.slane %v1076, 1
      %v1196 = vrot.slane %v1077, 1
      %v1197 = vsel %vm1139, %v1195, %v1196
      %v1198 = vrot.slane %v1078, 1
      %v1199 = vsel %vm1139, %v1196, %v1198
      %v1200 = vrot.slane %v1079, 1
      %v1201 = vrot.slane %v1080, 1
      %v1202 = vsel %vm1139, %v1200, %v1201
      %v1203 = vrot.slane %v1081, 1
      %v1204 = vsel %vm1139, %v1201, %v1203
      %v1205 = vrot.slane %v1082, 1
      %v1206 = vrot.slane %v1083, 1
      %v1207 = vsel %vm1139, %v1205, %v1206
      %v1208 = vrot.slane %v1084, 1
      %v1209 = vsel %vm1139, %v1206, %v1208
      %v1210 = vrot.slane %v1085, 1
      %v1211 = vrot.slane %v1086, 1
      %v1212 = vsel %vm1139, %v1210, %v1211
      %v1213 = vrot.slane %v1087, 1
      %v1214 = vsel %vm1139, %v1211, %v1213
      %v1215 = vrot.slane %v1088, 1
      %v1216 = vrot.slane %v1089, 1
      %v1217 = vsel %vm1139, %v1215, %v1216
      %v1218 = vrot.slane %v1090, 1
      %v1219 = vsel %vm1139, %v1216, %v1218
      %v1252 = vadd.f32 %v1007, %v1142
      %v1253 = vadd.f32 %v1008, %v1144
      %v1254 = vadd.f32 %v1009, %v1147
      %v1255 = vadd.f32 %v1010, %v1149
      %v1256 = vadd.f32 %v1011, %v1152
      %v1257 = vadd.f32 %v1012, %v1154
      %v1258 = vadd.f32 %v1013, %v1157
      %v1259 = vadd.f32 %v1014, %v1159
      %v1260 = vadd.f32 %v1015, %v1162
      %v1261 = vadd.f32 %v1016, %v1164
      %v1262 = vadd.f32 %v1017, %v1167
      %v1263 = vadd.f32 %v1018, %v1169
      %v1264 = vadd.f32 %v1019, %v1172
      %v1265 = vadd.f32 %v1020, %v1174
      %v1266 = vadd.f32 %v1021, %v1177
      %v1267 = vadd.f32 %v1022, %v1179
      %v1268 = vadd.f32 %v1023, %v1182
      %v1269 = vadd.f32 %v1024, %v1184
      %v1270 = vadd.f32 %v1025, %v1187
      %v1271 = vadd.f32 %v1026, %v1189
      %v1272 = vadd.f32 %v1027, %v1192
      %v1273 = vadd.f32 %v1028, %v1194
      %v1274 = vadd.f32 %v1029, %v1197
      %v1275 = vadd.f32 %v1030, %v1199
      %v1276 = vadd.f32 %v1031, %v1202
      %v1277 = vadd.f32 %v1032, %v1204
      %v1278 = vadd.f32 %v1033, %v1207
      %v1279 = vadd.f32 %v1034, %v1209
      %v1280 = vadd.f32 %v1035, %v1212
      %v1281 = vadd.f32 %v1036, %v1214
      %v1282 = vadd.f32 %v1037, %v1217
      %v1283 = vadd.f32 %v1038, %v1219
      %v1284 = vlaneseq
      %v1285 = vshrl.u32 %v1284, 7
      %v1286 = vsub.s32 0, %v1285
      %v1287 = vrot.slane %v557, %v1286
      %v1288 = vmul.f32 %v493, %v1287
      %v1289 = vmul.f32 %v494, %v1287
      %v1290 = vmul.f32 %v495, %v1287
      %v1291 = vmul.f32 %v496, %v1287
      %v1292 = vmul.f32 %v497, %v1287
      %v1293 = vmul.f32 %v498, %v1287
      %v1294 = vmul.f32 %v499, %v1287
      %v1295 = vmul.f32 %v500, %v1287
      %v1296 = vmul.f32 %v501, %v1287
      %v1297 = vmul.f32 %v502, %v1287
      %v1298 = vmul.f32 %v503, %v1287
      %v1299 = vmul.f32 %v504, %v1287
      %v1300 = vmul.f32 %v505, %v1287
      %v1301 = vmul.f32 %v506, %v1287
      %v1302 = vmul.f32 %v507, %v1287
      %v1303 = vmul.f32 %v508, %v1287
      %v1304 = vmul.f32 %v509, %v1287
      %v1305 = vmul.f32 %v510, %v1287
      %v1306 = vmul.f32 %v511, %v1287
      %v1307 = vmul.f32 %v512, %v1287
      %v1308 = vmul.f32 %v513, %v1287
      %v1309 = vmul.f32 %v514, %v1287
      %v1310 = vmul.f32 %v515, %v1287
      %v1311 = vmul.f32 %v516, %v1287
      %v1312 = vmul.f32 %v517, %v1287
      %v1313 = vmul.f32 %v518, %v1287
      %v1314 = vmul.f32 %v519, %v1287
      %v1315 = vmul.f32 %v520, %v1287
      %v1316 = vmul.f32 %v521, %v1287
      %v1317 = vmul.f32 %v522, %v1287
      %v1318 = vmul.f32 %v523, %v1287
      %v1319 = vmul.f32 %v524, %v1287
      %v1320 = vmul.f32 %v525, %v1287
      %v1321 = vmul.f32 %v526, %v1287
      %v1322 = vmul.f32 %v527, %v1287
      %v1323 = vmul.f32 %v528, %v1287
      %v1324 = vmul.f32 %v529, %v1287
      %v1325 = vmul.f32 %v530, %v1287
      %v1326 = vmul.f32 %v531, %v1287
      %v1327 = vmul.f32 %v532, %v1287
      %v1328 = vmul.f32 %v533, %v1287
      %v1329 = vmul.f32 %v534, %v1287
      %v1330 = vmul.f32 %v535, %v1287
      %v1331 = vmul.f32 %v536, %v1287
      %v1332 = vmul.f32 %v537, %v1287
      %v1333 = vmul.f32 %v538, %v1287
      %v1334 = vmul.f32 %v539, %v1287
      %v1335 = vmul.f32 %v540, %v1287
      %v1384 = vrot.slane %v1288, 1
      %v1385 = vrot.slane %v1289, 1
      %v1386 = vsel %vm1139, %v1384, %v1385
      %v1387 = vrot.slane %v1290, 1
      %v1388 = vsel %vm1139, %v1385, %v1387
      %v1389 = vrot.slane %v1291, 1
      %v1390 = vrot.slane %v1292, 1
      %v1391 = vsel %vm1139, %v1389, %v1390
      %v1392 = vrot.slane %v1293, 1
      %v1393 = vsel %vm1139, %v1390, %v1392
      %v1394 = vrot.slane %v1294, 1
      %v1395 = vrot.slane %v1295, 1
      %v1396 = vsel %vm1139, %v1394, %v1395
      %v1397 = vrot.slane %v1296, 1
      %v1398 = vsel %vm1139, %v1395, %v1397
      %v1399 = vrot.slane %v1297, 1
      %v1400 = vrot.slane %v1298, 1
      %v1401 = vsel %vm1139, %v1399, %v1400
      %v1402 = vrot.slane %v1299, 1
      %v1403 = vsel %vm1139, %v1400, %v1402
      %v1404 = vrot.slane %v1300, 1
      %v1405 = vrot.slane %v1301, 1
      %v1406 = vsel %vm1139, %v1404, %v1405
      %v1407 = vrot.slane %v1302, 1
      %v1408 = vsel %vm1139, %v1405, %v1407
      %v1409 = vrot.slane %v1303, 1
      %v1410 = vrot.slane %v1304, 1
      %v1411 = vsel %vm1139, %v1409, %v1410
      %v1412 = vrot.slane %v1305, 1
      %v1413 = vsel %vm1139, %v1410, %v1412
      %v1414 = vrot.slane %v1306, 1
      %v1415 = vrot.slane %v1307, 1
      %v1416 = vsel %vm1139, %v1414, %v1415
      %v1417 = vrot.slane %v1308, 1
      %v1418 = vsel %vm1139, %v1415, %v1417
      %v1419 = vrot.slane %v1309, 1
      %v1420 = vrot.slane %v1310, 1
      %v1421 = vsel %vm1139, %v1419, %v1420
      %v1422 = vrot.slane %v1311, 1
      %v1423 = vsel %vm1139, %v1420, %v1422
      %v1424 = vrot.slane %v1312, 1
      %v1425 = vrot.slane %v1313, 1
      %v1426 = vsel %vm1139, %v1424, %v1425
      %v1427 = vrot.slane %v1314, 1
      %v1428 = vsel %vm1139, %v1425, %v1427
      %v1429 = vrot.slane %v1315, 1
      %v1430 = vrot.slane %v1316, 1
      %v1431 = vsel %vm1139, %v1429, %v1430
      %v1432 = vrot.slane %v1317, 1
      %v1433 = vsel %vm1139, %v1430, %v1432
      %v1434 = vrot.slane %v1318, 1
      %v1435 = vrot.slane %v1319, 1
      %v1436 = vsel %vm1139, %v1434, %v1435
      %v1437 = vrot.slane %v1320, 1
      %v1438 = vsel %vm1139, %v1435, %v1437
      %v1439 = vrot.slane %v1321, 1
      %v1440 = vrot.slane %v1322, 1
      %v1441 = vsel %vm1139, %v1439, %v1440
      %v1442 = vrot.slane %v1323, 1
      %v1443 = vsel %vm1139, %v1440, %v1442
      %v1444 = vrot.slane %v1324, 1
      %v1445 = vrot.slane %v1325, 1
      %v1446 = vsel %vm1139, %v1444, %v1445
      %v1447 = vrot.slane %v1326, 1
      %v1448 = vsel %vm1139, %v1445, %v1447
      %v1449 = vrot.slane %v1327, 1
      %v1450 = vrot.slane %v1328, 1
      %v1451 = vsel %vm1139, %v1449, %v1450
      %v1452 = vrot.slane %v1329, 1
      %v1453 = vsel %vm1139, %v1450, %v1452
      %v1454 = vrot.slane %v1330, 1
      %v1455 = vrot.slane %v1331, 1
      %v1456 = vsel %vm1139, %v1454, %v1455
      %v1457 = vrot.slane %v1332, 1
      %v1458 = vsel %vm1139, %v1455, %v1457
      %v1459 = vrot.slane %v1333, 1
      %v1460 = vrot.slane %v1334, 1
      %v1461 = vsel %vm1139, %v1459, %v1460
      %v1462 = vrot.slane %v1335, 1
      %v1463 = vsel %vm1139, %v1460, %v1462
      %v1496 = vadd.f32 %v1252, %v1386
      %v1497 = vadd.f32 %v1253, %v1388
      %v1498 = vadd.f32 %v1254, %v1391
      %v1499 = vadd.f32 %v1255, %v1393
      %v1500 = vadd.f32 %v1256, %v1396
      %v1501 = vadd.f32 %v1257, %v1398
      %v1502 = vadd.f32 %v1258, %v1401
      %v1503 = vadd.f32 %v1259, %v1403
      %v1504 = vadd.f32 %v1260, %v1406
      %v1505 = vadd.f32 %v1261, %v1408
      %v1506 = vadd.f32 %v1262, %v1411
      %v1507 = vadd.f32 %v1263, %v1413
      %v1508 = vadd.f32 %v1264, %v1416
      %v1509 = vadd.f32 %v1265, %v1418
      %v1510 = vadd.f32 %v1266, %v1421
      %v1511 = vadd.f32 %v1267, %v1423
      %v1512 = vadd.f32 %v1268, %v1426
      %v1513 = vadd.f32 %v1269, %v1428
      %v1514 = vadd.f32 %v1270, %v1431
      %v1515 = vadd.f32 %v1271, %v1433
      %v1516 = vadd.f32 %v1272, %v1436
      %v1517 = vadd.f32 %v1273, %v1438
      %v1518 = vadd.f32 %v1274, %v1441
      %v1519 = vadd.f32 %v1275, %v1443
      %v1520 = vadd.f32 %v1276, %v1446
      %v1521 = vadd.f32 %v1277, %v1448
      %v1522 = vadd.f32 %v1278, %v1451
      %v1523 = vadd.f32 %v1279, %v1453
      %v1524 = vadd.f32 %v1280, %v1456
      %v1525 = vadd.f32 %v1281, %v1458
      %v1526 = vadd.f32 %v1282, %v1461
      %v1527 = vadd.f32 %v1283, %v1463
      %v1528 = vlaneseq
      %v1529 = vshrl.u32 %v1528, 7
      %v1530 = vsub.s32 7, %v1529
      %v1531 = vrot.slane %v557, %v1530
      %v1532 = vmul.f32 %v496, %v1531
      %v1533 = vmul.f32 %v497, %v1531
      %v1534 = vmul.f32 %v498, %v1531
      %v1535 = vmul.f32 %v499, %v1531
      %v1536 = vmul.f32 %v500, %v1531
      %v1537 = vmul.f32 %v501, %v1531
      %v1538 = vmul.f32 %v502, %v1531
      %v1539 = vmul.f32 %v503, %v1531
      %v1540 = vmul.f32 %v504, %v1531
      %v1541 = vmul.f32 %v505, %v1531
      %v1542 = vmul.f32 %v506, %v1531
      %v1543 = vmul.f32 %v507, %v1531
      %v1544 = vmul.f32 %v508, %v1531
      %v1545 = vmul.f32 %v509, %v1531
      %v1546 = vmul.f32 %v510, %v1531
      %v1547 = vmul.f32 %v511, %v1531
      %v1548 = vmul.f32 %v512, %v1531
      %v1549 = vmul.f32 %v513, %v1531
      %v1550 = vmul.f32 %v514, %v1531
      %v1551 = vmul.f32 %v515, %v1531
      %v1552 = vmul.f32 %v516, %v1531
      %v1553 = vmul.f32 %v517, %v1531
      %v1554 = vmul.f32 %v518, %v1531
      %v1555 = vmul.f32 %v519, %v1531
      %v1556 = vmul.f32 %v520, %v1531
      %v1557 = vmul.f32 %v521, %v1531
      %v1558 = vmul.f32 %v522, %v1531
      %v1559 = vmul.f32 %v523, %v1531
      %v1560 = vmul.f32 %v524, %v1531
      %v1561 = vmul.f32 %v525, %v1531
      %v1562 = vmul.f32 %v526, %v1531
      %v1563 = vmul.f32 %v527, %v1531
      %v1564 = vmul.f32 %v528, %v1531
      %v1565 = vmul.f32 %v529, %v1531
      %v1566 = vmul.f32 %v530, %v1531
      %v1567 = vmul.f32 %v531, %v1531
      %v1568 = vmul.f32 %v532, %v1531
      %v1569 = vmul.f32 %v533, %v1531
      %v1570 = vmul.f32 %v534, %v1531
      %v1571 = vmul.f32 %v535, %v1531
      %v1572 = vmul.f32 %v536, %v1531
      %v1573 = vmul.f32 %v537, %v1531
      %v1574 = vmul.f32 %v538, %v1531
      %v1575 = vmul.f32 %v539, %v1531
      %v1576 = vmul.f32 %v540, %v1531
      %v1577 = vmul.f32 %v541, %v1531
      %v1578 = vmul.f32 %v542, %v1531
      %v1579 = vmul.f32 %v543, %v1531
      %v1628 = vrot.slane %v1532, 1
      %v1629 = vrot.slane %v1533, 1
      %v1630 = vsel %vm1139, %v1628, %v1629
      %v1631 = vrot.slane %v1534, 1
      %v1632 = vsel %vm1139, %v1629, %v1631
      %v1633 = vrot.slane %v1535, 1
      %v1634 = vrot.slane %v1536, 1
      %v1635 = vsel %vm1139, %v1633, %v1634
      %v1636 = vrot.slane %v1537, 1
      %v1637 = vsel %vm1139, %v1634, %v1636
      %v1638 = vrot.slane %v1538, 1
      %v1639 = vrot.slane %v1539, 1
      %v1640 = vsel %vm1139, %v1638, %v1639
      %v1641 = vrot.slane %v1540, 1
      %v1642 = vsel %vm1139, %v1639, %v1641
      %v1643 = vrot.slane %v1541, 1
      %v1644 = vrot.slane %v1542, 1
      %v1645 = vsel %vm1139, %v1643, %v1644
      %v1646 = vrot.slane %v1543, 1
      %v1647 = vsel %vm1139, %v1644, %v1646
      %v1648 = vrot.slane %v1544, 1
      %v1649 = vrot.slane %v1545, 1
      %v1650 = vsel %vm1139, %v1648, %v1649
      %v1651 = vrot.slane %v1546, 1
      %v1652 = vsel %vm1139, %v1649, %v1651
      %v1653 = vrot.slane %v1547, 1
      %v1654 = vrot.slane %v1548, 1
      %v1655 = vsel %vm1139, %v1653, %v1654
      %v1656 = vrot.slane %v1549, 1
      %v1657 = vsel %vm1139, %v1654, %v1656
      %v1658 = vrot.slane %v1550, 1
      %v1659 = vrot.slane %v1551, 1
      %v1660 = vsel %vm1139, %v1658, %v1659
      %v1661 = vrot.slane %v1552, 1
      %v1662 = vsel %vm1139, %v1659, %v1661
      %v1663 = vrot.slane %v1553, 1
      %v1664 = vrot.slane %v1554, 1
      %v1665 = vsel %vm1139, %v1663, %v1664
      %v1666 = vrot.slane %v1555, 1
      %v1667 = vsel %vm1139, %v1664, %v1666
      %v1668 = vrot.slane %v1556, 1
      %v1669 = vrot.slane %v1557, 1
      %v1670 = vsel %vm1139, %v1668, %v1669
      %v1671 = vrot.slane %v1558, 1
      %v1672 = vsel %vm1139, %v1669, %v1671
      %v1673 = vrot.slane %v1559, 1
      %v1674 = vrot.slane %v1560, 1
      %v1675 = vsel %vm1139, %v1673, %v1674
      %v1676 = vrot.slane %v1561, 1
      %v1677 = vsel %vm1139, %v1674, %v1676
      %v1678 = vrot.slane %v1562, 1
      %v1679 = vrot.slane %v1563, 1
      %v1680 = vsel %vm1139, %v1678, %v1679
      %v1681 = vrot.slane %v1564, 1
      %v1682 = vsel %vm1139, %v1679, %v1681
      %v1683 = vrot.slane %v1565, 1
      %v1684 = vrot.slane %v1566, 1
      %v1685 = vsel %vm1139, %v1683, %v1684
      %v1686 = vrot.slane %v1567, 1
      %v1687 = vsel %vm1139, %v1684, %v1686
      %v1688 = vrot.slane %v1568, 1
      %v1689 = vrot.slane %v1569, 1
      %v1690 = vsel %vm1139, %v1688, %v1689
      %v1691 = vrot.slane %v1570, 1
      %v1692 = vsel %vm1139, %v1689, %v1691
      %v1693 = vrot.slane %v1571, 1
      %v1694 = vrot.slane %v1572, 1
      %v1695 = vsel %vm1139, %v1693, %v1694
      %v1696 = vrot.slane %v1573, 1
      %v1697 = vsel %vm1139, %v1694, %v1696
      %v1698 = vrot.slane %v1574, 1
      %v1699 = vrot.slane %v1575, 1
      %v1700 = vsel %vm1139, %v1698, %v1699
      %v1701 = vrot.slane %v1576, 1
      %v1702 = vsel %vm1139, %v1699, %v1701
      %v1703 = vrot.slane %v1577, 1
      %v1704 = vrot.slane %v1578, 1
      %v1705 = vsel %vm1139, %v1703, %v1704
      %v1706 = vrot.slane %v1579, 1
      %v1707 = vsel %vm1139, %v1704, %v1706
      %v1740 = vadd.f32 %v1496, %v1630
      %v1741 = vadd.f32 %v1497, %v1632
      %v1742 = vadd.f32 %v1498, %v1635
      %v1743 = vadd.f32 %v1499, %v1637
      %v1744 = vadd.f32 %v1500, %v1640
      %v1745 = vadd.f32 %v1501, %v1642
      %v1746 = vadd.f32 %v1502, %v1645
      %v1747 = vadd.f32 %v1503, %v1647
      %v1748 = vadd.f32 %v1504, %v1650
      %v1749 = vadd.f32 %v1505, %v1652
      %v1750 = vadd.f32 %v1506, %v1655
      %v1751 = vadd.f32 %v1507, %v1657
      %v1752 = vadd.f32 %v1508, %v1660
      %v1753 = vadd.f32 %v1509, %v1662
      %v1754 = vadd.f32 %v1510, %v1665
      %v1755 = vadd.f32 %v1511, %v1667
      %v1756 = vadd.f32 %v1512, %v1670
      %v1757 = vadd.f32 %v1513, %v1672
      %v1758 = vadd.f32 %v1514, %v1675
      %v1759 = vadd.f32 %v1515, %v1677
      %v1760 = vadd.f32 %v1516, %v1680
      %v1761 = vadd.f32 %v1517, %v1682
      %v1762 = vadd.f32 %v1518, %v1685
      %v1763 = vadd.f32 %v1519, %v1687
      %v1764 = vadd.f32 %v1520, %v1690
      %v1765 = vadd.f32 %v1521, %v1692
      %v1766 = vadd.f32 %v1522, %v1695
      %v1767 = vadd.f32 %v1523, %v1697
      %v1768 = vadd.f32 %v1524, %v1700
      %v1769 = vadd.f32 %v1525, %v1702
      %v1770 = vadd.f32 %v1526, %v1705
      %v1771 = vadd.f32 %v1527, %v1707
      %v1772 = vlaneseq
      %v1773 = vshrl.u32 %v1772, 7
      %v1774 = vsub.s32 6, %v1773
      %v1775 = vrot.slane %v558, %v1774
      %v1776 = vmul.f32 %v499, %v1775
      %v1777 = vmul.f32 %v500, %v1775
      %v1778 = vmul.f32 %v501, %v1775
      %v1779 = vmul.f32 %v502, %v1775
      %v1780 = vmul.f32 %v503, %v1775
      %v1781 = vmul.f32 %v504, %v1775
      %v1782 = vmul.f32 %v505, %v1775
      %v1783 = vmul.f32 %v506, %v1775
      %v1784 = vmul.f32 %v507, %v1775
      %v1785 = vmul.f32 %v508, %v1775
      %v1786 = vmul.f32 %v509, %v1775
      %v1787 = vmul.f32 %v510, %v1775
      %v1788 = vmul.f32 %v511, %v1775
      %v1789 = vmul.f32 %v512, %v1775
      %v1790 = vmul.f32 %v513, %v1775
      %v1791 = vmul.f32 %v514, %v1775
      %v1792 = vmul.f32 %v515, %v1775
      %v1793 = vmul.f32 %v516, %v1775
      %v1794 = vmul.f32 %v517, %v1775
      %v1795 = vmul.f32 %v518, %v1775
      %v1796 = vmul.f32 %v519, %v1775
      %v1797 = vmul.f32 %v520, %v1775
      %v1798 = vmul.f32 %v521, %v1775
      %v1799 = vmul.f32 %v522, %v1775
      %v1800 = vmul.f32 %v523, %v1775
      %v1801 = vmul.f32 %v524, %v1775
      %v1802 = vmul.f32 %v525, %v1775
      %v1803 = vmul.f32 %v526, %v1775
      %v1804 = vmul.f32 %v527, %v1775
      %v1805 = vmul.f32 %v528, %v1775
      %v1806 = vmul.f32 %v529, %v1775
      %v1807 = vmul.f32 %v530, %v1775
      %v1808 = vmul.f32 %v531, %v1775
      %v1809 = vmul.f32 %v532, %v1775
      %v1810 = vmul.f32 %v533, %v1775
      %v1811 = vmul.f32 %v534, %v1775
      %v1812 = vmul.f32 %v535, %v1775
      %v1813 = vmul.f32 %v536, %v1775
      %v1814 = vmul.f32 %v537, %v1775
      %v1815 = vmul.f32 %v538, %v1775
      %v1816 = vmul.f32 %v539, %v1775
      %v1817 = vmul.f32 %v540, %v1775
      %v1818 = vmul.f32 %v541, %v1775
      %v1819 = vmul.f32 %v542, %v1775
      %v1820 = vmul.f32 %v543, %v1775
      %v1821 = vmul.f32 %v544, %v1775
      %v1822 = vmul.f32 %v545, %v1775
      %v1823 = vmul.f32 %v546, %v1775
      %v1872 = vrot.slane %v1776, 1
      %v1873 = vrot.slane %v1777, 1
      %v1874 = vsel %vm1139, %v1872, %v1873
      %v1875 = vrot.slane %v1778, 1
      %v1876 = vsel %vm1139, %v1873, %v1875
      %v1877 = vrot.slane %v1779, 1
      %v1878 = vrot.slane %v1780, 1
      %v1879 = vsel %vm1139, %v1877, %v1878
      %v1880 = vrot.slane %v1781, 1
      %v1881 = vsel %vm1139, %v1878, %v1880
      %v1882 = vrot.slane %v1782, 1
      %v1883 = vrot.slane %v1783, 1
      %v1884 = vsel %vm1139, %v1882, %v1883
      %v1885 = vrot.slane %v1784, 1
      %v1886 = vsel %vm1139, %v1883, %v1885
      %v1887 = vrot.slane %v1785, 1
      %v1888 = vrot.slane %v1786, 1
      %v1889 = vsel %vm1139, %v1887, %v1888
      %v1890 = vrot.slane %v1787, 1
      %v1891 = vsel %vm1139, %v1888, %v1890
      %v1892 = vrot.slane %v1788, 1
      %v1893 = vrot.slane %v1789, 1
      %v1894 = vsel %vm1139, %v1892, %v1893
      %v1895 = vrot.slane %v1790, 1
      %v1896 = vsel %vm1139, %v1893, %v1895
      %v1897 = vrot.slane %v1791, 1
      %v1898 = vrot.slane %v1792, 1
      %v1899 = vsel %vm1139, %v1897, %v1898
      %v1900 = vrot.slane %v1793, 1
      %v1901 = vsel %vm1139, %v1898, %v1900
      %v1902 = vrot.slane %v1794, 1
      %v1903 = vrot.slane %v1795, 1
      %v1904 = vsel %vm1139, %v1902, %v1903
      %v1905 = vrot.slane %v1796, 1
      %v1906 = vsel %vm1139, %v1903, %v1905
      %v1907 = vrot.slane %v1797, 1
      %v1908 = vrot.slane %v1798, 1
      %v1909 = vsel %vm1139, %v1907, %v1908
      %v1910 = vrot.slane %v1799, 1
      %v1911 = vsel %vm1139, %v1908, %v1910
      %v1912 = vrot.slane %v1800, 1
      %v1913 = vrot.slane %v1801, 1
      %v1914 = vsel %vm1139, %v1912, %v1913
      %v1915 = vrot.slane %v1802, 1
      %v1916 = vsel %vm1139, %v1913, %v1915
      %v1917 = vrot.slane %v1803, 1
      %v1918 = vrot.slane %v1804, 1
      %v1919 = vsel %vm1139, %v1917, %v1918
      %v1920 = vrot.slane %v1805, 1
      %v1921 = vsel %vm1139, %v1918, %v1920
      %v1922 = vrot.slane %v1806, 1
      %v1923 = vrot.slane %v1807, 1
      %v1924 = vsel %vm1139, %v1922, %v1923
      %v1925 = vrot.slane %v1808, 1
      %v1926 = vsel %vm1139, %v1923, %v1925
      %v1927 = vrot.slane %v1809, 1
      %v1928 = vrot.slane %v1810, 1
      %v1929 = vsel %vm1139, %v1927, %v1928
      %v1930 = vrot.slane %v1811, 1
      %v1931 = vsel %vm1139, %v1928, %v1930
      %v1932 = vrot.slane %v1812, 1
      %v1933 = vrot.slane %v1813, 1
      %v1934 = vsel %vm1139, %v1932, %v1933
      %v1935 = vrot.slane %v1814, 1
      %v1936 = vsel %vm1139, %v1933, %v1935
      %v1937 = vrot.slane %v1815, 1
      %v1938 = vrot.slane %v1816, 1
      %v1939 = vsel %vm1139, %v1937, %v1938
      %v1940 = vrot.slane %v1817, 1
      %v1941 = vsel %vm1139, %v1938, %v1940
      %v1942 = vrot.slane %v1818, 1
      %v1943 = vrot.slane %v1819, 1
      %v1944 = vsel %vm1139, %v1942, %v1943
      %v1945 = vrot.slane %v1820, 1
      %v1946 = vsel %vm1139, %v1943, %v1945
      %v1947 = vrot.slane %v1821, 1
      %v1948 = vrot.slane %v1822, 1
      %v1949 = vsel %vm1139, %v1947, %v1948
      %v1950 = vrot.slane %v1823, 1
      %v1951 = vsel %vm1139, %v1948, %v1950
      %v1984 = vadd.f32 %v1740, %v1874
      %v1985 = vadd.f32 %v1741, %v1876
      %v1986 = vadd.f32 %v1742, %v1879
      %v1987 = vadd.f32 %v1743, %v1881
      %v1988 = vadd.f32 %v1744, %v1884
      %v1989 = vadd.f32 %v1745, %v1886
      %v1990 = vadd.f32 %v1746, %v1889
      %v1991 = vadd.f32 %v1747, %v1891
      %v1992 = vadd.f32 %v1748, %v1894
      %v1993 = vadd.f32 %v1749, %v1896
      %v1994 = vadd.f32 %v1750, %v1899
      %v1995 = vadd.f32 %v1751, %v1901
      %v1996 = vadd.f32 %v1752, %v1904
      %v1997 = vadd.f32 %v1753, %v1906
      %v1998 = vadd.f32 %v1754, %v1909
      %v1999 = vadd.f32 %v1755, %v1911
      %v2000 = vadd.f32 %v1756, %v1914
      %v2001 = vadd.f32 %v1757, %v1916
      %v2002 = vadd.f32 %v1758, %v1919
      %v2003 = vadd.f32 %v1759, %v1921
      %v2004 = vadd.f32 %v1760, %v1924
      %v2005 = vadd.f32 %v1761, %v1926
      %v2006 = vadd.f32 %v1762, %v1929
      %v2007 = vadd.f32 %v1763, %v1931
      %v2008 = vadd.f32 %v1764, %v1934
      %v2009 = vadd.f32 %v1765, %v1936
      %v2010 = vadd.f32 %v1766, %v1939
      %v2011 = vadd.f32 %v1767, %v1941
      %v2012 = vadd.f32 %v1768, %v1944
      %v2013 = vadd.f32 %v1769, %v1946
      %v2014 = vadd.f32 %v1770, %v1949
      %v2015 = vadd.f32 %v1771, %v1951
      %v2016 = vlaneseq
      %v2017 = vshrl.u32 %v2016, 7
      %v2018 = vsub.s32 5, %v2017
      %v2019 = vrot.slane %v559, %v2018
      %v2020 = vmul.f32 %v502, %v2019
      %v2021 = vmul.f32 %v503, %v2019
      %v2022 = vmul.f32 %v504, %v2019
      %v2023 = vmul.f32 %v505, %v2019
      %v2024 = vmul.f32 %v506, %v2019
      %v2025 = vmul.f32 %v507, %v2019
      %v2026 = vmul.f32 %v508, %v2019
      %v2027 = vmul.f32 %v509, %v2019
      %v2028 = vmul.f32 %v510, %v2019
      %v2029 = vmul.f32 %v511, %v2019
      %v2030 = vmul.f32 %v512, %v2019
      %v2031 = vmul.f32 %v513, %v2019
      %v2032 = vmul.f32 %v514, %v2019
      %v2033 = vmul.f32 %v515, %v2019
      %v2034 = vmul.f32 %v516, %v2019
      %v2035 = vmul.f32 %v517, %v2019
      %v2036 = vmul.f32 %v518, %v2019
      %v2037 = vmul.f32 %v519, %v2019
      %v2038 = vmul.f32 %v520, %v2019
      %v2039 = vmul.f32 %v521, %v2019
      %v2040 = vmul.f32 %v522, %v2019
      %v2041 = vmul.f32 %v523, %v2019
      %v2042 = vmul.f32 %v524, %v2019
      %v2043 = vmul.f32 %v525, %v2019
      %v2044 = vmul.f32 %v526, %v2019
      %v2045 = vmul.f32 %v527, %v2019
      %v2046 = vmul.f32 %v528, %v2019
      %v2047 = vmul.f32 %v529, %v2019
      %v2048 = vmul.f32 %v530, %v2019
      %v2049 = vmul.f32 %v531, %v2019
      %v2050 = vmul.f32 %v532, %v2019
      %v2051 = vmul.f32 %v533, %v2019
      %v2052 = vmul.f32 %v534, %v2019
      %v2053 = vmul.f32 %v535, %v2019
      %v2054 = vmul.f32 %v536, %v2019
      %v2055 = vmul.f32 %v537, %v2019
      %v2056 = vmul.f32 %v538, %v2019
      %v2057 = vmul.f32 %v539, %v2019
      %v2058 = vmul.f32 %v540, %v2019
      %v2059 = vmul.f32 %v541, %v2019
      %v2060 = vmul.f32 %v542, %v2019
      %v2061 = vmul.f32 %v543, %v2019
      %v2062 = vmul.f32 %v544, %v2019
      %v2063 = vmul.f32 %v545, %v2019
      %v2064 = vmul.f32 %v546, %v2019
      %v2065 = vmul.f32 %v547, %v2019
      %v2066 = vmul.f32 %v548, %v2019
      %v2067 = vmul.f32 %v549, %v2019
      %v2116 = vrot.slane %v2020, 1
      %v2117 = vrot.slane %v2021, 1
      %v2118 = vsel %vm1139, %v2116, %v2117
      %v2119 = vrot.slane %v2022, 1
      %v2120 = vsel %vm1139, %v2117, %v2119
      %v2121 = vrot.slane %v2023, 1
      %v2122 = vrot.slane %v2024, 1
      %v2123 = vsel %vm1139, %v2121, %v2122
      %v2124 = vrot.slane %v2025, 1
      %v2125 = vsel %vm1139, %v2122, %v2124
      %v2126 = vrot.slane %v2026, 1
      %v2127 = vrot.slane %v2027, 1
      %v2128 = vsel %vm1139, %v2126, %v2127
      %v2129 = vrot.slane %v2028, 1
      %v2130 = vsel %vm1139, %v2127, %v2129
      %v2131 = vrot.slane %v2029, 1
      %v2132 = vrot.slane %v2030, 1
      %v2133 = vsel %vm1139, %v2131, %v2132
      %v2134 = vrot.slane %v2031, 1
      %v2135 = vsel %vm1139, %v2132, %v2134
      %v2136 = vrot.slane %v2032, 1
      %v2137 = vrot.slane %v2033, 1
      %v2138 = vsel %vm1139, %v2136, %v2137
      %v2139 = vrot.slane %v2034, 1
      %v2140 = vsel %vm1139, %v2137, %v2139
      %v2141 = vrot.slane %v2035, 1
      %v2142 = vrot.slane %v2036, 1
      %v2143 = vsel %vm1139, %v2141, %v2142
      %v2144 = vrot.slane %v2037, 1
      %v2145 = vsel %vm1139, %v2142, %v2144
      %v2146 = vrot.slane %v2038, 1
      %v2147 = vrot.slane %v2039, 1
      %v2148 = vsel %vm1139, %v2146, %v2147
      %v2149 = vrot.slane %v2040, 1
      %v2150 = vsel %vm1139, %v2147, %v2149
      %v2151 = vrot.slane %v2041, 1
      %v2152 = vrot.slane %v2042, 1
      %v2153 = vsel %vm1139, %v2151, %v2152
      %v2154 = vrot.slane %v2043, 1
      %v2155 = vsel %vm1139, %v2152, %v2154
      %v2156 = vrot.slane %v2044, 1
      %v2157 = vrot.slane %v2045, 1
      %v2158 = vsel %vm1139, %v2156, %v2157
      %v2159 = vrot.slane %v2046, 1
      %v2160 = vsel %vm1139, %v2157, %v2159
      %v2161 = vrot.slane %v2047, 1
      %v2162 = vrot.slane %v2048, 1
      %v2163 = vsel %vm1139, %v2161, %v2162
      %v2164 = vrot.slane %v2049, 1
      %v2165 = vsel %vm1139, %v2162, %v2164
      %v2166 = vrot.slane %v2050, 1
      %v2167 = vrot.slane %v2051, 1
      %v2168 = vsel %vm1139, %v2166, %v2167
      %v2169 = vrot.slane %v2052, 1
      %v2170 = vsel %vm1139, %v2167, %v2169
      %v2171 = vrot.slane %v2053, 1
      %v2172 = vrot.slane %v2054, 1
      %v2173 = vsel %vm1139, %v2171, %v2172
      %v2174 = vrot.slane %v2055, 1
      %v2175 = vsel %vm1139, %v2172, %v2174
      %v2176 = vrot.slane %v2056, 1
      %v2177 = vrot.slane %v2057, 1
      %v2178 = vsel %vm1139, %v2176, %v2177
      %v2179 = vrot.slane %v2058, 1
      %v2180 = vsel %vm1139, %v2177, %v2179
      %v2181 = vrot.slane %v2059, 1
      %v2182 = vrot.slane %v2060, 1
      %v2183 = vsel %vm1139, %v2181, %v2182
      %v2184 = vrot.slane %v2061, 1
      %v2185 = vsel %vm1139, %v2182, %v2184
      %v2186 = vrot.slane %v2062, 1
      %v2187 = vrot.slane %v2063, 1
      %v2188 = vsel %vm1139, %v2186, %v2187
      %v2189 = vrot.slane %v2064, 1
      %v2190 = vsel %vm1139, %v2187, %v2189
      %v2191 = vrot.slane %v2065, 1
      %v2192 = vrot.slane %v2066, 1
      %v2193 = vsel %vm1139, %v2191, %v2192
      %v2194 = vrot.slane %v2067, 1
      %v2195 = vsel %vm1139, %v2192, %v2194
      %v2228 = vadd.f32 %v1984, %v2118
      %v2229 = vadd.f32 %v1985, %v2120
      %v2230 = vadd.f32 %v1986, %v2123
      %v2231 = vadd.f32 %v1987, %v2125
      %v2232 = vadd.f32 %v1988, %v2128
      %v2233 = vadd.f32 %v1989, %v2130
      %v2234 = vadd.f32 %v1990, %v2133
      %v2235 = vadd.f32 %v1991, %v2135
      %v2236 = vadd.f32 %v1992, %v2138
      %v2237 = vadd.f32 %v1993, %v2140
      %v2238 = vadd.f32 %v1994, %v2143
      %v2239 = vadd.f32 %v1995, %v2145
      %v2240 = vadd.f32 %v1996, %v2148
      %v2241 = vadd.f32 %v1997, %v2150
      %v2242 = vadd.f32 %v1998, %v2153
      %v2243 = vadd.f32 %v1999, %v2155
      %v2244 = vadd.f32 %v2000, %v2158
      %v2245 = vadd.f32 %v2001, %v2160
      %v2246 = vadd.f32 %v2002, %v2163
      %v2247 = vadd.f32 %v2003, %v2165
      %v2248 = vadd.f32 %v2004, %v2168
      %v2249 = vadd.f32 %v2005, %v2170
      %v2250 = vadd.f32 %v2006, %v2173
      %v2251 = vadd.f32 %v2007, %v2175
      %v2252 = vadd.f32 %v2008, %v2178
      %v2253 = vadd.f32 %v2009, %v2180
      %v2254 = vadd.f32 %v2010, %v2183
      %v2255 = vadd.f32 %v2011, %v2185
      %v2256 = vadd.f32 %v2012, %v2188
      %v2257 = vadd.f32 %v2013, %v2190
      %v2258 = vadd.f32 %v2014, %v2193
      %v2259 = vadd.f32 %v2015, %v2195
      %v2260 = vlaneseq
      %v2261 = vshrl.u32 %v2260, 7
      %v2262 = vsub.s32 4, %v2261
      %v2263 = vrot.slane %v560, %v2262
      %v2264 = vmul.f32 %v505, %v2263
      %v2265 = vmul.f32 %v506, %v2263
      %v2266 = vmul.f32 %v507, %v2263
      %v2267 = vmul.f32 %v508, %v2263
      %v2268 = vmul.f32 %v509, %v2263
      %v2269 = vmul.f32 %v510, %v2263
      %v2270 = vmul.f32 %v511, %v2263
      %v2271 = vmul.f32 %v512, %v2263
      %v2272 = vmul.f32 %v513, %v2263
      %v2273 = vmul.f32 %v514, %v2263
      %v2274 = vmul.f32 %v515, %v2263
      %v2275 = vmul.f32 %v516, %v2263
      %v2276 = vmul.f32 %v517, %v2263
      %v2277 = vmul.f32 %v518, %v2263
      %v2278 = vmul.f32 %v519, %v2263
      %v2279 = vmul.f32 %v520, %v2263
      %v2280 = vmul.f32 %v521, %v2263
      %v2281 = vmul.f32 %v522, %v2263
      %v2282 = vmul.f32 %v523, %v2263
      %v2283 = vmul.f32 %v524, %v2263
      %v2284 = vmul.f32 %v525, %v2263
      %v2285 = vmul.f32 %v526, %v2263
      %v2286 = vmul.f32 %v527, %v2263
      %v2287 = vmul.f32 %v528, %v2263
      %v2288 = vmul.f32 %v529, %v2263
      %v2289 = vmul.f32 %v530, %v2263
      %v2290 = vmul.f32 %v531, %v2263
      %v2291 = vmul.f32 %v532, %v2263
      %v2292 = vmul.f32 %v533, %v2263
      %v2293 = vmul.f32 %v534, %v2263
      %v2294 = vmul.f32 %v535, %v2263
      %v2295 = vmul.f32 %v536, %v2263
      %v2296 = vmul.f32 %v537, %v2263
      %v2297 = vmul.f32 %v538, %v2263
      %v2298 = vmul.f32 %v539, %v2263
      %v2299 = vmul.f32 %v540, %v2263
      %v2300 = vmul.f32 %v541, %v2263
      %v2301 = vmul.f32 %v542, %v2263
      %v2302 = vmul.f32 %v543, %v2263
      %v2303 = vmul.f32 %v544, %v2263
      %v2304 = vmul.f32 %v545, %v2263
      %v2305 = vmul.f32 %v546, %v2263
      %v2306 = vmul.f32 %v547, %v2263
      %v2307 = vmul.f32 %v548, %v2263
      %v2308 = vmul.f32 %v549, %v2263
      %v2309 = vmul.f32 %v550, %v2263
      %v2310 = vmul.f32 %v551, %v2263
      %v2311 = vmul.f32 %v552, %v2263
      %v2360 = vrot.slane %v2264, 1
      %v2361 = vrot.slane %v2265, 1
      %v2362 = vsel %vm1139, %v2360, %v2361
      %v2363 = vrot.slane %v2266, 1
      %v2364 = vsel %vm1139, %v2361, %v2363
      %v2365 = vrot.slane %v2267, 1
      %v2366 = vrot.slane %v2268, 1
      %v2367 = vsel %vm1139, %v2365, %v2366
      %v2368 = vrot.slane %v2269, 1
      %v2369 = vsel %vm1139, %v2366, %v2368
      %v2370 = vrot.slane %v2270, 1
      %v2371 = vrot.slane %v2271, 1
      %v2372 = vsel %vm1139, %v2370, %v2371
      %v2373 = vrot.slane %v2272, 1
      %v2374 = vsel %vm1139, %v2371, %v2373
      %v2375 = vrot.slane %v2273, 1
      %v2376 = vrot.slane %v2274, 1
      %v2377 = vsel %vm1139, %v2375, %v2376
      %v2378 = vrot.slane %v2275, 1
      %v2379 = vsel %vm1139, %v2376, %v2378
      %v2380 = vrot.slane %v2276, 1
      %v2381 = vrot.slane %v2277, 1
      %v2382 = vsel %vm1139, %v2380, %v2381
      %v2383 = vrot.slane %v2278, 1
      %v2384 = vsel %vm1139, %v2381, %v2383
      %v2385 = vrot.slane %v2279, 1
      %v2386 = vrot.slane %v2280, 1
      %v2387 = vsel %vm1139, %v2385, %v2386
      %v2388 = vrot.slane %v2281, 1
      %v2389 = vsel %vm1139, %v2386, %v2388
      %v2390 = vrot.slane %v2282, 1
      %v2391 = vrot.slane %v2283, 1
      %v2392 = vsel %vm1139, %v2390, %v2391
      %v2393 = vrot.slane %v2284, 1
      %v2394 = vsel %vm1139, %v2391, %v2393
      %v2395 = vrot.slane %v2285, 1
      %v2396 = vrot.slane %v2286, 1
      %v2397 = vsel %vm1139, %v2395, %v2396
      %v2398 = vrot.slane %v2287, 1
      %v2399 = vsel %vm1139, %v2396, %v2398
      %v2400 = vrot.slane %v2288, 1
      %v2401 = vrot.slane %v2289, 1
      %v2402 = vsel %vm1139, %v2400, %v2401
      %v2403 = vrot.slane %v2290, 1
      %v2404 = vsel %vm1139, %v2401, %v2403
      %v2405 = vrot.slane %v2291, 1
      %v2406 = vrot.slane %v2292, 1
      %v2407 = vsel %vm1139, %v2405, %v2406
      %v2408 = vrot.slane %v2293, 1
      %v2409 = vsel %vm1139, %v2406, %v2408
      %v2410 = vrot.slane %v2294, 1
      %v2411 = vrot.slane %v2295, 1
      %v2412 = vsel %vm1139, %v2410, %v2411
      %v2413 = vrot.slane %v2296, 1
      %v2414 = vsel %vm1139, %v2411, %v2413
      %v2415 = vrot.slane %v2297, 1
      %v2416 = vrot.slane %v2298, 1
      %v2417 = vsel %vm1139, %v2415, %v2416
      %v2418 = vrot.slane %v2299, 1
      %v2419 = vsel %vm1139, %v2416, %v2418
      %v2420 = vrot.slane %v2300, 1
      %v2421 = vrot.slane %v2301, 1
      %v2422 = vsel %vm1139, %v2420, %v2421
      %v2423 = vrot.slane %v2302, 1
      %v2424 = vsel %vm1139, %v2421, %v2423
      %v2425 = vrot.slane %v2303, 1
      %v2426 = vrot.slane %v2304, 1
      %v2427 = vsel %vm1139, %v2425, %v2426
      %v2428 = vrot.slane %v2305, 1
      %v2429 = vsel %vm1139, %v2426, %v2428
      %v2430 = vrot.slane %v2306, 1
      %v2431 = vrot.slane %v2307, 1
      %v2432 = vsel %vm1139, %v2430, %v2431
      %v2433 = vrot.slane %v2308, 1
      %v2434 = vsel %vm1139, %v2431, %v2433
      %v2435 = vrot.slane %v2309, 1
      %v2436 = vrot.slane %v2310, 1
      %v2437 = vsel %vm1139, %v2435, %v2436
      %v2438 = vrot.slane %v2311, 1
      %v2439 = vsel %vm1139, %v2436, %v2438
      %v2472 = vadd.f32 %v2228, %v2362
      %v2473 = vadd.f32 %v2229, %v2364
      %v2474 = vadd.f32 %v2230, %v2367
      %v2475 = vadd.f32 %v2231, %v2369
      %v2476 = vadd.f32 %v2232, %v2372
      %v2477 = vadd.f32 %v2233, %v2374
      %v2478 = vadd.f32 %v2234, %v2377
      %v2479 = vadd.f32 %v2235, %v2379
      %v2480 = vadd.f32 %v2236, %v2382
      %v2481 = vadd.f32 %v2237, %v2384
      %v2482 = vadd.f32 %v2238, %v2387
      %v2483 = vadd.f32 %v2239, %v2389
      %v2484 = vadd.f32 %v2240, %v2392
      %v2485 = vadd.f32 %v2241, %v2394
      %v2486 = vadd.f32 %v2242, %v2397
      %v2487 = vadd.f32 %v2243, %v2399
      %v2488 = vadd.f32 %v2244, %v2402
      %v2489 = vadd.f32 %v2245, %v2404
      %v2490 = vadd.f32 %v2246, %v2407
      %v2491 = vadd.f32 %v2247, %v2409
      %v2492 = vadd.f32 %v2248, %v2412
      %v2493 = vadd.f32 %v2249, %v2414
      %v2494 = vadd.f32 %v2250, %v2417
      %v2495 = vadd.f32 %v2251, %v2419
      %v2496 = vadd.f32 %v2252, %v2422
      %v2497 = vadd.f32 %v2253, %v2424
      %v2498 = vadd.f32 %v2254, %v2427
      %v2499 = vadd.f32 %v2255, %v2429
      %v2500 = vadd.f32 %v2256, %v2432
      %v2501 = vadd.f32 %v2257, %v2434
      %v2502 = vadd.f32 %v2258, %v2437
      %v2503 = vadd.f32 %v2259, %v2439
      %v2504 = vlaneseq
      %v2505 = vshrl.u32 %v2504, 7
      %v2506 = vsub.s32 3, %v2505
      %v2507 = vrot.slane %v561, %v2506
      %v2508 = vmul.f32 %v508, %v2507
      %v2509 = vmul.f32 %v509, %v2507
      %v2510 = vmul.f32 %v510, %v2507
      %v2511 = vmul.f32 %v511, %v2507
      %v2512 = vmul.f32 %v512, %v2507
      %v2513 = vmul.f32 %v513, %v2507
      %v2514 = vmul.f32 %v514, %v2507
      %v2515 = vmul.f32 %v515, %v2507
      %v2516 = vmul.f32 %v516, %v2507
      %v2517 = vmul.f32 %v517, %v2507
      %v2518 = vmul.f32 %v518, %v2507
      %v2519 = vmul.f32 %v519, %v2507
      %v2520 = vmul.f32 %v520, %v2507
      %v2521 = vmul.f32 %v521, %v2507
      %v2522 = vmul.f32 %v522, %v2507
      %v2523 = vmul.f32 %v523, %v2507
      %v2524 = vmul.f32 %v524, %v2507
      %v2525 = vmul.f32 %v525, %v2507
      %v2526 = vmul.f32 %v526, %v2507
      %v2527 = vmul.f32 %v527, %v2507
      %v2528 = vmul.f32 %v528, %v2507
      %v2529 = vmul.f32 %v529, %v2507
      %v2530 = vmul.f32 %v530, %v2507
      %v2531 = vmul.f32 %v531, %v2507
      %v2532 = vmul.f32 %v532, %v2507
      %v2533 = vmul.f32 %v533, %v2507
      %v2534 = vmul.f32 %v534, %v2507
      %v2535 = vmul.f32 %v535, %v2507
      %v2536 = vmul.f32 %v536, %v2507
      %v2537 = vmul.f32 %v537, %v2507
      %v2538 = vmul.f32 %v538, %v2507
      %v2539 = vmul.f32 %v539, %v2507
      %v2540 = vmul.f32 %v540, %v2507
      %v2541 = vmul.f32 %v541, %v2507
      %v2542 = vmul.f32 %v542, %v2507
      %v2543 = vmul.f32 %v543, %v2507
      %v2544 = vmul.f32 %v544, %v2507
      %v2545 = vmul.f32 %v545, %v2507
      %v2546 = vmul.f32 %v546, %v2507
      %v2547 = vmul.f32 %v547, %v2507
      %v2548 = vmul.f32 %v548, %v2507
      %v2549 = vmul.f32 %v549, %v2507
      %v2550 = vmul.f32 %v550, %v2507
      %v2551 = vmul.f32 %v551, %v2507
      %v2552 = vmul.f32 %v552, %v2507
      %v2553 = vmul.f32 %v553, %v2507
      %v2554 = vmul.f32 %v554, %v2507
      %v2555 = vmul.f32 %v555, %v2507
      %v2604 = vrot.slane %v2508, 1
      %v2605 = vrot.slane %v2509, 1
      %v2606 = vsel %vm1139, %v2604, %v2605
      %v2607 = vrot.slane %v2510, 1
      %v2608 = vsel %vm1139, %v2605, %v2607
      %v2609 = vrot.slane %v2511, 1
      %v2610 = vrot.slane %v2512, 1
      %v2611 = vsel %vm1139, %v2609, %v2610
      %v2612 = vrot.slane %v2513, 1
      %v2613 = vsel %vm1139, %v2610, %v2612
      %v2614 = vrot.slane %v2514, 1
      %v2615 = vrot.slane %v2515, 1
      %v2616 = vsel %vm1139, %v2614, %v2615
      %v2617 = vrot.slane %v2516, 1
      %v2618 = vsel %vm1139, %v2615, %v2617
      %v2619 = vrot.slane %v2517, 1
      %v2620 = vrot.slane %v2518, 1
      %v2621 = vsel %vm1139, %v2619, %v2620
      %v2622 = vrot.slane %v2519, 1
      %v2623 = vsel %vm1139, %v2620, %v2622
      %v2624 = vrot.slane %v2520, 1
      %v2625 = vrot.slane %v2521, 1
      %v2626 = vsel %vm1139, %v2624, %v2625
      %v2627 = vrot.slane %v2522, 1
      %v2628 = vsel %vm1139, %v2625, %v2627
      %v2629 = vrot.slane %v2523, 1
      %v2630 = vrot.slane %v2524, 1
      %v2631 = vsel %vm1139, %v2629, %v2630
      %v2632 = vrot.slane %v2525, 1
      %v2633 = vsel %vm1139, %v2630, %v2632
      %v2634 = vrot.slane %v2526, 1
      %v2635 = vrot.slane %v2527, 1
      %v2636 = vsel %vm1139, %v2634, %v2635
      %v2637 = vrot.slane %v2528, 1
      %v2638 = vsel %vm1139, %v2635, %v2637
      %v2639 = vrot.slane %v2529, 1
      %v2640 = vrot.slane %v2530, 1
      %v2641 = vsel %vm1139, %v2639, %v2640
      %v2642 = vrot.slane %v2531, 1
      %v2643 = vsel %vm1139, %v2640, %v2642
      %v2644 = vrot.slane %v2532, 1
      %v2645 = vrot.slane %v2533, 1
      %v2646 = vsel %vm1139, %v2644, %v2645
      %v2647 = vrot.slane %v2534, 1
      %v2648 = vsel %vm1139, %v2645, %v2647
      %v2649 = vrot.slane %v2535, 1
      %v2650 = vrot.slane %v2536, 1
      %v2651 = vsel %vm1139, %v2649, %v2650
      %v2652 = vrot.slane %v2537, 1
      %v2653 = vsel %vm1139, %v2650, %v2652
      %v2654 = vrot.slane %v2538, 1
      %v2655 = vrot.slane %v2539, 1
      %v2656 = vsel %vm1139, %v2654, %v2655
      %v2657 = vrot.slane %v2540, 1
      %v2658 = vsel %vm1139, %v2655, %v2657
      %v2659 = vrot.slane %v2541, 1
      %v2660 = vrot.slane %v2542, 1
      %v2661 = vsel %vm1139, %v2659, %v2660
      %v2662 = vrot.slane %v2543, 1
      %v2663 = vsel %vm1139, %v2660, %v2662
      %v2664 = vrot.slane %v2544, 1
      %v2665 = vrot.slane %v2545, 1
      %v2666 = vsel %vm1139, %v2664, %v2665
      %v2667 = vrot.slane %v2546, 1
      %v2668 = vsel %vm1139, %v2665, %v2667
      %v2669 = vrot.slane %v2547, 1
      %v2670 = vrot.slane %v2548, 1
      %v2671 = vsel %vm1139, %v2669, %v2670
      %v2672 = vrot.slane %v2549, 1
      %v2673 = vsel %vm1139, %v2670, %v2672
      %v2674 = vrot.slane %v2550, 1
      %v2675 = vrot.slane %v2551, 1
      %v2676 = vsel %vm1139, %v2674, %v2675
      %v2677 = vrot.slane %v2552, 1
      %v2678 = vsel %vm1139, %v2675, %v2677
      %v2679 = vrot.slane %v2553, 1
      %v2680 = vrot.slane %v2554, 1
      %v2681 = vsel %vm1139, %v2679, %v2680
      %v2682 = vrot.slane %v2555, 1
      %v2683 = vsel %vm1139, %v2680, %v2682
      %v2716 = vadd.f32 %v2472, %v2606
      %v2717 = vadd.f32 %v2473, %v2608
      %v2718 = vadd.f32 %v2474, %v2611
      %v2719 = vadd.f32 %v2475, %v2613
      %v2720 = vadd.f32 %v2476, %v2616
      %v2721 = vadd.f32 %v2477, %v2618
      %v2722 = vadd.f32 %v2478, %v2621
      %v2723 = vadd.f32 %v2479, %v2623
      %v2724 = vadd.f32 %v2480, %v2626
      %v2725 = vadd.f32 %v2481, %v2628
      %v2726 = vadd.f32 %v2482, %v2631
      %v2727 = vadd.f32 %v2483, %v2633
      %v2728 = vadd.f32 %v2484, %v2636
      %v2729 = vadd.f32 %v2485, %v2638
      %v2730 = vadd.f32 %v2486, %v2641
      %v2731 = vadd.f32 %v2487, %v2643
      %v2732 = vadd.f32 %v2488, %v2646
      %v2733 = vadd.f32 %v2489, %v2648
      %v2734 = vadd.f32 %v2490, %v2651
      %v2735 = vadd.f32 %v2491, %v2653
      %v2736 = vadd.f32 %v2492, %v2656
      %v2737 = vadd.f32 %v2493, %v2658
      %v2738 = vadd.f32 %v2494, %v2661
      %v2739 = vadd.f32 %v2495, %v2663
      %v2740 = vadd.f32 %v2496, %v2666
      %v2741 = vadd.f32 %v2497, %v2668
      %v2742 = vadd.f32 %v2498, %v2671
      %v2743 = vadd.f32 %v2499, %v2673
      %v2744 = vadd.f32 %v2500, %v2676
      %v2745 = vadd.f32 %v2501, %v2678
      %v2746 = vadd.f32 %v2502, %v2681
      %v2747 = vadd.f32 %v2503, %v2683
      %v2748 = vlaneseq
      %v2749 = vshrl.u32 %v2748, 7
      %v2750 = vsub.s32 2, %v2749
      %v2751 = vrot.slane %v556, %v2750
      %v2752 = vmul.f32 %v490, %v2751
      %v2753 = vmul.f32 %v491, %v2751
      %v2754 = vmul.f32 %v492, %v2751
      %v2755 = vmul.f32 %v493, %v2751
      %v2756 = vmul.f32 %v494, %v2751
      %v2757 = vmul.f32 %v495, %v2751
      %v2758 = vmul.f32 %v496, %v2751
      %v2759 = vmul.f32 %v497, %v2751
      %v2760 = vmul.f32 %v498, %v2751
      %v2761 = vmul.f32 %v499, %v2751
      %v2762 = vmul.f32 %v500, %v2751
      %v2763 = vmul.f32 %v501, %v2751
      %v2764 = vmul.f32 %v502, %v2751
      %v2765 = vmul.f32 %v503, %v2751
      %v2766 = vmul.f32 %v504, %v2751
      %v2767 = vmul.f32 %v505, %v2751
      %v2768 = vmul.f32 %v506, %v2751
      %v2769 = vmul.f32 %v507, %v2751
      %v2770 = vmul.f32 %v508, %v2751
      %v2771 = vmul.f32 %v509, %v2751
      %v2772 = vmul.f32 %v510, %v2751
      %v2773 = vmul.f32 %v511, %v2751
      %v2774 = vmul.f32 %v512, %v2751
      %v2775 = vmul.f32 %v513, %v2751
      %v2776 = vmul.f32 %v514, %v2751
      %v2777 = vmul.f32 %v515, %v2751
      %v2778 = vmul.f32 %v516, %v2751
      %v2779 = vmul.f32 %v517, %v2751
      %v2780 = vmul.f32 %v518, %v2751
      %v2781 = vmul.f32 %v519, %v2751
      %v2782 = vmul.f32 %v520, %v2751
      %v2783 = vmul.f32 %v521, %v2751
      %v2784 = vmul.f32 %v522, %v2751
      %v2785 = vmul.f32 %v523, %v2751
      %v2786 = vmul.f32 %v524, %v2751
      %v2787 = vmul.f32 %v525, %v2751
      %v2788 = vmul.f32 %v526, %v2751
      %v2789 = vmul.f32 %v527, %v2751
      %v2790 = vmul.f32 %v528, %v2751
      %v2791 = vmul.f32 %v529, %v2751
      %v2792 = vmul.f32 %v530, %v2751
      %v2793 = vmul.f32 %v531, %v2751
      %v2794 = vmul.f32 %v532, %v2751
      %v2795 = vmul.f32 %v533, %v2751
      %v2796 = vmul.f32 %v534, %v2751
      %v2797 = vmul.f32 %v535, %v2751
      %v2798 = vmul.f32 %v536, %v2751
      %v2799 = vmul.f32 %v537, %v2751
      %vm2848 = vcmask 1045504
      %v2849 = vrot.slane %v2752, 2
      %v2850 = vrot.slane %v2753, 2
      %v2851 = vsel %vm2848, %v2849, %v2850
      %v2852 = vrot.slane %v2754, 2
      %v2853 = vsel %vm2848, %v2850, %v2852
      %v2854 = vrot.slane %v2755, 2
      %v2855 = vrot.slane %v2756, 2
      %v2856 = vsel %vm2848, %v2854, %v2855
      %v2857 = vrot.slane %v2757, 2
      %v2858 = vsel %vm2848, %v2855, %v2857
      %v2859 = vrot.slane %v2758, 2
      %v2860 = vrot.slane %v2759, 2
      %v2861 = vsel %vm2848, %v2859, %v2860
      %v2862 = vrot.slane %v2760, 2
      %v2863 = vsel %vm2848, %v2860, %v2862
      %v2864 = vrot.slane %v2761, 2
      %v2865 = vrot.slane %v2762, 2
      %v2866 = vsel %vm2848, %v2864, %v2865
      %v2867 = vrot.slane %v2763, 2
      %v2868 = vsel %vm2848, %v2865, %v2867
      %v2869 = vrot.slane %v2764, 2
      %v2870 = vrot.slane %v2765, 2
      %v2871 = vsel %vm2848, %v2869, %v2870
      %v2872 = vrot.slane %v2766, 2
      %v2873 = vsel %vm2848, %v2870, %v2872
      %v2874 = vrot.slane %v2767, 2
      %v2875 = vrot.slane %v2768, 2
      %v2876 = vsel %vm2848, %v2874, %v2875
      %v2877 = vrot.slane %v2769, 2
      %v2878 = vsel %vm2848, %v2875, %v2877
      %v2879 = vrot.slane %v2770, 2
      %v2880 = vrot.slane %v2771, 2
      %v2881 = vsel %vm2848, %v2879, %v2880
      %v2882 = vrot.slane %v2772, 2
      %v2883 = vsel %vm2848, %v2880, %v2882
      %v2884 = vrot.slane %v2773, 2
      %v2885 = vrot.slane %v2774, 2
      %v2886 = vsel %vm2848, %v2884, %v2885
      %v2887 = vrot.slane %v2775, 2
      %v2888 = vsel %vm2848, %v2885, %v2887
      %v2889 = vrot.slane %v2776, 2
      %v2890 = vrot.slane %v2777, 2
      %v2891 = vsel %vm2848, %v2889, %v2890
      %v2892 = vrot.slane %v2778, 2
      %v2893 = vsel %vm2848, %v2890, %v2892
      %v2894 = vrot.slane %v2779, 2
      %v2895 = vrot.slane %v2780, 2
      %v2896 = vsel %vm2848, %v2894, %v2895
      %v2897 = vrot.slane %v2781, 2
      %v2898 = vsel %vm2848, %v2895, %v2897
      %v2899 = vrot.slane %v2782, 2
      %v2900 = vrot.slane %v2783, 2
      %v2901 = vsel %vm2848, %v2899, %v2900
      %v2902 = vrot.slane %v2784, 2
      %v2903 = vsel %vm2848, %v2900, %v2902
      %v2904 = vrot.slane %v2785, 2
      %v2905 = vrot.slane %v2786, 2
      %v2906 = vsel %vm2848, %v2904, %v2905
      %v2907 = vrot.slane %v2787, 2
      %v2908 = vsel %vm2848, %v2905, %v2907
      %v2909 = vrot.slane %v2788, 2
      %v2910 = vrot.slane %v2789, 2
      %v2911 = vsel %vm2848, %v2909, %v2910
      %v2912 = vrot.slane %v2790, 2
      %v2913 = vsel %vm2848, %v2910, %v2912
      %v2914 = vrot.slane %v2791, 2
      %v2915 = vrot.slane %v2792, 2
      %v2916 = vsel %vm2848, %v2914, %v2915
      %v2917 = vrot.slane %v2793, 2
      %v2918 = vsel %vm2848, %v2915, %v2917
      %v2919 = vrot.slane %v2794, 2
      %v2920 = vrot.slane %v2795, 2
      %v2921 = vsel %vm2848, %v2919, %v2920
      %v2922 = vrot.slane %v2796, 2
      %v2923 = vsel %vm2848, %v2920, %v2922
      %v2924 = vrot.slane %v2797, 2
      %v2925 = vrot.slane %v2798, 2
      %v2926 = vsel %vm2848, %v2924, %v2925
      %v2927 = vrot.slane %v2799, 2
      %v2928 = vsel %vm2848, %v2925, %v2927
      %v2961 = vadd.f32 %v2716, %v2851
      %v2962 = vadd.f32 %v2717, %v2853
      %v2963 = vadd.f32 %v2718, %v2856
      %v2964 = vadd.f32 %v2719, %v2858
      %v2965 = vadd.f32 %v2720, %v2861
      %v2966 = vadd.f32 %v2721, %v2863
      %v2967 = vadd.f32 %v2722, %v2866
      %v2968 = vadd.f32 %v2723, %v2868
      %v2969 = vadd.f32 %v2724, %v2871
      %v2970 = vadd.f32 %v2725, %v2873
      %v2971 = vadd.f32 %v2726, %v2876
      %v2972 = vadd.f32 %v2727, %v2878
      %v2973 = vadd.f32 %v2728, %v2881
      %v2974 = vadd.f32 %v2729, %v2883
      %v2975 = vadd.f32 %v2730, %v2886
      %v2976 = vadd.f32 %v2731, %v2888
      %v2977 = vadd.f32 %v2732, %v2891
      %v2978 = vadd.f32 %v2733, %v2893
      %v2979 = vadd.f32 %v2734, %v2896
      %v2980 = vadd.f32 %v2735, %v2898
      %v2981 = vadd.f32 %v2736, %v2901
      %v2982 = vadd.f32 %v2737, %v2903
      %v2983 = vadd.f32 %v2738, %v2906
      %v2984 = vadd.f32 %v2739, %v2908
      %v2985 = vadd.f32 %v2740, %v2911
      %v2986 = vadd.f32 %v2741, %v2913
      %v2987 = vadd.f32 %v2742, %v2916
      %v2988 = vadd.f32 %v2743, %v2918
      %v2989 = vadd.f32 %v2744, %v2921
      %v2990 = vadd.f32 %v2745, %v2923
      %v2991 = vadd.f32 %v2746, %v2926
      %v2992 = vadd.f32 %v2747, %v2928
      %v2993 = vlaneseq
      %v2994 = vshrl.u32 %v2993, 7
      %v2995 = vsub.s32 1, %v2994
      %v2996 = vrot.slane %v557, %v2995
      %v2997 = vmul.f32 %v493, %v2996
      %v2998 = vmul.f32 %v494, %v2996
      %v2999 = vmul.f32 %v495, %v2996
      %v3000 = vmul.f32 %v496, %v2996
      %v3001 = vmul.f32 %v497, %v2996
      %v3002 = vmul.f32 %v498, %v2996
      %v3003 = vmul.f32 %v499, %v2996
      %v3004 = vmul.f32 %v500, %v2996
      %v3005 = vmul.f32 %v501, %v2996
      %v3006 = vmul.f32 %v502, %v2996
      %v3007 = vmul.f32 %v503, %v2996
      %v3008 = vmul.f32 %v504, %v2996
      %v3009 = vmul.f32 %v505, %v2996
      %v3010 = vmul.f32 %v506, %v2996
      %v3011 = vmul.f32 %v507, %v2996
      %v3012 = vmul.f32 %v508, %v2996
      %v3013 = vmul.f32 %v509, %v2996
      %v3014 = vmul.f32 %v510, %v2996
      %v3015 = vmul.f32 %v511, %v2996
      %v3016 = vmul.f32 %v512, %v2996
      %v3017 = vmul.f32 %v513, %v2996
      %v3018 = vmul.f32 %v514, %v2996
      %v3019 = vmul.f32 %v515, %v2996
      %v3020 = vmul.f32 %v516, %v2996
      %v3021 = vmul.f32 %v517, %v2996
      %v3022 = vmul.f32 %v518, %v2996
      %v3023 = vmul.f32 %v519, %v2996
      %v3024 = vmul.f32 %v520, %v2996
      %v3025 = vmul.f32 %v521, %v2996
      %v3026 = vmul.f32 %v522, %v2996
      %v3027 = vmul.f32 %v523, %v2996
      %v3028 = vmul.f32 %v524, %v2996
      %v3029 = vmul.f32 %v525, %v2996
      %v3030 = vmul.f32 %v526, %v2996
      %v3031 = vmul.f32 %v527, %v2996
      %v3032 = vmul.f32 %v528, %v2996
      %v3033 = vmul.f32 %v529, %v2996
      %v3034 = vmul.f32 %v530, %v2996
      %v3035 = vmul.f32 %v531, %v2996
      %v3036 = vmul.f32 %v532, %v2996
      %v3037 = vmul.f32 %v533, %v2996
      %v3038 = vmul.f32 %v534, %v2996
      %v3039 = vmul.f32 %v535, %v2996
      %v3040 = vmul.f32 %v536, %v2996
      %v3041 = vmul.f32 %v537, %v2996
      %v3042 = vmul.f32 %v538, %v2996
      %v3043 = vmul.f32 %v539, %v2996
      %v3044 = vmul.f32 %v540, %v2996
      %v3093 = vrot.slane %v2997, 2
      %v3094 = vrot.slane %v2998, 2
      %v3095 = vsel %vm2848, %v3093, %v3094
      %v3096 = vrot.slane %v2999, 2
      %v3097 = vsel %vm2848, %v3094, %v3096
      %v3098 = vrot.slane %v3000, 2
      %v3099 = vrot.slane %v3001, 2
      %v3100 = vsel %vm2848, %v3098, %v3099
      %v3101 = vrot.slane %v3002, 2
      %v3102 = vsel %vm2848, %v3099, %v3101
      %v3103 = vrot.slane %v3003, 2
      %v3104 = vrot.slane %v3004, 2
      %v3105 = vsel %vm2848, %v3103, %v3104
      %v3106 = vrot.slane %v3005, 2
      %v3107 = vsel %vm2848, %v3104, %v3106
      %v3108 = vrot.slane %v3006, 2
      %v3109 = vrot.slane %v3007, 2
      %v3110 = vsel %vm2848, %v3108, %v3109
      %v3111 = vrot.slane %v3008, 2
      %v3112 = vsel %vm2848, %v3109, %v3111
      %v3113 = vrot.slane %v3009, 2
      %v3114 = vrot.slane %v3010, 2
      %v3115 = vsel %vm2848, %v3113, %v3114
      %v3116 = vrot.slane %v3011, 2
      %v3117 = vsel %vm2848, %v3114, %v3116
      %v3118 = vrot.slane %v3012, 2
      %v3119 = vrot.slane %v3013, 2
      %v3120 = vsel %vm2848, %v3118, %v3119
      %v3121 = vrot.slane %v3014, 2
      %v3122 = vsel %vm2848, %v3119, %v3121
      %v3123 = vrot.slane %v3015, 2
      %v3124 = vrot.slane %v3016, 2
      %v3125 = vsel %vm2848, %v3123, %v3124
      %v3126 = vrot.slane %v3017, 2
      %v3127 = vsel %vm2848, %v3124, %v3126
      %v3128 = vrot.slane %v3018, 2
      %v3129 = vrot.slane %v3019, 2
      %v3130 = vsel %vm2848, %v3128, %v3129
      %v3131 = vrot.slane %v3020, 2
      %v3132 = vsel %vm2848, %v3129, %v3131
      %v3133 = vrot.slane %v3021, 2
      %v3134 = vrot.slane %v3022, 2
      %v3135 = vsel %vm2848, %v3133, %v3134
      %v3136 = vrot.slane %v3023, 2
      %v3137 = vsel %vm2848, %v3134, %v3136
      %v3138 = vrot.slane %v3024, 2
      %v3139 = vrot.slane %v3025, 2
      %v3140 = vsel %vm2848, %v3138, %v3139
      %v3141 = vrot.slane %v3026, 2
      %v3142 = vsel %vm2848, %v3139, %v3141
      %v3143 = vrot.slane %v3027, 2
      %v3144 = vrot.slane %v3028, 2
      %v3145 = vsel %vm2848, %v3143, %v3144
      %v3146 = vrot.slane %v3029, 2
      %v3147 = vsel %vm2848, %v3144, %v3146
      %v3148 = vrot.slane %v3030, 2
      %v3149 = vrot.slane %v3031, 2
      %v3150 = vsel %vm2848, %v3148, %v3149
      %v3151 = vrot.slane %v3032, 2
      %v3152 = vsel %vm2848, %v3149, %v3151
      %v3153 = vrot.slane %v3033, 2
      %v3154 = vrot.slane %v3034, 2
      %v3155 = vsel %vm2848, %v3153, %v3154
      %v3156 = vrot.slane %v3035, 2
      %v3157 = vsel %vm2848, %v3154, %v3156
      %v3158 = vrot.slane %v3036, 2
      %v3159 = vrot.slane %v3037, 2
      %v3160 = vsel %vm2848, %v3158, %v3159
      %v3161 = vrot.slane %v3038, 2
      %v3162 = vsel %vm2848, %v3159, %v3161
      %v3163 = vrot.slane %v3039, 2
      %v3164 = vrot.slane %v3040, 2
      %v3165 = vsel %vm2848, %v3163, %v3164
      %v3166 = vrot.slane %v3041, 2
      %v3167 = vsel %vm2848, %v3164, %v3166
      %v3168 = vrot.slane %v3042, 2
      %v3169 = vrot.slane %v3043, 2
      %v3170 = vsel %vm2848, %v3168, %v3169
      %v3171 = vrot.slane %v3044, 2
      %v3172 = vsel %vm2848, %v3169, %v3171
      %v3205 = vadd.f32 %v2961, %v3095
      %v3206 = vadd.f32 %v2962, %v3097
      %v3207 = vadd.f32 %v2963, %v3100
      %v3208 = vadd.f32 %v2964, %v3102
      %v3209 = vadd.f32 %v2965, %v3105
      %v3210 = vadd.f32 %v2966, %v3107
      %v3211 = vadd.f32 %v2967, %v3110
      %v3212 = vadd.f32 %v2968, %v3112
      %v3213 = vadd.f32 %v2969, %v3115
      %v3214 = vadd.f32 %v2970, %v3117
      %v3215 = vadd.f32 %v2971, %v3120
      %v3216 = vadd.f32 %v2972, %v3122
      %v3217 = vadd.f32 %v2973, %v3125
      %v3218 = vadd.f32 %v2974, %v3127
      %v3219 = vadd.f32 %v2975, %v3130
      %v3220 = vadd.f32 %v2976, %v3132
      %v3221 = vadd.f32 %v2977, %v3135
      %v3222 = vadd.f32 %v2978, %v3137
      %v3223 = vadd.f32 %v2979, %v3140
      %v3224 = vadd.f32 %v2980, %v3142
      %v3225 = vadd.f32 %v2981, %v3145
      %v3226 = vadd.f32 %v2982, %v3147
      %v3227 = vadd.f32 %v2983, %v3150
      %v3228 = vadd.f32 %v2984, %v3152
      %v3229 = vadd.f32 %v2985, %v3155
      %v3230 = vadd.f32 %v2986, %v3157
      %v3231 = vadd.f32 %v2987, %v3160
      %v3232 = vadd.f32 %v2988, %v3162
      %v3233 = vadd.f32 %v2989, %v3165
      %v3234 = vadd.f32 %v2990, %v3167
      %v3235 = vadd.f32 %v2991, %v3170
      %v3236 = vadd.f32 %v2992, %v3172
      %v3237 = vlaneseq
      %v3238 = vshrl.u32 %v3237, 7
      %v3239 = vsub.s32 0, %v3238
      %v3240 = vrot.slane %v558, %v3239
      %v3241 = vmul.f32 %v496, %v3240
      %v3242 = vmul.f32 %v497, %v3240
      %v3243 = vmul.f32 %v498, %v3240
      %v3244 = vmul.f32 %v499, %v3240
      %v3245 = vmul.f32 %v500, %v3240
      %v3246 = vmul.f32 %v501, %v3240
      %v3247 = vmul.f32 %v502, %v3240
      %v3248 = vmul.f32 %v503, %v3240
      %v3249 = vmul.f32 %v504, %v3240
      %v3250 = vmul.f32 %v505, %v3240
      %v3251 = vmul.f32 %v506, %v3240
      %v3252 = vmul.f32 %v507, %v3240
      %v3253 = vmul.f32 %v508, %v3240
      %v3254 = vmul.f32 %v509, %v3240
      %v3255 = vmul.f32 %v510, %v3240
      %v3256 = vmul.f32 %v511, %v3240
      %v3257 = vmul.f32 %v512, %v3240
      %v3258 = vmul.f32 %v513, %v3240
      %v3259 = vmul.f32 %v514, %v3240
      %v3260 = vmul.f32 %v515, %v3240
      %v3261 = vmul.f32 %v516, %v3240
      %v3262 = vmul.f32 %v517, %v3240
      %v3263 = vmul.f32 %v518, %v3240
      %v3264 = vmul.f32 %v519, %v3240
      %v3265 = vmul.f32 %v520, %v3240
      %v3266 = vmul.f32 %v521, %v3240
      %v3267 = vmul.f32 %v522, %v3240
      %v3268 = vmul.f32 %v523, %v3240
      %v3269 = vmul.f32 %v524, %v3240
      %v3270 = vmul.f32 %v525, %v3240
      %v3271 = vmul.f32 %v526, %v3240
      %v3272 = vmul.f32 %v527, %v3240
      %v3273 = vmul.f32 %v528, %v3240
      %v3274 = vmul.f32 %v529, %v3240
      %v3275 = vmul.f32 %v530, %v3240
      %v3276 = vmul.f32 %v531, %v3240
      %v3277 = vmul.f32 %v532, %v3240
      %v3278 = vmul.f32 %v533, %v3240
      %v3279 = vmul.f32 %v534, %v3240
      %v3280 = vmul.f32 %v535, %v3240
      %v3281 = vmul.f32 %v536, %v3240
      %v3282 = vmul.f32 %v537, %v3240
      %v3283 = vmul.f32 %v538, %v3240
      %v3284 = vmul.f32 %v539, %v3240
      %v3285 = vmul.f32 %v540, %v3240
      %v3286 = vmul.f32 %v541, %v3240
      %v3287 = vmul.f32 %v542, %v3240
      %v3288 = vmul.f32 %v543, %v3240
      %v3337 = vrot.slane %v3241, 2
      %v3338 = vrot.slane %v3242, 2
      %v3339 = vsel %vm2848, %v3337, %v3338
      %v3340 = vrot.slane %v3243, 2
      %v3341 = vsel %vm2848, %v3338, %v3340
      %v3342 = vrot.slane %v3244, 2
      %v3343 = vrot.slane %v3245, 2
      %v3344 = vsel %vm2848, %v3342, %v3343
      %v3345 = vrot.slane %v3246, 2
      %v3346 = vsel %vm2848, %v3343, %v3345
      %v3347 = vrot.slane %v3247, 2
      %v3348 = vrot.slane %v3248, 2
      %v3349 = vsel %vm2848, %v3347, %v3348
      %v3350 = vrot.slane %v3249, 2
      %v3351 = vsel %vm2848, %v3348, %v3350
      %v3352 = vrot.slane %v3250, 2
      %v3353 = vrot.slane %v3251, 2
      %v3354 = vsel %vm2848, %v3352, %v3353
      %v3355 = vrot.slane %v3252, 2
      %v3356 = vsel %vm2848, %v3353, %v3355
      %v3357 = vrot.slane %v3253, 2
      %v3358 = vrot.slane %v3254, 2
      %v3359 = vsel %vm2848, %v3357, %v3358
      %v3360 = vrot.slane %v3255, 2
      %v3361 = vsel %vm2848, %v3358, %v3360
      %v3362 = vrot.slane %v3256, 2
      %v3363 = vrot.slane %v3257, 2
      %v3364 = vsel %vm2848, %v3362, %v3363
      %v3365 = vrot.slane %v3258, 2
      %v3366 = vsel %vm2848, %v3363, %v3365
      %v3367 = vrot.slane %v3259, 2
      %v3368 = vrot.slane %v3260, 2
      %v3369 = vsel %vm2848, %v3367, %v3368
      %v3370 = vrot.slane %v3261, 2
      %v3371 = vsel %vm2848, %v3368, %v3370
      %v3372 = vrot.slane %v3262, 2
      %v3373 = vrot.slane %v3263, 2
      %v3374 = vsel %vm2848, %v3372, %v3373
      %v3375 = vrot.slane %v3264, 2
      %v3376 = vsel %vm2848, %v3373, %v3375
      %v3377 = vrot.slane %v3265, 2
      %v3378 = vrot.slane %v3266, 2
      %v3379 = vsel %vm2848, %v3377, %v3378
      %v3380 = vrot.slane %v3267, 2
      %v3381 = vsel %vm2848, %v3378, %v3380
      %v3382 = vrot.slane %v3268, 2
      %v3383 = vrot.slane %v3269, 2
      %v3384 = vsel %vm2848, %v3382, %v3383
      %v3385 = vrot.slane %v3270, 2
      %v3386 = vsel %vm2848, %v3383, %v3385
      %v3387 = vrot.slane %v3271, 2
      %v3388 = vrot.slane %v3272, 2
      %v3389 = vsel %vm2848, %v3387, %v3388
      %v3390 = vrot.slane %v3273, 2
      %v3391 = vsel %vm2848, %v3388, %v3390
      %v3392 = vrot.slane %v3274, 2
      %v3393 = vrot.slane %v3275, 2
      %v3394 = vsel %vm2848, %v3392, %v3393
      %v3395 = vrot.slane %v3276, 2
      %v3396 = vsel %vm2848, %v3393, %v3395
      %v3397 = vrot.slane %v3277, 2
      %v3398 = vrot.slane %v3278, 2
      %v3399 = vsel %vm2848, %v3397, %v3398
      %v3400 = vrot.slane %v3279, 2
      %v3401 = vsel %vm2848, %v3398, %v3400
      %v3402 = vrot.slane %v3280, 2
      %v3403 = vrot.slane %v3281, 2
      %v3404 = vsel %vm2848, %v3402, %v3403
      %v3405 = vrot.slane %v3282, 2
      %v3406 = vsel %vm2848, %v3403, %v3405
      %v3407 = vrot.slane %v3283, 2
      %v3408 = vrot.slane %v3284, 2
      %v3409 = vsel %vm2848, %v3407, %v3408
      %v3410 = vrot.slane %v3285, 2
      %v3411 = vsel %vm2848, %v3408, %v3410
      %v3412 = vrot.slane %v3286, 2
      %v3413 = vrot.slane %v3287, 2
      %v3414 = vsel %vm2848, %v3412, %v3413
      %v3415 = vrot.slane %v3288, 2
      %v3416 = vsel %vm2848, %v3413, %v3415
      %v3449 = vadd.f32 %v3205, %v3339
      %v3450 = vadd.f32 %v3206, %v3341
      %v3451 = vadd.f32 %v3207, %v3344
      %v3452 = vadd.f32 %v3208, %v3346
      %v3453 = vadd.f32 %v3209, %v3349
      %v3454 = vadd.f32 %v3210, %v3351
      %v3455 = vadd.f32 %v3211, %v3354
      %v3456 = vadd.f32 %v3212, %v3356
      %v3457 = vadd.f32 %v3213, %v3359
      %v3458 = vadd.f32 %v3214, %v3361
      %v3459 = vadd.f32 %v3215, %v3364
      %v3460 = vadd.f32 %v3216, %v3366
      %v3461 = vadd.f32 %v3217, %v3369
      %v3462 = vadd.f32 %v3218, %v3371
      %v3463 = vadd.f32 %v3219, %v3374
      %v3464 = vadd.f32 %v3220, %v3376
      %v3465 = vadd.f32 %v3221, %v3379
      %v3466 = vadd.f32 %v3222, %v3381
      %v3467 = vadd.f32 %v3223, %v3384
      %v3468 = vadd.f32 %v3224, %v3386
      %v3469 = vadd.f32 %v3225, %v3389
      %v3470 = vadd.f32 %v3226, %v3391
      %v3471 = vadd.f32 %v3227, %v3394
      %v3472 = vadd.f32 %v3228, %v3396
      %v3473 = vadd.f32 %v3229, %v3399
      %v3474 = vadd.f32 %v3230, %v3401
      %v3475 = vadd.f32 %v3231, %v3404
      %v3476 = vadd.f32 %v3232, %v3406
      %v3477 = vadd.f32 %v3233, %v3409
      %v3478 = vadd.f32 %v3234, %v3411
      %v3479 = vadd.f32 %v3235, %v3414
      %v3480 = vadd.f32 %v3236, %v3416
      %v3481 = vlaneseq
      %v3482 = vshrl.u32 %v3481, 7
      %v3483 = vsub.s32 7, %v3482
      %v3484 = vrot.slane %v558, %v3483
      %v3485 = vmul.f32 %v499, %v3484
      %v3486 = vmul.f32 %v500, %v3484
      %v3487 = vmul.f32 %v501, %v3484
      %v3488 = vmul.f32 %v502, %v3484
      %v3489 = vmul.f32 %v503, %v3484
      %v3490 = vmul.f32 %v504, %v3484
      %v3491 = vmul.f32 %v505, %v3484
      %v3492 = vmul.f32 %v506, %v3484
      %v3493 = vmul.f32 %v507, %v3484
      %v3494 = vmul.f32 %v508, %v3484
      %v3495 = vmul.f32 %v509, %v3484
      %v3496 = vmul.f32 %v510, %v3484
      %v3497 = vmul.f32 %v511, %v3484
      %v3498 = vmul.f32 %v512, %v3484
      %v3499 = vmul.f32 %v513, %v3484
      %v3500 = vmul.f32 %v514, %v3484
      %v3501 = vmul.f32 %v515, %v3484
      %v3502 = vmul.f32 %v516, %v3484
      %v3503 = vmul.f32 %v517, %v3484
      %v3504 = vmul.f32 %v518, %v3484
      %v3505 = vmul.f32 %v519, %v3484
      %v3506 = vmul.f32 %v520, %v3484
      %v3507 = vmul.f32 %v521, %v3484
      %v3508 = vmul.f32 %v522, %v3484
      %v3509 = vmul.f32 %v523, %v3484
      %v3510 = vmul.f32 %v524, %v3484
      %v3511 = vmul.f32 %v525, %v3484
      %v3512 = vmul.f32 %v526, %v3484
      %v3513 = vmul.f32 %v527, %v3484
      %v3514 = vmul.f32 %v528, %v3484
      %v3515 = vmul.f32 %v529, %v3484
      %v3516 = vmul.f32 %v530, %v3484
      %v3517 = vmul.f32 %v531, %v3484
      %v3518 = vmul.f32 %v532, %v3484
      %v3519 = vmul.f32 %v533, %v3484
      %v3520 = vmul.f32 %v534, %v3484
      %v3521 = vmul.f32 %v535, %v3484
      %v3522 = vmul.f32 %v536, %v3484
      %v3523 = vmul.f32 %v537, %v3484
      %v3524 = vmul.f32 %v538, %v3484
      %v3525 = vmul.f32 %v539, %v3484
      %v3526 = vmul.f32 %v540, %v3484
      %v3527 = vmul.f32 %v541, %v3484
      %v3528 = vmul.f32 %v542, %v3484
      %v3529 = vmul.f32 %v543, %v3484
      %v3530 = vmul.f32 %v544, %v3484
      %v3531 = vmul.f32 %v545, %v3484
      %v3532 = vmul.f32 %v546, %v3484
      %v3581 = vrot.slane %v3485, 2
      %v3582 = vrot.slane %v3486, 2
      %v3583 = vsel %vm2848, %v3581, %v3582
      %v3584 = vrot.slane %v3487, 2
      %v3585 = vsel %vm2848, %v3582, %v3584
      %v3586 = vrot.slane %v3488, 2
      %v3587 = vrot.slane %v3489, 2
      %v3588 = vsel %vm2848, %v3586, %v3587
      %v3589 = vrot.slane %v3490, 2
      %v3590 = vsel %vm2848, %v3587, %v3589
      %v3591 = vrot.slane %v3491, 2
      %v3592 = vrot.slane %v3492, 2
      %v3593 = vsel %vm2848, %v3591, %v3592
      %v3594 = vrot.slane %v3493, 2
      %v3595 = vsel %vm2848, %v3592, %v3594
      %v3596 = vrot.slane %v3494, 2
      %v3597 = vrot.slane %v3495, 2
      %v3598 = vsel %vm2848, %v3596, %v3597
      %v3599 = vrot.slane %v3496, 2
      %v3600 = vsel %vm2848, %v3597, %v3599
      %v3601 = vrot.slane %v3497, 2
      %v3602 = vrot.slane %v3498, 2
      %v3603 = vsel %vm2848, %v3601, %v3602
      %v3604 = vrot.slane %v3499, 2
      %v3605 = vsel %vm2848, %v3602, %v3604
      %v3606 = vrot.slane %v3500, 2
      %v3607 = vrot.slane %v3501, 2
      %v3608 = vsel %vm2848, %v3606, %v3607
      %v3609 = vrot.slane %v3502, 2
      %v3610 = vsel %vm2848, %v3607, %v3609
      %v3611 = vrot.slane %v3503, 2
      %v3612 = vrot.slane %v3504, 2
      %v3613 = vsel %vm2848, %v3611, %v3612
      %v3614 = vrot.slane %v3505, 2
      %v3615 = vsel %vm2848, %v3612, %v3614
      %v3616 = vrot.slane %v3506, 2
      %v3617 = vrot.slane %v3507, 2
      %v3618 = vsel %vm2848, %v3616, %v3617
      %v3619 = vrot.slane %v3508, 2
      %v3620 = vsel %vm2848, %v3617, %v3619
      %v3621 = vrot.slane %v3509, 2
      %v3622 = vrot.slane %v3510, 2
      %v3623 = vsel %vm2848, %v3621, %v3622
      %v3624 = vrot.slane %v3511, 2
      %v3625 = vsel %vm2848, %v3622, %v3624
      %v3626 = vrot.slane %v3512, 2
      %v3627 = vrot.slane %v3513, 2
      %v3628 = vsel %vm2848, %v3626, %v3627
      %v3629 = vrot.slane %v3514, 2
      %v3630 = vsel %vm2848, %v3627, %v3629
      %v3631 = vrot.slane %v3515, 2
      %v3632 = vrot.slane %v3516, 2
      %v3633 = vsel %vm2848, %v3631, %v3632
      %v3634 = vrot.slane %v3517, 2
      %v3635 = vsel %vm2848, %v3632, %v3634
      %v3636 = vrot.slane %v3518, 2
      %v3637 = vrot.slane %v3519, 2
      %v3638 = vsel %vm2848, %v3636, %v3637
      %v3639 = vrot.slane %v3520, 2
      %v3640 = vsel %vm2848, %v3637, %v3639
      %v3641 = vrot.slane %v3521, 2
      %v3642 = vrot.slane %v3522, 2
      %v3643 = vsel %vm2848, %v3641, %v3642
      %v3644 = vrot.slane %v3523, 2
      %v3645 = vsel %vm2848, %v3642, %v3644
      %v3646 = vrot.slane %v3524, 2
      %v3647 = vrot.slane %v3525, 2
      %v3648 = vsel %vm2848, %v3646, %v3647
      %v3649 = vrot.slane %v3526, 2
      %v3650 = vsel %vm2848, %v3647, %v3649
      %v3651 = vrot.slane %v3527, 2
      %v3652 = vrot.slane %v3528, 2
      %v3653 = vsel %vm2848, %v3651, %v3652
      %v3654 = vrot.slane %v3529, 2
      %v3655 = vsel %vm2848, %v3652, %v3654
      %v3656 = vrot.slane %v3530, 2
      %v3657 = vrot.slane %v3531, 2
      %v3658 = vsel %vm2848, %v3656, %v3657
      %v3659 = vrot.slane %v3532, 2
      %v3660 = vsel %vm2848, %v3657, %v3659
      %v3693 = vadd.f32 %v3449, %v3583
      %v3694 = vadd.f32 %v3450, %v3585
      %v3695 = vadd.f32 %v3451, %v3588
      %v3696 = vadd.f32 %v3452, %v3590
      %v3697 = vadd.f32 %v3453, %v3593
      %v3698 = vadd.f32 %v3454, %v3595
      %v3699 = vadd.f32 %v3455, %v3598
      %v3700 = vadd.f32 %v3456, %v3600
      %v3701 = vadd.f32 %v3457, %v3603
      %v3702 = vadd.f32 %v3458, %v3605
      %v3703 = vadd.f32 %v3459, %v3608
      %v3704 = vadd.f32 %v3460, %v3610
      %v3705 = vadd.f32 %v3461, %v3613
      %v3706 = vadd.f32 %v3462, %v3615
      %v3707 = vadd.f32 %v3463, %v3618
      %v3708 = vadd.f32 %v3464, %v3620
      %v3709 = vadd.f32 %v3465, %v3623
      %v3710 = vadd.f32 %v3466, %v3625
      %v3711 = vadd.f32 %v3467, %v3628
      %v3712 = vadd.f32 %v3468, %v3630
      %v3713 = vadd.f32 %v3469, %v3633
      %v3714 = vadd.f32 %v3470, %v3635
      %v3715 = vadd.f32 %v3471, %v3638
      %v3716 = vadd.f32 %v3472, %v3640
      %v3717 = vadd.f32 %v3473, %v3643
      %v3718 = vadd.f32 %v3474, %v3645
      %v3719 = vadd.f32 %v3475, %v3648
      %v3720 = vadd.f32 %v3476, %v3650
      %v3721 = vadd.f32 %v3477, %v3653
      %v3722 = vadd.f32 %v3478, %v3655
      %v3723 = vadd.f32 %v3479, %v3658
      %v3724 = vadd.f32 %v3480, %v3660
      %v3725 = vlaneseq
      %v3726 = vshrl.u32 %v3725, 7
      %v3727 = vsub.s32 6, %v3726
      %v3728 = vrot.slane %v559, %v3727
      %v3729 = vmul.f32 %v502, %v3728
      %v3730 = vmul.f32 %v503, %v3728
      %v3731 = vmul.f32 %v504, %v3728
      %v3732 = vmul.f32 %v505, %v3728
      %v3733 = vmul.f32 %v506, %v3728
      %v3734 = vmul.f32 %v507, %v3728
      %v3735 = vmul.f32 %v508, %v3728
      %v3736 = vmul.f32 %v509, %v3728
      %v3737 = vmul.f32 %v510, %v3728
      %v3738 = vmul.f32 %v511, %v3728
      %v3739 = vmul.f32 %v512, %v3728
      %v3740 = vmul.f32 %v513, %v3728
      %v3741 = vmul.f32 %v514, %v3728
      %v3742 = vmul.f32 %v515, %v3728
      %v3743 = vmul.f32 %v516, %v3728
      %v3744 = vmul.f32 %v517, %v3728
      %v3745 = vmul.f32 %v518, %v3728
      %v3746 = vmul.f32 %v519, %v3728
      %v3747 = vmul.f32 %v520, %v3728
      %v3748 = vmul.f32 %v521, %v3728
      %v3749 = vmul.f32 %v522, %v3728
      %v3750 = vmul.f32 %v523, %v3728
      %v3751 = vmul.f32 %v524, %v3728
      %v3752 = vmul.f32 %v525, %v3728
      %v3753 = vmul.f32 %v526, %v3728
      %v3754 = vmul.f32 %v527, %v3728
      %v3755 = vmul.f32 %v528, %v3728
      %v3756 = vmul.f32 %v529, %v3728
      %v3757 = vmul.f32 %v530, %v3728
      %v3758 = vmul.f32 %v531, %v3728
      %v3759 = vmul.f32 %v532, %v3728
      %v3760 = vmul.f32 %v533, %v3728
      %v3761 = vmul.f32 %v534, %v3728
      %v3762 = vmul.f32 %v535, %v3728
      %v3763 = vmul.f32 %v536, %v3728
      %v3764 = vmul.f32 %v537, %v3728
      %v3765 = vmul.f32 %v538, %v3728
      %v3766 = vmul.f32 %v539, %v3728
      %v3767 = vmul.f32 %v540, %v3728
      %v3768 = vmul.f32 %v541, %v3728
      %v3769 = vmul.f32 %v542, %v3728
      %v3770 = vmul.f32 %v543, %v3728
      %v3771 = vmul.f32 %v544, %v3728
      %v3772 = vmul.f32 %v545, %v3728
      %v3773 = vmul.f32 %v546, %v3728
      %v3774 = vmul.f32 %v547, %v3728
      %v3775 = vmul.f32 %v548, %v3728
      %v3776 = vmul.f32 %v549, %v3728
      %v3825 = vrot.slane %v3729, 2
      %v3826 = vrot.slane %v3730, 2
      %v3827 = vsel %vm2848, %v3825, %v3826
      %v3828 = vrot.slane %v3731, 2
      %v3829 = vsel %vm2848, %v3826, %v3828
      %v3830 = vrot.slane %v3732, 2
      %v3831 = vrot.slane %v3733, 2
      %v3832 = vsel %vm2848, %v3830, %v3831
      %v3833 = vrot.slane %v3734, 2
      %v3834 = vsel %vm2848, %v3831, %v3833
      %v3835 = vrot.slane %v3735, 2
      %v3836 = vrot.slane %v3736, 2
      %v3837 = vsel %vm2848, %v3835, %v3836
      %v3838 = vrot.slane %v3737, 2
      %v3839 = vsel %vm2848, %v3836, %v3838
      %v3840 = vrot.slane %v3738, 2
      %v3841 = vrot.slane %v3739, 2
      %v3842 = vsel %vm2848, %v3840, %v3841
      %v3843 = vrot.slane %v3740, 2
      %v3844 = vsel %vm2848, %v3841, %v3843
      %v3845 = vrot.slane %v3741, 2
      %v3846 = vrot.slane %v3742, 2
      %v3847 = vsel %vm2848, %v3845, %v3846
      %v3848 = vrot.slane %v3743, 2
      %v3849 = vsel %vm2848, %v3846, %v3848
      %v3850 = vrot.slane %v3744, 2
      %v3851 = vrot.slane %v3745, 2
      %v3852 = vsel %vm2848, %v3850, %v3851
      %v3853 = vrot.slane %v3746, 2
      %v3854 = vsel %vm2848, %v3851, %v3853
      %v3855 = vrot.slane %v3747, 2
      %v3856 = vrot.slane %v3748, 2
      %v3857 = vsel %vm2848, %v3855, %v3856
      %v3858 = vrot.slane %v3749, 2
      %v3859 = vsel %vm2848, %v3856, %v3858
      %v3860 = vrot.slane %v3750, 2
      %v3861 = vrot.slane %v3751, 2
      %v3862 = vsel %vm2848, %v3860, %v3861
      %v3863 = vrot.slane %v3752, 2
      %v3864 = vsel %vm2848, %v3861, %v3863
      %v3865 = vrot.slane %v3753, 2
      %v3866 = vrot.slane %v3754, 2
      %v3867 = vsel %vm2848, %v3865, %v3866
      %v3868 = vrot.slane %v3755, 2
      %v3869 = vsel %vm2848, %v3866, %v3868
      %v3870 = vrot.slane %v3756, 2
      %v3871 = vrot.slane %v3757, 2
      %v3872 = vsel %vm2848, %v3870, %v3871
      %v3873 = vrot.slane %v3758, 2
      %v3874 = vsel %vm2848, %v3871, %v3873
      %v3875 = vrot.slane %v3759, 2
      %v3876 = vrot.slane %v3760, 2
      %v3877 = vsel %vm2848, %v3875, %v3876
      %v3878 = vrot.slane %v3761, 2
      %v3879 = vsel %vm2848, %v3876, %v3878
      %v3880 = vrot.slane %v3762, 2
      %v3881 = vrot.slane %v3763, 2
      %v3882 = vsel %vm2848, %v3880, %v3881
      %v3883 = vrot.slane %v3764, 2
      %v3884 = vsel %vm2848, %v3881, %v3883
      %v3885 = vrot.slane %v3765, 2
      %v3886 = vrot.slane %v3766, 2
      %v3887 = vsel %vm2848, %v3885, %v3886
      %v3888 = vrot.slane %v3767, 2
      %v3889 = vsel %vm2848, %v3886, %v3888
      %v3890 = vrot.slane %v3768, 2
      %v3891 = vrot.slane %v3769, 2
      %v3892 = vsel %vm2848, %v3890, %v3891
      %v3893 = vrot.slane %v3770, 2
      %v3894 = vsel %vm2848, %v3891, %v3893
      %v3895 = vrot.slane %v3771, 2
      %v3896 = vrot.slane %v3772, 2
      %v3897 = vsel %vm2848, %v3895, %v3896
      %v3898 = vrot.slane %v3773, 2
      %v3899 = vsel %vm2848, %v3896, %v3898
      %v3900 = vrot.slane %v3774, 2
      %v3901 = vrot.slane %v3775, 2
      %v3902 = vsel %vm2848, %v3900, %v3901
      %v3903 = vrot.slane %v3776, 2
      %v3904 = vsel %vm2848, %v3901, %v3903
      %v3937 = vadd.f32 %v3693, %v3827
      %v3938 = vadd.f32 %v3694, %v3829
      %v3939 = vadd.f32 %v3695, %v3832
      %v3940 = vadd.f32 %v3696, %v3834
      %v3941 = vadd.f32 %v3697, %v3837
      %v3942 = vadd.f32 %v3698, %v3839
      %v3943 = vadd.f32 %v3699, %v3842
      %v3944 = vadd.f32 %v3700, %v3844
      %v3945 = vadd.f32 %v3701, %v3847
      %v3946 = vadd.f32 %v3702, %v3849
      %v3947 = vadd.f32 %v3703, %v3852
      %v3948 = vadd.f32 %v3704, %v3854
      %v3949 = vadd.f32 %v3705, %v3857
      %v3950 = vadd.f32 %v3706, %v3859
      %v3951 = vadd.f32 %v3707, %v3862
      %v3952 = vadd.f32 %v3708, %v3864
      %v3953 = vadd.f32 %v3709, %v3867
      %v3954 = vadd.f32 %v3710, %v3869
      %v3955 = vadd.f32 %v3711, %v3872
      %v3956 = vadd.f32 %v3712, %v3874
      %v3957 = vadd.f32 %v3713, %v3877
      %v3958 = vadd.f32 %v3714, %v3879
      %v3959 = vadd.f32 %v3715, %v3882
      %v3960 = vadd.f32 %v3716, %v3884
      %v3961 = vadd.f32 %v3717, %v3887
      %v3962 = vadd.f32 %v3718, %v3889
      %v3963 = vadd.f32 %v3719, %v3892
      %v3964 = vadd.f32 %v3720, %v3894
      %v3965 = vadd.f32 %v3721, %v3897
      %v3966 = vadd.f32 %v3722, %v3899
      %v3967 = vadd.f32 %v3723, %v3902
      %v3968 = vadd.f32 %v3724, %v3904
      %v3969 = vlaneseq
      %v3970 = vshrl.u32 %v3969, 7
      %v3971 = vsub.s32 5, %v3970
      %v3972 = vrot.slane %v560, %v3971
      %v3973 = vmul.f32 %v505, %v3972
      %v3974 = vmul.f32 %v506, %v3972
      %v3975 = vmul.f32 %v507, %v3972
      %v3976 = vmul.f32 %v508, %v3972
      %v3977 = vmul.f32 %v509, %v3972
      %v3978 = vmul.f32 %v510, %v3972
      %v3979 = vmul.f32 %v511, %v3972
      %v3980 = vmul.f32 %v512, %v3972
      %v3981 = vmul.f32 %v513, %v3972
      %v3982 = vmul.f32 %v514, %v3972
      %v3983 = vmul.f32 %v515, %v3972
      %v3984 = vmul.f32 %v516, %v3972
      %v3985 = vmul.f32 %v517, %v3972
      %v3986 = vmul.f32 %v518, %v3972
      %v3987 = vmul.f32 %v519, %v3972
      %v3988 = vmul.f32 %v520, %v3972
      %v3989 = vmul.f32 %v521, %v3972
      %v3990 = vmul.f32 %v522, %v3972
      %v3991 = vmul.f32 %v523, %v3972
      %v3992 = vmul.f32 %v524, %v3972
      %v3993 = vmul.f32 %v525, %v3972
      %v3994 = vmul.f32 %v526, %v3972
      %v3995 = vmul.f32 %v527, %v3972
      %v3996 = vmul.f32 %v528, %v3972
      %v3997 = vmul.f32 %v529, %v3972
      %v3998 = vmul.f32 %v530, %v3972
      %v3999 = vmul.f32 %v531, %v3972
      %v4000 = vmul.f32 %v532, %v3972
      %v4001 = vmul.f32 %v533, %v3972
      %v4002 = vmul.f32 %v534, %v3972
      %v4003 = vmul.f32 %v535, %v3972
      %v4004 = vmul.f32 %v536, %v3972
      %v4005 = vmul.f32 %v537, %v3972
      %v4006 = vmul.f32 %v538, %v3972
      %v4007 = vmul.f32 %v539, %v3972
      %v4008 = vmul.f32 %v540, %v3972
      %v4009 = vmul.f32 %v541, %v3972
      %v4010 = vmul.f32 %v542, %v3972
      %v4011 = vmul.f32 %v543, %v3972
      %v4012 = vmul.f32 %v544, %v3972
      %v4013 = vmul.f32 %v545, %v3972
      %v4014 = vmul.f32 %v546, %v3972
      %v4015 = vmul.f32 %v547, %v3972
      %v4016 = vmul.f32 %v548, %v3972
      %v4017 = vmul.f32 %v549, %v3972
      %v4018 = vmul.f32 %v550, %v3972
      %v4019 = vmul.f32 %v551, %v3972
      %v4020 = vmul.f32 %v552, %v3972
      %v4069 = vrot.slane %v3973, 2
      %v4070 = vrot.slane %v3974, 2
      %v4071 = vsel %vm2848, %v4069, %v4070
      %v4072 = vrot.slane %v3975, 2
      %v4073 = vsel %vm2848, %v4070, %v4072
      %v4074 = vrot.slane %v3976, 2
      %v4075 = vrot.slane %v3977, 2
      %v4076 = vsel %vm2848, %v4074, %v4075
      %v4077 = vrot.slane %v3978, 2
      %v4078 = vsel %vm2848, %v4075, %v4077
      %v4079 = vrot.slane %v3979, 2
      %v4080 = vrot.slane %v3980, 2
      %v4081 = vsel %vm2848, %v4079, %v4080
      %v4082 = vrot.slane %v3981, 2
      %v4083 = vsel %vm2848, %v4080, %v4082
      %v4084 = vrot.slane %v3982, 2
      %v4085 = vrot.slane %v3983, 2
      %v4086 = vsel %vm2848, %v4084, %v4085
      %v4087 = vrot.slane %v3984, 2
      %v4088 = vsel %vm2848, %v4085, %v4087
      %v4089 = vrot.slane %v3985, 2
      %v4090 = vrot.slane %v3986, 2
      %v4091 = vsel %vm2848, %v4089, %v4090
      %v4092 = vrot.slane %v3987, 2
      %v4093 = vsel %vm2848, %v4090, %v4092
      %v4094 = vrot.slane %v3988, 2
      %v4095 = vrot.slane %v3989, 2
      %v4096 = vsel %vm2848, %v4094, %v4095
      %v4097 = vrot.slane %v3990, 2
      %v4098 = vsel %vm2848, %v4095, %v4097
      %v4099 = vrot.slane %v3991, 2
      %v4100 = vrot.slane %v3992, 2
      %v4101 = vsel %vm2848, %v4099, %v4100
      %v4102 = vrot.slane %v3993, 2
      %v4103 = vsel %vm2848, %v4100, %v4102
      %v4104 = vrot.slane %v3994, 2
      %v4105 = vrot.slane %v3995, 2
      %v4106 = vsel %vm2848, %v4104, %v4105
      %v4107 = vrot.slane %v3996, 2
      %v4108 = vsel %vm2848, %v4105, %v4107
      %v4109 = vrot.slane %v3997, 2
      %v4110 = vrot.slane %v3998, 2
      %v4111 = vsel %vm2848, %v4109, %v4110
      %v4112 = vrot.slane %v3999, 2
      %v4113 = vsel %vm2848, %v4110, %v4112
      %v4114 = vrot.slane %v4000, 2
      %v4115 = vrot.slane %v4001, 2
      %v4116 = vsel %vm2848, %v4114, %v4115
      %v4117 = vrot.slane %v4002, 2
      %v4118 = vsel %vm2848, %v4115, %v4117
      %v4119 = vrot.slane %v4003, 2
      %v4120 = vrot.slane %v4004, 2
      %v4121 = vsel %vm2848, %v4119, %v4120
      %v4122 = vrot.slane %v4005, 2
      %v4123 = vsel %vm2848, %v4120, %v4122
      %v4124 = vrot.slane %v4006, 2
      %v4125 = vrot.slane %v4007, 2
      %v4126 = vsel %vm2848, %v4124, %v4125
      %v4127 = vrot.slane %v4008, 2
      %v4128 = vsel %vm2848, %v4125, %v4127
      %v4129 = vrot.slane %v4009, 2
      %v4130 = vrot.slane %v4010, 2
      %v4131 = vsel %vm2848, %v4129, %v4130
      %v4132 = vrot.slane %v4011, 2
      %v4133 = vsel %vm2848, %v4130, %v4132
      %v4134 = vrot.slane %v4012, 2
      %v4135 = vrot.slane %v4013, 2
      %v4136 = vsel %vm2848, %v4134, %v4135
      %v4137 = vrot.slane %v4014, 2
      %v4138 = vsel %vm2848, %v4135, %v4137
      %v4139 = vrot.slane %v4015, 2
      %v4140 = vrot.slane %v4016, 2
      %v4141 = vsel %vm2848, %v4139, %v4140
      %v4142 = vrot.slane %v4017, 2
      %v4143 = vsel %vm2848, %v4140, %v4142
      %v4144 = vrot.slane %v4018, 2
      %v4145 = vrot.slane %v4019, 2
      %v4146 = vsel %vm2848, %v4144, %v4145
      %v4147 = vrot.slane %v4020, 2
      %v4148 = vsel %vm2848, %v4145, %v4147
      %v4181 = vadd.f32 %v3937, %v4071
      %v4182 = vadd.f32 %v3938, %v4073
      %v4183 = vadd.f32 %v3939, %v4076
      %v4184 = vadd.f32 %v3940, %v4078
      %v4185 = vadd.f32 %v3941, %v4081
      %v4186 = vadd.f32 %v3942, %v4083
      %v4187 = vadd.f32 %v3943, %v4086
      %v4188 = vadd.f32 %v3944, %v4088
      %v4189 = vadd.f32 %v3945, %v4091
      %v4190 = vadd.f32 %v3946, %v4093
      %v4191 = vadd.f32 %v3947, %v4096
      %v4192 = vadd.f32 %v3948, %v4098
      %v4193 = vadd.f32 %v3949, %v4101
      %v4194 = vadd.f32 %v3950, %v4103
      %v4195 = vadd.f32 %v3951, %v4106
      %v4196 = vadd.f32 %v3952, %v4108
      %v4197 = vadd.f32 %v3953, %v4111
      %v4198 = vadd.f32 %v3954, %v4113
      %v4199 = vadd.f32 %v3955, %v4116
      %v4200 = vadd.f32 %v3956, %v4118
      %v4201 = vadd.f32 %v3957, %v4121
      %v4202 = vadd.f32 %v3958, %v4123
      %v4203 = vadd.f32 %v3959, %v4126
      %v4204 = vadd.f32 %v3960, %v4128
      %v4205 = vadd.f32 %v3961, %v4131
      %v4206 = vadd.f32 %v3962, %v4133
      %v4207 = vadd.f32 %v3963, %v4136
      %v4208 = vadd.f32 %v3964, %v4138
      %v4209 = vadd.f32 %v3965, %v4141
      %v4210 = vadd.f32 %v3966, %v4143
      %v4211 = vadd.f32 %v3967, %v4146
      %v4212 = vadd.f32 %v3968, %v4148
      %v4213 = vlaneseq
      %v4214 = vshrl.u32 %v4213, 7
      %v4215 = vsub.s32 4, %v4214
      %v4216 = vrot.slane %v561, %v4215
      %v4217 = vmul.f32 %v508, %v4216
      %v4218 = vmul.f32 %v509, %v4216
      %v4219 = vmul.f32 %v510, %v4216
      %v4220 = vmul.f32 %v511, %v4216
      %v4221 = vmul.f32 %v512, %v4216
      %v4222 = vmul.f32 %v513, %v4216
      %v4223 = vmul.f32 %v514, %v4216
      %v4224 = vmul.f32 %v515, %v4216
      %v4225 = vmul.f32 %v516, %v4216
      %v4226 = vmul.f32 %v517, %v4216
      %v4227 = vmul.f32 %v518, %v4216
      %v4228 = vmul.f32 %v519, %v4216
      %v4229 = vmul.f32 %v520, %v4216
      %v4230 = vmul.f32 %v521, %v4216
      %v4231 = vmul.f32 %v522, %v4216
      %v4232 = vmul.f32 %v523, %v4216
      %v4233 = vmul.f32 %v524, %v4216
      %v4234 = vmul.f32 %v525, %v4216
      %v4235 = vmul.f32 %v526, %v4216
      %v4236 = vmul.f32 %v527, %v4216
      %v4237 = vmul.f32 %v528, %v4216
      %v4238 = vmul.f32 %v529, %v4216
      %v4239 = vmul.f32 %v530, %v4216
      %v4240 = vmul.f32 %v531, %v4216
      %v4241 = vmul.f32 %v532, %v4216
      %v4242 = vmul.f32 %v533, %v4216
      %v4243 = vmul.f32 %v534, %v4216
      %v4244 = vmul.f32 %v535, %v4216
      %v4245 = vmul.f32 %v536, %v4216
      %v4246 = vmul.f32 %v537, %v4216
      %v4247 = vmul.f32 %v538, %v4216
      %v4248 = vmul.f32 %v539, %v4216
      %v4249 = vmul.f32 %v540, %v4216
      %v4250 = vmul.f32 %v541, %v4216
      %v4251 = vmul.f32 %v542, %v4216
      %v4252 = vmul.f32 %v543, %v4216
      %v4253 = vmul.f32 %v544, %v4216
      %v4254 = vmul.f32 %v545, %v4216
      %v4255 = vmul.f32 %v546, %v4216
      %v4256 = vmul.f32 %v547, %v4216
      %v4257 = vmul.f32 %v548, %v4216
      %v4258 = vmul.f32 %v549, %v4216
      %v4259 = vmul.f32 %v550, %v4216
      %v4260 = vmul.f32 %v551, %v4216
      %v4261 = vmul.f32 %v552, %v4216
      %v4262 = vmul.f32 %v553, %v4216
      %v4263 = vmul.f32 %v554, %v4216
      %v4264 = vmul.f32 %v555, %v4216
      %v4313 = vrot.slane %v4217, 2
      %v4314 = vrot.slane %v4218, 2
      %v4315 = vsel %vm2848, %v4313, %v4314
      %v4316 = vrot.slane %v4219, 2
      %v4317 = vsel %vm2848, %v4314, %v4316
      %v4318 = vrot.slane %v4220, 2
      %v4319 = vrot.slane %v4221, 2
      %v4320 = vsel %vm2848, %v4318, %v4319
      %v4321 = vrot.slane %v4222, 2
      %v4322 = vsel %vm2848, %v4319, %v4321
      %v4323 = vrot.slane %v4223, 2
      %v4324 = vrot.slane %v4224, 2
      %v4325 = vsel %vm2848, %v4323, %v4324
      %v4326 = vrot.slane %v4225, 2
      %v4327 = vsel %vm2848, %v4324, %v4326
      %v4328 = vrot.slane %v4226, 2
      %v4329 = vrot.slane %v4227, 2
      %v4330 = vsel %vm2848, %v4328, %v4329
      %v4331 = vrot.slane %v4228, 2
      %v4332 = vsel %vm2848, %v4329, %v4331
      %v4333 = vrot.slane %v4229, 2
      %v4334 = vrot.slane %v4230, 2
      %v4335 = vsel %vm2848, %v4333, %v4334
      %v4336 = vrot.slane %v4231, 2
      %v4337 = vsel %vm2848, %v4334, %v4336
      %v4338 = vrot.slane %v4232, 2
      %v4339 = vrot.slane %v4233, 2
      %v4340 = vsel %vm2848, %v4338, %v4339
      %v4341 = vrot.slane %v4234, 2
      %v4342 = vsel %vm2848, %v4339, %v4341
      %v4343 = vrot.slane %v4235, 2
      %v4344 = vrot.slane %v4236, 2
      %v4345 = vsel %vm2848, %v4343, %v4344
      %v4346 = vrot.slane %v4237, 2
      %v4347 = vsel %vm2848, %v4344, %v4346
      %v4348 = vrot.slane %v4238, 2
      %v4349 = vrot.slane %v4239, 2
      %v4350 = vsel %vm2848, %v4348, %v4349
      %v4351 = vrot.slane %v4240, 2
      %v4352 = vsel %vm2848, %v4349, %v4351
      %v4353 = vrot.slane %v4241, 2
      %v4354 = vrot.slane %v4242, 2
      %v4355 = vsel %vm2848, %v4353, %v4354
      %v4356 = vrot.slane %v4243, 2
      %v4357 = vsel %vm2848, %v4354, %v4356
      %v4358 = vrot.slane %v4244, 2
      %v4359 = vrot.slane %v4245, 2
      %v4360 = vsel %vm2848, %v4358, %v4359
      %v4361 = vrot.slane %v4246, 2
      %v4362 = vsel %vm2848, %v4359, %v4361
      %v4363 = vrot.slane %v4247, 2
      %v4364 = vrot.slane %v4248, 2
      %v4365 = vsel %vm2848, %v4363, %v4364
      %v4366 = vrot.slane %v4249, 2
      %v4367 = vsel %vm2848, %v4364, %v4366
      %v4368 = vrot.slane %v4250, 2
      %v4369 = vrot.slane %v4251, 2
      %v4370 = vsel %vm2848, %v4368, %v4369
      %v4371 = vrot.slane %v4252, 2
      %v4372 = vsel %vm2848, %v4369, %v4371
      %v4373 = vrot.slane %v4253, 2
      %v4374 = vrot.slane %v4254, 2
      %v4375 = vsel %vm2848, %v4373, %v4374
      %v4376 = vrot.slane %v4255, 2
      %v4377 = vsel %vm2848, %v4374, %v4376
      %v4378 = vrot.slane %v4256, 2
      %v4379 = vrot.slane %v4257, 2
      %v4380 = vsel %vm2848, %v4378, %v4379
      %v4381 = vrot.slane %v4258, 2
      %v4382 = vsel %vm2848, %v4379, %v4381
      %v4383 = vrot.slane %v4259, 2
      %v4384 = vrot.slane %v4260, 2
      %v4385 = vsel %vm2848, %v4383, %v4384
      %v4386 = vrot.slane %v4261, 2
      %v4387 = vsel %vm2848, %v4384, %v4386
      %v4388 = vrot.slane %v4262, 2
      %v4389 = vrot.slane %v4263, 2
      %v4390 = vsel %vm2848, %v4388, %v4389
      %v4391 = vrot.slane %v4264, 2
      %v4392 = vsel %vm2848, %v4389, %v4391
      %v4425 = vadd.f32 %v4181, %v4315
      %v4426 = vadd.f32 %v4182, %v4317
      %v4427 = vadd.f32 %v4183, %v4320
      %v4428 = vadd.f32 %v4184, %v4322
      %v4429 = vadd.f32 %v4185, %v4325
      %v4430 = vadd.f32 %v4186, %v4327
      %v4431 = vadd.f32 %v4187, %v4330
      %v4432 = vadd.f32 %v4188, %v4332
      %v4433 = vadd.f32 %v4189, %v4335
      %v4434 = vadd.f32 %v4190, %v4337
      %v4435 = vadd.f32 %v4191, %v4340
      %v4436 = vadd.f32 %v4192, %v4342
      %v4437 = vadd.f32 %v4193, %v4345
      %v4438 = vadd.f32 %v4194, %v4347
      %v4439 = vadd.f32 %v4195, %v4350
      %v4440 = vadd.f32 %v4196, %v4352
      %v4441 = vadd.f32 %v4197, %v4355
      %v4442 = vadd.f32 %v4198, %v4357
      %v4443 = vadd.f32 %v4199, %v4360
      %v4444 = vadd.f32 %v4200, %v4362
      %v4445 = vadd.f32 %v4201, %v4365
      %v4446 = vadd.f32 %v4202, %v4367
      %v4447 = vadd.f32 %v4203, %v4370
      %v4448 = vadd.f32 %v4204, %v4372
      %v4449 = vadd.f32 %v4205, %v4375
      %v4450 = vadd.f32 %v4206, %v4377
      %v4451 = vadd.f32 %v4207, %v4380
      %v4452 = vadd.f32 %v4208, %v4382
      %v4453 = vadd.f32 %v4209, %v4385
      %v4454 = vadd.f32 %v4210, %v4387
      %v4455 = vadd.f32 %v4211, %v4390
      %v4456 = vadd.f32 %v4212, %v4392
      %v4457 = vlaneseq
      %v4458 = vshrl.u32 %v4457, 7
      %v4459 = vsub.s32 3, %v4458
      %v4460 = vrot.slane %v556, %v4459
      %v4461 = vmul.f32 %v490, %v4460
      %v4462 = vmul.f32 %v491, %v4460
      %v4463 = vmul.f32 %v492, %v4460
      %v4464 = vmul.f32 %v493, %v4460
      %v4465 = vmul.f32 %v494, %v4460
      %v4466 = vmul.f32 %v495, %v4460
      %v4467 = vmul.f32 %v496, %v4460
      %v4468 = vmul.f32 %v497, %v4460
      %v4469 = vmul.f32 %v498, %v4460
      %v4470 = vmul.f32 %v499, %v4460
      %v4471 = vmul.f32 %v500, %v4460
      %v4472 = vmul.f32 %v501, %v4460
      %v4473 = vmul.f32 %v502, %v4460
      %v4474 = vmul.f32 %v503, %v4460
      %v4475 = vmul.f32 %v504, %v4460
      %v4476 = vmul.f32 %v505, %v4460
      %v4477 = vmul.f32 %v506, %v4460
      %v4478 = vmul.f32 %v507, %v4460
      %v4479 = vmul.f32 %v508, %v4460
      %v4480 = vmul.f32 %v509, %v4460
      %v4481 = vmul.f32 %v510, %v4460
      %v4482 = vmul.f32 %v511, %v4460
      %v4483 = vmul.f32 %v512, %v4460
      %v4484 = vmul.f32 %v513, %v4460
      %v4485 = vmul.f32 %v514, %v4460
      %v4486 = vmul.f32 %v515, %v4460
      %v4487 = vmul.f32 %v516, %v4460
      %v4488 = vmul.f32 %v517, %v4460
      %v4489 = vmul.f32 %v518, %v4460
      %v4490 = vmul.f32 %v519, %v4460
      %v4491 = vmul.f32 %v520, %v4460
      %v4492 = vmul.f32 %v521, %v4460
      %v4493 = vmul.f32 %v522, %v4460
      %v4494 = vmul.f32 %v523, %v4460
      %v4495 = vmul.f32 %v524, %v4460
      %v4496 = vmul.f32 %v525, %v4460
      %v4497 = vmul.f32 %v526, %v4460
      %v4498 = vmul.f32 %v527, %v4460
      %v4499 = vmul.f32 %v528, %v4460
      %v4500 = vmul.f32 %v529, %v4460
      %v4501 = vmul.f32 %v530, %v4460
      %v4502 = vmul.f32 %v531, %v4460
      %v4503 = vmul.f32 %v532, %v4460
      %v4504 = vmul.f32 %v533, %v4460
      %v4505 = vmul.f32 %v534, %v4460
      %v4506 = vmul.f32 %v535, %v4460
      %v4507 = vmul.f32 %v536, %v4460
      %v4508 = vmul.f32 %v537, %v4460
      %vm4557 = vcmask 1044480
      %v4558 = vrot.slane %v4461, 3
      %v4559 = vrot.slane %v4462, 3
      %v4560 = vsel %vm4557, %v4558, %v4559
      %v4561 = vrot.slane %v4463, 3
      %v4562 = vsel %vm4557, %v4559, %v4561
      %v4563 = vrot.slane %v4464, 3
      %v4564 = vrot.slane %v4465, 3
      %v4565 = vsel %vm4557, %v4563, %v4564
      %v4566 = vrot.slane %v4466, 3
      %v4567 = vsel %vm4557, %v4564, %v4566
      %v4568 = vrot.slane %v4467, 3
      %v4569 = vrot.slane %v4468, 3
      %v4570 = vsel %vm4557, %v4568, %v4569
      %v4571 = vrot.slane %v4469, 3
      %v4572 = vsel %vm4557, %v4569, %v4571
      %v4573 = vrot.slane %v4470, 3
      %v4574 = vrot.slane %v4471, 3
      %v4575 = vsel %vm4557, %v4573, %v4574
      %v4576 = vrot.slane %v4472, 3
      %v4577 = vsel %vm4557, %v4574, %v4576
      %v4578 = vrot.slane %v4473, 3
      %v4579 = vrot.slane %v4474, 3
      %v4580 = vsel %vm4557, %v4578, %v4579
      %v4581 = vrot.slane %v4475, 3
      %v4582 = vsel %vm4557, %v4579, %v4581
      %v4583 = vrot.slane %v4476, 3
      %v4584 = vrot.slane %v4477, 3
      %v4585 = vsel %vm4557, %v4583, %v4584
      %v4586 = vrot.slane %v4478, 3
      %v4587 = vsel %vm4557, %v4584, %v4586
      %v4588 = vrot.slane %v4479, 3
      %v4589 = vrot.slane %v4480, 3
      %v4590 = vsel %vm4557, %v4588, %v4589
      %v4591 = vrot.slane %v4481, 3
      %v4592 = vsel %vm4557, %v4589, %v4591
      %v4593 = vrot.slane %v4482, 3
      %v4594 = vrot.slane %v4483, 3
      %v4595 = vsel %vm4557, %v4593, %v4594
      %v4596 = vrot.slane %v4484, 3
      %v4597 = vsel %vm4557, %v4594, %v4596
      %v4598 = vrot.slane %v4485, 3
      %v4599 = vrot.slane %v4486, 3
      %v4600 = vsel %vm4557, %v4598, %v4599
      %v4601 = vrot.slane %v4487, 3
      %v4602 = vsel %vm4557, %v4599, %v4601
      %v4603 = vrot.slane %v4488, 3
      %v4604 = vrot.slane %v4489, 3
      %v4605 = vsel %vm4557, %v4603, %v4604
      %v4606 = vrot.slane %v4490, 3
      %v4607 = vsel %vm4557, %v4604, %v4606
      %v4608 = vrot.slane %v4491, 3
      %v4609 = vrot.slane %v4492, 3
      %v4610 = vsel %vm4557, %v4608, %v4609
      %v4611 = vrot.slane %v4493, 3
      %v4612 = vsel %vm4557, %v4609, %v4611
      %v4613 = vrot.slane %v4494, 3
      %v4614 = vrot.slane %v4495, 3
      %v4615 = vsel %vm4557, %v4613, %v4614
      %v4616 = vrot.slane %v4496, 3
      %v4617 = vsel %vm4557, %v4614, %v4616
      %v4618 = vrot.slane %v4497, 3
      %v4619 = vrot.slane %v4498, 3
      %v4620 = vsel %vm4557, %v4618, %v4619
      %v4621 = vrot.slane %v4499, 3
      %v4622 = vsel %vm4557, %v4619, %v4621
      %v4623 = vrot.slane %v4500, 3
      %v4624 = vrot.slane %v4501, 3
      %v4625 = vsel %vm4557, %v4623, %v4624
      %v4626 = vrot.slane %v4502, 3
      %v4627 = vsel %vm4557, %v4624, %v4626
      %v4628 = vrot.slane %v4503, 3
      %v4629 = vrot.slane %v4504, 3
      %v4630 = vsel %vm4557, %v4628, %v4629
      %v4631 = vrot.slane %v4505, 3
      %v4632 = vsel %vm4557, %v4629, %v4631
      %v4633 = vrot.slane %v4506, 3
      %v4634 = vrot.slane %v4507, 3
      %v4635 = vsel %vm4557, %v4633, %v4634
      %v4636 = vrot.slane %v4508, 3
      %v4637 = vsel %vm4557, %v4634, %v4636
      %v4670 = vadd.f32 %v4425, %v4560
      %v4671 = vadd.f32 %v4426, %v4562
      %v4672 = vadd.f32 %v4427, %v4565
      %v4673 = vadd.f32 %v4428, %v4567
      %v4674 = vadd.f32 %v4429, %v4570
      %v4675 = vadd.f32 %v4430, %v4572
      %v4676 = vadd.f32 %v4431, %v4575
      %v4677 = vadd.f32 %v4432, %v4577
      %v4678 = vadd.f32 %v4433, %v4580
      %v4679 = vadd.f32 %v4434, %v4582
      %v4680 = vadd.f32 %v4435, %v4585
      %v4681 = vadd.f32 %v4436, %v4587
      %v4682 = vadd.f32 %v4437, %v4590
      %v4683 = vadd.f32 %v4438, %v4592
      %v4684 = vadd.f32 %v4439, %v4595
      %v4685 = vadd.f32 %v4440, %v4597
      %v4686 = vadd.f32 %v4441, %v4600
      %v4687 = vadd.f32 %v4442, %v4602
      %v4688 = vadd.f32 %v4443, %v4605
      %v4689 = vadd.f32 %v4444, %v4607
      %v4690 = vadd.f32 %v4445, %v4610
      %v4691 = vadd.f32 %v4446, %v4612
      %v4692 = vadd.f32 %v4447, %v4615
      %v4693 = vadd.f32 %v4448, %v4617
      %v4694 = vadd.f32 %v4449, %v4620
      %v4695 = vadd.f32 %v4450, %v4622
      %v4696 = vadd.f32 %v4451, %v4625
      %v4697 = vadd.f32 %v4452, %v4627
      %v4698 = vadd.f32 %v4453, %v4630
      %v4699 = vadd.f32 %v4454, %v4632
      %v4700 = vadd.f32 %v4455, %v4635
      %v4701 = vadd.f32 %v4456, %v4637
      %v4702 = vlaneseq
      %v4703 = vshrl.u32 %v4702, 7
      %v4704 = vsub.s32 2, %v4703
      %v4705 = vrot.slane %v557, %v4704
      %v4706 = vmul.f32 %v493, %v4705
      %v4707 = vmul.f32 %v494, %v4705
      %v4708 = vmul.f32 %v495, %v4705
      %v4709 = vmul.f32 %v496, %v4705
      %v4710 = vmul.f32 %v497, %v4705
      %v4711 = vmul.f32 %v498, %v4705
      %v4712 = vmul.f32 %v499, %v4705
      %v4713 = vmul.f32 %v500, %v4705
      %v4714 = vmul.f32 %v501, %v4705
      %v4715 = vmul.f32 %v502, %v4705
      %v4716 = vmul.f32 %v503, %v4705
      %v4717 = vmul.f32 %v504, %v4705
      %v4718 = vmul.f32 %v505, %v4705
      %v4719 = vmul.f32 %v506, %v4705
      %v4720 = vmul.f32 %v507, %v4705
      %v4721 = vmul.f32 %v508, %v4705
      %v4722 = vmul.f32 %v509, %v4705
      %v4723 = vmul.f32 %v510, %v4705
      %v4724 = vmul.f32 %v511, %v4705
      %v4725 = vmul.f32 %v512, %v4705
      %v4726 = vmul.f32 %v513, %v4705
      %v4727 = vmul.f32 %v514, %v4705
      %v4728 = vmul.f32 %v515, %v4705
      %v4729 = vmul.f32 %v516, %v4705
      %v4730 = vmul.f32 %v517, %v4705
      %v4731 = vmul.f32 %v518, %v4705
      %v4732 = vmul.f32 %v519, %v4705
      %v4733 = vmul.f32 %v520, %v4705
      %v4734 = vmul.f32 %v521, %v4705
      %v4735 = vmul.f32 %v522, %v4705
      %v4736 = vmul.f32 %v523, %v4705
      %v4737 = vmul.f32 %v524, %v4705
      %v4738 = vmul.f32 %v525, %v4705
      %v4739 = vmul.f32 %v526, %v4705
      %v4740 = vmul.f32 %v527, %v4705
      %v4741 = vmul.f32 %v528, %v4705
      %v4742 = vmul.f32 %v529, %v4705
      %v4743 = vmul.f32 %v530, %v4705
      %v4744 = vmul.f32 %v531, %v4705
      %v4745 = vmul.f32 %v532, %v4705
      %v4746 = vmul.f32 %v533, %v4705
      %v4747 = vmul.f32 %v534, %v4705
      %v4748 = vmul.f32 %v535, %v4705
      %v4749 = vmul.f32 %v536, %v4705
      %v4750 = vmul.f32 %v537, %v4705
      %v4751 = vmul.f32 %v538, %v4705
      %v4752 = vmul.f32 %v539, %v4705
      %v4753 = vmul.f32 %v540, %v4705
      %v4802 = vrot.slane %v4706, 3
      %v4803 = vrot.slane %v4707, 3
      %v4804 = vsel %vm4557, %v4802, %v4803
      %v4805 = vrot.slane %v4708, 3
      %v4806 = vsel %vm4557, %v4803, %v4805
      %v4807 = vrot.slane %v4709, 3
      %v4808 = vrot.slane %v4710, 3
      %v4809 = vsel %vm4557, %v4807, %v4808
      %v4810 = vrot.slane %v4711, 3
      %v4811 = vsel %vm4557, %v4808, %v4810
      %v4812 = vrot.slane %v4712, 3
      %v4813 = vrot.slane %v4713, 3
      %v4814 = vsel %vm4557, %v4812, %v4813
      %v4815 = vrot.slane %v4714, 3
      %v4816 = vsel %vm4557, %v4813, %v4815
      %v4817 = vrot.slane %v4715, 3
      %v4818 = vrot.slane %v4716, 3
      %v4819 = vsel %vm4557, %v4817, %v4818
      %v4820 = vrot.slane %v4717, 3
      %v4821 = vsel %vm4557, %v4818, %v4820
      %v4822 = vrot.slane %v4718, 3
      %v4823 = vrot.slane %v4719, 3
      %v4824 = vsel %vm4557, %v4822, %v4823
      %v4825 = vrot.slane %v4720, 3
      %v4826 = vsel %vm4557, %v4823, %v4825
      %v4827 = vrot.slane %v4721, 3
      %v4828 = vrot.slane %v4722, 3
      %v4829 = vsel %vm4557, %v4827, %v4828
      %v4830 = vrot.slane %v4723, 3
      %v4831 = vsel %vm4557, %v4828, %v4830
      %v4832 = vrot.slane %v4724, 3
      %v4833 = vrot.slane %v4725, 3
      %v4834 = vsel %vm4557, %v4832, %v4833
      %v4835 = vrot.slane %v4726, 3
      %v4836 = vsel %vm4557, %v4833, %v4835
      %v4837 = vrot.slane %v4727, 3
      %v4838 = vrot.slane %v4728, 3
      %v4839 = vsel %vm4557, %v4837, %v4838
      %v4840 = vrot.slane %v4729, 3
      %v4841 = vsel %vm4557, %v4838, %v4840
      %v4842 = vrot.slane %v4730, 3
      %v4843 = vrot.slane %v4731, 3
      %v4844 = vsel %vm4557, %v4842, %v4843
      %v4845 = vrot.slane %v4732, 3
      %v4846 = vsel %vm4557, %v4843, %v4845
      %v4847 = vrot.slane %v4733, 3
      %v4848 = vrot.slane %v4734, 3
      %v4849 = vsel %vm4557, %v4847, %v4848
      %v4850 = vrot.slane %v4735, 3
      %v4851 = vsel %vm4557, %v4848, %v4850
      %v4852 = vrot.slane %v4736, 3
      %v4853 = vrot.slane %v4737, 3
      %v4854 = vsel %vm4557, %v4852, %v4853
      %v4855 = vrot.slane %v4738, 3
      %v4856 = vsel %vm4557, %v4853, %v4855
      %v4857 = vrot.slane %v4739, 3
      %v4858 = vrot.slane %v4740, 3
      %v4859 = vsel %vm4557, %v4857, %v4858
      %v4860 = vrot.slane %v4741, 3
      %v4861 = vsel %vm4557, %v4858, %v4860
      %v4862 = vrot.slane %v4742, 3
      %v4863 = vrot.slane %v4743, 3
      %v4864 = vsel %vm4557, %v4862, %v4863
      %v4865 = vrot.slane %v4744, 3
      %v4866 = vsel %vm4557, %v4863, %v4865
      %v4867 = vrot.slane %v4745, 3
      %v4868 = vrot.slane %v4746, 3
      %v4869 = vsel %vm4557, %v4867, %v4868
      %v4870 = vrot.slane %v4747, 3
      %v4871 = vsel %vm4557, %v4868, %v4870
      %v4872 = vrot.slane %v4748, 3
      %v4873 = vrot.slane %v4749, 3
      %v4874 = vsel %vm4557, %v4872, %v4873
      %v4875 = vrot.slane %v4750, 3
      %v4876 = vsel %vm4557, %v4873, %v4875
      %v4877 = vrot.slane %v4751, 3
      %v4878 = vrot.slane %v4752, 3
      %v4879 = vsel %vm4557, %v4877, %v4878
      %v4880 = vrot.slane %v4753, 3
      %v4881 = vsel %vm4557, %v4878, %v4880
      %v4914 = vadd.f32 %v4670, %v4804
      %v4915 = vadd.f32 %v4671, %v4806
      %v4916 = vadd.f32 %v4672, %v4809
      %v4917 = vadd.f32 %v4673, %v4811
      %v4918 = vadd.f32 %v4674, %v4814
      %v4919 = vadd.f32 %v4675, %v4816
      %v4920 = vadd.f32 %v4676, %v4819
      %v4921 = vadd.f32 %v4677, %v4821
      %v4922 = vadd.f32 %v4678, %v4824
      %v4923 = vadd.f32 %v4679, %v4826
      %v4924 = vadd.f32 %v4680, %v4829
      %v4925 = vadd.f32 %v4681, %v4831
      %v4926 = vadd.f32 %v4682, %v4834
      %v4927 = vadd.f32 %v4683, %v4836
      %v4928 = vadd.f32 %v4684, %v4839
      %v4929 = vadd.f32 %v4685, %v4841
      %v4930 = vadd.f32 %v4686, %v4844
      %v4931 = vadd.f32 %v4687, %v4846
      %v4932 = vadd.f32 %v4688, %v4849
      %v4933 = vadd.f32 %v4689, %v4851
      %v4934 = vadd.f32 %v4690, %v4854
      %v4935 = vadd.f32 %v4691, %v4856
      %v4936 = vadd.f32 %v4692, %v4859
      %v4937 = vadd.f32 %v4693, %v4861
      %v4938 = vadd.f32 %v4694, %v4864
      %v4939 = vadd.f32 %v4695, %v4866
      %v4940 = vadd.f32 %v4696, %v4869
      %v4941 = vadd.f32 %v4697, %v4871
      %v4942 = vadd.f32 %v4698, %v4874
      %v4943 = vadd.f32 %v4699, %v4876
      %v4944 = vadd.f32 %v4700, %v4879
      %v4945 = vadd.f32 %v4701, %v4881
      %v4946 = vlaneseq
      %v4947 = vshrl.u32 %v4946, 7
      %v4948 = vsub.s32 1, %v4947
      %v4949 = vrot.slane %v558, %v4948
      %v4950 = vmul.f32 %v496, %v4949
      %v4951 = vmul.f32 %v497, %v4949
      %v4952 = vmul.f32 %v498, %v4949
      %v4953 = vmul.f32 %v499, %v4949
      %v4954 = vmul.f32 %v500, %v4949
      %v4955 = vmul.f32 %v501, %v4949
      %v4956 = vmul.f32 %v502, %v4949
      %v4957 = vmul.f32 %v503, %v4949
      %v4958 = vmul.f32 %v504, %v4949
      %v4959 = vmul.f32 %v505, %v4949
      %v4960 = vmul.f32 %v506, %v4949
      %v4961 = vmul.f32 %v507, %v4949
      %v4962 = vmul.f32 %v508, %v4949
      %v4963 = vmul.f32 %v509, %v4949
      %v4964 = vmul.f32 %v510, %v4949
      %v4965 = vmul.f32 %v511, %v4949
      %v4966 = vmul.f32 %v512, %v4949
      %v4967 = vmul.f32 %v513, %v4949
      %v4968 = vmul.f32 %v514, %v4949
      %v4969 = vmul.f32 %v515, %v4949
      %v4970 = vmul.f32 %v516, %v4949
      %v4971 = vmul.f32 %v517, %v4949
      %v4972 = vmul.f32 %v518, %v4949
      %v4973 = vmul.f32 %v519, %v4949
      %v4974 = vmul.f32 %v520, %v4949
      %v4975 = vmul.f32 %v521, %v4949
      %v4976 = vmul.f32 %v522, %v4949
      %v4977 = vmul.f32 %v523, %v4949
      %v4978 = vmul.f32 %v524, %v4949
      %v4979 = vmul.f32 %v525, %v4949
      %v4980 = vmul.f32 %v526, %v4949
      %v4981 = vmul.f32 %v527, %v4949
      %v4982 = vmul.f32 %v528, %v4949
      %v4983 = vmul.f32 %v529, %v4949
      %v4984 = vmul.f32 %v530, %v4949
      %v4985 = vmul.f32 %v531, %v4949
      %v4986 = vmul.f32 %v532, %v4949
      %v4987 = vmul.f32 %v533, %v4949
      %v4988 = vmul.f32 %v534, %v4949
      %v4989 = vmul.f32 %v535, %v4949
      %v4990 = vmul.f32 %v536, %v4949
      %v4991 = vmul.f32 %v537, %v4949
      %v4992 = vmul.f32 %v538, %v4949
      %v4993 = vmul.f32 %v539, %v4949
      %v4994 = vmul.f32 %v540, %v4949
      %v4995 = vmul.f32 %v541, %v4949
      %v4996 = vmul.f32 %v542, %v4949
      %v4997 = vmul.f32 %v543, %v4949
      %v5046 = vrot.slane %v4950, 3
      %v5047 = vrot.slane %v4951, 3
      %v5048 = vsel %vm4557, %v5046, %v5047
      %v5049 = vrot.slane %v4952, 3
      %v5050 = vsel %vm4557, %v5047, %v5049
      %v5051 = vrot.slane %v4953, 3
      %v5052 = vrot.slane %v4954, 3
      %v5053 = vsel %vm4557, %v5051, %v5052
      %v5054 = vrot.slane %v4955, 3
      %v5055 = vsel %vm4557, %v5052, %v5054
      %v5056 = vrot.slane %v4956, 3
      %v5057 = vrot.slane %v4957, 3
      %v5058 = vsel %vm4557, %v5056, %v5057
      %v5059 = vrot.slane %v4958, 3
      %v5060 = vsel %vm4557, %v5057, %v5059
      %v5061 = vrot.slane %v4959, 3
      %v5062 = vrot.slane %v4960, 3
      %v5063 = vsel %vm4557, %v5061, %v5062
      %v5064 = vrot.slane %v4961, 3
      %v5065 = vsel %vm4557, %v5062, %v5064
      %v5066 = vrot.slane %v4962, 3
      %v5067 = vrot.slane %v4963, 3
      %v5068 = vsel %vm4557, %v5066, %v5067
      %v5069 = vrot.slane %v4964, 3
      %v5070 = vsel %vm4557, %v5067, %v5069
      %v5071 = vrot.slane %v4965, 3
      %v5072 = vrot.slane %v4966, 3
      %v5073 = vsel %vm4557, %v5071, %v5072
      %v5074 = vrot.slane %v4967, 3
      %v5075 = vsel %vm4557, %v5072, %v5074
      %v5076 = vrot.slane %v4968, 3
      %v5077 = vrot.slane %v4969, 3
      %v5078 = vsel %vm4557, %v5076, %v5077
      %v5079 = vrot.slane %v4970, 3
      %v5080 = vsel %vm4557, %v5077, %v5079
      %v5081 = vrot.slane %v4971, 3
      %v5082 = vrot.slane %v4972, 3
      %v5083 = vsel %vm4557, %v5081, %v5082
      %v5084 = vrot.slane %v4973, 3
      %v5085 = vsel %vm4557, %v5082, %v5084
      %v5086 = vrot.slane %v4974, 3
      %v5087 = vrot.slane %v4975, 3
      %v5088 = vsel %vm4557, %v5086, %v5087
      %v5089 = vrot.slane %v4976, 3
      %v5090 = vsel %vm4557, %v5087, %v5089
      %v5091 = vrot.slane %v4977, 3
      %v5092 = vrot.slane %v4978, 3
      %v5093 = vsel %vm4557, %v5091, %v5092
      %v5094 = vrot.slane %v4979, 3
      %v5095 = vsel %vm4557, %v5092, %v5094
      %v5096 = vrot.slane %v4980, 3
      %v5097 = vrot.slane %v4981, 3
      %v5098 = vsel %vm4557, %v5096, %v5097
      %v5099 = vrot.slane %v4982, 3
      %v5100 = vsel %vm4557, %v5097, %v5099
      %v5101 = vrot.slane %v4983, 3
      %v5102 = vrot.slane %v4984, 3
      %v5103 = vsel %vm4557, %v5101, %v5102
      %v5104 = vrot.slane %v4985, 3
      %v5105 = vsel %vm4557, %v5102, %v5104
      %v5106 = vrot.slane %v4986, 3
      %v5107 = vrot.slane %v4987, 3
      %v5108 = vsel %vm4557, %v5106, %v5107
      %v5109 = vrot.slane %v4988, 3
      %v5110 = vsel %vm4557, %v5107, %v5109
      %v5111 = vrot.slane %v4989, 3
      %v5112 = vrot.slane %v4990, 3
      %v5113 = vsel %vm4557, %v5111, %v5112
      %v5114 = vrot.slane %v4991, 3
      %v5115 = vsel %vm4557, %v5112, %v5114
      %v5116 = vrot.slane %v4992, 3
      %v5117 = vrot.slane %v4993, 3
      %v5118 = vsel %vm4557, %v5116, %v5117
      %v5119 = vrot.slane %v4994, 3
      %v5120 = vsel %vm4557, %v5117, %v5119
      %v5121 = vrot.slane %v4995, 3
      %v5122 = vrot.slane %v4996, 3
      %v5123 = vsel %vm4557, %v5121, %v5122
      %v5124 = vrot.slane %v4997, 3
      %v5125 = vsel %vm4557, %v5122, %v5124
      %v5158 = vadd.f32 %v4914, %v5048
      %v5159 = vadd.f32 %v4915, %v5050
      %v5160 = vadd.f32 %v4916, %v5053
      %v5161 = vadd.f32 %v4917, %v5055
      %v5162 = vadd.f32 %v4918, %v5058
      %v5163 = vadd.f32 %v4919, %v5060
      %v5164 = vadd.f32 %v4920, %v5063
      %v5165 = vadd.f32 %v4921, %v5065
      %v5166 = vadd.f32 %v4922, %v5068
      %v5167 = vadd.f32 %v4923, %v5070
      %v5168 = vadd.f32 %v4924, %v5073
      %v5169 = vadd.f32 %v4925, %v5075
      %v5170 = vadd.f32 %v4926, %v5078
      %v5171 = vadd.f32 %v4927, %v5080
      %v5172 = vadd.f32 %v4928, %v5083
      %v5173 = vadd.f32 %v4929, %v5085
      %v5174 = vadd.f32 %v4930, %v5088
      %v5175 = vadd.f32 %v4931, %v5090
      %v5176 = vadd.f32 %v4932, %v5093
      %v5177 = vadd.f32 %v4933, %v5095
      %v5178 = vadd.f32 %v4934, %v5098
      %v5179 = vadd.f32 %v4935, %v5100
      %v5180 = vadd.f32 %v4936, %v5103
      %v5181 = vadd.f32 %v4937, %v5105
      %v5182 = vadd.f32 %v4938, %v5108
      %v5183 = vadd.f32 %v4939, %v5110
      %v5184 = vadd.f32 %v4940, %v5113
      %v5185 = vadd.f32 %v4941, %v5115
      %v5186 = vadd.f32 %v4942, %v5118
      %v5187 = vadd.f32 %v4943, %v5120
      %v5188 = vadd.f32 %v4944, %v5123
      %v5189 = vadd.f32 %v4945, %v5125
      %v5190 = vlaneseq
      %v5191 = vshrl.u32 %v5190, 7
      %v5192 = vsub.s32 0, %v5191
      %v5193 = vrot.slane %v559, %v5192
      %v5194 = vmul.f32 %v499, %v5193
      %v5195 = vmul.f32 %v500, %v5193
      %v5196 = vmul.f32 %v501, %v5193
      %v5197 = vmul.f32 %v502, %v5193
      %v5198 = vmul.f32 %v503, %v5193
      %v5199 = vmul.f32 %v504, %v5193
      %v5200 = vmul.f32 %v505, %v5193
      %v5201 = vmul.f32 %v506, %v5193
      %v5202 = vmul.f32 %v507, %v5193
      %v5203 = vmul.f32 %v508, %v5193
      %v5204 = vmul.f32 %v509, %v5193
      %v5205 = vmul.f32 %v510, %v5193
      %v5206 = vmul.f32 %v511, %v5193
      %v5207 = vmul.f32 %v512, %v5193
      %v5208 = vmul.f32 %v513, %v5193
      %v5209 = vmul.f32 %v514, %v5193
      %v5210 = vmul.f32 %v515, %v5193
      %v5211 = vmul.f32 %v516, %v5193
      %v5212 = vmul.f32 %v517, %v5193
      %v5213 = vmul.f32 %v518, %v5193
      %v5214 = vmul.f32 %v519, %v5193
      %v5215 = vmul.f32 %v520, %v5193
      %v5216 = vmul.f32 %v521, %v5193
      %v5217 = vmul.f32 %v522, %v5193
      %v5218 = vmul.f32 %v523, %v5193
      %v5219 = vmul.f32 %v524, %v5193
      %v5220 = vmul.f32 %v525, %v5193
      %v5221 = vmul.f32 %v526, %v5193
      %v5222 = vmul.f32 %v527, %v5193
      %v5223 = vmul.f32 %v528, %v5193
      %v5224 = vmul.f32 %v529, %v5193
      %v5225 = vmul.f32 %v530, %v5193
      %v5226 = vmul.f32 %v531, %v5193
      %v5227 = vmul.f32 %v532, %v5193
      %v5228 = vmul.f32 %v533, %v5193
      %v5229 = vmul.f32 %v534, %v5193
      %v5230 = vmul.f32 %v535, %v5193
      %v5231 = vmul.f32 %v536, %v5193
      %v5232 = vmul.f32 %v537, %v5193
      %v5233 = vmul.f32 %v538, %v5193
      %v5234 = vmul.f32 %v539, %v5193
      %v5235 = vmul.f32 %v540, %v5193
      %v5236 = vmul.f32 %v541, %v5193
      %v5237 = vmul.f32 %v542, %v5193
      %v5238 = vmul.f32 %v543, %v5193
      %v5239 = vmul.f32 %v544, %v5193
      %v5240 = vmul.f32 %v545, %v5193
      %v5241 = vmul.f32 %v546, %v5193
      %v5290 = vrot.slane %v5194, 3
      %v5291 = vrot.slane %v5195, 3
      %v5292 = vsel %vm4557, %v5290, %v5291
      %v5293 = vrot.slane %v5196, 3
      %v5294 = vsel %vm4557, %v5291, %v5293
      %v5295 = vrot.slane %v5197, 3
      %v5296 = vrot.slane %v5198, 3
      %v5297 = vsel %vm4557, %v5295, %v5296
      %v5298 = vrot.slane %v5199, 3
      %v5299 = vsel %vm4557, %v5296, %v5298
      %v5300 = vrot.slane %v5200, 3
      %v5301 = vrot.slane %v5201, 3
      %v5302 = vsel %vm4557, %v5300, %v5301
      %v5303 = vrot.slane %v5202, 3
      %v5304 = vsel %vm4557, %v5301, %v5303
      %v5305 = vrot.slane %v5203, 3
      %v5306 = vrot.slane %v5204, 3
      %v5307 = vsel %vm4557, %v5305, %v5306
      %v5308 = vrot.slane %v5205, 3
      %v5309 = vsel %vm4557, %v5306, %v5308
      %v5310 = vrot.slane %v5206, 3
      %v5311 = vrot.slane %v5207, 3
      %v5312 = vsel %vm4557, %v5310, %v5311
      %v5313 = vrot.slane %v5208, 3
      %v5314 = vsel %vm4557, %v5311, %v5313
      %v5315 = vrot.slane %v5209, 3
      %v5316 = vrot.slane %v5210, 3
      %v5317 = vsel %vm4557, %v5315, %v5316
      %v5318 = vrot.slane %v5211, 3
      %v5319 = vsel %vm4557, %v5316, %v5318
      %v5320 = vrot.slane %v5212, 3
      %v5321 = vrot.slane %v5213, 3
      %v5322 = vsel %vm4557, %v5320, %v5321
      %v5323 = vrot.slane %v5214, 3
      %v5324 = vsel %vm4557, %v5321, %v5323
      %v5325 = vrot.slane %v5215, 3
      %v5326 = vrot.slane %v5216, 3
      %v5327 = vsel %vm4557, %v5325, %v5326
      %v5328 = vrot.slane %v5217, 3
      %v5329 = vsel %vm4557, %v5326, %v5328
      %v5330 = vrot.slane %v5218, 3
      %v5331 = vrot.slane %v5219, 3
      %v5332 = vsel %vm4557, %v5330, %v5331
      %v5333 = vrot.slane %v5220, 3
      %v5334 = vsel %vm4557, %v5331, %v5333
      %v5335 = vrot.slane %v5221, 3
      %v5336 = vrot.slane %v5222, 3
      %v5337 = vsel %vm4557, %v5335, %v5336
      %v5338 = vrot.slane %v5223, 3
      %v5339 = vsel %vm4557, %v5336, %v5338
      %v5340 = vrot.slane %v5224, 3
      %v5341 = vrot.slane %v5225, 3
      %v5342 = vsel %vm4557, %v5340, %v5341
      %v5343 = vrot.slane %v5226, 3
      %v5344 = vsel %vm4557, %v5341, %v5343
      %v5345 = vrot.slane %v5227, 3
      %v5346 = vrot.slane %v5228, 3
      %v5347 = vsel %vm4557, %v5345, %v5346
      %v5348 = vrot.slane %v5229, 3
      %v5349 = vsel %vm4557, %v5346, %v5348
      %v5350 = vrot.slane %v5230, 3
      %v5351 = vrot.slane %v5231, 3
      %v5352 = vsel %vm4557, %v5350, %v5351
      %v5353 = vrot.slane %v5232, 3
      %v5354 = vsel %vm4557, %v5351, %v5353
      %v5355 = vrot.slane %v5233, 3
      %v5356 = vrot.slane %v5234, 3
      %v5357 = vsel %vm4557, %v5355, %v5356
      %v5358 = vrot.slane %v5235, 3
      %v5359 = vsel %vm4557, %v5356, %v5358
      %v5360 = vrot.slane %v5236, 3
      %v5361 = vrot.slane %v5237, 3
      %v5362 = vsel %vm4557, %v5360, %v5361
      %v5363 = vrot.slane %v5238, 3
      %v5364 = vsel %vm4557, %v5361, %v5363
      %v5365 = vrot.slane %v5239, 3
      %v5366 = vrot.slane %v5240, 3
      %v5367 = vsel %vm4557, %v5365, %v5366
      %v5368 = vrot.slane %v5241, 3
      %v5369 = vsel %vm4557, %v5366, %v5368
      %v5402 = vadd.f32 %v5158, %v5292
      %v5403 = vadd.f32 %v5159, %v5294
      %v5404 = vadd.f32 %v5160, %v5297
      %v5405 = vadd.f32 %v5161, %v5299
      %v5406 = vadd.f32 %v5162, %v5302
      %v5407 = vadd.f32 %v5163, %v5304
      %v5408 = vadd.f32 %v5164, %v5307
      %v5409 = vadd.f32 %v5165, %v5309
      %v5410 = vadd.f32 %v5166, %v5312
      %v5411 = vadd.f32 %v5167, %v5314
      %v5412 = vadd.f32 %v5168, %v5317
      %v5413 = vadd.f32 %v5169, %v5319
      %v5414 = vadd.f32 %v5170, %v5322
      %v5415 = vadd.f32 %v5171, %v5324
      %v5416 = vadd.f32 %v5172, %v5327
      %v5417 = vadd.f32 %v5173, %v5329
      %v5418 = vadd.f32 %v5174, %v5332
      %v5419 = vadd.f32 %v5175, %v5334
      %v5420 = vadd.f32 %v5176, %v5337
      %v5421 = vadd.f32 %v5177, %v5339
      %v5422 = vadd.f32 %v5178, %v5342
      %v5423 = vadd.f32 %v5179, %v5344
      %v5424 = vadd.f32 %v5180, %v5347
      %v5425 = vadd.f32 %v5181, %v5349
      %v5426 = vadd.f32 %v5182, %v5352
      %v5427 = vadd.f32 %v5183, %v5354
      %v5428 = vadd.f32 %v5184, %v5357
      %v5429 = vadd.f32 %v5185, %v5359
      %v5430 = vadd.f32 %v5186, %v5362
      %v5431 = vadd.f32 %v5187, %v5364
      %v5432 = vadd.f32 %v5188, %v5367
      %v5433 = vadd.f32 %v5189, %v5369
      %v5434 = vlaneseq
      %v5435 = vshrl.u32 %v5434, 7
      %v5436 = vsub.s32 7, %v5435
      %v5437 = vrot.slane %v559, %v5436
      %v5438 = vmul.f32 %v502, %v5437
      %v5439 = vmul.f32 %v503, %v5437
      %v5440 = vmul.f32 %v504, %v5437
      %v5441 = vmul.f32 %v505, %v5437
      %v5442 = vmul.f32 %v506, %v5437
      %v5443 = vmul.f32 %v507, %v5437
      %v5444 = vmul.f32 %v508, %v5437
      %v5445 = vmul.f32 %v509, %v5437
      %v5446 = vmul.f32 %v510, %v5437
      %v5447 = vmul.f32 %v511, %v5437
      %v5448 = vmul.f32 %v512, %v5437
      %v5449 = vmul.f32 %v513, %v5437
      %v5450 = vmul.f32 %v514, %v5437
      %v5451 = vmul.f32 %v515, %v5437
      %v5452 = vmul.f32 %v516, %v5437
      %v5453 = vmul.f32 %v517, %v5437
      %v5454 = vmul.f32 %v518, %v5437
      %v5455 = vmul.f32 %v519, %v5437
      %v5456 = vmul.f32 %v520, %v5437
      %v5457 = vmul.f32 %v521, %v5437
      %v5458 = vmul.f32 %v522, %v5437
      %v5459 = vmul.f32 %v523, %v5437
      %v5460 = vmul.f32 %v524, %v5437
      %v5461 = vmul.f32 %v525, %v5437
      %v5462 = vmul.f32 %v526, %v5437
      %v5463 = vmul.f32 %v527, %v5437
      %v5464 = vmul.f32 %v528, %v5437
      %v5465 = vmul.f32 %v529, %v5437
      %v5466 = vmul.f32 %v530, %v5437
      %v5467 = vmul.f32 %v531, %v5437
      %v5468 = vmul.f32 %v532, %v5437
      %v5469 = vmul.f32 %v533, %v5437
      %v5470 = vmul.f32 %v534, %v5437
      %v5471 = vmul.f32 %v535, %v5437
      %v5472 = vmul.f32 %v536, %v5437
      %v5473 = vmul.f32 %v537, %v5437
      %v5474 = vmul.f32 %v538, %v5437
      %v5475 = vmul.f32 %v539, %v5437
      %v5476 = vmul.f32 %v540, %v5437
      %v5477 = vmul.f32 %v541, %v5437
      %v5478 = vmul.f32 %v542, %v5437
      %v5479 = vmul.f32 %v543, %v5437
      %v5480 = vmul.f32 %v544, %v5437
      %v5481 = vmul.f32 %v545, %v5437
      %v5482 = vmul.f32 %v546, %v5437
      %v5483 = vmul.f32 %v547, %v5437
      %v5484 = vmul.f32 %v548, %v5437
      %v5485 = vmul.f32 %v549, %v5437
      %v5534 = vrot.slane %v5438, 3
      %v5535 = vrot.slane %v5439, 3
      %v5536 = vsel %vm4557, %v5534, %v5535
      %v5537 = vrot.slane %v5440, 3
      %v5538 = vsel %vm4557, %v5535, %v5537
      %v5539 = vrot.slane %v5441, 3
      %v5540 = vrot.slane %v5442, 3
      %v5541 = vsel %vm4557, %v5539, %v5540
      %v5542 = vrot.slane %v5443, 3
      %v5543 = vsel %vm4557, %v5540, %v5542
      %v5544 = vrot.slane %v5444, 3
      %v5545 = vrot.slane %v5445, 3
      %v5546 = vsel %vm4557, %v5544, %v5545
      %v5547 = vrot.slane %v5446, 3
      %v5548 = vsel %vm4557, %v5545, %v5547
      %v5549 = vrot.slane %v5447, 3
      %v5550 = vrot.slane %v5448, 3
      %v5551 = vsel %vm4557, %v5549, %v5550
      %v5552 = vrot.slane %v5449, 3
      %v5553 = vsel %vm4557, %v5550, %v5552
      %v5554 = vrot.slane %v5450, 3
      %v5555 = vrot.slane %v5451, 3
      %v5556 = vsel %vm4557, %v5554, %v5555
      %v5557 = vrot.slane %v5452, 3
      %v5558 = vsel %vm4557, %v5555, %v5557
      %v5559 = vrot.slane %v5453, 3
      %v5560 = vrot.slane %v5454, 3
      %v5561 = vsel %vm4557, %v5559, %v5560
      %v5562 = vrot.slane %v5455, 3
      %v5563 = vsel %vm4557, %v5560, %v5562
      %v5564 = vrot.slane %v5456, 3
      %v5565 = vrot.slane %v5457, 3
      %v5566 = vsel %vm4557, %v5564, %v5565
      %v5567 = vrot.slane %v5458, 3
      %v5568 = vsel %vm4557, %v5565, %v5567
      %v5569 = vrot.slane %v5459, 3
      %v5570 = vrot.slane %v5460, 3
      %v5571 = vsel %vm4557, %v5569, %v5570
      %v5572 = vrot.slane %v5461, 3
      %v5573 = vsel %vm4557, %v5570, %v5572
      %v5574 = vrot.slane %v5462, 3
      %v5575 = vrot.slane %v5463, 3
      %v5576 = vsel %vm4557, %v5574, %v5575
      %v5577 = vrot.slane %v5464, 3
      %v5578 = vsel %vm4557, %v5575, %v5577
      %v5579 = vrot.slane %v5465, 3
      %v5580 = vrot.slane %v5466, 3
      %v5581 = vsel %vm4557, %v5579, %v5580
      %v5582 = vrot.slane %v5467, 3
      %v5583 = vsel %vm4557, %v5580, %v5582
      %v5584 = vrot.slane %v5468, 3
      %v5585 = vrot.slane %v5469, 3
      %v5586 = vsel %vm4557, %v5584, %v5585
      %v5587 = vrot.slane %v5470, 3
      %v5588 = vsel %vm4557, %v5585, %v5587
      %v5589 = vrot.slane %v5471, 3
      %v5590 = vrot.slane %v5472, 3
      %v5591 = vsel %vm4557, %v5589, %v5590
      %v5592 = vrot.slane %v5473, 3
      %v5593 = vsel %vm4557, %v5590, %v5592
      %v5594 = vrot.slane %v5474, 3
      %v5595 = vrot.slane %v5475, 3
      %v5596 = vsel %vm4557, %v5594, %v5595
      %v5597 = vrot.slane %v5476, 3
      %v5598 = vsel %vm4557, %v5595, %v5597
      %v5599 = vrot.slane %v5477, 3
      %v5600 = vrot.slane %v5478, 3
      %v5601 = vsel %vm4557, %v5599, %v5600
      %v5602 = vrot.slane %v5479, 3
      %v5603 = vsel %vm4557, %v5600, %v5602
      %v5604 = vrot.slane %v5480, 3
      %v5605 = vrot.slane %v5481, 3
      %v5606 = vsel %vm4557, %v5604, %v5605
      %v5607 = vrot.slane %v5482, 3
      %v5608 = vsel %vm4557, %v5605, %v5607
      %v5609 = vrot.slane %v5483, 3
      %v5610 = vrot.slane %v5484, 3
      %v5611 = vsel %vm4557, %v5609, %v5610
      %v5612 = vrot.slane %v5485, 3
      %v5613 = vsel %vm4557, %v5610, %v5612
      %v5646 = vadd.f32 %v5402, %v5536
      %v5647 = vadd.f32 %v5403, %v5538
      %v5648 = vadd.f32 %v5404, %v5541
      %v5649 = vadd.f32 %v5405, %v5543
      %v5650 = vadd.f32 %v5406, %v5546
      %v5651 = vadd.f32 %v5407, %v5548
      %v5652 = vadd.f32 %v5408, %v5551
      %v5653 = vadd.f32 %v5409, %v5553
      %v5654 = vadd.f32 %v5410, %v5556
      %v5655 = vadd.f32 %v5411, %v5558
      %v5656 = vadd.f32 %v5412, %v5561
      %v5657 = vadd.f32 %v5413, %v5563
      %v5658 = vadd.f32 %v5414, %v5566
      %v5659 = vadd.f32 %v5415, %v5568
      %v5660 = vadd.f32 %v5416, %v5571
      %v5661 = vadd.f32 %v5417, %v5573
      %v5662 = vadd.f32 %v5418, %v5576
      %v5663 = vadd.f32 %v5419, %v5578
      %v5664 = vadd.f32 %v5420, %v5581
      %v5665 = vadd.f32 %v5421, %v5583
      %v5666 = vadd.f32 %v5422, %v5586
      %v5667 = vadd.f32 %v5423, %v5588
      %v5668 = vadd.f32 %v5424, %v5591
      %v5669 = vadd.f32 %v5425, %v5593
      %v5670 = vadd.f32 %v5426, %v5596
      %v5671 = vadd.f32 %v5427, %v5598
      %v5672 = vadd.f32 %v5428, %v5601
      %v5673 = vadd.f32 %v5429, %v5603
      %v5674 = vadd.f32 %v5430, %v5606
      %v5675 = vadd.f32 %v5431, %v5608
      %v5676 = vadd.f32 %v5432, %v5611
      %v5677 = vadd.f32 %v5433, %v5613
      %v5678 = vlaneseq
      %v5679 = vshrl.u32 %v5678, 7
      %v5680 = vsub.s32 6, %v5679
      %v5681 = vrot.slane %v560, %v5680
      %v5682 = vmul.f32 %v505, %v5681
      %v5683 = vmul.f32 %v506, %v5681
      %v5684 = vmul.f32 %v507, %v5681
      %v5685 = vmul.f32 %v508, %v5681
      %v5686 = vmul.f32 %v509, %v5681
      %v5687 = vmul.f32 %v510, %v5681
      %v5688 = vmul.f32 %v511, %v5681
      %v5689 = vmul.f32 %v512, %v5681
      %v5690 = vmul.f32 %v513, %v5681
      %v5691 = vmul.f32 %v514, %v5681
      %v5692 = vmul.f32 %v515, %v5681
      %v5693 = vmul.f32 %v516, %v5681
      %v5694 = vmul.f32 %v517, %v5681
      %v5695 = vmul.f32 %v518, %v5681
      %v5696 = vmul.f32 %v519, %v5681
      %v5697 = vmul.f32 %v520, %v5681
      %v5698 = vmul.f32 %v521, %v5681
      %v5699 = vmul.f32 %v522, %v5681
      %v5700 = vmul.f32 %v523, %v5681
      %v5701 = vmul.f32 %v524, %v5681
      %v5702 = vmul.f32 %v525, %v5681
      %v5703 = vmul.f32 %v526, %v5681
      %v5704 = vmul.f32 %v527, %v5681
      %v5705 = vmul.f32 %v528, %v5681
      %v5706 = vmul.f32 %v529, %v5681
      %v5707 = vmul.f32 %v530, %v5681
      %v5708 = vmul.f32 %v531, %v5681
      %v5709 = vmul.f32 %v532, %v5681
      %v5710 = vmul.f32 %v533, %v5681
      %v5711 = vmul.f32 %v534, %v5681
      %v5712 = vmul.f32 %v535, %v5681
      %v5713 = vmul.f32 %v536, %v5681
      %v5714 = vmul.f32 %v537, %v5681
      %v5715 = vmul.f32 %v538, %v5681
      %v5716 = vmul.f32 %v539, %v5681
      %v5717 = vmul.f32 %v540, %v5681
      %v5718 = vmul.f32 %v541, %v5681
      %v5719 = vmul.f32 %v542, %v5681
      %v5720 = vmul.f32 %v543, %v5681
      %v5721 = vmul.f32 %v544, %v5681
      %v5722 = vmul.f32 %v545, %v5681
      %v5723 = vmul.f32 %v546, %v5681
      %v5724 = vmul.f32 %v547, %v5681
      %v5725 = vmul.f32 %v548, %v5681
      %v5726 = vmul.f32 %v549, %v5681
      %v5727 = vmul.f32 %v550, %v5681
      %v5728 = vmul.f32 %v551, %v5681
      %v5729 = vmul.f32 %v552, %v5681
      %v5778 = vrot.slane %v5682, 3
      %v5779 = vrot.slane %v5683, 3
      %v5780 = vsel %vm4557, %v5778, %v5779
      %v5781 = vrot.slane %v5684, 3
      %v5782 = vsel %vm4557, %v5779, %v5781
      %v5783 = vrot.slane %v5685, 3
      %v5784 = vrot.slane %v5686, 3
      %v5785 = vsel %vm4557, %v5783, %v5784
      %v5786 = vrot.slane %v5687, 3
      %v5787 = vsel %vm4557, %v5784, %v5786
      %v5788 = vrot.slane %v5688, 3
      %v5789 = vrot.slane %v5689, 3
      %v5790 = vsel %vm4557, %v5788, %v5789
      %v5791 = vrot.slane %v5690, 3
      %v5792 = vsel %vm4557, %v5789, %v5791
      %v5793 = vrot.slane %v5691, 3
      %v5794 = vrot.slane %v5692, 3
      %v5795 = vsel %vm4557, %v5793, %v5794
      %v5796 = vrot.slane %v5693, 3
      %v5797 = vsel %vm4557, %v5794, %v5796
      %v5798 = vrot.slane %v5694, 3
      %v5799 = vrot.slane %v5695, 3
      %v5800 = vsel %vm4557, %v5798, %v5799
      %v5801 = vrot.slane %v5696, 3
      %v5802 = vsel %vm4557, %v5799, %v5801
      %v5803 = vrot.slane %v5697, 3
      %v5804 = vrot.slane %v5698, 3
      %v5805 = vsel %vm4557, %v5803, %v5804
      %v5806 = vrot.slane %v5699, 3
      %v5807 = vsel %vm4557, %v5804, %v5806
      %v5808 = vrot.slane %v5700, 3
      %v5809 = vrot.slane %v5701, 3
      %v5810 = vsel %vm4557, %v5808, %v5809
      %v5811 = vrot.slane %v5702, 3
      %v5812 = vsel %vm4557, %v5809, %v5811
      %v5813 = vrot.slane %v5703, 3
      %v5814 = vrot.slane %v5704, 3
      %v5815 = vsel %vm4557, %v5813, %v5814
      %v5816 = vrot.slane %v5705, 3
      %v5817 = vsel %vm4557, %v5814, %v5816
      %v5818 = vrot.slane %v5706, 3
      %v5819 = vrot.slane %v5707, 3
      %v5820 = vsel %vm4557, %v5818, %v5819
      %v5821 = vrot.slane %v5708, 3
      %v5822 = vsel %vm4557, %v5819, %v5821
      %v5823 = vrot.slane %v5709, 3
      %v5824 = vrot.slane %v5710, 3
      %v5825 = vsel %vm4557, %v5823, %v5824
      %v5826 = vrot.slane %v5711, 3
      %v5827 = vsel %vm4557, %v5824, %v5826
      %v5828 = vrot.slane %v5712, 3
      %v5829 = vrot.slane %v5713, 3
      %v5830 = vsel %vm4557, %v5828, %v5829
      %v5831 = vrot.slane %v5714, 3
      %v5832 = vsel %vm4557, %v5829, %v5831
      %v5833 = vrot.slane %v5715, 3
      %v5834 = vrot.slane %v5716, 3
      %v5835 = vsel %vm4557, %v5833, %v5834
      %v5836 = vrot.slane %v5717, 3
      %v5837 = vsel %vm4557, %v5834, %v5836
      %v5838 = vrot.slane %v5718, 3
      %v5839 = vrot.slane %v5719, 3
      %v5840 = vsel %vm4557, %v5838, %v5839
      %v5841 = vrot.slane %v5720, 3
      %v5842 = vsel %vm4557, %v5839, %v5841
      %v5843 = vrot.slane %v5721, 3
      %v5844 = vrot.slane %v5722, 3
      %v5845 = vsel %vm4557, %v5843, %v5844
      %v5846 = vrot.slane %v5723, 3
      %v5847 = vsel %vm4557, %v5844, %v5846
      %v5848 = vrot.slane %v5724, 3
      %v5849 = vrot.slane %v5725, 3
      %v5850 = vsel %vm4557, %v5848, %v5849
      %v5851 = vrot.slane %v5726, 3
      %v5852 = vsel %vm4557, %v5849, %v5851
      %v5853 = vrot.slane %v5727, 3
      %v5854 = vrot.slane %v5728, 3
      %v5855 = vsel %vm4557, %v5853, %v5854
      %v5856 = vrot.slane %v5729, 3
      %v5857 = vsel %vm4557, %v5854, %v5856
      %v5890 = vadd.f32 %v5646, %v5780
      %v5891 = vadd.f32 %v5647, %v5782
      %v5892 = vadd.f32 %v5648, %v5785
      %v5893 = vadd.f32 %v5649, %v5787
      %v5894 = vadd.f32 %v5650, %v5790
      %v5895 = vadd.f32 %v5651, %v5792
      %v5896 = vadd.f32 %v5652, %v5795
      %v5897 = vadd.f32 %v5653, %v5797
      %v5898 = vadd.f32 %v5654, %v5800
      %v5899 = vadd.f32 %v5655, %v5802
      %v5900 = vadd.f32 %v5656, %v5805
      %v5901 = vadd.f32 %v5657, %v5807
      %v5902 = vadd.f32 %v5658, %v5810
      %v5903 = vadd.f32 %v5659, %v5812
      %v5904 = vadd.f32 %v5660, %v5815
      %v5905 = vadd.f32 %v5661, %v5817
      %v5906 = vadd.f32 %v5662, %v5820
      %v5907 = vadd.f32 %v5663, %v5822
      %v5908 = vadd.f32 %v5664, %v5825
      %v5909 = vadd.f32 %v5665, %v5827
      %v5910 = vadd.f32 %v5666, %v5830
      %v5911 = vadd.f32 %v5667, %v5832
      %v5912 = vadd.f32 %v5668, %v5835
      %v5913 = vadd.f32 %v5669, %v5837
      %v5914 = vadd.f32 %v5670, %v5840
      %v5915 = vadd.f32 %v5671, %v5842
      %v5916 = vadd.f32 %v5672, %v5845
      %v5917 = vadd.f32 %v5673, %v5847
      %v5918 = vadd.f32 %v5674, %v5850
      %v5919 = vadd.f32 %v5675, %v5852
      %v5920 = vadd.f32 %v5676, %v5855
      %v5921 = vadd.f32 %v5677, %v5857
      %v5922 = vlaneseq
      %v5923 = vshrl.u32 %v5922, 7
      %v5924 = vsub.s32 5, %v5923
      %v5925 = vrot.slane %v561, %v5924
      %v5926 = vmul.f32 %v508, %v5925
      %v5927 = vmul.f32 %v509, %v5925
      %v5928 = vmul.f32 %v510, %v5925
      %v5929 = vmul.f32 %v511, %v5925
      %v5930 = vmul.f32 %v512, %v5925
      %v5931 = vmul.f32 %v513, %v5925
      %v5932 = vmul.f32 %v514, %v5925
      %v5933 = vmul.f32 %v515, %v5925
      %v5934 = vmul.f32 %v516, %v5925
      %v5935 = vmul.f32 %v517, %v5925
      %v5936 = vmul.f32 %v518, %v5925
      %v5937 = vmul.f32 %v519, %v5925
      %v5938 = vmul.f32 %v520, %v5925
      %v5939 = vmul.f32 %v521, %v5925
      %v5940 = vmul.f32 %v522, %v5925
      %v5941 = vmul.f32 %v523, %v5925
      %v5942 = vmul.f32 %v524, %v5925
      %v5943 = vmul.f32 %v525, %v5925
      %v5944 = vmul.f32 %v526, %v5925
      %v5945 = vmul.f32 %v527, %v5925
      %v5946 = vmul.f32 %v528, %v5925
      %v5947 = vmul.f32 %v529, %v5925
      %v5948 = vmul.f32 %v530, %v5925
      %v5949 = vmul.f32 %v531, %v5925
      %v5950 = vmul.f32 %v532, %v5925
      %v5951 = vmul.f32 %v533, %v5925
      %v5952 = vmul.f32 %v534, %v5925
      %v5953 = vmul.f32 %v535, %v5925
      %v5954 = vmul.f32 %v536, %v5925
      %v5955 = vmul.f32 %v537, %v5925
      %v5956 = vmul.f32 %v538, %v5925
      %v5957 = vmul.f32 %v539, %v5925
      %v5958 = vmul.f32 %v540, %v5925
      %v5959 = vmul.f32 %v541, %v5925
      %v5960 = vmul.f32 %v542, %v5925
      %v5961 = vmul.f32 %v543, %v5925
      %v5962 = vmul.f32 %v544, %v5925
      %v5963 = vmul.f32 %v545, %v5925
      %v5964 = vmul.f32 %v546, %v5925
      %v5965 = vmul.f32 %v547, %v5925
      %v5966 = vmul.f32 %v548, %v5925
      %v5967 = vmul.f32 %v549, %v5925
      %v5968 = vmul.f32 %v550, %v5925
      %v5969 = vmul.f32 %v551, %v5925
      %v5970 = vmul.f32 %v552, %v5925
      %v5971 = vmul.f32 %v553, %v5925
      %v5972 = vmul.f32 %v554, %v5925
      %v5973 = vmul.f32 %v555, %v5925
      %v6022 = vrot.slane %v5926, 3
      %v6023 = vrot.slane %v5927, 3
      %v6024 = vsel %vm4557, %v6022, %v6023
      %v6025 = vrot.slane %v5928, 3
      %v6026 = vsel %vm4557, %v6023, %v6025
      %v6027 = vrot.slane %v5929, 3
      %v6028 = vrot.slane %v5930, 3
      %v6029 = vsel %vm4557, %v6027, %v6028
      %v6030 = vrot.slane %v5931, 3
      %v6031 = vsel %vm4557, %v6028, %v6030
      %v6032 = vrot.slane %v5932, 3
      %v6033 = vrot.slane %v5933, 3
      %v6034 = vsel %vm4557, %v6032, %v6033
      %v6035 = vrot.slane %v5934, 3
      %v6036 = vsel %vm4557, %v6033, %v6035
      %v6037 = vrot.slane %v5935, 3
      %v6038 = vrot.slane %v5936, 3
      %v6039 = vsel %vm4557, %v6037, %v6038
      %v6040 = vrot.slane %v5937, 3
      %v6041 = vsel %vm4557, %v6038, %v6040
      %v6042 = vrot.slane %v5938, 3
      %v6043 = vrot.slane %v5939, 3
      %v6044 = vsel %vm4557, %v6042, %v6043
      %v6045 = vrot.slane %v5940, 3
      %v6046 = vsel %vm4557, %v6043, %v6045
      %v6047 = vrot.slane %v5941, 3
      %v6048 = vrot.slane %v5942, 3
      %v6049 = vsel %vm4557, %v6047, %v6048
      %v6050 = vrot.slane %v5943, 3
      %v6051 = vsel %vm4557, %v6048, %v6050
      %v6052 = vrot.slane %v5944, 3
      %v6053 = vrot.slane %v5945, 3
      %v6054 = vsel %vm4557, %v6052, %v6053
      %v6055 = vrot.slane %v5946, 3
      %v6056 = vsel %vm4557, %v6053, %v6055
      %v6057 = vrot.slane %v5947, 3
      %v6058 = vrot.slane %v5948, 3
      %v6059 = vsel %vm4557, %v6057, %v6058
      %v6060 = vrot.slane %v5949, 3
      %v6061 = vsel %vm4557, %v6058, %v6060
      %v6062 = vrot.slane %v5950, 3
      %v6063 = vrot.slane %v5951, 3
      %v6064 = vsel %vm4557, %v6062, %v6063
      %v6065 = vrot.slane %v5952, 3
      %v6066 = vsel %vm4557, %v6063, %v6065
      %v6067 = vrot.slane %v5953, 3
      %v6068 = vrot.slane %v5954, 3
      %v6069 = vsel %vm4557, %v6067, %v6068
      %v6070 = vrot.slane %v5955, 3
      %v6071 = vsel %vm4557, %v6068, %v6070
      %v6072 = vrot.slane %v5956, 3
      %v6073 = vrot.slane %v5957, 3
      %v6074 = vsel %vm4557, %v6072, %v6073
      %v6075 = vrot.slane %v5958, 3
      %v6076 = vsel %vm4557, %v6073, %v6075
      %v6077 = vrot.slane %v5959, 3
      %v6078 = vrot.slane %v5960, 3
      %v6079 = vsel %vm4557, %v6077, %v6078
      %v6080 = vrot.slane %v5961, 3
      %v6081 = vsel %vm4557, %v6078, %v6080
      %v6082 = vrot.slane %v5962, 3
      %v6083 = vrot.slane %v5963, 3
      %v6084 = vsel %vm4557, %v6082, %v6083
      %v6085 = vrot.slane %v5964, 3
      %v6086 = vsel %vm4557, %v6083, %v6085
      %v6087 = vrot.slane %v5965, 3
      %v6088 = vrot.slane %v5966, 3
      %v6089 = vsel %vm4557, %v6087, %v6088
      %v6090 = vrot.slane %v5967, 3
      %v6091 = vsel %vm4557, %v6088, %v6090
      %v6092 = vrot.slane %v5968, 3
      %v6093 = vrot.slane %v5969, 3
      %v6094 = vsel %vm4557, %v6092, %v6093
      %v6095 = vrot.slane %v5970, 3
      %v6096 = vsel %vm4557, %v6093, %v6095
      %v6097 = vrot.slane %v5971, 3
      %v6098 = vrot.slane %v5972, 3
      %v6099 = vsel %vm4557, %v6097, %v6098
      %v6100 = vrot.slane %v5973, 3
      %v6101 = vsel %vm4557, %v6098, %v6100
      %v6134 = vadd.f32 %v5890, %v6024
      %v6135 = vadd.f32 %v5891, %v6026
      %v6136 = vadd.f32 %v5892, %v6029
      %v6137 = vadd.f32 %v5893, %v6031
      %v6138 = vadd.f32 %v5894, %v6034
      %v6139 = vadd.f32 %v5895, %v6036
      %v6140 = vadd.f32 %v5896, %v6039
      %v6141 = vadd.f32 %v5897, %v6041
      %v6142 = vadd.f32 %v5898, %v6044
      %v6143 = vadd.f32 %v5899, %v6046
      %v6144 = vadd.f32 %v5900, %v6049
      %v6145 = vadd.f32 %v5901, %v6051
      %v6146 = vadd.f32 %v5902, %v6054
      %v6147 = vadd.f32 %v5903, %v6056
      %v6148 = vadd.f32 %v5904, %v6059
      %v6149 = vadd.f32 %v5905, %v6061
      %v6150 = vadd.f32 %v5906, %v6064
      %v6151 = vadd.f32 %v5907, %v6066
      %v6152 = vadd.f32 %v5908, %v6069
      %v6153 = vadd.f32 %v5909, %v6071
      %v6154 = vadd.f32 %v5910, %v6074
      %v6155 = vadd.f32 %v5911, %v6076
      %v6156 = vadd.f32 %v5912, %v6079
      %v6157 = vadd.f32 %v5913, %v6081
      %v6158 = vadd.f32 %v5914, %v6084
      %v6159 = vadd.f32 %v5915, %v6086
      %v6160 = vadd.f32 %v5916, %v6089
      %v6161 = vadd.f32 %v5917, %v6091
      %v6162 = vadd.f32 %v5918, %v6094
      %v6163 = vadd.f32 %v5919, %v6096
      %v6164 = vadd.f32 %v5920, %v6099
      %v6165 = vadd.f32 %v5921, %v6101
      %v6166 = vlaneseq
      %v6167 = vshrl.u32 %v6166, 7
      %v6168 = vsub.s32 4, %v6167
      %v6169 = vrot.slane %v556, %v6168
      %v6170 = vmul.f32 %v490, %v6169
      %v6171 = vmul.f32 %v491, %v6169
      %v6172 = vmul.f32 %v492, %v6169
      %v6173 = vmul.f32 %v493, %v6169
      %v6174 = vmul.f32 %v494, %v6169
      %v6175 = vmul.f32 %v495, %v6169
      %v6176 = vmul.f32 %v496, %v6169
      %v6177 = vmul.f32 %v497, %v6169
      %v6178 = vmul.f32 %v498, %v6169
      %v6179 = vmul.f32 %v499, %v6169
      %v6180 = vmul.f32 %v500, %v6169
      %v6181 = vmul.f32 %v501, %v6169
      %v6182 = vmul.f32 %v502, %v6169
      %v6183 = vmul.f32 %v503, %v6169
      %v6184 = vmul.f32 %v504, %v6169
      %v6185 = vmul.f32 %v505, %v6169
      %v6186 = vmul.f32 %v506, %v6169
      %v6187 = vmul.f32 %v507, %v6169
      %v6188 = vmul.f32 %v508, %v6169
      %v6189 = vmul.f32 %v509, %v6169
      %v6190 = vmul.f32 %v510, %v6169
      %v6191 = vmul.f32 %v511, %v6169
      %v6192 = vmul.f32 %v512, %v6169
      %v6193 = vmul.f32 %v513, %v6169
      %v6194 = vmul.f32 %v514, %v6169
      %v6195 = vmul.f32 %v515, %v6169
      %v6196 = vmul.f32 %v516, %v6169
      %v6197 = vmul.f32 %v517, %v6169
      %v6198 = vmul.f32 %v518, %v6169
      %v6199 = vmul.f32 %v519, %v6169
      %v6200 = vmul.f32 %v520, %v6169
      %v6201 = vmul.f32 %v521, %v6169
      %v6202 = vmul.f32 %v522, %v6169
      %v6203 = vmul.f32 %v523, %v6169
      %v6204 = vmul.f32 %v524, %v6169
      %v6205 = vmul.f32 %v525, %v6169
      %v6206 = vmul.f32 %v526, %v6169
      %v6207 = vmul.f32 %v527, %v6169
      %v6208 = vmul.f32 %v528, %v6169
      %v6209 = vmul.f32 %v529, %v6169
      %v6210 = vmul.f32 %v530, %v6169
      %v6211 = vmul.f32 %v531, %v6169
      %v6212 = vmul.f32 %v532, %v6169
      %v6213 = vmul.f32 %v533, %v6169
      %v6214 = vmul.f32 %v534, %v6169
      %v6215 = vmul.f32 %v535, %v6169
      %v6216 = vmul.f32 %v536, %v6169
      %v6217 = vmul.f32 %v537, %v6169
      %vm6266 = vcmask 1043456
      %v6267 = vrot.slane %v6170, 4
      %v6268 = vrot.slane %v6171, 4
      %v6269 = vsel %vm6266, %v6267, %v6268
      %v6270 = vrot.slane %v6172, 4
      %v6271 = vsel %vm6266, %v6268, %v6270
      %v6272 = vrot.slane %v6173, 4
      %v6273 = vrot.slane %v6174, 4
      %v6274 = vsel %vm6266, %v6272, %v6273
      %v6275 = vrot.slane %v6175, 4
      %v6276 = vsel %vm6266, %v6273, %v6275
      %v6277 = vrot.slane %v6176, 4
      %v6278 = vrot.slane %v6177, 4
      %v6279 = vsel %vm6266, %v6277, %v6278
      %v6280 = vrot.slane %v6178, 4
      %v6281 = vsel %vm6266, %v6278, %v6280
      %v6282 = vrot.slane %v6179, 4
      %v6283 = vrot.slane %v6180, 4
      %v6284 = vsel %vm6266, %v6282, %v6283
      %v6285 = vrot.slane %v6181, 4
      %v6286 = vsel %vm6266, %v6283, %v6285
      %v6287 = vrot.slane %v6182, 4
      %v6288 = vrot.slane %v6183, 4
      %v6289 = vsel %vm6266, %v6287, %v6288
      %v6290 = vrot.slane %v6184, 4
      %v6291 = vsel %vm6266, %v6288, %v6290
      %v6292 = vrot.slane %v6185, 4
      %v6293 = vrot.slane %v6186, 4
      %v6294 = vsel %vm6266, %v6292, %v6293
      %v6295 = vrot.slane %v6187, 4
      %v6296 = vsel %vm6266, %v6293, %v6295
      %v6297 = vrot.slane %v6188, 4
      %v6298 = vrot.slane %v6189, 4
      %v6299 = vsel %vm6266, %v6297, %v6298
      %v6300 = vrot.slane %v6190, 4
      %v6301 = vsel %vm6266, %v6298, %v6300
      %v6302 = vrot.slane %v6191, 4
      %v6303 = vrot.slane %v6192, 4
      %v6304 = vsel %vm6266, %v6302, %v6303
      %v6305 = vrot.slane %v6193, 4
      %v6306 = vsel %vm6266, %v6303, %v6305
      %v6307 = vrot.slane %v6194, 4
      %v6308 = vrot.slane %v6195, 4
      %v6309 = vsel %vm6266, %v6307, %v6308
      %v6310 = vrot.slane %v6196, 4
      %v6311 = vsel %vm6266, %v6308, %v6310
      %v6312 = vrot.slane %v6197, 4
      %v6313 = vrot.slane %v6198, 4
      %v6314 = vsel %vm6266, %v6312, %v6313
      %v6315 = vrot.slane %v6199, 4
      %v6316 = vsel %vm6266, %v6313, %v6315
      %v6317 = vrot.slane %v6200, 4
      %v6318 = vrot.slane %v6201, 4
      %v6319 = vsel %vm6266, %v6317, %v6318
      %v6320 = vrot.slane %v6202, 4
      %v6321 = vsel %vm6266, %v6318, %v6320
      %v6322 = vrot.slane %v6203, 4
      %v6323 = vrot.slane %v6204, 4
      %v6324 = vsel %vm6266, %v6322, %v6323
      %v6325 = vrot.slane %v6205, 4
      %v6326 = vsel %vm6266, %v6323, %v6325
      %v6327 = vrot.slane %v6206, 4
      %v6328 = vrot.slane %v6207, 4
      %v6329 = vsel %vm6266, %v6327, %v6328
      %v6330 = vrot.slane %v6208, 4
      %v6331 = vsel %vm6266, %v6328, %v6330
      %v6332 = vrot.slane %v6209, 4
      %v6333 = vrot.slane %v6210, 4
      %v6334 = vsel %vm6266, %v6332, %v6333
      %v6335 = vrot.slane %v6211, 4
      %v6336 = vsel %vm6266, %v6333, %v6335
      %v6337 = vrot.slane %v6212, 4
      %v6338 = vrot.slane %v6213, 4
      %v6339 = vsel %vm6266, %v6337, %v6338
      %v6340 = vrot.slane %v6214, 4
      %v6341 = vsel %vm6266, %v6338, %v6340
      %v6342 = vrot.slane %v6215, 4
      %v6343 = vrot.slane %v6216, 4
      %v6344 = vsel %vm6266, %v6342, %v6343
      %v6345 = vrot.slane %v6217, 4
      %v6346 = vsel %vm6266, %v6343, %v6345
      %v6379 = vadd.f32 %v6134, %v6269
      %v6380 = vadd.f32 %v6135, %v6271
      %v6381 = vadd.f32 %v6136, %v6274
      %v6382 = vadd.f32 %v6137, %v6276
      %v6383 = vadd.f32 %v6138, %v6279
      %v6384 = vadd.f32 %v6139, %v6281
      %v6385 = vadd.f32 %v6140, %v6284
      %v6386 = vadd.f32 %v6141, %v6286
      %v6387 = vadd.f32 %v6142, %v6289
      %v6388 = vadd.f32 %v6143, %v6291
      %v6389 = vadd.f32 %v6144, %v6294
      %v6390 = vadd.f32 %v6145, %v6296
      %v6391 = vadd.f32 %v6146, %v6299
      %v6392 = vadd.f32 %v6147, %v6301
      %v6393 = vadd.f32 %v6148, %v6304
      %v6394 = vadd.f32 %v6149, %v6306
      %v6395 = vadd.f32 %v6150, %v6309
      %v6396 = vadd.f32 %v6151, %v6311
      %v6397 = vadd.f32 %v6152, %v6314
      %v6398 = vadd.f32 %v6153, %v6316
      %v6399 = vadd.f32 %v6154, %v6319
      %v6400 = vadd.f32 %v6155, %v6321
      %v6401 = vadd.f32 %v6156, %v6324
      %v6402 = vadd.f32 %v6157, %v6326
      %v6403 = vadd.f32 %v6158, %v6329
      %v6404 = vadd.f32 %v6159, %v6331
      %v6405 = vadd.f32 %v6160, %v6334
      %v6406 = vadd.f32 %v6161, %v6336
      %v6407 = vadd.f32 %v6162, %v6339
      %v6408 = vadd.f32 %v6163, %v6341
      %v6409 = vadd.f32 %v6164, %v6344
      %v6410 = vadd.f32 %v6165, %v6346
      %v6411 = vlaneseq
      %v6412 = vshrl.u32 %v6411, 7
      %v6413 = vsub.s32 3, %v6412
      %v6414 = vrot.slane %v557, %v6413
      %v6415 = vmul.f32 %v493, %v6414
      %v6416 = vmul.f32 %v494, %v6414
      %v6417 = vmul.f32 %v495, %v6414
      %v6418 = vmul.f32 %v496, %v6414
      %v6419 = vmul.f32 %v497, %v6414
      %v6420 = vmul.f32 %v498, %v6414
      %v6421 = vmul.f32 %v499, %v6414
      %v6422 = vmul.f32 %v500, %v6414
      %v6423 = vmul.f32 %v501, %v6414
      %v6424 = vmul.f32 %v502, %v6414
      %v6425 = vmul.f32 %v503, %v6414
      %v6426 = vmul.f32 %v504, %v6414
      %v6427 = vmul.f32 %v505, %v6414
      %v6428 = vmul.f32 %v506, %v6414
      %v6429 = vmul.f32 %v507, %v6414
      %v6430 = vmul.f32 %v508, %v6414
      %v6431 = vmul.f32 %v509, %v6414
      %v6432 = vmul.f32 %v510, %v6414
      %v6433 = vmul.f32 %v511, %v6414
      %v6434 = vmul.f32 %v512, %v6414
      %v6435 = vmul.f32 %v513, %v6414
      %v6436 = vmul.f32 %v514, %v6414
      %v6437 = vmul.f32 %v515, %v6414
      %v6438 = vmul.f32 %v516, %v6414
      %v6439 = vmul.f32 %v517, %v6414
      %v6440 = vmul.f32 %v518, %v6414
      %v6441 = vmul.f32 %v519, %v6414
      %v6442 = vmul.f32 %v520, %v6414
      %v6443 = vmul.f32 %v521, %v6414
      %v6444 = vmul.f32 %v522, %v6414
      %v6445 = vmul.f32 %v523, %v6414
      %v6446 = vmul.f32 %v524, %v6414
      %v6447 = vmul.f32 %v525, %v6414
      %v6448 = vmul.f32 %v526, %v6414
      %v6449 = vmul.f32 %v527, %v6414
      %v6450 = vmul.f32 %v528, %v6414
      %v6451 = vmul.f32 %v529, %v6414
      %v6452 = vmul.f32 %v530, %v6414
      %v6453 = vmul.f32 %v531, %v6414
      %v6454 = vmul.f32 %v532, %v6414
      %v6455 = vmul.f32 %v533, %v6414
      %v6456 = vmul.f32 %v534, %v6414
      %v6457 = vmul.f32 %v535, %v6414
      %v6458 = vmul.f32 %v536, %v6414
      %v6459 = vmul.f32 %v537, %v6414
      %v6460 = vmul.f32 %v538, %v6414
      %v6461 = vmul.f32 %v539, %v6414
      %v6462 = vmul.f32 %v540, %v6414
      %v6511 = vrot.slane %v6415, 4
      %v6512 = vrot.slane %v6416, 4
      %v6513 = vsel %vm6266, %v6511, %v6512
      %v6514 = vrot.slane %v6417, 4
      %v6515 = vsel %vm6266, %v6512, %v6514
      %v6516 = vrot.slane %v6418, 4
      %v6517 = vrot.slane %v6419, 4
      %v6518 = vsel %vm6266, %v6516, %v6517
      %v6519 = vrot.slane %v6420, 4
      %v6520 = vsel %vm6266, %v6517, %v6519
      %v6521 = vrot.slane %v6421, 4
      %v6522 = vrot.slane %v6422, 4
      %v6523 = vsel %vm6266, %v6521, %v6522
      %v6524 = vrot.slane %v6423, 4
      %v6525 = vsel %vm6266, %v6522, %v6524
      %v6526 = vrot.slane %v6424, 4
      %v6527 = vrot.slane %v6425, 4
      %v6528 = vsel %vm6266, %v6526, %v6527
      %v6529 = vrot.slane %v6426, 4
      %v6530 = vsel %vm6266, %v6527, %v6529
      %v6531 = vrot.slane %v6427, 4
      %v6532 = vrot.slane %v6428, 4
      %v6533 = vsel %vm6266, %v6531, %v6532
      %v6534 = vrot.slane %v6429, 4
      %v6535 = vsel %vm6266, %v6532, %v6534
      %v6536 = vrot.slane %v6430, 4
      %v6537 = vrot.slane %v6431, 4
      %v6538 = vsel %vm6266, %v6536, %v6537
      %v6539 = vrot.slane %v6432, 4
      %v6540 = vsel %vm6266, %v6537, %v6539
      %v6541 = vrot.slane %v6433, 4
      %v6542 = vrot.slane %v6434, 4
      %v6543 = vsel %vm6266, %v6541, %v6542
      %v6544 = vrot.slane %v6435, 4
      %v6545 = vsel %vm6266, %v6542, %v6544
      %v6546 = vrot.slane %v6436, 4
      %v6547 = vrot.slane %v6437, 4
      %v6548 = vsel %vm6266, %v6546, %v6547
      %v6549 = vrot.slane %v6438, 4
      %v6550 = vsel %vm6266, %v6547, %v6549
      %v6551 = vrot.slane %v6439, 4
      %v6552 = vrot.slane %v6440, 4
      %v6553 = vsel %vm6266, %v6551, %v6552
      %v6554 = vrot.slane %v6441, 4
      %v6555 = vsel %vm6266, %v6552, %v6554
      %v6556 = vrot.slane %v6442, 4
      %v6557 = vrot.slane %v6443, 4
      %v6558 = vsel %vm6266, %v6556, %v6557
      %v6559 = vrot.slane %v6444, 4
      %v6560 = vsel %vm6266, %v6557, %v6559
      %v6561 = vrot.slane %v6445, 4
      %v6562 = vrot.slane %v6446, 4
      %v6563 = vsel %vm6266, %v6561, %v6562
      %v6564 = vrot.slane %v6447, 4
      %v6565 = vsel %vm6266, %v6562, %v6564
      %v6566 = vrot.slane %v6448, 4
      %v6567 = vrot.slane %v6449, 4
      %v6568 = vsel %vm6266, %v6566, %v6567
      %v6569 = vrot.slane %v6450, 4
      %v6570 = vsel %vm6266, %v6567, %v6569
      %v6571 = vrot.slane %v6451, 4
      %v6572 = vrot.slane %v6452, 4
      %v6573 = vsel %vm6266, %v6571, %v6572
      %v6574 = vrot.slane %v6453, 4
      %v6575 = vsel %vm6266, %v6572, %v6574
      %v6576 = vrot.slane %v6454, 4
      %v6577 = vrot.slane %v6455, 4
      %v6578 = vsel %vm6266, %v6576, %v6577
      %v6579 = vrot.slane %v6456, 4
      %v6580 = vsel %vm6266, %v6577, %v6579
      %v6581 = vrot.slane %v6457, 4
      %v6582 = vrot.slane %v6458, 4
      %v6583 = vsel %vm6266, %v6581, %v6582
      %v6584 = vrot.slane %v6459, 4
      %v6585 = vsel %vm6266, %v6582, %v6584
      %v6586 = vrot.slane %v6460, 4
      %v6587 = vrot.slane %v6461, 4
      %v6588 = vsel %vm6266, %v6586, %v6587
      %v6589 = vrot.slane %v6462, 4
      %v6590 = vsel %vm6266, %v6587, %v6589
      %v6623 = vadd.f32 %v6379, %v6513
      %v6624 = vadd.f32 %v6380, %v6515
      %v6625 = vadd.f32 %v6381, %v6518
      %v6626 = vadd.f32 %v6382, %v6520
      %v6627 = vadd.f32 %v6383, %v6523
      %v6628 = vadd.f32 %v6384, %v6525
      %v6629 = vadd.f32 %v6385, %v6528
      %v6630 = vadd.f32 %v6386, %v6530
      %v6631 = vadd.f32 %v6387, %v6533
      %v6632 = vadd.f32 %v6388, %v6535
      %v6633 = vadd.f32 %v6389, %v6538
      %v6634 = vadd.f32 %v6390, %v6540
      %v6635 = vadd.f32 %v6391, %v6543
      %v6636 = vadd.f32 %v6392, %v6545
      %v6637 = vadd.f32 %v6393, %v6548
      %v6638 = vadd.f32 %v6394, %v6550
      %v6639 = vadd.f32 %v6395, %v6553
      %v6640 = vadd.f32 %v6396, %v6555
      %v6641 = vadd.f32 %v6397, %v6558
      %v6642 = vadd.f32 %v6398, %v6560
      %v6643 = vadd.f32 %v6399, %v6563
      %v6644 = vadd.f32 %v6400, %v6565
      %v6645 = vadd.f32 %v6401, %v6568
      %v6646 = vadd.f32 %v6402, %v6570
      %v6647 = vadd.f32 %v6403, %v6573
      %v6648 = vadd.f32 %v6404, %v6575
      %v6649 = vadd.f32 %v6405, %v6578
      %v6650 = vadd.f32 %v6406, %v6580
      %v6651 = vadd.f32 %v6407, %v6583
      %v6652 = vadd.f32 %v6408, %v6585
      %v6653 = vadd.f32 %v6409, %v6588
      %v6654 = vadd.f32 %v6410, %v6590
      %v6655 = vlaneseq
      %v6656 = vshrl.u32 %v6655, 7
      %v6657 = vsub.s32 2, %v6656
      %v6658 = vrot.slane %v558, %v6657
      %v6659 = vmul.f32 %v496, %v6658
      %v6660 = vmul.f32 %v497, %v6658
      %v6661 = vmul.f32 %v498, %v6658
      %v6662 = vmul.f32 %v499, %v6658
      %v6663 = vmul.f32 %v500, %v6658
      %v6664 = vmul.f32 %v501, %v6658
      %v6665 = vmul.f32 %v502, %v6658
      %v6666 = vmul.f32 %v503, %v6658
      %v6667 = vmul.f32 %v504, %v6658
      %v6668 = vmul.f32 %v505, %v6658
      %v6669 = vmul.f32 %v506, %v6658
      %v6670 = vmul.f32 %v507, %v6658
      %v6671 = vmul.f32 %v508, %v6658
      %v6672 = vmul.f32 %v509, %v6658
      %v6673 = vmul.f32 %v510, %v6658
      %v6674 = vmul.f32 %v511, %v6658
      %v6675 = vmul.f32 %v512, %v6658
      %v6676 = vmul.f32 %v513, %v6658
      %v6677 = vmul.f32 %v514, %v6658
      %v6678 = vmul.f32 %v515, %v6658
      %v6679 = vmul.f32 %v516, %v6658
      %v6680 = vmul.f32 %v517, %v6658
      %v6681 = vmul.f32 %v518, %v6658
      %v6682 = vmul.f32 %v519, %v6658
      %v6683 = vmul.f32 %v520, %v6658
      %v6684 = vmul.f32 %v521, %v6658
      %v6685 = vmul.f32 %v522, %v6658
      %v6686 = vmul.f32 %v523, %v6658
      %v6687 = vmul.f32 %v524, %v6658
      %v6688 = vmul.f32 %v525, %v6658
      %v6689 = vmul.f32 %v526, %v6658
      %v6690 = vmul.f32 %v527, %v6658
      %v6691 = vmul.f32 %v528, %v6658
      %v6692 = vmul.f32 %v529, %v6658
      %v6693 = vmul.f32 %v530, %v6658
      %v6694 = vmul.f32 %v531, %v6658
      %v6695 = vmul.f32 %v532, %v6658
      %v6696 = vmul.f32 %v533, %v6658
      %v6697 = vmul.f32 %v534, %v6658
      %v6698 = vmul.f32 %v535, %v6658
      %v6699 = vmul.f32 %v536, %v6658
      %v6700 = vmul.f32 %v537, %v6658
      %v6701 = vmul.f32 %v538, %v6658
      %v6702 = vmul.f32 %v539, %v6658
      %v6703 = vmul.f32 %v540, %v6658
      %v6704 = vmul.f32 %v541, %v6658
      %v6705 = vmul.f32 %v542, %v6658
      %v6706 = vmul.f32 %v543, %v6658
      %v6755 = vrot.slane %v6659, 4
      %v6756 = vrot.slane %v6660, 4
      %v6757 = vsel %vm6266, %v6755, %v6756
      %v6758 = vrot.slane %v6661, 4
      %v6759 = vsel %vm6266, %v6756, %v6758
      %v6760 = vrot.slane %v6662, 4
      %v6761 = vrot.slane %v6663, 4
      %v6762 = vsel %vm6266, %v6760, %v6761
      %v6763 = vrot.slane %v6664, 4
      %v6764 = vsel %vm6266, %v6761, %v6763
      %v6765 = vrot.slane %v6665, 4
      %v6766 = vrot.slane %v6666, 4
      %v6767 = vsel %vm6266, %v6765, %v6766
      %v6768 = vrot.slane %v6667, 4
      %v6769 = vsel %vm6266, %v6766, %v6768
      %v6770 = vrot.slane %v6668, 4
      %v6771 = vrot.slane %v6669, 4
      %v6772 = vsel %vm6266, %v6770, %v6771
      %v6773 = vrot.slane %v6670, 4
      %v6774 = vsel %vm6266, %v6771, %v6773
      %v6775 = vrot.slane %v6671, 4
      %v6776 = vrot.slane %v6672, 4
      %v6777 = vsel %vm6266, %v6775, %v6776
      %v6778 = vrot.slane %v6673, 4
      %v6779 = vsel %vm6266, %v6776, %v6778
      %v6780 = vrot.slane %v6674, 4
      %v6781 = vrot.slane %v6675, 4
      %v6782 = vsel %vm6266, %v6780, %v6781
      %v6783 = vrot.slane %v6676, 4
      %v6784 = vsel %vm6266, %v6781, %v6783
      %v6785 = vrot.slane %v6677, 4
      %v6786 = vrot.slane %v6678, 4
      %v6787 = vsel %vm6266, %v6785, %v6786
      %v6788 = vrot.slane %v6679, 4
      %v6789 = vsel %vm6266, %v6786, %v6788
      %v6790 = vrot.slane %v6680, 4
      %v6791 = vrot.slane %v6681, 4
      %v6792 = vsel %vm6266, %v6790, %v6791
      %v6793 = vrot.slane %v6682, 4
      %v6794 = vsel %vm6266, %v6791, %v6793
      %v6795 = vrot.slane %v6683, 4
      %v6796 = vrot.slane %v6684, 4
      %v6797 = vsel %vm6266, %v6795, %v6796
      %v6798 = vrot.slane %v6685, 4
      %v6799 = vsel %vm6266, %v6796, %v6798
      %v6800 = vrot.slane %v6686, 4
      %v6801 = vrot.slane %v6687, 4
      %v6802 = vsel %vm6266, %v6800, %v6801
      %v6803 = vrot.slane %v6688, 4
      %v6804 = vsel %vm6266, %v6801, %v6803
      %v6805 = vrot.slane %v6689, 4
      %v6806 = vrot.slane %v6690, 4
      %v6807 = vsel %vm6266, %v6805, %v6806
      %v6808 = vrot.slane %v6691, 4
      %v6809 = vsel %vm6266, %v6806, %v6808
      %v6810 = vrot.slane %v6692, 4
      %v6811 = vrot.slane %v6693, 4
      %v6812 = vsel %vm6266, %v6810, %v6811
      %v6813 = vrot.slane %v6694, 4
      %v6814 = vsel %vm6266, %v6811, %v6813
      %v6815 = vrot.slane %v6695, 4
      %v6816 = vrot.slane %v6696, 4
      %v6817 = vsel %vm6266, %v6815, %v6816
      %v6818 = vrot.slane %v6697, 4
      %v6819 = vsel %vm6266, %v6816, %v6818
      %v6820 = vrot.slane %v6698, 4
      %v6821 = vrot.slane %v6699, 4
      %v6822 = vsel %vm6266, %v6820, %v6821
      %v6823 = vrot.slane %v6700, 4
      %v6824 = vsel %vm6266, %v6821, %v6823
      %v6825 = vrot.slane %v6701, 4
      %v6826 = vrot.slane %v6702, 4
      %v6827 = vsel %vm6266, %v6825, %v6826
      %v6828 = vrot.slane %v6703, 4
      %v6829 = vsel %vm6266, %v6826, %v6828
      %v6830 = vrot.slane %v6704, 4
      %v6831 = vrot.slane %v6705, 4
      %v6832 = vsel %vm6266, %v6830, %v6831
      %v6833 = vrot.slane %v6706, 4
      %v6834 = vsel %vm6266, %v6831, %v6833
      %v6867 = vadd.f32 %v6623, %v6757
      %v6868 = vadd.f32 %v6624, %v6759
      %v6869 = vadd.f32 %v6625, %v6762
      %v6870 = vadd.f32 %v6626, %v6764
      %v6871 = vadd.f32 %v6627, %v6767
      %v6872 = vadd.f32 %v6628, %v6769
      %v6873 = vadd.f32 %v6629, %v6772
      %v6874 = vadd.f32 %v6630, %v6774
      %v6875 = vadd.f32 %v6631, %v6777
      %v6876 = vadd.f32 %v6632, %v6779
      %v6877 = vadd.f32 %v6633, %v6782
      %v6878 = vadd.f32 %v6634, %v6784
      %v6879 = vadd.f32 %v6635, %v6787
      %v6880 = vadd.f32 %v6636, %v6789
      %v6881 = vadd.f32 %v6637, %v6792
      %v6882 = vadd.f32 %v6638, %v6794
      %v6883 = vadd.f32 %v6639, %v6797
      %v6884 = vadd.f32 %v6640, %v6799
      %v6885 = vadd.f32 %v6641, %v6802
      %v6886 = vadd.f32 %v6642, %v6804
      %v6887 = vadd.f32 %v6643, %v6807
      %v6888 = vadd.f32 %v6644, %v6809
      %v6889 = vadd.f32 %v6645, %v6812
      %v6890 = vadd.f32 %v6646, %v6814
      %v6891 = vadd.f32 %v6647, %v6817
      %v6892 = vadd.f32 %v6648, %v6819
      %v6893 = vadd.f32 %v6649, %v6822
      %v6894 = vadd.f32 %v6650, %v6824
      %v6895 = vadd.f32 %v6651, %v6827
      %v6896 = vadd.f32 %v6652, %v6829
      %v6897 = vadd.f32 %v6653, %v6832
      %v6898 = vadd.f32 %v6654, %v6834
      %v6899 = vlaneseq
      %v6900 = vshrl.u32 %v6899, 7
      %v6901 = vsub.s32 1, %v6900
      %v6902 = vrot.slane %v559, %v6901
      %v6903 = vmul.f32 %v499, %v6902
      %v6904 = vmul.f32 %v500, %v6902
      %v6905 = vmul.f32 %v501, %v6902
      %v6906 = vmul.f32 %v502, %v6902
      %v6907 = vmul.f32 %v503, %v6902
      %v6908 = vmul.f32 %v504, %v6902
      %v6909 = vmul.f32 %v505, %v6902
      %v6910 = vmul.f32 %v506, %v6902
      %v6911 = vmul.f32 %v507, %v6902
      %v6912 = vmul.f32 %v508, %v6902
      %v6913 = vmul.f32 %v509, %v6902
      %v6914 = vmul.f32 %v510, %v6902
      %v6915 = vmul.f32 %v511, %v6902
      %v6916 = vmul.f32 %v512, %v6902
      %v6917 = vmul.f32 %v513, %v6902
      %v6918 = vmul.f32 %v514, %v6902
      %v6919 = vmul.f32 %v515, %v6902
      %v6920 = vmul.f32 %v516, %v6902
      %v6921 = vmul.f32 %v517, %v6902
      %v6922 = vmul.f32 %v518, %v6902
      %v6923 = vmul.f32 %v519, %v6902
      %v6924 = vmul.f32 %v520, %v6902
      %v6925 = vmul.f32 %v521, %v6902
      %v6926 = vmul.f32 %v522, %v6902
      %v6927 = vmul.f32 %v523, %v6902
      %v6928 = vmul.f32 %v524, %v6902
      %v6929 = vmul.f32 %v525, %v6902
      %v6930 = vmul.f32 %v526, %v6902
      %v6931 = vmul.f32 %v527, %v6902
      %v6932 = vmul.f32 %v528, %v6902
      %v6933 = vmul.f32 %v529, %v6902
      %v6934 = vmul.f32 %v530, %v6902
      %v6935 = vmul.f32 %v531, %v6902
      %v6936 = vmul.f32 %v532, %v6902
      %v6937 = vmul.f32 %v533, %v6902
      %v6938 = vmul.f32 %v534, %v6902
      %v6939 = vmul.f32 %v535, %v6902
      %v6940 = vmul.f32 %v536, %v6902
      %v6941 = vmul.f32 %v537, %v6902
      %v6942 = vmul.f32 %v538, %v6902
      %v6943 = vmul.f32 %v539, %v6902
      %v6944 = vmul.f32 %v540, %v6902
      %v6945 = vmul.f32 %v541, %v6902
      %v6946 = vmul.f32 %v542, %v6902
      %v6947 = vmul.f32 %v543, %v6902
      %v6948 = vmul.f32 %v544, %v6902
      %v6949 = vmul.f32 %v545, %v6902
      %v6950 = vmul.f32 %v546, %v6902
      %v6999 = vrot.slane %v6903, 4
      %v7000 = vrot.slane %v6904, 4
      %v7001 = vsel %vm6266, %v6999, %v7000
      %v7002 = vrot.slane %v6905, 4
      %v7003 = vsel %vm6266, %v7000, %v7002
      %v7004 = vrot.slane %v6906, 4
      %v7005 = vrot.slane %v6907, 4
      %v7006 = vsel %vm6266, %v7004, %v7005
      %v7007 = vrot.slane %v6908, 4
      %v7008 = vsel %vm6266, %v7005, %v7007
      %v7009 = vrot.slane %v6909, 4
      %v7010 = vrot.slane %v6910, 4
      %v7011 = vsel %vm6266, %v7009, %v7010
      %v7012 = vrot.slane %v6911, 4
      %v7013 = vsel %vm6266, %v7010, %v7012
      %v7014 = vrot.slane %v6912, 4
      %v7015 = vrot.slane %v6913, 4
      %v7016 = vsel %vm6266, %v7014, %v7015
      %v7017 = vrot.slane %v6914, 4
      %v7018 = vsel %vm6266, %v7015, %v7017
      %v7019 = vrot.slane %v6915, 4
      %v7020 = vrot.slane %v6916, 4
      %v7021 = vsel %vm6266, %v7019, %v7020
      %v7022 = vrot.slane %v6917, 4
      %v7023 = vsel %vm6266, %v7020, %v7022
      %v7024 = vrot.slane %v6918, 4
      %v7025 = vrot.slane %v6919, 4
      %v7026 = vsel %vm6266, %v7024, %v7025
      %v7027 = vrot.slane %v6920, 4
      %v7028 = vsel %vm6266, %v7025, %v7027
      %v7029 = vrot.slane %v6921, 4
      %v7030 = vrot.slane %v6922, 4
      %v7031 = vsel %vm6266, %v7029, %v7030
      %v7032 = vrot.slane %v6923, 4
      %v7033 = vsel %vm6266, %v7030, %v7032
      %v7034 = vrot.slane %v6924, 4
      %v7035 = vrot.slane %v6925, 4
      %v7036 = vsel %vm6266, %v7034, %v7035
      %v7037 = vrot.slane %v6926, 4
      %v7038 = vsel %vm6266, %v7035, %v7037
      %v7039 = vrot.slane %v6927, 4
      %v7040 = vrot.slane %v6928, 4
      %v7041 = vsel %vm6266, %v7039, %v7040
      %v7042 = vrot.slane %v6929, 4
      %v7043 = vsel %vm6266, %v7040, %v7042
      %v7044 = vrot.slane %v6930, 4
      %v7045 = vrot.slane %v6931, 4
      %v7046 = vsel %vm6266, %v7044, %v7045
      %v7047 = vrot.slane %v6932, 4
      %v7048 = vsel %vm6266, %v7045, %v7047
      %v7049 = vrot.slane %v6933, 4
      %v7050 = vrot.slane %v6934, 4
      %v7051 = vsel %vm6266, %v7049, %v7050
      %v7052 = vrot.slane %v6935, 4
      %v7053 = vsel %vm6266, %v7050, %v7052
      %v7054 = vrot.slane %v6936, 4
      %v7055 = vrot.slane %v6937, 4
      %v7056 = vsel %vm6266, %v7054, %v7055
      %v7057 = vrot.slane %v6938, 4
      %v7058 = vsel %vm6266, %v7055, %v7057
      %v7059 = vrot.slane %v6939, 4
      %v7060 = vrot.slane %v6940, 4
      %v7061 = vsel %vm6266, %v7059, %v7060
      %v7062 = vrot.slane %v6941, 4
      %v7063 = vsel %vm6266, %v7060, %v7062
      %v7064 = vrot.slane %v6942, 4
      %v7065 = vrot.slane %v6943, 4
      %v7066 = vsel %vm6266, %v7064, %v7065
      %v7067 = vrot.slane %v6944, 4
      %v7068 = vsel %vm6266, %v7065, %v7067
      %v7069 = vrot.slane %v6945, 4
      %v7070 = vrot.slane %v6946, 4
      %v7071 = vsel %vm6266, %v7069, %v7070
      %v7072 = vrot.slane %v6947, 4
      %v7073 = vsel %vm6266, %v7070, %v7072
      %v7074 = vrot.slane %v6948, 4
      %v7075 = vrot.slane %v6949, 4
      %v7076 = vsel %vm6266, %v7074, %v7075
      %v7077 = vrot.slane %v6950, 4
      %v7078 = vsel %vm6266, %v7075, %v7077
      %v7111 = vadd.f32 %v6867, %v7001
      %v7112 = vadd.f32 %v6868, %v7003
      %v7113 = vadd.f32 %v6869, %v7006
      %v7114 = vadd.f32 %v6870, %v7008
      %v7115 = vadd.f32 %v6871, %v7011
      %v7116 = vadd.f32 %v6872, %v7013
      %v7117 = vadd.f32 %v6873, %v7016
      %v7118 = vadd.f32 %v6874, %v7018
      %v7119 = vadd.f32 %v6875, %v7021
      %v7120 = vadd.f32 %v6876, %v7023
      %v7121 = vadd.f32 %v6877, %v7026
      %v7122 = vadd.f32 %v6878, %v7028
      %v7123 = vadd.f32 %v6879, %v7031
      %v7124 = vadd.f32 %v6880, %v7033
      %v7125 = vadd.f32 %v6881, %v7036
      %v7126 = vadd.f32 %v6882, %v7038
      %v7127 = vadd.f32 %v6883, %v7041
      %v7128 = vadd.f32 %v6884, %v7043
      %v7129 = vadd.f32 %v6885, %v7046
      %v7130 = vadd.f32 %v6886, %v7048
      %v7131 = vadd.f32 %v6887, %v7051
      %v7132 = vadd.f32 %v6888, %v7053
      %v7133 = vadd.f32 %v6889, %v7056
      %v7134 = vadd.f32 %v6890, %v7058
      %v7135 = vadd.f32 %v6891, %v7061
      %v7136 = vadd.f32 %v6892, %v7063
      %v7137 = vadd.f32 %v6893, %v7066
      %v7138 = vadd.f32 %v6894, %v7068
      %v7139 = vadd.f32 %v6895, %v7071
      %v7140 = vadd.f32 %v6896, %v7073
      %v7141 = vadd.f32 %v6897, %v7076
      %v7142 = vadd.f32 %v6898, %v7078
      %v7143 = vlaneseq
      %v7144 = vshrl.u32 %v7143, 7
      %v7145 = vsub.s32 0, %v7144
      %v7146 = vrot.slane %v560, %v7145
      %v7147 = vmul.f32 %v502, %v7146
      %v7148 = vmul.f32 %v503, %v7146
      %v7149 = vmul.f32 %v504, %v7146
      %v7150 = vmul.f32 %v505, %v7146
      %v7151 = vmul.f32 %v506, %v7146
      %v7152 = vmul.f32 %v507, %v7146
      %v7153 = vmul.f32 %v508, %v7146
      %v7154 = vmul.f32 %v509, %v7146
      %v7155 = vmul.f32 %v510, %v7146
      %v7156 = vmul.f32 %v511, %v7146
      %v7157 = vmul.f32 %v512, %v7146
      %v7158 = vmul.f32 %v513, %v7146
      %v7159 = vmul.f32 %v514, %v7146
      %v7160 = vmul.f32 %v515, %v7146
      %v7161 = vmul.f32 %v516, %v7146
      %v7162 = vmul.f32 %v517, %v7146
      %v7163 = vmul.f32 %v518, %v7146
      %v7164 = vmul.f32 %v519, %v7146
      %v7165 = vmul.f32 %v520, %v7146
      %v7166 = vmul.f32 %v521, %v7146
      %v7167 = vmul.f32 %v522, %v7146
      %v7168 = vmul.f32 %v523, %v7146
      %v7169 = vmul.f32 %v524, %v7146
      %v7170 = vmul.f32 %v525, %v7146
      %v7171 = vmul.f32 %v526, %v7146
      %v7172 = vmul.f32 %v527, %v7146
      %v7173 = vmul.f32 %v528, %v7146
      %v7174 = vmul.f32 %v529, %v7146
      %v7175 = vmul.f32 %v530, %v7146
      %v7176 = vmul.f32 %v531, %v7146
      %v7177 = vmul.f32 %v532, %v7146
      %v7178 = vmul.f32 %v533, %v7146
      %v7179 = vmul.f32 %v534, %v7146
      %v7180 = vmul.f32 %v535, %v7146
      %v7181 = vmul.f32 %v536, %v7146
      %v7182 = vmul.f32 %v537, %v7146
      %v7183 = vmul.f32 %v538, %v7146
      %v7184 = vmul.f32 %v539, %v7146
      %v7185 = vmul.f32 %v540, %v7146
      %v7186 = vmul.f32 %v541, %v7146
      %v7187 = vmul.f32 %v542, %v7146
      %v7188 = vmul.f32 %v543, %v7146
      %v7189 = vmul.f32 %v544, %v7146
      %v7190 = vmul.f32 %v545, %v7146
      %v7191 = vmul.f32 %v546, %v7146
      %v7192 = vmul.f32 %v547, %v7146
      %v7193 = vmul.f32 %v548, %v7146
      %v7194 = vmul.f32 %v549, %v7146
      %v7243 = vrot.slane %v7147, 4
      %v7244 = vrot.slane %v7148, 4
      %v7245 = vsel %vm6266, %v7243, %v7244
      %v7246 = vrot.slane %v7149, 4
      %v7247 = vsel %vm6266, %v7244, %v7246
      %v7248 = vrot.slane %v7150, 4
      %v7249 = vrot.slane %v7151, 4
      %v7250 = vsel %vm6266, %v7248, %v7249
      %v7251 = vrot.slane %v7152, 4
      %v7252 = vsel %vm6266, %v7249, %v7251
      %v7253 = vrot.slane %v7153, 4
      %v7254 = vrot.slane %v7154, 4
      %v7255 = vsel %vm6266, %v7253, %v7254
      %v7256 = vrot.slane %v7155, 4
      %v7257 = vsel %vm6266, %v7254, %v7256
      %v7258 = vrot.slane %v7156, 4
      %v7259 = vrot.slane %v7157, 4
      %v7260 = vsel %vm6266, %v7258, %v7259
      %v7261 = vrot.slane %v7158, 4
      %v7262 = vsel %vm6266, %v7259, %v7261
      %v7263 = vrot.slane %v7159, 4
      %v7264 = vrot.slane %v7160, 4
      %v7265 = vsel %vm6266, %v7263, %v7264
      %v7266 = vrot.slane %v7161, 4
      %v7267 = vsel %vm6266, %v7264, %v7266
      %v7268 = vrot.slane %v7162, 4
      %v7269 = vrot.slane %v7163, 4
      %v7270 = vsel %vm6266, %v7268, %v7269
      %v7271 = vrot.slane %v7164, 4
      %v7272 = vsel %vm6266, %v7269, %v7271
      %v7273 = vrot.slane %v7165, 4
      %v7274 = vrot.slane %v7166, 4
      %v7275 = vsel %vm6266, %v7273, %v7274
      %v7276 = vrot.slane %v7167, 4
      %v7277 = vsel %vm6266, %v7274, %v7276
      %v7278 = vrot.slane %v7168, 4
      %v7279 = vrot.slane %v7169, 4
      %v7280 = vsel %vm6266, %v7278, %v7279
      %v7281 = vrot.slane %v7170, 4
      %v7282 = vsel %vm6266, %v7279, %v7281
      %v7283 = vrot.slane %v7171, 4
      %v7284 = vrot.slane %v7172, 4
      %v7285 = vsel %vm6266, %v7283, %v7284
      %v7286 = vrot.slane %v7173, 4
      %v7287 = vsel %vm6266, %v7284, %v7286
      %v7288 = vrot.slane %v7174, 4
      %v7289 = vrot.slane %v7175, 4
      %v7290 = vsel %vm6266, %v7288, %v7289
      %v7291 = vrot.slane %v7176, 4
      %v7292 = vsel %vm6266, %v7289, %v7291
      %v7293 = vrot.slane %v7177, 4
      %v7294 = vrot.slane %v7178, 4
      %v7295 = vsel %vm6266, %v7293, %v7294
      %v7296 = vrot.slane %v7179, 4
      %v7297 = vsel %vm6266, %v7294, %v7296
      %v7298 = vrot.slane %v7180, 4
      %v7299 = vrot.slane %v7181, 4
      %v7300 = vsel %vm6266, %v7298, %v7299
      %v7301 = vrot.slane %v7182, 4
      %v7302 = vsel %vm6266, %v7299, %v7301
      %v7303 = vrot.slane %v7183, 4
      %v7304 = vrot.slane %v7184, 4
      %v7305 = vsel %vm6266, %v7303, %v7304
      %v7306 = vrot.slane %v7185, 4
      %v7307 = vsel %vm6266, %v7304, %v7306
      %v7308 = vrot.slane %v7186, 4
      %v7309 = vrot.slane %v7187, 4
      %v7310 = vsel %vm6266, %v7308, %v7309
      %v7311 = vrot.slane %v7188, 4
      %v7312 = vsel %vm6266, %v7309, %v7311
      %v7313 = vrot.slane %v7189, 4
      %v7314 = vrot.slane %v7190, 4
      %v7315 = vsel %vm6266, %v7313, %v7314
      %v7316 = vrot.slane %v7191, 4
      %v7317 = vsel %vm6266, %v7314, %v7316
      %v7318 = vrot.slane %v7192, 4
      %v7319 = vrot.slane %v7193, 4
      %v7320 = vsel %vm6266, %v7318, %v7319
      %v7321 = vrot.slane %v7194, 4
      %v7322 = vsel %vm6266, %v7319, %v7321
      %v7355 = vadd.f32 %v7111, %v7245
      %v7356 = vadd.f32 %v7112, %v7247
      %v7357 = vadd.f32 %v7113, %v7250
      %v7358 = vadd.f32 %v7114, %v7252
      %v7359 = vadd.f32 %v7115, %v7255
      %v7360 = vadd.f32 %v7116, %v7257
      %v7361 = vadd.f32 %v7117, %v7260
      %v7362 = vadd.f32 %v7118, %v7262
      %v7363 = vadd.f32 %v7119, %v7265
      %v7364 = vadd.f32 %v7120, %v7267
      %v7365 = vadd.f32 %v7121, %v7270
      %v7366 = vadd.f32 %v7122, %v7272
      %v7367 = vadd.f32 %v7123, %v7275
      %v7368 = vadd.f32 %v7124, %v7277
      %v7369 = vadd.f32 %v7125, %v7280
      %v7370 = vadd.f32 %v7126, %v7282
      %v7371 = vadd.f32 %v7127, %v7285
      %v7372 = vadd.f32 %v7128, %v7287
      %v7373 = vadd.f32 %v7129, %v7290
      %v7374 = vadd.f32 %v7130, %v7292
      %v7375 = vadd.f32 %v7131, %v7295
      %v7376 = vadd.f32 %v7132, %v7297
      %v7377 = vadd.f32 %v7133, %v7300
      %v7378 = vadd.f32 %v7134, %v7302
      %v7379 = vadd.f32 %v7135, %v7305
      %v7380 = vadd.f32 %v7136, %v7307
      %v7381 = vadd.f32 %v7137, %v7310
      %v7382 = vadd.f32 %v7138, %v7312
      %v7383 = vadd.f32 %v7139, %v7315
      %v7384 = vadd.f32 %v7140, %v7317
      %v7385 = vadd.f32 %v7141, %v7320
      %v7386 = vadd.f32 %v7142, %v7322
      %v7387 = vlaneseq
      %v7388 = vshrl.u32 %v7387, 7
      %v7389 = vsub.s32 7, %v7388
      %v7390 = vrot.slane %v560, %v7389
      %v7391 = vmul.f32 %v505, %v7390
      %v7392 = vmul.f32 %v506, %v7390
      %v7393 = vmul.f32 %v507, %v7390
      %v7394 = vmul.f32 %v508, %v7390
      %v7395 = vmul.f32 %v509, %v7390
      %v7396 = vmul.f32 %v510, %v7390
      %v7397 = vmul.f32 %v511, %v7390
      %v7398 = vmul.f32 %v512, %v7390
      %v7399 = vmul.f32 %v513, %v7390
      %v7400 = vmul.f32 %v514, %v7390
      %v7401 = vmul.f32 %v515, %v7390
      %v7402 = vmul.f32 %v516, %v7390
      %v7403 = vmul.f32 %v517, %v7390
      %v7404 = vmul.f32 %v518, %v7390
      %v7405 = vmul.f32 %v519, %v7390
      %v7406 = vmul.f32 %v520, %v7390
      %v7407 = vmul.f32 %v521, %v7390
      %v7408 = vmul.f32 %v522, %v7390
      %v7409 = vmul.f32 %v523, %v7390
      %v7410 = vmul.f32 %v524, %v7390
      %v7411 = vmul.f32 %v525, %v7390
      %v7412 = vmul.f32 %v526, %v7390
      %v7413 = vmul.f32 %v527, %v7390
      %v7414 = vmul.f32 %v528, %v7390
      %v7415 = vmul.f32 %v529, %v7390
      %v7416 = vmul.f32 %v530, %v7390
      %v7417 = vmul.f32 %v531, %v7390
      %v7418 = vmul.f32 %v532, %v7390
      %v7419 = vmul.f32 %v533, %v7390
      %v7420 = vmul.f32 %v534, %v7390
      %v7421 = vmul.f32 %v535, %v7390
      %v7422 = vmul.f32 %v536, %v7390
      %v7423 = vmul.f32 %v537, %v7390
      %v7424 = vmul.f32 %v538, %v7390
      %v7425 = vmul.f32 %v539, %v7390
      %v7426 = vmul.f32 %v540, %v7390
      %v7427 = vmul.f32 %v541, %v7390
      %v7428 = vmul.f32 %v542, %v7390
      %v7429 = vmul.f32 %v543, %v7390
      %v7430 = vmul.f32 %v544, %v7390
      %v7431 = vmul.f32 %v545, %v7390
      %v7432 = vmul.f32 %v546, %v7390
      %v7433 = vmul.f32 %v547, %v7390
      %v7434 = vmul.f32 %v548, %v7390
      %v7435 = vmul.f32 %v549, %v7390
      %v7436 = vmul.f32 %v550, %v7390
      %v7437 = vmul.f32 %v551, %v7390
      %v7438 = vmul.f32 %v552, %v7390
      %v7487 = vrot.slane %v7391, 4
      %v7488 = vrot.slane %v7392, 4
      %v7489 = vsel %vm6266, %v7487, %v7488
      %v7490 = vrot.slane %v7393, 4
      %v7491 = vsel %vm6266, %v7488, %v7490
      %v7492 = vrot.slane %v7394, 4
      %v7493 = vrot.slane %v7395, 4
      %v7494 = vsel %vm6266, %v7492, %v7493
      %v7495 = vrot.slane %v7396, 4
      %v7496 = vsel %vm6266, %v7493, %v7495
      %v7497 = vrot.slane %v7397, 4
      %v7498 = vrot.slane %v7398, 4
      %v7499 = vsel %vm6266, %v7497, %v7498
      %v7500 = vrot.slane %v7399, 4
      %v7501 = vsel %vm6266, %v7498, %v7500
      %v7502 = vrot.slane %v7400, 4
      %v7503 = vrot.slane %v7401, 4
      %v7504 = vsel %vm6266, %v7502, %v7503
      %v7505 = vrot.slane %v7402, 4
      %v7506 = vsel %vm6266, %v7503, %v7505
      %v7507 = vrot.slane %v7403, 4
      %v7508 = vrot.slane %v7404, 4
      %v7509 = vsel %vm6266, %v7507, %v7508
      %v7510 = vrot.slane %v7405, 4
      %v7511 = vsel %vm6266, %v7508, %v7510
      %v7512 = vrot.slane %v7406, 4
      %v7513 = vrot.slane %v7407, 4
      %v7514 = vsel %vm6266, %v7512, %v7513
      %v7515 = vrot.slane %v7408, 4
      %v7516 = vsel %vm6266, %v7513, %v7515
      %v7517 = vrot.slane %v7409, 4
      %v7518 = vrot.slane %v7410, 4
      %v7519 = vsel %vm6266, %v7517, %v7518
      %v7520 = vrot.slane %v7411, 4
      %v7521 = vsel %vm6266, %v7518, %v7520
      %v7522 = vrot.slane %v7412, 4
      %v7523 = vrot.slane %v7413, 4
      %v7524 = vsel %vm6266, %v7522, %v7523
      %v7525 = vrot.slane %v7414, 4
      %v7526 = vsel %vm6266, %v7523, %v7525
      %v7527 = vrot.slane %v7415, 4
      %v7528 = vrot.slane %v7416, 4
      %v7529 = vsel %vm6266, %v7527, %v7528
      %v7530 = vrot.slane %v7417, 4
      %v7531 = vsel %vm6266, %v7528, %v7530
      %v7532 = vrot.slane %v7418, 4
      %v7533 = vrot.slane %v7419, 4
      %v7534 = vsel %vm6266, %v7532, %v7533
      %v7535 = vrot.slane %v7420, 4
      %v7536 = vsel %vm6266, %v7533, %v7535
      %v7537 = vrot.slane %v7421, 4
      %v7538 = vrot.slane %v7422, 4
      %v7539 = vsel %vm6266, %v7537, %v7538
      %v7540 = vrot.slane %v7423, 4
      %v7541 = vsel %vm6266, %v7538, %v7540
      %v7542 = vrot.slane %v7424, 4
      %v7543 = vrot.slane %v7425, 4
      %v7544 = vsel %vm6266, %v7542, %v7543
      %v7545 = vrot.slane %v7426, 4
      %v7546 = vsel %vm6266, %v7543, %v7545
      %v7547 = vrot.slane %v7427, 4
      %v7548 = vrot.slane %v7428, 4
      %v7549 = vsel %vm6266, %v7547, %v7548
      %v7550 = vrot.slane %v7429, 4
      %v7551 = vsel %vm6266, %v7548, %v7550
      %v7552 = vrot.slane %v7430, 4
      %v7553 = vrot.slane %v7431, 4
      %v7554 = vsel %vm6266, %v7552, %v7553
      %v7555 = vrot.slane %v7432, 4
      %v7556 = vsel %vm6266, %v7553, %v7555
      %v7557 = vrot.slane %v7433, 4
      %v7558 = vrot.slane %v7434, 4
      %v7559 = vsel %vm6266, %v7557, %v7558
      %v7560 = vrot.slane %v7435, 4
      %v7561 = vsel %vm6266, %v7558, %v7560
      %v7562 = vrot.slane %v7436, 4
      %v7563 = vrot.slane %v7437, 4
      %v7564 = vsel %vm6266, %v7562, %v7563
      %v7565 = vrot.slane %v7438, 4
      %v7566 = vsel %vm6266, %v7563, %v7565
      %v7599 = vadd.f32 %v7355, %v7489
      %v7600 = vadd.f32 %v7356, %v7491
      %v7601 = vadd.f32 %v7357, %v7494
      %v7602 = vadd.f32 %v7358, %v7496
      %v7603 = vadd.f32 %v7359, %v7499
      %v7604 = vadd.f32 %v7360, %v7501
      %v7605 = vadd.f32 %v7361, %v7504
      %v7606 = vadd.f32 %v7362, %v7506
      %v7607 = vadd.f32 %v7363, %v7509
      %v7608 = vadd.f32 %v7364, %v7511
      %v7609 = vadd.f32 %v7365, %v7514
      %v7610 = vadd.f32 %v7366, %v7516
      %v7611 = vadd.f32 %v7367, %v7519
      %v7612 = vadd.f32 %v7368, %v7521
      %v7613 = vadd.f32 %v7369, %v7524
      %v7614 = vadd.f32 %v7370, %v7526
      %v7615 = vadd.f32 %v7371, %v7529
      %v7616 = vadd.f32 %v7372, %v7531
      %v7617 = vadd.f32 %v7373, %v7534
      %v7618 = vadd.f32 %v7374, %v7536
      %v7619 = vadd.f32 %v7375, %v7539
      %v7620 = vadd.f32 %v7376, %v7541
      %v7621 = vadd.f32 %v7377, %v7544
      %v7622 = vadd.f32 %v7378, %v7546
      %v7623 = vadd.f32 %v7379, %v7549
      %v7624 = vadd.f32 %v7380, %v7551
      %v7625 = vadd.f32 %v7381, %v7554
      %v7626 = vadd.f32 %v7382, %v7556
      %v7627 = vadd.f32 %v7383, %v7559
      %v7628 = vadd.f32 %v7384, %v7561
      %v7629 = vadd.f32 %v7385, %v7564
      %v7630 = vadd.f32 %v7386, %v7566
      %v7631 = vlaneseq
      %v7632 = vshrl.u32 %v7631, 7
      %v7633 = vsub.s32 6, %v7632
      %v7634 = vrot.slane %v561, %v7633
      %v7635 = vmul.f32 %v508, %v7634
      %v7636 = vmul.f32 %v509, %v7634
      %v7637 = vmul.f32 %v510, %v7634
      %v7638 = vmul.f32 %v511, %v7634
      %v7639 = vmul.f32 %v512, %v7634
      %v7640 = vmul.f32 %v513, %v7634
      %v7641 = vmul.f32 %v514, %v7634
      %v7642 = vmul.f32 %v515, %v7634
      %v7643 = vmul.f32 %v516, %v7634
      %v7644 = vmul.f32 %v517, %v7634
      %v7645 = vmul.f32 %v518, %v7634
      %v7646 = vmul.f32 %v519, %v7634
      %v7647 = vmul.f32 %v520, %v7634
      %v7648 = vmul.f32 %v521, %v7634
      %v7649 = vmul.f32 %v522, %v7634
      %v7650 = vmul.f32 %v523, %v7634
      %v7651 = vmul.f32 %v524, %v7634
      %v7652 = vmul.f32 %v525, %v7634
      %v7653 = vmul.f32 %v526, %v7634
      %v7654 = vmul.f32 %v527, %v7634
      %v7655 = vmul.f32 %v528, %v7634
      %v7656 = vmul.f32 %v529, %v7634
      %v7657 = vmul.f32 %v530, %v7634
      %v7658 = vmul.f32 %v531, %v7634
      %v7659 = vmul.f32 %v532, %v7634
      %v7660 = vmul.f32 %v533, %v7634
      %v7661 = vmul.f32 %v534, %v7634
      %v7662 = vmul.f32 %v535, %v7634
      %v7663 = vmul.f32 %v536, %v7634
      %v7664 = vmul.f32 %v537, %v7634
      %v7665 = vmul.f32 %v538, %v7634
      %v7666 = vmul.f32 %v539, %v7634
      %v7667 = vmul.f32 %v540, %v7634
      %v7668 = vmul.f32 %v541, %v7634
      %v7669 = vmul.f32 %v542, %v7634
      %v7670 = vmul.f32 %v543, %v7634
      %v7671 = vmul.f32 %v544, %v7634
      %v7672 = vmul.f32 %v545, %v7634
      %v7673 = vmul.f32 %v546, %v7634
      %v7674 = vmul.f32 %v547, %v7634
      %v7675 = vmul.f32 %v548, %v7634
      %v7676 = vmul.f32 %v549, %v7634
      %v7677 = vmul.f32 %v550, %v7634
      %v7678 = vmul.f32 %v551, %v7634
      %v7679 = vmul.f32 %v552, %v7634
      %v7680 = vmul.f32 %v553, %v7634
      %v7681 = vmul.f32 %v554, %v7634
      %v7682 = vmul.f32 %v555, %v7634
      %v7731 = vrot.slane %v7635, 4
      %v7732 = vrot.slane %v7636, 4
      %v7733 = vsel %vm6266, %v7731, %v7732
      %v7734 = vrot.slane %v7637, 4
      %v7735 = vsel %vm6266, %v7732, %v7734
      %v7736 = vrot.slane %v7638, 4
      %v7737 = vrot.slane %v7639, 4
      %v7738 = vsel %vm6266, %v7736, %v7737
      %v7739 = vrot.slane %v7640, 4
      %v7740 = vsel %vm6266, %v7737, %v7739
      %v7741 = vrot.slane %v7641, 4
      %v7742 = vrot.slane %v7642, 4
      %v7743 = vsel %vm6266, %v7741, %v7742
      %v7744 = vrot.slane %v7643, 4
      %v7745 = vsel %vm6266, %v7742, %v7744
      %v7746 = vrot.slane %v7644, 4
      %v7747 = vrot.slane %v7645, 4
      %v7748 = vsel %vm6266, %v7746, %v7747
      %v7749 = vrot.slane %v7646, 4
      %v7750 = vsel %vm6266, %v7747, %v7749
      %v7751 = vrot.slane %v7647, 4
      %v7752 = vrot.slane %v7648, 4
      %v7753 = vsel %vm6266, %v7751, %v7752
      %v7754 = vrot.slane %v7649, 4
      %v7755 = vsel %vm6266, %v7752, %v7754
      %v7756 = vrot.slane %v7650, 4
      %v7757 = vrot.slane %v7651, 4
      %v7758 = vsel %vm6266, %v7756, %v7757
      %v7759 = vrot.slane %v7652, 4
      %v7760 = vsel %vm6266, %v7757, %v7759
      %v7761 = vrot.slane %v7653, 4
      %v7762 = vrot.slane %v7654, 4
      %v7763 = vsel %vm6266, %v7761, %v7762
      %v7764 = vrot.slane %v7655, 4
      %v7765 = vsel %vm6266, %v7762, %v7764
      %v7766 = vrot.slane %v7656, 4
      %v7767 = vrot.slane %v7657, 4
      %v7768 = vsel %vm6266, %v7766, %v7767
      %v7769 = vrot.slane %v7658, 4
      %v7770 = vsel %vm6266, %v7767, %v7769
      %v7771 = vrot.slane %v7659, 4
      %v7772 = vrot.slane %v7660, 4
      %v7773 = vsel %vm6266, %v7771, %v7772
      %v7774 = vrot.slane %v7661, 4
      %v7775 = vsel %vm6266, %v7772, %v7774
      %v7776 = vrot.slane %v7662, 4
      %v7777 = vrot.slane %v7663, 4
      %v7778 = vsel %vm6266, %v7776, %v7777
      %v7779 = vrot.slane %v7664, 4
      %v7780 = vsel %vm6266, %v7777, %v7779
      %v7781 = vrot.slane %v7665, 4
      %v7782 = vrot.slane %v7666, 4
      %v7783 = vsel %vm6266, %v7781, %v7782
      %v7784 = vrot.slane %v7667, 4
      %v7785 = vsel %vm6266, %v7782, %v7784
      %v7786 = vrot.slane %v7668, 4
      %v7787 = vrot.slane %v7669, 4
      %v7788 = vsel %vm6266, %v7786, %v7787
      %v7789 = vrot.slane %v7670, 4
      %v7790 = vsel %vm6266, %v7787, %v7789
      %v7791 = vrot.slane %v7671, 4
      %v7792 = vrot.slane %v7672, 4
      %v7793 = vsel %vm6266, %v7791, %v7792
      %v7794 = vrot.slane %v7673, 4
      %v7795 = vsel %vm6266, %v7792, %v7794
      %v7796 = vrot.slane %v7674, 4
      %v7797 = vrot.slane %v7675, 4
      %v7798 = vsel %vm6266, %v7796, %v7797
      %v7799 = vrot.slane %v7676, 4
      %v7800 = vsel %vm6266, %v7797, %v7799
      %v7801 = vrot.slane %v7677, 4
      %v7802 = vrot.slane %v7678, 4
      %v7803 = vsel %vm6266, %v7801, %v7802
      %v7804 = vrot.slane %v7679, 4
      %v7805 = vsel %vm6266, %v7802, %v7804
      %v7806 = vrot.slane %v7680, 4
      %v7807 = vrot.slane %v7681, 4
      %v7808 = vsel %vm6266, %v7806, %v7807
      %v7809 = vrot.slane %v7682, 4
      %v7810 = vsel %vm6266, %v7807, %v7809
      %v7843 = vadd.f32 %v7599, %v7733
      %v7844 = vadd.f32 %v7600, %v7735
      %v7845 = vadd.f32 %v7601, %v7738
      %v7846 = vadd.f32 %v7602, %v7740
      %v7847 = vadd.f32 %v7603, %v7743
      %v7848 = vadd.f32 %v7604, %v7745
      %v7849 = vadd.f32 %v7605, %v7748
      %v7850 = vadd.f32 %v7606, %v7750
      %v7851 = vadd.f32 %v7607, %v7753
      %v7852 = vadd.f32 %v7608, %v7755
      %v7853 = vadd.f32 %v7609, %v7758
      %v7854 = vadd.f32 %v7610, %v7760
      %v7855 = vadd.f32 %v7611, %v7763
      %v7856 = vadd.f32 %v7612, %v7765
      %v7857 = vadd.f32 %v7613, %v7768
      %v7858 = vadd.f32 %v7614, %v7770
      %v7859 = vadd.f32 %v7615, %v7773
      %v7860 = vadd.f32 %v7616, %v7775
      %v7861 = vadd.f32 %v7617, %v7778
      %v7862 = vadd.f32 %v7618, %v7780
      %v7863 = vadd.f32 %v7619, %v7783
      %v7864 = vadd.f32 %v7620, %v7785
      %v7865 = vadd.f32 %v7621, %v7788
      %v7866 = vadd.f32 %v7622, %v7790
      %v7867 = vadd.f32 %v7623, %v7793
      %v7868 = vadd.f32 %v7624, %v7795
      %v7869 = vadd.f32 %v7625, %v7798
      %v7870 = vadd.f32 %v7626, %v7800
      %v7871 = vadd.f32 %v7627, %v7803
      %v7872 = vadd.f32 %v7628, %v7805
      %v7873 = vadd.f32 %v7629, %v7808
      %v7874 = vadd.f32 %v7630, %v7810
      %v7875 = vlaneseq
      %v7876 = vshrl.u32 %v7875, 7
      %v7877 = vsub.s32 5, %v7876
      %v7878 = vrot.slane %v556, %v7877
      %v7879 = vmul.f32 %v490, %v7878
      %v7880 = vmul.f32 %v491, %v7878
      %v7881 = vmul.f32 %v492, %v7878
      %v7882 = vmul.f32 %v493, %v7878
      %v7883 = vmul.f32 %v494, %v7878
      %v7884 = vmul.f32 %v495, %v7878
      %v7885 = vmul.f32 %v496, %v7878
      %v7886 = vmul.f32 %v497, %v7878
      %v7887 = vmul.f32 %v498, %v7878
      %v7888 = vmul.f32 %v499, %v7878
      %v7889 = vmul.f32 %v500, %v7878
      %v7890 = vmul.f32 %v501, %v7878
      %v7891 = vmul.f32 %v502, %v7878
      %v7892 = vmul.f32 %v503, %v7878
      %v7893 = vmul.f32 %v504, %v7878
      %v7894 = vmul.f32 %v505, %v7878
      %v7895 = vmul.f32 %v506, %v7878
      %v7896 = vmul.f32 %v507, %v7878
      %v7897 = vmul.f32 %v508, %v7878
      %v7898 = vmul.f32 %v509, %v7878
      %v7899 = vmul.f32 %v510, %v7878
      %v7900 = vmul.f32 %v511, %v7878
      %v7901 = vmul.f32 %v512, %v7878
      %v7902 = vmul.f32 %v513, %v7878
      %v7903 = vmul.f32 %v514, %v7878
      %v7904 = vmul.f32 %v515, %v7878
      %v7905 = vmul.f32 %v516, %v7878
      %v7906 = vmul.f32 %v517, %v7878
      %v7907 = vmul.f32 %v518, %v7878
      %v7908 = vmul.f32 %v519, %v7878
      %v7909 = vmul.f32 %v520, %v7878
      %v7910 = vmul.f32 %v521, %v7878
      %v7911 = vmul.f32 %v522, %v7878
      %v7912 = vmul.f32 %v523, %v7878
      %v7913 = vmul.f32 %v524, %v7878
      %v7914 = vmul.f32 %v525, %v7878
      %v7915 = vmul.f32 %v526, %v7878
      %v7916 = vmul.f32 %v527, %v7878
      %v7917 = vmul.f32 %v528, %v7878
      %v7918 = vmul.f32 %v529, %v7878
      %v7919 = vmul.f32 %v530, %v7878
      %v7920 = vmul.f32 %v531, %v7878
      %v7921 = vmul.f32 %v532, %v7878
      %v7922 = vmul.f32 %v533, %v7878
      %v7923 = vmul.f32 %v534, %v7878
      %v7924 = vmul.f32 %v535, %v7878
      %v7925 = vmul.f32 %v536, %v7878
      %v7926 = vmul.f32 %v537, %v7878
      %vm7975 = vcmask 1042432
      %v7976 = vrot.slane %v7879, 5
      %v7977 = vrot.slane %v7880, 5
      %v7978 = vsel %vm7975, %v7976, %v7977
      %v7979 = vrot.slane %v7881, 5
      %v7980 = vsel %vm7975, %v7977, %v7979
      %v7981 = vrot.slane %v7882, 5
      %v7982 = vrot.slane %v7883, 5
      %v7983 = vsel %vm7975, %v7981, %v7982
      %v7984 = vrot.slane %v7884, 5
      %v7985 = vsel %vm7975, %v7982, %v7984
      %v7986 = vrot.slane %v7885, 5
      %v7987 = vrot.slane %v7886, 5
      %v7988 = vsel %vm7975, %v7986, %v7987
      %v7989 = vrot.slane %v7887, 5
      %v7990 = vsel %vm7975, %v7987, %v7989
      %v7991 = vrot.slane %v7888, 5
      %v7992 = vrot.slane %v7889, 5
      %v7993 = vsel %vm7975, %v7991, %v7992
      %v7994 = vrot.slane %v7890, 5
      %v7995 = vsel %vm7975, %v7992, %v7994
      %v7996 = vrot.slane %v7891, 5
      %v7997 = vrot.slane %v7892, 5
      %v7998 = vsel %vm7975, %v7996, %v7997
      %v7999 = vrot.slane %v7893, 5
      %v8000 = vsel %vm7975, %v7997, %v7999
      %v8001 = vrot.slane %v7894, 5
      %v8002 = vrot.slane %v7895, 5
      %v8003 = vsel %vm7975, %v8001, %v8002
      %v8004 = vrot.slane %v7896, 5
      %v8005 = vsel %vm7975, %v8002, %v8004
      %v8006 = vrot.slane %v7897, 5
      %v8007 = vrot.slane %v7898, 5
      %v8008 = vsel %vm7975, %v8006, %v8007
      %v8009 = vrot.slane %v7899, 5
      %v8010 = vsel %vm7975, %v8007, %v8009
      %v8011 = vrot.slane %v7900, 5
      %v8012 = vrot.slane %v7901, 5
      %v8013 = vsel %vm7975, %v8011, %v8012
      %v8014 = vrot.slane %v7902, 5
      %v8015 = vsel %vm7975, %v8012, %v8014
      %v8016 = vrot.slane %v7903, 5
      %v8017 = vrot.slane %v7904, 5
      %v8018 = vsel %vm7975, %v8016, %v8017
      %v8019 = vrot.slane %v7905, 5
      %v8020 = vsel %vm7975, %v8017, %v8019
      %v8021 = vrot.slane %v7906, 5
      %v8022 = vrot.slane %v7907, 5
      %v8023 = vsel %vm7975, %v8021, %v8022
      %v8024 = vrot.slane %v7908, 5
      %v8025 = vsel %vm7975, %v8022, %v8024
      %v8026 = vrot.slane %v7909, 5
      %v8027 = vrot.slane %v7910, 5
      %v8028 = vsel %vm7975, %v8026, %v8027
      %v8029 = vrot.slane %v7911, 5
      %v8030 = vsel %vm7975, %v8027, %v8029
      %v8031 = vrot.slane %v7912, 5
      %v8032 = vrot.slane %v7913, 5
      %v8033 = vsel %vm7975, %v8031, %v8032
      %v8034 = vrot.slane %v7914, 5
      %v8035 = vsel %vm7975, %v8032, %v8034
      %v8036 = vrot.slane %v7915, 5
      %v8037 = vrot.slane %v7916, 5
      %v8038 = vsel %vm7975, %v8036, %v8037
      %v8039 = vrot.slane %v7917, 5
      %v8040 = vsel %vm7975, %v8037, %v8039
      %v8041 = vrot.slane %v7918, 5
      %v8042 = vrot.slane %v7919, 5
      %v8043 = vsel %vm7975, %v8041, %v8042
      %v8044 = vrot.slane %v7920, 5
      %v8045 = vsel %vm7975, %v8042, %v8044
      %v8046 = vrot.slane %v7921, 5
      %v8047 = vrot.slane %v7922, 5
      %v8048 = vsel %vm7975, %v8046, %v8047
      %v8049 = vrot.slane %v7923, 5
      %v8050 = vsel %vm7975, %v8047, %v8049
      %v8051 = vrot.slane %v7924, 5
      %v8052 = vrot.slane %v7925, 5
      %v8053 = vsel %vm7975, %v8051, %v8052
      %v8054 = vrot.slane %v7926, 5
      %v8055 = vsel %vm7975, %v8052, %v8054
      %v8088 = vadd.f32 %v7843, %v7978
      %v8089 = vadd.f32 %v7844, %v7980
      %v8090 = vadd.f32 %v7845, %v7983
      %v8091 = vadd.f32 %v7846, %v7985
      %v8092 = vadd.f32 %v7847, %v7988
      %v8093 = vadd.f32 %v7848, %v7990
      %v8094 = vadd.f32 %v7849, %v7993
      %v8095 = vadd.f32 %v7850, %v7995
      %v8096 = vadd.f32 %v7851, %v7998
      %v8097 = vadd.f32 %v7852, %v8000
      %v8098 = vadd.f32 %v7853, %v8003
      %v8099 = vadd.f32 %v7854, %v8005
      %v8100 = vadd.f32 %v7855, %v8008
      %v8101 = vadd.f32 %v7856, %v8010
      %v8102 = vadd.f32 %v7857, %v8013
      %v8103 = vadd.f32 %v7858, %v8015
      %v8104 = vadd.f32 %v7859, %v8018
      %v8105 = vadd.f32 %v7860, %v8020
      %v8106 = vadd.f32 %v7861, %v8023
      %v8107 = vadd.f32 %v7862, %v8025
      %v8108 = vadd.f32 %v7863, %v8028
      %v8109 = vadd.f32 %v7864, %v8030
      %v8110 = vadd.f32 %v7865, %v8033
      %v8111 = vadd.f32 %v7866, %v8035
      %v8112 = vadd.f32 %v7867, %v8038
      %v8113 = vadd.f32 %v7868, %v8040
      %v8114 = vadd.f32 %v7869, %v8043
      %v8115 = vadd.f32 %v7870, %v8045
      %v8116 = vadd.f32 %v7871, %v8048
      %v8117 = vadd.f32 %v7872, %v8050
      %v8118 = vadd.f32 %v7873, %v8053
      %v8119 = vadd.f32 %v7874, %v8055
      %v8120 = vlaneseq
      %v8121 = vshrl.u32 %v8120, 7
      %v8122 = vsub.s32 4, %v8121
      %v8123 = vrot.slane %v557, %v8122
      %v8124 = vmul.f32 %v493, %v8123
      %v8125 = vmul.f32 %v494, %v8123
      %v8126 = vmul.f32 %v495, %v8123
      %v8127 = vmul.f32 %v496, %v8123
      %v8128 = vmul.f32 %v497, %v8123
      %v8129 = vmul.f32 %v498, %v8123
      %v8130 = vmul.f32 %v499, %v8123
      %v8131 = vmul.f32 %v500, %v8123
      %v8132 = vmul.f32 %v501, %v8123
      %v8133 = vmul.f32 %v502, %v8123
      %v8134 = vmul.f32 %v503, %v8123
      %v8135 = vmul.f32 %v504, %v8123
      %v8136 = vmul.f32 %v505, %v8123
      %v8137 = vmul.f32 %v506, %v8123
      %v8138 = vmul.f32 %v507, %v8123
      %v8139 = vmul.f32 %v508, %v8123
      %v8140 = vmul.f32 %v509, %v8123
      %v8141 = vmul.f32 %v510, %v8123
      %v8142 = vmul.f32 %v511, %v8123
      %v8143 = vmul.f32 %v512, %v8123
      %v8144 = vmul.f32 %v513, %v8123
      %v8145 = vmul.f32 %v514, %v8123
      %v8146 = vmul.f32 %v515, %v8123
      %v8147 = vmul.f32 %v516, %v8123
      %v8148 = vmul.f32 %v517, %v8123
      %v8149 = vmul.f32 %v518, %v8123
      %v8150 = vmul.f32 %v519, %v8123
      %v8151 = vmul.f32 %v520, %v8123
      %v8152 = vmul.f32 %v521, %v8123
      %v8153 = vmul.f32 %v522, %v8123
      %v8154 = vmul.f32 %v523, %v8123
      %v8155 = vmul.f32 %v524, %v8123
      %v8156 = vmul.f32 %v525, %v8123
      %v8157 = vmul.f32 %v526, %v8123
      %v8158 = vmul.f32 %v527, %v8123
      %v8159 = vmul.f32 %v528, %v8123
      %v8160 = vmul.f32 %v529, %v8123
      %v8161 = vmul.f32 %v530, %v8123
      %v8162 = vmul.f32 %v531, %v8123
      %v8163 = vmul.f32 %v532, %v8123
      %v8164 = vmul.f32 %v533, %v8123
      %v8165 = vmul.f32 %v534, %v8123
      %v8166 = vmul.f32 %v535, %v8123
      %v8167 = vmul.f32 %v536, %v8123
      %v8168 = vmul.f32 %v537, %v8123
      %v8169 = vmul.f32 %v538, %v8123
      %v8170 = vmul.f32 %v539, %v8123
      %v8171 = vmul.f32 %v540, %v8123
      %v8220 = vrot.slane %v8124, 5
      %v8221 = vrot.slane %v8125, 5
      %v8222 = vsel %vm7975, %v8220, %v8221
      %v8223 = vrot.slane %v8126, 5
      %v8224 = vsel %vm7975, %v8221, %v8223
      %v8225 = vrot.slane %v8127, 5
      %v8226 = vrot.slane %v8128, 5
      %v8227 = vsel %vm7975, %v8225, %v8226
      %v8228 = vrot.slane %v8129, 5
      %v8229 = vsel %vm7975, %v8226, %v8228
      %v8230 = vrot.slane %v8130, 5
      %v8231 = vrot.slane %v8131, 5
      %v8232 = vsel %vm7975, %v8230, %v8231
      %v8233 = vrot.slane %v8132, 5
      %v8234 = vsel %vm7975, %v8231, %v8233
      %v8235 = vrot.slane %v8133, 5
      %v8236 = vrot.slane %v8134, 5
      %v8237 = vsel %vm7975, %v8235, %v8236
      %v8238 = vrot.slane %v8135, 5
      %v8239 = vsel %vm7975, %v8236, %v8238
      %v8240 = vrot.slane %v8136, 5
      %v8241 = vrot.slane %v8137, 5
      %v8242 = vsel %vm7975, %v8240, %v8241
      %v8243 = vrot.slane %v8138, 5
      %v8244 = vsel %vm7975, %v8241, %v8243
      %v8245 = vrot.slane %v8139, 5
      %v8246 = vrot.slane %v8140, 5
      %v8247 = vsel %vm7975, %v8245, %v8246
      %v8248 = vrot.slane %v8141, 5
      %v8249 = vsel %vm7975, %v8246, %v8248
      %v8250 = vrot.slane %v8142, 5
      %v8251 = vrot.slane %v8143, 5
      %v8252 = vsel %vm7975, %v8250, %v8251
      %v8253 = vrot.slane %v8144, 5
      %v8254 = vsel %vm7975, %v8251, %v8253
      %v8255 = vrot.slane %v8145, 5
      %v8256 = vrot.slane %v8146, 5
      %v8257 = vsel %vm7975, %v8255, %v8256
      %v8258 = vrot.slane %v8147, 5
      %v8259 = vsel %vm7975, %v8256, %v8258
      %v8260 = vrot.slane %v8148, 5
      %v8261 = vrot.slane %v8149, 5
      %v8262 = vsel %vm7975, %v8260, %v8261
      %v8263 = vrot.slane %v8150, 5
      %v8264 = vsel %vm7975, %v8261, %v8263
      %v8265 = vrot.slane %v8151, 5
      %v8266 = vrot.slane %v8152, 5
      %v8267 = vsel %vm7975, %v8265, %v8266
      %v8268 = vrot.slane %v8153, 5
      %v8269 = vsel %vm7975, %v8266, %v8268
      %v8270 = vrot.slane %v8154, 5
      %v8271 = vrot.slane %v8155, 5
      %v8272 = vsel %vm7975, %v8270, %v8271
      %v8273 = vrot.slane %v8156, 5
      %v8274 = vsel %vm7975, %v8271, %v8273
      %v8275 = vrot.slane %v8157, 5
      %v8276 = vrot.slane %v8158, 5
      %v8277 = vsel %vm7975, %v8275, %v8276
      %v8278 = vrot.slane %v8159, 5
      %v8279 = vsel %vm7975, %v8276, %v8278
      %v8280 = vrot.slane %v8160, 5
      %v8281 = vrot.slane %v8161, 5
      %v8282 = vsel %vm7975, %v8280, %v8281
      %v8283 = vrot.slane %v8162, 5
      %v8284 = vsel %vm7975, %v8281, %v8283
      %v8285 = vrot.slane %v8163, 5
      %v8286 = vrot.slane %v8164, 5
      %v8287 = vsel %vm7975, %v8285, %v8286
      %v8288 = vrot.slane %v8165, 5
      %v8289 = vsel %vm7975, %v8286, %v8288
      %v8290 = vrot.slane %v8166, 5
      %v8291 = vrot.slane %v8167, 5
      %v8292 = vsel %vm7975, %v8290, %v8291
      %v8293 = vrot.slane %v8168, 5
      %v8294 = vsel %vm7975, %v8291, %v8293
      %v8295 = vrot.slane %v8169, 5
      %v8296 = vrot.slane %v8170, 5
      %v8297 = vsel %vm7975, %v8295, %v8296
      %v8298 = vrot.slane %v8171, 5
      %v8299 = vsel %vm7975, %v8296, %v8298
      %v8332 = vadd.f32 %v8088, %v8222
      %v8333 = vadd.f32 %v8089, %v8224
      %v8334 = vadd.f32 %v8090, %v8227
      %v8335 = vadd.f32 %v8091, %v8229
      %v8336 = vadd.f32 %v8092, %v8232
      %v8337 = vadd.f32 %v8093, %v8234
      %v8338 = vadd.f32 %v8094, %v8237
      %v8339 = vadd.f32 %v8095, %v8239
      %v8340 = vadd.f32 %v8096, %v8242
      %v8341 = vadd.f32 %v8097, %v8244
      %v8342 = vadd.f32 %v8098, %v8247
      %v8343 = vadd.f32 %v8099, %v8249
      %v8344 = vadd.f32 %v8100, %v8252
      %v8345 = vadd.f32 %v8101, %v8254
      %v8346 = vadd.f32 %v8102, %v8257
      %v8347 = vadd.f32 %v8103, %v8259
      %v8348 = vadd.f32 %v8104, %v8262
      %v8349 = vadd.f32 %v8105, %v8264
      %v8350 = vadd.f32 %v8106, %v8267
      %v8351 = vadd.f32 %v8107, %v8269
      %v8352 = vadd.f32 %v8108, %v8272
      %v8353 = vadd.f32 %v8109, %v8274
      %v8354 = vadd.f32 %v8110, %v8277
      %v8355 = vadd.f32 %v8111, %v8279
      %v8356 = vadd.f32 %v8112, %v8282
      %v8357 = vadd.f32 %v8113, %v8284
      %v8358 = vadd.f32 %v8114, %v8287
      %v8359 = vadd.f32 %v8115, %v8289
      %v8360 = vadd.f32 %v8116, %v8292
      %v8361 = vadd.f32 %v8117, %v8294
      %v8362 = vadd.f32 %v8118, %v8297
      %v8363 = vadd.f32 %v8119, %v8299
      %v8364 = vlaneseq
      %v8365 = vshrl.u32 %v8364, 7
      %v8366 = vsub.s32 3, %v8365
      %v8367 = vrot.slane %v558, %v8366
      %v8368 = vmul.f32 %v496, %v8367
      %v8369 = vmul.f32 %v497, %v8367
      %v8370 = vmul.f32 %v498, %v8367
      %v8371 = vmul.f32 %v499, %v8367
      %v8372 = vmul.f32 %v500, %v8367
      %v8373 = vmul.f32 %v501, %v8367
      %v8374 = vmul.f32 %v502, %v8367
      %v8375 = vmul.f32 %v503, %v8367
      %v8376 = vmul.f32 %v504, %v8367
      %v8377 = vmul.f32 %v505, %v8367
      %v8378 = vmul.f32 %v506, %v8367
      %v8379 = vmul.f32 %v507, %v8367
      %v8380 = vmul.f32 %v508, %v8367
      %v8381 = vmul.f32 %v509, %v8367
      %v8382 = vmul.f32 %v510, %v8367
      %v8383 = vmul.f32 %v511, %v8367
      %v8384 = vmul.f32 %v512, %v8367
      %v8385 = vmul.f32 %v513, %v8367
      %v8386 = vmul.f32 %v514, %v8367
      %v8387 = vmul.f32 %v515, %v8367
      %v8388 = vmul.f32 %v516, %v8367
      %v8389 = vmul.f32 %v517, %v8367
      %v8390 = vmul.f32 %v518, %v8367
      %v8391 = vmul.f32 %v519, %v8367
      %v8392 = vmul.f32 %v520, %v8367
      %v8393 = vmul.f32 %v521, %v8367
      %v8394 = vmul.f32 %v522, %v8367
      %v8395 = vmul.f32 %v523, %v8367
      %v8396 = vmul.f32 %v524, %v8367
      %v8397 = vmul.f32 %v525, %v8367
      %v8398 = vmul.f32 %v526, %v8367
      %v8399 = vmul.f32 %v527, %v8367
      %v8400 = vmul.f32 %v528, %v8367
      %v8401 = vmul.f32 %v529, %v8367
      %v8402 = vmul.f32 %v530, %v8367
      %v8403 = vmul.f32 %v531, %v8367
      %v8404 = vmul.f32 %v532, %v8367
      %v8405 = vmul.f32 %v533, %v8367
      %v8406 = vmul.f32 %v534, %v8367
      %v8407 = vmul.f32 %v535, %v8367
      %v8408 = vmul.f32 %v536, %v8367
      %v8409 = vmul.f32 %v537, %v8367
      %v8410 = vmul.f32 %v538, %v8367
      %v8411 = vmul.f32 %v539, %v8367
      %v8412 = vmul.f32 %v540, %v8367
      %v8413 = vmul.f32 %v541, %v8367
      %v8414 = vmul.f32 %v542, %v8367
      %v8415 = vmul.f32 %v543, %v8367
      %v8464 = vrot.slane %v8368, 5
      %v8465 = vrot.slane %v8369, 5
      %v8466 = vsel %vm7975, %v8464, %v8465
      %v8467 = vrot.slane %v8370, 5
      %v8468 = vsel %vm7975, %v8465, %v8467
      %v8469 = vrot.slane %v8371, 5
      %v8470 = vrot.slane %v8372, 5
      %v8471 = vsel %vm7975, %v8469, %v8470
      %v8472 = vrot.slane %v8373, 5
      %v8473 = vsel %vm7975, %v8470, %v8472
      %v8474 = vrot.slane %v8374, 5
      %v8475 = vrot.slane %v8375, 5
      %v8476 = vsel %vm7975, %v8474, %v8475
      %v8477 = vrot.slane %v8376, 5
      %v8478 = vsel %vm7975, %v8475, %v8477
      %v8479 = vrot.slane %v8377, 5
      %v8480 = vrot.slane %v8378, 5
      %v8481 = vsel %vm7975, %v8479, %v8480
      %v8482 = vrot.slane %v8379, 5
      %v8483 = vsel %vm7975, %v8480, %v8482
      %v8484 = vrot.slane %v8380, 5
      %v8485 = vrot.slane %v8381, 5
      %v8486 = vsel %vm7975, %v8484, %v8485
      %v8487 = vrot.slane %v8382, 5
      %v8488 = vsel %vm7975, %v8485, %v8487
      %v8489 = vrot.slane %v8383, 5
      %v8490 = vrot.slane %v8384, 5
      %v8491 = vsel %vm7975, %v8489, %v8490
      %v8492 = vrot.slane %v8385, 5
      %v8493 = vsel %vm7975, %v8490, %v8492
      %v8494 = vrot.slane %v8386, 5
      %v8495 = vrot.slane %v8387, 5
      %v8496 = vsel %vm7975, %v8494, %v8495
      %v8497 = vrot.slane %v8388, 5
      %v8498 = vsel %vm7975, %v8495, %v8497
      %v8499 = vrot.slane %v8389, 5
      %v8500 = vrot.slane %v8390, 5
      %v8501 = vsel %vm7975, %v8499, %v8500
      %v8502 = vrot.slane %v8391, 5
      %v8503 = vsel %vm7975, %v8500, %v8502
      %v8504 = vrot.slane %v8392, 5
      %v8505 = vrot.slane %v8393, 5
      %v8506 = vsel %vm7975, %v8504, %v8505
      %v8507 = vrot.slane %v8394, 5
      %v8508 = vsel %vm7975, %v8505, %v8507
      %v8509 = vrot.slane %v8395, 5
      %v8510 = vrot.slane %v8396, 5
      %v8511 = vsel %vm7975, %v8509, %v8510
      %v8512 = vrot.slane %v8397, 5
      %v8513 = vsel %vm7975, %v8510, %v8512
      %v8514 = vrot.slane %v8398, 5
      %v8515 = vrot.slane %v8399, 5
      %v8516 = vsel %vm7975, %v8514, %v8515
      %v8517 = vrot.slane %v8400, 5
      %v8518 = vsel %vm7975, %v8515, %v8517
      %v8519 = vrot.slane %v8401, 5
      %v8520 = vrot.slane %v8402, 5
      %v8521 = vsel %vm7975, %v8519, %v8520
      %v8522 = vrot.slane %v8403, 5
      %v8523 = vsel %vm7975, %v8520, %v8522
      %v8524 = vrot.slane %v8404, 5
      %v8525 = vrot.slane %v8405, 5
      %v8526 = vsel %vm7975, %v8524, %v8525
      %v8527 = vrot.slane %v8406, 5
      %v8528 = vsel %vm7975, %v8525, %v8527
      %v8529 = vrot.slane %v8407, 5
      %v8530 = vrot.slane %v8408, 5
      %v8531 = vsel %vm7975, %v8529, %v8530
      %v8532 = vrot.slane %v8409, 5
      %v8533 = vsel %vm7975, %v8530, %v8532
      %v8534 = vrot.slane %v8410, 5
      %v8535 = vrot.slane %v8411, 5
      %v8536 = vsel %vm7975, %v8534, %v8535
      %v8537 = vrot.slane %v8412, 5
      %v8538 = vsel %vm7975, %v8535, %v8537
      %v8539 = vrot.slane %v8413, 5
      %v8540 = vrot.slane %v8414, 5
      %v8541 = vsel %vm7975, %v8539, %v8540
      %v8542 = vrot.slane %v8415, 5
      %v8543 = vsel %vm7975, %v8540, %v8542
      %v8576 = vadd.f32 %v8332, %v8466
      %v8577 = vadd.f32 %v8333, %v8468
      %v8578 = vadd.f32 %v8334, %v8471
      %v8579 = vadd.f32 %v8335, %v8473
      %v8580 = vadd.f32 %v8336, %v8476
      %v8581 = vadd.f32 %v8337, %v8478
      %v8582 = vadd.f32 %v8338, %v8481
      %v8583 = vadd.f32 %v8339, %v8483
      %v8584 = vadd.f32 %v8340, %v8486
      %v8585 = vadd.f32 %v8341, %v8488
      %v8586 = vadd.f32 %v8342, %v8491
      %v8587 = vadd.f32 %v8343, %v8493
      %v8588 = vadd.f32 %v8344, %v8496
      %v8589 = vadd.f32 %v8345, %v8498
      %v8590 = vadd.f32 %v8346, %v8501
      %v8591 = vadd.f32 %v8347, %v8503
      %v8592 = vadd.f32 %v8348, %v8506
      %v8593 = vadd.f32 %v8349, %v8508
      %v8594 = vadd.f32 %v8350, %v8511
      %v8595 = vadd.f32 %v8351, %v8513
      %v8596 = vadd.f32 %v8352, %v8516
      %v8597 = vadd.f32 %v8353, %v8518
      %v8598 = vadd.f32 %v8354, %v8521
      %v8599 = vadd.f32 %v8355, %v8523
      %v8600 = vadd.f32 %v8356, %v8526
      %v8601 = vadd.f32 %v8357, %v8528
      %v8602 = vadd.f32 %v8358, %v8531
      %v8603 = vadd.f32 %v8359, %v8533
      %v8604 = vadd.f32 %v8360, %v8536
      %v8605 = vadd.f32 %v8361, %v8538
      %v8606 = vadd.f32 %v8362, %v8541
      %v8607 = vadd.f32 %v8363, %v8543
      %v8608 = vlaneseq
      %v8609 = vshrl.u32 %v8608, 7
      %v8610 = vsub.s32 2, %v8609
      %v8611 = vrot.slane %v559, %v8610
      %v8612 = vmul.f32 %v499, %v8611
      %v8613 = vmul.f32 %v500, %v8611
      %v8614 = vmul.f32 %v501, %v8611
      %v8615 = vmul.f32 %v502, %v8611
      %v8616 = vmul.f32 %v503, %v8611
      %v8617 = vmul.f32 %v504, %v8611
      %v8618 = vmul.f32 %v505, %v8611
      %v8619 = vmul.f32 %v506, %v8611
      %v8620 = vmul.f32 %v507, %v8611
      %v8621 = vmul.f32 %v508, %v8611
      %v8622 = vmul.f32 %v509, %v8611
      %v8623 = vmul.f32 %v510, %v8611
      %v8624 = vmul.f32 %v511, %v8611
      %v8625 = vmul.f32 %v512, %v8611
      %v8626 = vmul.f32 %v513, %v8611
      %v8627 = vmul.f32 %v514, %v8611
      %v8628 = vmul.f32 %v515, %v8611
      %v8629 = vmul.f32 %v516, %v8611
      %v8630 = vmul.f32 %v517, %v8611
      %v8631 = vmul.f32 %v518, %v8611
      %v8632 = vmul.f32 %v519, %v8611
      %v8633 = vmul.f32 %v520, %v8611
      %v8634 = vmul.f32 %v521, %v8611
      %v8635 = vmul.f32 %v522, %v8611
      %v8636 = vmul.f32 %v523, %v8611
      %v8637 = vmul.f32 %v524, %v8611
      %v8638 = vmul.f32 %v525, %v8611
      %v8639 = vmul.f32 %v526, %v8611
      %v8640 = vmul.f32 %v527, %v8611
      %v8641 = vmul.f32 %v528, %v8611
      %v8642 = vmul.f32 %v529, %v8611
      %v8643 = vmul.f32 %v530, %v8611
      %v8644 = vmul.f32 %v531, %v8611
      %v8645 = vmul.f32 %v532, %v8611
      %v8646 = vmul.f32 %v533, %v8611
      %v8647 = vmul.f32 %v534, %v8611
      %v8648 = vmul.f32 %v535, %v8611
      %v8649 = vmul.f32 %v536, %v8611
      %v8650 = vmul.f32 %v537, %v8611
      %v8651 = vmul.f32 %v538, %v8611
      %v8652 = vmul.f32 %v539, %v8611
      %v8653 = vmul.f32 %v540, %v8611
      %v8654 = vmul.f32 %v541, %v8611
      %v8655 = vmul.f32 %v542, %v8611
      %v8656 = vmul.f32 %v543, %v8611
      %v8657 = vmul.f32 %v544, %v8611
      %v8658 = vmul.f32 %v545, %v8611
      %v8659 = vmul.f32 %v546, %v8611
      %v8708 = vrot.slane %v8612, 5
      %v8709 = vrot.slane %v8613, 5
      %v8710 = vsel %vm7975, %v8708, %v8709
      %v8711 = vrot.slane %v8614, 5
      %v8712 = vsel %vm7975, %v8709, %v8711
      %v8713 = vrot.slane %v8615, 5
      %v8714 = vrot.slane %v8616, 5
      %v8715 = vsel %vm7975, %v8713, %v8714
      %v8716 = vrot.slane %v8617, 5
      %v8717 = vsel %vm7975, %v8714, %v8716
      %v8718 = vrot.slane %v8618, 5
      %v8719 = vrot.slane %v8619, 5
      %v8720 = vsel %vm7975, %v8718, %v8719
      %v8721 = vrot.slane %v8620, 5
      %v8722 = vsel %vm7975, %v8719, %v8721
      %v8723 = vrot.slane %v8621, 5
      %v8724 = vrot.slane %v8622, 5
      %v8725 = vsel %vm7975, %v8723, %v8724
      %v8726 = vrot.slane %v8623, 5
      %v8727 = vsel %vm7975, %v8724, %v8726
      %v8728 = vrot.slane %v8624, 5
      %v8729 = vrot.slane %v8625, 5
      %v8730 = vsel %vm7975, %v8728, %v8729
      %v8731 = vrot.slane %v8626, 5
      %v8732 = vsel %vm7975, %v8729, %v8731
      %v8733 = vrot.slane %v8627, 5
      %v8734 = vrot.slane %v8628, 5
      %v8735 = vsel %vm7975, %v8733, %v8734
      %v8736 = vrot.slane %v8629, 5
      %v8737 = vsel %vm7975, %v8734, %v8736
      %v8738 = vrot.slane %v8630, 5
      %v8739 = vrot.slane %v8631, 5
      %v8740 = vsel %vm7975, %v8738, %v8739
      %v8741 = vrot.slane %v8632, 5
      %v8742 = vsel %vm7975, %v8739, %v8741
      %v8743 = vrot.slane %v8633, 5
      %v8744 = vrot.slane %v8634, 5
      %v8745 = vsel %vm7975, %v8743, %v8744
      %v8746 = vrot.slane %v8635, 5
      %v8747 = vsel %vm7975, %v8744, %v8746
      %v8748 = vrot.slane %v8636, 5
      %v8749 = vrot.slane %v8637, 5
      %v8750 = vsel %vm7975, %v8748, %v8749
      %v8751 = vrot.slane %v8638, 5
      %v8752 = vsel %vm7975, %v8749, %v8751
      %v8753 = vrot.slane %v8639, 5
      %v8754 = vrot.slane %v8640, 5
      %v8755 = vsel %vm7975, %v8753, %v8754
      %v8756 = vrot.slane %v8641, 5
      %v8757 = vsel %vm7975, %v8754, %v8756
      %v8758 = vrot.slane %v8642, 5
      %v8759 = vrot.slane %v8643, 5
      %v8760 = vsel %vm7975, %v8758, %v8759
      %v8761 = vrot.slane %v8644, 5
      %v8762 = vsel %vm7975, %v8759, %v8761
      %v8763 = vrot.slane %v8645, 5
      %v8764 = vrot.slane %v8646, 5
      %v8765 = vsel %vm7975, %v8763, %v8764
      %v8766 = vrot.slane %v8647, 5
      %v8767 = vsel %vm7975, %v8764, %v8766
      %v8768 = vrot.slane %v8648, 5
      %v8769 = vrot.slane %v8649, 5
      %v8770 = vsel %vm7975, %v8768, %v8769
      %v8771 = vrot.slane %v8650, 5
      %v8772 = vsel %vm7975, %v8769, %v8771
      %v8773 = vrot.slane %v8651, 5
      %v8774 = vrot.slane %v8652, 5
      %v8775 = vsel %vm7975, %v8773, %v8774
      %v8776 = vrot.slane %v8653, 5
      %v8777 = vsel %vm7975, %v8774, %v8776
      %v8778 = vrot.slane %v8654, 5
      %v8779 = vrot.slane %v8655, 5
      %v8780 = vsel %vm7975, %v8778, %v8779
      %v8781 = vrot.slane %v8656, 5
      %v8782 = vsel %vm7975, %v8779, %v8781
      %v8783 = vrot.slane %v8657, 5
      %v8784 = vrot.slane %v8658, 5
      %v8785 = vsel %vm7975, %v8783, %v8784
      %v8786 = vrot.slane %v8659, 5
      %v8787 = vsel %vm7975, %v8784, %v8786
      %v8820 = vadd.f32 %v8576, %v8710
      %v8821 = vadd.f32 %v8577, %v8712
      %v8822 = vadd.f32 %v8578, %v8715
      %v8823 = vadd.f32 %v8579, %v8717
      %v8824 = vadd.f32 %v8580, %v8720
      %v8825 = vadd.f32 %v8581, %v8722
      %v8826 = vadd.f32 %v8582, %v8725
      %v8827 = vadd.f32 %v8583, %v8727
      %v8828 = vadd.f32 %v8584, %v8730
      %v8829 = vadd.f32 %v8585, %v8732
      %v8830 = vadd.f32 %v8586, %v8735
      %v8831 = vadd.f32 %v8587, %v8737
      %v8832 = vadd.f32 %v8588, %v8740
      %v8833 = vadd.f32 %v8589, %v8742
      %v8834 = vadd.f32 %v8590, %v8745
      %v8835 = vadd.f32 %v8591, %v8747
      %v8836 = vadd.f32 %v8592, %v8750
      %v8837 = vadd.f32 %v8593, %v8752
      %v8838 = vadd.f32 %v8594, %v8755
      %v8839 = vadd.f32 %v8595, %v8757
      %v8840 = vadd.f32 %v8596, %v8760
      %v8841 = vadd.f32 %v8597, %v8762
      %v8842 = vadd.f32 %v8598, %v8765
      %v8843 = vadd.f32 %v8599, %v8767
      %v8844 = vadd.f32 %v8600, %v8770
      %v8845 = vadd.f32 %v8601, %v8772
      %v8846 = vadd.f32 %v8602, %v8775
      %v8847 = vadd.f32 %v8603, %v8777
      %v8848 = vadd.f32 %v8604, %v8780
      %v8849 = vadd.f32 %v8605, %v8782
      %v8850 = vadd.f32 %v8606, %v8785
      %v8851 = vadd.f32 %v8607, %v8787
      %v8852 = vlaneseq
      %v8853 = vshrl.u32 %v8852, 7
      %v8854 = vsub.s32 1, %v8853
      %v8855 = vrot.slane %v560, %v8854
      %v8856 = vmul.f32 %v502, %v8855
      %v8857 = vmul.f32 %v503, %v8855
      %v8858 = vmul.f32 %v504, %v8855
      %v8859 = vmul.f32 %v505, %v8855
      %v8860 = vmul.f32 %v506, %v8855
      %v8861 = vmul.f32 %v507, %v8855
      %v8862 = vmul.f32 %v508, %v8855
      %v8863 = vmul.f32 %v509, %v8855
      %v8864 = vmul.f32 %v510, %v8855
      %v8865 = vmul.f32 %v511, %v8855
      %v8866 = vmul.f32 %v512, %v8855
      %v8867 = vmul.f32 %v513, %v8855
      %v8868 = vmul.f32 %v514, %v8855
      %v8869 = vmul.f32 %v515, %v8855
      %v8870 = vmul.f32 %v516, %v8855
      %v8871 = vmul.f32 %v517, %v8855
      %v8872 = vmul.f32 %v518, %v8855
      %v8873 = vmul.f32 %v519, %v8855
      %v8874 = vmul.f32 %v520, %v8855
      %v8875 = vmul.f32 %v521, %v8855
      %v8876 = vmul.f32 %v522, %v8855
      %v8877 = vmul.f32 %v523, %v8855
      %v8878 = vmul.f32 %v524, %v8855
      %v8879 = vmul.f32 %v525, %v8855
      %v8880 = vmul.f32 %v526, %v8855
      %v8881 = vmul.f32 %v527, %v8855
      %v8882 = vmul.f32 %v528, %v8855
      %v8883 = vmul.f32 %v529, %v8855
      %v8884 = vmul.f32 %v530, %v8855
      %v8885 = vmul.f32 %v531, %v8855
      %v8886 = vmul.f32 %v532, %v8855
      %v8887 = vmul.f32 %v533, %v8855
      %v8888 = vmul.f32 %v534, %v8855
      %v8889 = vmul.f32 %v535, %v8855
      %v8890 = vmul.f32 %v536, %v8855
      %v8891 = vmul.f32 %v537, %v8855
      %v8892 = vmul.f32 %v538, %v8855
      %v8893 = vmul.f32 %v539, %v8855
      %v8894 = vmul.f32 %v540, %v8855
      %v8895 = vmul.f32 %v541, %v8855
      %v8896 = vmul.f32 %v542, %v8855
      %v8897 = vmul.f32 %v543, %v8855
      %v8898 = vmul.f32 %v544, %v8855
      %v8899 = vmul.f32 %v545, %v8855
      %v8900 = vmul.f32 %v546, %v8855
      %v8901 = vmul.f32 %v547, %v8855
      %v8902 = vmul.f32 %v548, %v8855
      %v8903 = vmul.f32 %v549, %v8855
      %v8952 = vrot.slane %v8856, 5
      %v8953 = vrot.slane %v8857, 5
      %v8954 = vsel %vm7975, %v8952, %v8953
      %v8955 = vrot.slane %v8858, 5
      %v8956 = vsel %vm7975, %v8953, %v8955
      %v8957 = vrot.slane %v8859, 5
      %v8958 = vrot.slane %v8860, 5
      %v8959 = vsel %vm7975, %v8957, %v8958
      %v8960 = vrot.slane %v8861, 5
      %v8961 = vsel %vm7975, %v8958, %v8960
      %v8962 = vrot.slane %v8862, 5
      %v8963 = vrot.slane %v8863, 5
      %v8964 = vsel %vm7975, %v8962, %v8963
      %v8965 = vrot.slane %v8864, 5
      %v8966 = vsel %vm7975, %v8963, %v8965
      %v8967 = vrot.slane %v8865, 5
      %v8968 = vrot.slane %v8866, 5
      %v8969 = vsel %vm7975, %v8967, %v8968
      %v8970 = vrot.slane %v8867, 5
      %v8971 = vsel %vm7975, %v8968, %v8970
      %v8972 = vrot.slane %v8868, 5
      %v8973 = vrot.slane %v8869, 5
      %v8974 = vsel %vm7975, %v8972, %v8973
      %v8975 = vrot.slane %v8870, 5
      %v8976 = vsel %vm7975, %v8973, %v8975
      %v8977 = vrot.slane %v8871, 5
      %v8978 = vrot.slane %v8872, 5
      %v8979 = vsel %vm7975, %v8977, %v8978
      %v8980 = vrot.slane %v8873, 5
      %v8981 = vsel %vm7975, %v8978, %v8980
      %v8982 = vrot.slane %v8874, 5
      %v8983 = vrot.slane %v8875, 5
      %v8984 = vsel %vm7975, %v8982, %v8983
      %v8985 = vrot.slane %v8876, 5
      %v8986 = vsel %vm7975, %v8983, %v8985
      %v8987 = vrot.slane %v8877, 5
      %v8988 = vrot.slane %v8878, 5
      %v8989 = vsel %vm7975, %v8987, %v8988
      %v8990 = vrot.slane %v8879, 5
      %v8991 = vsel %vm7975, %v8988, %v8990
      %v8992 = vrot.slane %v8880, 5
      %v8993 = vrot.slane %v8881, 5
      %v8994 = vsel %vm7975, %v8992, %v8993
      %v8995 = vrot.slane %v8882, 5
      %v8996 = vsel %vm7975, %v8993, %v8995
      %v8997 = vrot.slane %v8883, 5
      %v8998 = vrot.slane %v8884, 5
      %v8999 = vsel %vm7975, %v8997, %v8998
      %v9000 = vrot.slane %v8885, 5
      %v9001 = vsel %vm7975, %v8998, %v9000
      %v9002 = vrot.slane %v8886, 5
      %v9003 = vrot.slane %v8887, 5
      %v9004 = vsel %vm7975, %v9002, %v9003
      %v9005 = vrot.slane %v8888, 5
      %v9006 = vsel %vm7975, %v9003, %v9005
      %v9007 = vrot.slane %v8889, 5
      %v9008 = vrot.slane %v8890, 5
      %v9009 = vsel %vm7975, %v9007, %v9008
      %v9010 = vrot.slane %v8891, 5
      %v9011 = vsel %vm7975, %v9008, %v9010
      %v9012 = vrot.slane %v8892, 5
      %v9013 = vrot.slane %v8893, 5
      %v9014 = vsel %vm7975, %v9012, %v9013
      %v9015 = vrot.slane %v8894, 5
      %v9016 = vsel %vm7975, %v9013, %v9015
      %v9017 = vrot.slane %v8895, 5
      %v9018 = vrot.slane %v8896, 5
      %v9019 = vsel %vm7975, %v9017, %v9018
      %v9020 = vrot.slane %v8897, 5
      %v9021 = vsel %vm7975, %v9018, %v9020
      %v9022 = vrot.slane %v8898, 5
      %v9023 = vrot.slane %v8899, 5
      %v9024 = vsel %vm7975, %v9022, %v9023
      %v9025 = vrot.slane %v8900, 5
      %v9026 = vsel %vm7975, %v9023, %v9025
      %v9027 = vrot.slane %v8901, 5
      %v9028 = vrot.slane %v8902, 5
      %v9029 = vsel %vm7975, %v9027, %v9028
      %v9030 = vrot.slane %v8903, 5
      %v9031 = vsel %vm7975, %v9028, %v9030
      %v9064 = vadd.f32 %v8820, %v8954
      %v9065 = vadd.f32 %v8821, %v8956
      %v9066 = vadd.f32 %v8822, %v8959
      %v9067 = vadd.f32 %v8823, %v8961
      %v9068 = vadd.f32 %v8824, %v8964
      %v9069 = vadd.f32 %v8825, %v8966
      %v9070 = vadd.f32 %v8826, %v8969
      %v9071 = vadd.f32 %v8827, %v8971
      %v9072 = vadd.f32 %v8828, %v8974
      %v9073 = vadd.f32 %v8829, %v8976
      %v9074 = vadd.f32 %v8830, %v8979
      %v9075 = vadd.f32 %v8831, %v8981
      %v9076 = vadd.f32 %v8832, %v8984
      %v9077 = vadd.f32 %v8833, %v8986
      %v9078 = vadd.f32 %v8834, %v8989
      %v9079 = vadd.f32 %v8835, %v8991
      %v9080 = vadd.f32 %v8836, %v8994
      %v9081 = vadd.f32 %v8837, %v8996
      %v9082 = vadd.f32 %v8838, %v8999
      %v9083 = vadd.f32 %v8839, %v9001
      %v9084 = vadd.f32 %v8840, %v9004
      %v9085 = vadd.f32 %v8841, %v9006
      %v9086 = vadd.f32 %v8842, %v9009
      %v9087 = vadd.f32 %v8843, %v9011
      %v9088 = vadd.f32 %v8844, %v9014
      %v9089 = vadd.f32 %v8845, %v9016
      %v9090 = vadd.f32 %v8846, %v9019
      %v9091 = vadd.f32 %v8847, %v9021
      %v9092 = vadd.f32 %v8848, %v9024
      %v9093 = vadd.f32 %v8849, %v9026
      %v9094 = vadd.f32 %v8850, %v9029
      %v9095 = vadd.f32 %v8851, %v9031
      %v9096 = vlaneseq
      %v9097 = vshrl.u32 %v9096, 7
      %v9098 = vsub.s32 0, %v9097
      %v9099 = vrot.slane %v561, %v9098
      %v9100 = vmul.f32 %v505, %v9099
      %v9101 = vmul.f32 %v506, %v9099
      %v9102 = vmul.f32 %v507, %v9099
      %v9103 = vmul.f32 %v508, %v9099
      %v9104 = vmul.f32 %v509, %v9099
      %v9105 = vmul.f32 %v510, %v9099
      %v9106 = vmul.f32 %v511, %v9099
      %v9107 = vmul.f32 %v512, %v9099
      %v9108 = vmul.f32 %v513, %v9099
      %v9109 = vmul.f32 %v514, %v9099
      %v9110 = vmul.f32 %v515, %v9099
      %v9111 = vmul.f32 %v516, %v9099
      %v9112 = vmul.f32 %v517, %v9099
      %v9113 = vmul.f32 %v518, %v9099
      %v9114 = vmul.f32 %v519, %v9099
      %v9115 = vmul.f32 %v520, %v9099
      %v9116 = vmul.f32 %v521, %v9099
      %v9117 = vmul.f32 %v522, %v9099
      %v9118 = vmul.f32 %v523, %v9099
      %v9119 = vmul.f32 %v524, %v9099
      %v9120 = vmul.f32 %v525, %v9099
      %v9121 = vmul.f32 %v526, %v9099
      %v9122 = vmul.f32 %v527, %v9099
      %v9123 = vmul.f32 %v528, %v9099
      %v9124 = vmul.f32 %v529, %v9099
      %v9125 = vmul.f32 %v530, %v9099
      %v9126 = vmul.f32 %v531, %v9099
      %v9127 = vmul.f32 %v532, %v9099
      %v9128 = vmul.f32 %v533, %v9099
      %v9129 = vmul.f32 %v534, %v9099
      %v9130 = vmul.f32 %v535, %v9099
      %v9131 = vmul.f32 %v536, %v9099
      %v9132 = vmul.f32 %v537, %v9099
      %v9133 = vmul.f32 %v538, %v9099
      %v9134 = vmul.f32 %v539, %v9099
      %v9135 = vmul.f32 %v540, %v9099
      %v9136 = vmul.f32 %v541, %v9099
      %v9137 = vmul.f32 %v542, %v9099
      %v9138 = vmul.f32 %v543, %v9099
      %v9139 = vmul.f32 %v544, %v9099
      %v9140 = vmul.f32 %v545, %v9099
      %v9141 = vmul.f32 %v546, %v9099
      %v9142 = vmul.f32 %v547, %v9099
      %v9143 = vmul.f32 %v548, %v9099
      %v9144 = vmul.f32 %v549, %v9099
      %v9145 = vmul.f32 %v550, %v9099
      %v9146 = vmul.f32 %v551, %v9099
      %v9147 = vmul.f32 %v552, %v9099
      %v9196 = vrot.slane %v9100, 5
      %v9197 = vrot.slane %v9101, 5
      %v9198 = vsel %vm7975, %v9196, %v9197
      %v9199 = vrot.slane %v9102, 5
      %v9200 = vsel %vm7975, %v9197, %v9199
      %v9201 = vrot.slane %v9103, 5
      %v9202 = vrot.slane %v9104, 5
      %v9203 = vsel %vm7975, %v9201, %v9202
      %v9204 = vrot.slane %v9105, 5
      %v9205 = vsel %vm7975, %v9202, %v9204
      %v9206 = vrot.slane %v9106, 5
      %v9207 = vrot.slane %v9107, 5
      %v9208 = vsel %vm7975, %v9206, %v9207
      %v9209 = vrot.slane %v9108, 5
      %v9210 = vsel %vm7975, %v9207, %v9209
      %v9211 = vrot.slane %v9109, 5
      %v9212 = vrot.slane %v9110, 5
      %v9213 = vsel %vm7975, %v9211, %v9212
      %v9214 = vrot.slane %v9111, 5
      %v9215 = vsel %vm7975, %v9212, %v9214
      %v9216 = vrot.slane %v9112, 5
      %v9217 = vrot.slane %v9113, 5
      %v9218 = vsel %vm7975, %v9216, %v9217
      %v9219 = vrot.slane %v9114, 5
      %v9220 = vsel %vm7975, %v9217, %v9219
      %v9221 = vrot.slane %v9115, 5
      %v9222 = vrot.slane %v9116, 5
      %v9223 = vsel %vm7975, %v9221, %v9222
      %v9224 = vrot.slane %v9117, 5
      %v9225 = vsel %vm7975, %v9222, %v9224
      %v9226 = vrot.slane %v9118, 5
      %v9227 = vrot.slane %v9119, 5
      %v9228 = vsel %vm7975, %v9226, %v9227
      %v9229 = vrot.slane %v9120, 5
      %v9230 = vsel %vm7975, %v9227, %v9229
      %v9231 = vrot.slane %v9121, 5
      %v9232 = vrot.slane %v9122, 5
      %v9233 = vsel %vm7975, %v9231, %v9232
      %v9234 = vrot.slane %v9123, 5
      %v9235 = vsel %vm7975, %v9232, %v9234
      %v9236 = vrot.slane %v9124, 5
      %v9237 = vrot.slane %v9125, 5
      %v9238 = vsel %vm7975, %v9236, %v9237
      %v9239 = vrot.slane %v9126, 5
      %v9240 = vsel %vm7975, %v9237, %v9239
      %v9241 = vrot.slane %v9127, 5
      %v9242 = vrot.slane %v9128, 5
      %v9243 = vsel %vm7975, %v9241, %v9242
      %v9244 = vrot.slane %v9129, 5
      %v9245 = vsel %vm7975, %v9242, %v9244
      %v9246 = vrot.slane %v9130, 5
      %v9247 = vrot.slane %v9131, 5
      %v9248 = vsel %vm7975, %v9246, %v9247
      %v9249 = vrot.slane %v9132, 5
      %v9250 = vsel %vm7975, %v9247, %v9249
      %v9251 = vrot.slane %v9133, 5
      %v9252 = vrot.slane %v9134, 5
      %v9253 = vsel %vm7975, %v9251, %v9252
      %v9254 = vrot.slane %v9135, 5
      %v9255 = vsel %vm7975, %v9252, %v9254
      %v9256 = vrot.slane %v9136, 5
      %v9257 = vrot.slane %v9137, 5
      %v9258 = vsel %vm7975, %v9256, %v9257
      %v9259 = vrot.slane %v9138, 5
      %v9260 = vsel %vm7975, %v9257, %v9259
      %v9261 = vrot.slane %v9139, 5
      %v9262 = vrot.slane %v9140, 5
      %v9263 = vsel %vm7975, %v9261, %v9262
      %v9264 = vrot.slane %v9141, 5
      %v9265 = vsel %vm7975, %v9262, %v9264
      %v9266 = vrot.slane %v9142, 5
      %v9267 = vrot.slane %v9143, 5
      %v9268 = vsel %vm7975, %v9266, %v9267
      %v9269 = vrot.slane %v9144, 5
      %v9270 = vsel %vm7975, %v9267, %v9269
      %v9271 = vrot.slane %v9145, 5
      %v9272 = vrot.slane %v9146, 5
      %v9273 = vsel %vm7975, %v9271, %v9272
      %v9274 = vrot.slane %v9147, 5
      %v9275 = vsel %vm7975, %v9272, %v9274
      %v9308 = vadd.f32 %v9064, %v9198
      %v9309 = vadd.f32 %v9065, %v9200
      %v9310 = vadd.f32 %v9066, %v9203
      %v9311 = vadd.f32 %v9067, %v9205
      %v9312 = vadd.f32 %v9068, %v9208
      %v9313 = vadd.f32 %v9069, %v9210
      %v9314 = vadd.f32 %v9070, %v9213
      %v9315 = vadd.f32 %v9071, %v9215
      %v9316 = vadd.f32 %v9072, %v9218
      %v9317 = vadd.f32 %v9073, %v9220
      %v9318 = vadd.f32 %v9074, %v9223
      %v9319 = vadd.f32 %v9075, %v9225
      %v9320 = vadd.f32 %v9076, %v9228
      %v9321 = vadd.f32 %v9077, %v9230
      %v9322 = vadd.f32 %v9078, %v9233
      %v9323 = vadd.f32 %v9079, %v9235
      %v9324 = vadd.f32 %v9080, %v9238
      %v9325 = vadd.f32 %v9081, %v9240
      %v9326 = vadd.f32 %v9082, %v9243
      %v9327 = vadd.f32 %v9083, %v9245
      %v9328 = vadd.f32 %v9084, %v9248
      %v9329 = vadd.f32 %v9085, %v9250
      %v9330 = vadd.f32 %v9086, %v9253
      %v9331 = vadd.f32 %v9087, %v9255
      %v9332 = vadd.f32 %v9088, %v9258
      %v9333 = vadd.f32 %v9089, %v9260
      %v9334 = vadd.f32 %v9090, %v9263
      %v9335 = vadd.f32 %v9091, %v9265
      %v9336 = vadd.f32 %v9092, %v9268
      %v9337 = vadd.f32 %v9093, %v9270
      %v9338 = vadd.f32 %v9094, %v9273
      %v9339 = vadd.f32 %v9095, %v9275
      %v9340 = vlaneseq
      %v9341 = vshrl.u32 %v9340, 7
      %v9342 = vsub.s32 7, %v9341
      %v9343 = vrot.slane %v561, %v9342
      %v9344 = vmul.f32 %v508, %v9343
      %v9345 = vmul.f32 %v509, %v9343
      %v9346 = vmul.f32 %v510, %v9343
      %v9347 = vmul.f32 %v511, %v9343
      %v9348 = vmul.f32 %v512, %v9343
      %v9349 = vmul.f32 %v513, %v9343
      %v9350 = vmul.f32 %v514, %v9343
      %v9351 = vmul.f32 %v515, %v9343
      %v9352 = vmul.f32 %v516, %v9343
      %v9353 = vmul.f32 %v517, %v9343
      %v9354 = vmul.f32 %v518, %v9343
      %v9355 = vmul.f32 %v519, %v9343
      %v9356 = vmul.f32 %v520, %v9343
      %v9357 = vmul.f32 %v521, %v9343
      %v9358 = vmul.f32 %v522, %v9343
      %v9359 = vmul.f32 %v523, %v9343
      %v9360 = vmul.f32 %v524, %v9343
      %v9361 = vmul.f32 %v525, %v9343
      %v9362 = vmul.f32 %v526, %v9343
      %v9363 = vmul.f32 %v527, %v9343
      %v9364 = vmul.f32 %v528, %v9343
      %v9365 = vmul.f32 %v529, %v9343
      %v9366 = vmul.f32 %v530, %v9343
      %v9367 = vmul.f32 %v531, %v9343
      %v9368 = vmul.f32 %v532, %v9343
      %v9369 = vmul.f32 %v533, %v9343
      %v9370 = vmul.f32 %v534, %v9343
      %v9371 = vmul.f32 %v535, %v9343
      %v9372 = vmul.f32 %v536, %v9343
      %v9373 = vmul.f32 %v537, %v9343
      %v9374 = vmul.f32 %v538, %v9343
      %v9375 = vmul.f32 %v539, %v9343
      %v9376 = vmul.f32 %v540, %v9343
      %v9377 = vmul.f32 %v541, %v9343
      %v9378 = vmul.f32 %v542, %v9343
      %v9379 = vmul.f32 %v543, %v9343
      %v9380 = vmul.f32 %v544, %v9343
      %v9381 = vmul.f32 %v545, %v9343
      %v9382 = vmul.f32 %v546, %v9343
      %v9383 = vmul.f32 %v547, %v9343
      %v9384 = vmul.f32 %v548, %v9343
      %v9385 = vmul.f32 %v549, %v9343
      %v9386 = vmul.f32 %v550, %v9343
      %v9387 = vmul.f32 %v551, %v9343
      %v9388 = vmul.f32 %v552, %v9343
      %v9389 = vmul.f32 %v553, %v9343
      %v9390 = vmul.f32 %v554, %v9343
      %v9391 = vmul.f32 %v555, %v9343
      %v9440 = vrot.slane %v9344, 5
      %v9441 = vrot.slane %v9345, 5
      %v9442 = vsel %vm7975, %v9440, %v9441
      %v9443 = vrot.slane %v9346, 5
      %v9444 = vsel %vm7975, %v9441, %v9443
      %v9445 = vrot.slane %v9347, 5
      %v9446 = vrot.slane %v9348, 5
      %v9447 = vsel %vm7975, %v9445, %v9446
      %v9448 = vrot.slane %v9349, 5
      %v9449 = vsel %vm7975, %v9446, %v9448
      %v9450 = vrot.slane %v9350, 5
      %v9451 = vrot.slane %v9351, 5
      %v9452 = vsel %vm7975, %v9450, %v9451
      %v9453 = vrot.slane %v9352, 5
      %v9454 = vsel %vm7975, %v9451, %v9453
      %v9455 = vrot.slane %v9353, 5
      %v9456 = vrot.slane %v9354, 5
      %v9457 = vsel %vm7975, %v9455, %v9456
      %v9458 = vrot.slane %v9355, 5
      %v9459 = vsel %vm7975, %v9456, %v9458
      %v9460 = vrot.slane %v9356, 5
      %v9461 = vrot.slane %v9357, 5
      %v9462 = vsel %vm7975, %v9460, %v9461
      %v9463 = vrot.slane %v9358, 5
      %v9464 = vsel %vm7975, %v9461, %v9463
      %v9465 = vrot.slane %v9359, 5
      %v9466 = vrot.slane %v9360, 5
      %v9467 = vsel %vm7975, %v9465, %v9466
      %v9468 = vrot.slane %v9361, 5
      %v9469 = vsel %vm7975, %v9466, %v9468
      %v9470 = vrot.slane %v9362, 5
      %v9471 = vrot.slane %v9363, 5
      %v9472 = vsel %vm7975, %v9470, %v9471
      %v9473 = vrot.slane %v9364, 5
      %v9474 = vsel %vm7975, %v9471, %v9473
      %v9475 = vrot.slane %v9365, 5
      %v9476 = vrot.slane %v9366, 5
      %v9477 = vsel %vm7975, %v9475, %v9476
      %v9478 = vrot.slane %v9367, 5
      %v9479 = vsel %vm7975, %v9476, %v9478
      %v9480 = vrot.slane %v9368, 5
      %v9481 = vrot.slane %v9369, 5
      %v9482 = vsel %vm7975, %v9480, %v9481
      %v9483 = vrot.slane %v9370, 5
      %v9484 = vsel %vm7975, %v9481, %v9483
      %v9485 = vrot.slane %v9371, 5
      %v9486 = vrot.slane %v9372, 5
      %v9487 = vsel %vm7975, %v9485, %v9486
      %v9488 = vrot.slane %v9373, 5
      %v9489 = vsel %vm7975, %v9486, %v9488
      %v9490 = vrot.slane %v9374, 5
      %v9491 = vrot.slane %v9375, 5
      %v9492 = vsel %vm7975, %v9490, %v9491
      %v9493 = vrot.slane %v9376, 5
      %v9494 = vsel %vm7975, %v9491, %v9493
      %v9495 = vrot.slane %v9377, 5
      %v9496 = vrot.slane %v9378, 5
      %v9497 = vsel %vm7975, %v9495, %v9496
      %v9498 = vrot.slane %v9379, 5
      %v9499 = vsel %vm7975, %v9496, %v9498
      %v9500 = vrot.slane %v9380, 5
      %v9501 = vrot.slane %v9381, 5
      %v9502 = vsel %vm7975, %v9500, %v9501
      %v9503 = vrot.slane %v9382, 5
      %v9504 = vsel %vm7975, %v9501, %v9503
      %v9505 = vrot.slane %v9383, 5
      %v9506 = vrot.slane %v9384, 5
      %v9507 = vsel %vm7975, %v9505, %v9506
      %v9508 = vrot.slane %v9385, 5
      %v9509 = vsel %vm7975, %v9506, %v9508
      %v9510 = vrot.slane %v9386, 5
      %v9511 = vrot.slane %v9387, 5
      %v9512 = vsel %vm7975, %v9510, %v9511
      %v9513 = vrot.slane %v9388, 5
      %v9514 = vsel %vm7975, %v9511, %v9513
      %v9515 = vrot.slane %v9389, 5
      %v9516 = vrot.slane %v9390, 5
      %v9517 = vsel %vm7975, %v9515, %v9516
      %v9518 = vrot.slane %v9391, 5
      %v9519 = vsel %vm7975, %v9516, %v9518
      %v9552 = vadd.f32 %v9308, %v9442
      %v9553 = vadd.f32 %v9309, %v9444
      %v9554 = vadd.f32 %v9310, %v9447
      %v9555 = vadd.f32 %v9311, %v9449
      %v9556 = vadd.f32 %v9312, %v9452
      %v9557 = vadd.f32 %v9313, %v9454
      %v9558 = vadd.f32 %v9314, %v9457
      %v9559 = vadd.f32 %v9315, %v9459
      %v9560 = vadd.f32 %v9316, %v9462
      %v9561 = vadd.f32 %v9317, %v9464
      %v9562 = vadd.f32 %v9318, %v9467
      %v9563 = vadd.f32 %v9319, %v9469
      %v9564 = vadd.f32 %v9320, %v9472
      %v9565 = vadd.f32 %v9321, %v9474
      %v9566 = vadd.f32 %v9322, %v9477
      %v9567 = vadd.f32 %v9323, %v9479
      %v9568 = vadd.f32 %v9324, %v9482
      %v9569 = vadd.f32 %v9325, %v9484
      %v9570 = vadd.f32 %v9326, %v9487
      %v9571 = vadd.f32 %v9327, %v9489
      %v9572 = vadd.f32 %v9328, %v9492
      %v9573 = vadd.f32 %v9329, %v9494
      %v9574 = vadd.f32 %v9330, %v9497
      %v9575 = vadd.f32 %v9331, %v9499
      %v9576 = vadd.f32 %v9332, %v9502
      %v9577 = vadd.f32 %v9333, %v9504
      %v9578 = vadd.f32 %v9334, %v9507
      %v9579 = vadd.f32 %v9335, %v9509
      %v9580 = vadd.f32 %v9336, %v9512
      %v9581 = vadd.f32 %v9337, %v9514
      %v9582 = vadd.f32 %v9338, %v9517
      %v9583 = vadd.f32 %v9339, %v9519
      %v9584 = vlaneseq
      %v9585 = vshrl.u32 %v9584, 7
      %v9586 = vsub.s32 6, %v9585
      %v9587 = vrot.slane %v556, %v9586
      %v9588 = vmul.f32 %v490, %v9587
      %v9589 = vmul.f32 %v491, %v9587
      %v9590 = vmul.f32 %v492, %v9587
      %v9591 = vmul.f32 %v493, %v9587
      %v9592 = vmul.f32 %v494, %v9587
      %v9593 = vmul.f32 %v495, %v9587
      %v9594 = vmul.f32 %v496, %v9587
      %v9595 = vmul.f32 %v497, %v9587
      %v9596 = vmul.f32 %v498, %v9587
      %v9597 = vmul.f32 %v499, %v9587
      %v9598 = vmul.f32 %v500, %v9587
      %v9599 = vmul.f32 %v501, %v9587
      %v9600 = vmul.f32 %v502, %v9587
      %v9601 = vmul.f32 %v503, %v9587
      %v9602 = vmul.f32 %v504, %v9587
      %v9603 = vmul.f32 %v505, %v9587
      %v9604 = vmul.f32 %v506, %v9587
      %v9605 = vmul.f32 %v507, %v9587
      %v9606 = vmul.f32 %v508, %v9587
      %v9607 = vmul.f32 %v509, %v9587
      %v9608 = vmul.f32 %v510, %v9587
      %v9609 = vmul.f32 %v511, %v9587
      %v9610 = vmul.f32 %v512, %v9587
      %v9611 = vmul.f32 %v513, %v9587
      %v9612 = vmul.f32 %v514, %v9587
      %v9613 = vmul.f32 %v515, %v9587
      %v9614 = vmul.f32 %v516, %v9587
      %v9615 = vmul.f32 %v517, %v9587
      %v9616 = vmul.f32 %v518, %v9587
      %v9617 = vmul.f32 %v519, %v9587
      %v9618 = vmul.f32 %v520, %v9587
      %v9619 = vmul.f32 %v521, %v9587
      %v9620 = vmul.f32 %v522, %v9587
      %v9621 = vmul.f32 %v523, %v9587
      %v9622 = vmul.f32 %v524, %v9587
      %v9623 = vmul.f32 %v525, %v9587
      %v9624 = vmul.f32 %v526, %v9587
      %v9625 = vmul.f32 %v527, %v9587
      %v9626 = vmul.f32 %v528, %v9587
      %v9627 = vmul.f32 %v529, %v9587
      %v9628 = vmul.f32 %v530, %v9587
      %v9629 = vmul.f32 %v531, %v9587
      %v9630 = vmul.f32 %v532, %v9587
      %v9631 = vmul.f32 %v533, %v9587
      %v9632 = vmul.f32 %v534, %v9587
      %v9633 = vmul.f32 %v535, %v9587
      %v9634 = vmul.f32 %v536, %v9587
      %v9635 = vmul.f32 %v537, %v9587
      %vm9684 = vcmask 1041408
      %v9685 = vrot.slane %v9588, 6
      %v9686 = vrot.slane %v9589, 6
      %v9687 = vsel %vm9684, %v9685, %v9686
      %v9688 = vrot.slane %v9590, 6
      %v9689 = vsel %vm9684, %v9686, %v9688
      %v9690 = vrot.slane %v9591, 6
      %v9691 = vrot.slane %v9592, 6
      %v9692 = vsel %vm9684, %v9690, %v9691
      %v9693 = vrot.slane %v9593, 6
      %v9694 = vsel %vm9684, %v9691, %v9693
      %v9695 = vrot.slane %v9594, 6
      %v9696 = vrot.slane %v9595, 6
      %v9697 = vsel %vm9684, %v9695, %v9696
      %v9698 = vrot.slane %v9596, 6
      %v9699 = vsel %vm9684, %v9696, %v9698
      %v9700 = vrot.slane %v9597, 6
      %v9701 = vrot.slane %v9598, 6
      %v9702 = vsel %vm9684, %v9700, %v9701
      %v9703 = vrot.slane %v9599, 6
      %v9704 = vsel %vm9684, %v9701, %v9703
      %v9705 = vrot.slane %v9600, 6
      %v9706 = vrot.slane %v9601, 6
      %v9707 = vsel %vm9684, %v9705, %v9706
      %v9708 = vrot.slane %v9602, 6
      %v9709 = vsel %vm9684, %v9706, %v9708
      %v9710 = vrot.slane %v9603, 6
      %v9711 = vrot.slane %v9604, 6
      %v9712 = vsel %vm9684, %v9710, %v9711
      %v9713 = vrot.slane %v9605, 6
      %v9714 = vsel %vm9684, %v9711, %v9713
      %v9715 = vrot.slane %v9606, 6
      %v9716 = vrot.slane %v9607, 6
      %v9717 = vsel %vm9684, %v9715, %v9716
      %v9718 = vrot.slane %v9608, 6
      %v9719 = vsel %vm9684, %v9716, %v9718
      %v9720 = vrot.slane %v9609, 6
      %v9721 = vrot.slane %v9610, 6
      %v9722 = vsel %vm9684, %v9720, %v9721
      %v9723 = vrot.slane %v9611, 6
      %v9724 = vsel %vm9684, %v9721, %v9723
      %v9725 = vrot.slane %v9612, 6
      %v9726 = vrot.slane %v9613, 6
      %v9727 = vsel %vm9684, %v9725, %v9726
      %v9728 = vrot.slane %v9614, 6
      %v9729 = vsel %vm9684, %v9726, %v9728
      %v9730 = vrot.slane %v9615, 6
      %v9731 = vrot.slane %v9616, 6
      %v9732 = vsel %vm9684, %v9730, %v9731
      %v9733 = vrot.slane %v9617, 6
      %v9734 = vsel %vm9684, %v9731, %v9733
      %v9735 = vrot.slane %v9618, 6
      %v9736 = vrot.slane %v9619, 6
      %v9737 = vsel %vm9684, %v9735, %v9736
      %v9738 = vrot.slane %v9620, 6
      %v9739 = vsel %vm9684, %v9736, %v9738
      %v9740 = vrot.slane %v9621, 6
      %v9741 = vrot.slane %v9622, 6
      %v9742 = vsel %vm9684, %v9740, %v9741
      %v9743 = vrot.slane %v9623, 6
      %v9744 = vsel %vm9684, %v9741, %v9743
      %v9745 = vrot.slane %v9624, 6
      %v9746 = vrot.slane %v9625, 6
      %v9747 = vsel %vm9684, %v9745, %v9746
      %v9748 = vrot.slane %v9626, 6
      %v9749 = vsel %vm9684, %v9746, %v9748
      %v9750 = vrot.slane %v9627, 6
      %v9751 = vrot.slane %v9628, 6
      %v9752 = vsel %vm9684, %v9750, %v9751
      %v9753 = vrot.slane %v9629, 6
      %v9754 = vsel %vm9684, %v9751, %v9753
      %v9755 = vrot.slane %v9630, 6
      %v9756 = vrot.slane %v9631, 6
      %v9757 = vsel %vm9684, %v9755, %v9756
      %v9758 = vrot.slane %v9632, 6
      %v9759 = vsel %vm9684, %v9756, %v9758
      %v9760 = vrot.slane %v9633, 6
      %v9761 = vrot.slane %v9634, 6
      %v9762 = vsel %vm9684, %v9760, %v9761
      %v9763 = vrot.slane %v9635, 6
      %v9764 = vsel %vm9684, %v9761, %v9763
      %v9797 = vadd.f32 %v9552, %v9687
      %v9798 = vadd.f32 %v9553, %v9689
      %v9799 = vadd.f32 %v9554, %v9692
      %v9800 = vadd.f32 %v9555, %v9694
      %v9801 = vadd.f32 %v9556, %v9697
      %v9802 = vadd.f32 %v9557, %v9699
      %v9803 = vadd.f32 %v9558, %v9702
      %v9804 = vadd.f32 %v9559, %v9704
      %v9805 = vadd.f32 %v9560, %v9707
      %v9806 = vadd.f32 %v9561, %v9709
      %v9807 = vadd.f32 %v9562, %v9712
      %v9808 = vadd.f32 %v9563, %v9714
      %v9809 = vadd.f32 %v9564, %v9717
      %v9810 = vadd.f32 %v9565, %v9719
      %v9811 = vadd.f32 %v9566, %v9722
      %v9812 = vadd.f32 %v9567, %v9724
      %v9813 = vadd.f32 %v9568, %v9727
      %v9814 = vadd.f32 %v9569, %v9729
      %v9815 = vadd.f32 %v9570, %v9732
      %v9816 = vadd.f32 %v9571, %v9734
      %v9817 = vadd.f32 %v9572, %v9737
      %v9818 = vadd.f32 %v9573, %v9739
      %v9819 = vadd.f32 %v9574, %v9742
      %v9820 = vadd.f32 %v9575, %v9744
      %v9821 = vadd.f32 %v9576, %v9747
      %v9822 = vadd.f32 %v9577, %v9749
      %v9823 = vadd.f32 %v9578, %v9752
      %v9824 = vadd.f32 %v9579, %v9754
      %v9825 = vadd.f32 %v9580, %v9757
      %v9826 = vadd.f32 %v9581, %v9759
      %v9827 = vadd.f32 %v9582, %v9762
      %v9828 = vadd.f32 %v9583, %v9764
      %v9829 = vlaneseq
      %v9830 = vshrl.u32 %v9829, 7
      %v9831 = vsub.s32 5, %v9830
      %v9832 = vrot.slane %v557, %v9831
      %v9833 = vmul.f32 %v493, %v9832
      %v9834 = vmul.f32 %v494, %v9832
      %v9835 = vmul.f32 %v495, %v9832
      %v9836 = vmul.f32 %v496, %v9832
      %v9837 = vmul.f32 %v497, %v9832
      %v9838 = vmul.f32 %v498, %v9832
      %v9839 = vmul.f32 %v499, %v9832
      %v9840 = vmul.f32 %v500, %v9832
      %v9841 = vmul.f32 %v501, %v9832
      %v9842 = vmul.f32 %v502, %v9832
      %v9843 = vmul.f32 %v503, %v9832
      %v9844 = vmul.f32 %v504, %v9832
      %v9845 = vmul.f32 %v505, %v9832
      %v9846 = vmul.f32 %v506, %v9832
      %v9847 = vmul.f32 %v507, %v9832
      %v9848 = vmul.f32 %v508, %v9832
      %v9849 = vmul.f32 %v509, %v9832
      %v9850 = vmul.f32 %v510, %v9832
      %v9851 = vmul.f32 %v511, %v9832
      %v9852 = vmul.f32 %v512, %v9832
      %v9853 = vmul.f32 %v513, %v9832
      %v9854 = vmul.f32 %v514, %v9832
      %v9855 = vmul.f32 %v515, %v9832
      %v9856 = vmul.f32 %v516, %v9832
      %v9857 = vmul.f32 %v517, %v9832
      %v9858 = vmul.f32 %v518, %v9832
      %v9859 = vmul.f32 %v519, %v9832
      %v9860 = vmul.f32 %v520, %v9832
      %v9861 = vmul.f32 %v521, %v9832
      %v9862 = vmul.f32 %v522, %v9832
      %v9863 = vmul.f32 %v523, %v9832
      %v9864 = vmul.f32 %v524, %v9832
      %v9865 = vmul.f32 %v525, %v9832
      %v9866 = vmul.f32 %v526, %v9832
      %v9867 = vmul.f32 %v527, %v9832
      %v9868 = vmul.f32 %v528, %v9832
      %v9869 = vmul.f32 %v529, %v9832
      %v9870 = vmul.f32 %v530, %v9832
      %v9871 = vmul.f32 %v531, %v9832
      %v9872 = vmul.f32 %v532, %v9832
      %v9873 = vmul.f32 %v533, %v9832
      %v9874 = vmul.f32 %v534, %v9832
      %v9875 = vmul.f32 %v535, %v9832
      %v9876 = vmul.f32 %v536, %v9832
      %v9877 = vmul.f32 %v537, %v9832
      %v9878 = vmul.f32 %v538, %v9832
      %v9879 = vmul.f32 %v539, %v9832
      %v9880 = vmul.f32 %v540, %v9832
      %v9929 = vrot.slane %v9833, 6
      %v9930 = vrot.slane %v9834, 6
      %v9931 = vsel %vm9684, %v9929, %v9930
      %v9932 = vrot.slane %v9835, 6
      %v9933 = vsel %vm9684, %v9930, %v9932
      %v9934 = vrot.slane %v9836, 6
      %v9935 = vrot.slane %v9837, 6
      %v9936 = vsel %vm9684, %v9934, %v9935
      %v9937 = vrot.slane %v9838, 6
      %v9938 = vsel %vm9684, %v9935, %v9937
      %v9939 = vrot.slane %v9839, 6
      %v9940 = vrot.slane %v9840, 6
      %v9941 = vsel %vm9684, %v9939, %v9940
      %v9942 = vrot.slane %v9841, 6
      %v9943 = vsel %vm9684, %v9940, %v9942
      %v9944 = vrot.slane %v9842, 6
      %v9945 = vrot.slane %v9843, 6
      %v9946 = vsel %vm9684, %v9944, %v9945
      %v9947 = vrot.slane %v9844, 6
      %v9948 = vsel %vm9684, %v9945, %v9947
      %v9949 = vrot.slane %v9845, 6
      %v9950 = vrot.slane %v9846, 6
      %v9951 = vsel %vm9684, %v9949, %v9950
      %v9952 = vrot.slane %v9847, 6
      %v9953 = vsel %vm9684, %v9950, %v9952
      %v9954 = vrot.slane %v9848, 6
      %v9955 = vrot.slane %v9849, 6
      %v9956 = vsel %vm9684, %v9954, %v9955
      %v9957 = vrot.slane %v9850, 6
      %v9958 = vsel %vm9684, %v9955, %v9957
      %v9959 = vrot.slane %v9851, 6
      %v9960 = vrot.slane %v9852, 6
      %v9961 = vsel %vm9684, %v9959, %v9960
      %v9962 = vrot.slane %v9853, 6
      %v9963 = vsel %vm9684, %v9960, %v9962
      %v9964 = vrot.slane %v9854, 6
      %v9965 = vrot.slane %v9855, 6
      %v9966 = vsel %vm9684, %v9964, %v9965
      %v9967 = vrot.slane %v9856, 6
      %v9968 = vsel %vm9684, %v9965, %v9967
      %v9969 = vrot.slane %v9857, 6
      %v9970 = vrot.slane %v9858, 6
      %v9971 = vsel %vm9684, %v9969, %v9970
      %v9972 = vrot.slane %v9859, 6
      %v9973 = vsel %vm9684, %v9970, %v9972
      %v9974 = vrot.slane %v9860, 6
      %v9975 = vrot.slane %v9861, 6
      %v9976 = vsel %vm9684, %v9974, %v9975
      %v9977 = vrot.slane %v9862, 6
      %v9978 = vsel %vm9684, %v9975, %v9977
      %v9979 = vrot.slane %v9863, 6
      %v9980 = vrot.slane %v9864, 6
      %v9981 = vsel %vm9684, %v9979, %v9980
      %v9982 = vrot.slane %v9865, 6
      %v9983 = vsel %vm9684, %v9980, %v9982
      %v9984 = vrot.slane %v9866, 6
      %v9985 = vrot.slane %v9867, 6
      %v9986 = vsel %vm9684, %v9984, %v9985
      %v9987 = vrot.slane %v9868, 6
      %v9988 = vsel %vm9684, %v9985, %v9987
      %v9989 = vrot.slane %v9869, 6
      %v9990 = vrot.slane %v9870, 6
      %v9991 = vsel %vm9684, %v9989, %v9990
      %v9992 = vrot.slane %v9871, 6
      %v9993 = vsel %vm9684, %v9990, %v9992
      %v9994 = vrot.slane %v9872, 6
      %v9995 = vrot.slane %v9873, 6
      %v9996 = vsel %vm9684, %v9994, %v9995
      %v9997 = vrot.slane %v9874, 6
      %v9998 = vsel %vm9684, %v9995, %v9997
      %v9999 = vrot.slane %v9875, 6
      %v10000 = vrot.slane %v9876, 6
      %v10001 = vsel %vm9684, %v9999, %v10000
      %v10002 = vrot.slane %v9877, 6
      %v10003 = vsel %vm9684, %v10000, %v10002
      %v10004 = vrot.slane %v9878, 6
      %v10005 = vrot.slane %v9879, 6
      %v10006 = vsel %vm9684, %v10004, %v10005
      %v10007 = vrot.slane %v9880, 6
      %v10008 = vsel %vm9684, %v10005, %v10007
      %v10041 = vadd.f32 %v9797, %v9931
      %v10042 = vadd.f32 %v9798, %v9933
      %v10043 = vadd.f32 %v9799, %v9936
      %v10044 = vadd.f32 %v9800, %v9938
      %v10045 = vadd.f32 %v9801, %v9941
      %v10046 = vadd.f32 %v9802, %v9943
      %v10047 = vadd.f32 %v9803, %v9946
      %v10048 = vadd.f32 %v9804, %v9948
      %v10049 = vadd.f32 %v9805, %v9951
      %v10050 = vadd.f32 %v9806, %v9953
      %v10051 = vadd.f32 %v9807, %v9956
      %v10052 = vadd.f32 %v9808, %v9958
      %v10053 = vadd.f32 %v9809, %v9961
      %v10054 = vadd.f32 %v9810, %v9963
      %v10055 = vadd.f32 %v9811, %v9966
      %v10056 = vadd.f32 %v9812, %v9968
      %v10057 = vadd.f32 %v9813, %v9971
      %v10058 = vadd.f32 %v9814, %v9973
      %v10059 = vadd.f32 %v9815, %v9976
      %v10060 = vadd.f32 %v9816, %v9978
      %v10061 = vadd.f32 %v9817, %v9981
      %v10062 = vadd.f32 %v9818, %v9983
      %v10063 = vadd.f32 %v9819, %v9986
      %v10064 = vadd.f32 %v9820, %v9988
      %v10065 = vadd.f32 %v9821, %v9991
      %v10066 = vadd.f32 %v9822, %v9993
      %v10067 = vadd.f32 %v9823, %v9996
      %v10068 = vadd.f32 %v9824, %v9998
      %v10069 = vadd.f32 %v9825, %v10001
      %v10070 = vadd.f32 %v9826, %v10003
      %v10071 = vadd.f32 %v9827, %v10006
      %v10072 = vadd.f32 %v9828, %v10008
      %v10073 = vlaneseq
      %v10074 = vshrl.u32 %v10073, 7
      %v10075 = vsub.s32 4, %v10074
      %v10076 = vrot.slane %v558, %v10075
      %v10077 = vmul.f32 %v496, %v10076
      %v10078 = vmul.f32 %v497, %v10076
      %v10079 = vmul.f32 %v498, %v10076
      %v10080 = vmul.f32 %v499, %v10076
      %v10081 = vmul.f32 %v500, %v10076
      %v10082 = vmul.f32 %v501, %v10076
      %v10083 = vmul.f32 %v502, %v10076
      %v10084 = vmul.f32 %v503, %v10076
      %v10085 = vmul.f32 %v504, %v10076
      %v10086 = vmul.f32 %v505, %v10076
      %v10087 = vmul.f32 %v506, %v10076
      %v10088 = vmul.f32 %v507, %v10076
      %v10089 = vmul.f32 %v508, %v10076
      %v10090 = vmul.f32 %v509, %v10076
      %v10091 = vmul.f32 %v510, %v10076
      %v10092 = vmul.f32 %v511, %v10076
      %v10093 = vmul.f32 %v512, %v10076
      %v10094 = vmul.f32 %v513, %v10076
      %v10095 = vmul.f32 %v514, %v10076
      %v10096 = vmul.f32 %v515, %v10076
      %v10097 = vmul.f32 %v516, %v10076
      %v10098 = vmul.f32 %v517, %v10076
      %v10099 = vmul.f32 %v518, %v10076
      %v10100 = vmul.f32 %v519, %v10076
      %v10101 = vmul.f32 %v520, %v10076
      %v10102 = vmul.f32 %v521, %v10076
      %v10103 = vmul.f32 %v522, %v10076
      %v10104 = vmul.f32 %v523, %v10076
      %v10105 = vmul.f32 %v524, %v10076
      %v10106 = vmul.f32 %v525, %v10076
      %v10107 = vmul.f32 %v526, %v10076
      %v10108 = vmul.f32 %v527, %v10076
      %v10109 = vmul.f32 %v528, %v10076
      %v10110 = vmul.f32 %v529, %v10076
      %v10111 = vmul.f32 %v530, %v10076
      %v10112 = vmul.f32 %v531, %v10076
      %v10113 = vmul.f32 %v532, %v10076
      %v10114 = vmul.f32 %v533, %v10076
      %v10115 = vmul.f32 %v534, %v10076
      %v10116 = vmul.f32 %v535, %v10076
      %v10117 = vmul.f32 %v536, %v10076
      %v10118 = vmul.f32 %v537, %v10076
      %v10119 = vmul.f32 %v538, %v10076
      %v10120 = vmul.f32 %v539, %v10076
      %v10121 = vmul.f32 %v540, %v10076
      %v10122 = vmul.f32 %v541, %v10076
      %v10123 = vmul.f32 %v542, %v10076
      %v10124 = vmul.f32 %v543, %v10076
      %v10173 = vrot.slane %v10077, 6
      %v10174 = vrot.slane %v10078, 6
      %v10175 = vsel %vm9684, %v10173, %v10174
      %v10176 = vrot.slane %v10079, 6
      %v10177 = vsel %vm9684, %v10174, %v10176
      %v10178 = vrot.slane %v10080, 6
      %v10179 = vrot.slane %v10081, 6
      %v10180 = vsel %vm9684, %v10178, %v10179
      %v10181 = vrot.slane %v10082, 6
      %v10182 = vsel %vm9684, %v10179, %v10181
      %v10183 = vrot.slane %v10083, 6
      %v10184 = vrot.slane %v10084, 6
      %v10185 = vsel %vm9684, %v10183, %v10184
      %v10186 = vrot.slane %v10085, 6
      %v10187 = vsel %vm9684, %v10184, %v10186
      %v10188 = vrot.slane %v10086, 6
      %v10189 = vrot.slane %v10087, 6
      %v10190 = vsel %vm9684, %v10188, %v10189
      %v10191 = vrot.slane %v10088, 6
      %v10192 = vsel %vm9684, %v10189, %v10191
      %v10193 = vrot.slane %v10089, 6
      %v10194 = vrot.slane %v10090, 6
      %v10195 = vsel %vm9684, %v10193, %v10194
      %v10196 = vrot.slane %v10091, 6
      %v10197 = vsel %vm9684, %v10194, %v10196
      %v10198 = vrot.slane %v10092, 6
      %v10199 = vrot.slane %v10093, 6
      %v10200 = vsel %vm9684, %v10198, %v10199
      %v10201 = vrot.slane %v10094, 6
      %v10202 = vsel %vm9684, %v10199, %v10201
      %v10203 = vrot.slane %v10095, 6
      %v10204 = vrot.slane %v10096, 6
      %v10205 = vsel %vm9684, %v10203, %v10204
      %v10206 = vrot.slane %v10097, 6
      %v10207 = vsel %vm9684, %v10204, %v10206
      %v10208 = vrot.slane %v10098, 6
      %v10209 = vrot.slane %v10099, 6
      %v10210 = vsel %vm9684, %v10208, %v10209
      %v10211 = vrot.slane %v10100, 6
      %v10212 = vsel %vm9684, %v10209, %v10211
      %v10213 = vrot.slane %v10101, 6
      %v10214 = vrot.slane %v10102, 6
      %v10215 = vsel %vm9684, %v10213, %v10214
      %v10216 = vrot.slane %v10103, 6
      %v10217 = vsel %vm9684, %v10214, %v10216
      %v10218 = vrot.slane %v10104, 6
      %v10219 = vrot.slane %v10105, 6
      %v10220 = vsel %vm9684, %v10218, %v10219
      %v10221 = vrot.slane %v10106, 6
      %v10222 = vsel %vm9684, %v10219, %v10221
      %v10223 = vrot.slane %v10107, 6
      %v10224 = vrot.slane %v10108, 6
      %v10225 = vsel %vm9684, %v10223, %v10224
      %v10226 = vrot.slane %v10109, 6
      %v10227 = vsel %vm9684, %v10224, %v10226
      %v10228 = vrot.slane %v10110, 6
      %v10229 = vrot.slane %v10111, 6
      %v10230 = vsel %vm9684, %v10228, %v10229
      %v10231 = vrot.slane %v10112, 6
      %v10232 = vsel %vm9684, %v10229, %v10231
      %v10233 = vrot.slane %v10113, 6
      %v10234 = vrot.slane %v10114, 6
      %v10235 = vsel %vm9684, %v10233, %v10234
      %v10236 = vrot.slane %v10115, 6
      %v10237 = vsel %vm9684, %v10234, %v10236
      %v10238 = vrot.slane %v10116, 6
      %v10239 = vrot.slane %v10117, 6
      %v10240 = vsel %vm9684, %v10238, %v10239
      %v10241 = vrot.slane %v10118, 6
      %v10242 = vsel %vm9684, %v10239, %v10241
      %v10243 = vrot.slane %v10119, 6
      %v10244 = vrot.slane %v10120, 6
      %v10245 = vsel %vm9684, %v10243, %v10244
      %v10246 = vrot.slane %v10121, 6
      %v10247 = vsel %vm9684, %v10244, %v10246
      %v10248 = vrot.slane %v10122, 6
      %v10249 = vrot.slane %v10123, 6
      %v10250 = vsel %vm9684, %v10248, %v10249
      %v10251 = vrot.slane %v10124, 6
      %v10252 = vsel %vm9684, %v10249, %v10251
      %v10285 = vadd.f32 %v10041, %v10175
      %v10286 = vadd.f32 %v10042, %v10177
      %v10287 = vadd.f32 %v10043, %v10180
      %v10288 = vadd.f32 %v10044, %v10182
      %v10289 = vadd.f32 %v10045, %v10185
      %v10290 = vadd.f32 %v10046, %v10187
      %v10291 = vadd.f32 %v10047, %v10190
      %v10292 = vadd.f32 %v10048, %v10192
      %v10293 = vadd.f32 %v10049, %v10195
      %v10294 = vadd.f32 %v10050, %v10197
      %v10295 = vadd.f32 %v10051, %v10200
      %v10296 = vadd.f32 %v10052, %v10202
      %v10297 = vadd.f32 %v10053, %v10205
      %v10298 = vadd.f32 %v10054, %v10207
      %v10299 = vadd.f32 %v10055, %v10210
      %v10300 = vadd.f32 %v10056, %v10212
      %v10301 = vadd.f32 %v10057, %v10215
      %v10302 = vadd.f32 %v10058, %v10217
      %v10303 = vadd.f32 %v10059, %v10220
      %v10304 = vadd.f32 %v10060, %v10222
      %v10305 = vadd.f32 %v10061, %v10225
      %v10306 = vadd.f32 %v10062, %v10227
      %v10307 = vadd.f32 %v10063, %v10230
      %v10308 = vadd.f32 %v10064, %v10232
      %v10309 = vadd.f32 %v10065, %v10235
      %v10310 = vadd.f32 %v10066, %v10237
      %v10311 = vadd.f32 %v10067, %v10240
      %v10312 = vadd.f32 %v10068, %v10242
      %v10313 = vadd.f32 %v10069, %v10245
      %v10314 = vadd.f32 %v10070, %v10247
      %v10315 = vadd.f32 %v10071, %v10250
      %v10316 = vadd.f32 %v10072, %v10252
      %v10317 = vlaneseq
      %v10318 = vshrl.u32 %v10317, 7
      %v10319 = vsub.s32 3, %v10318
      %v10320 = vrot.slane %v559, %v10319
      %v10321 = vmul.f32 %v499, %v10320
      %v10322 = vmul.f32 %v500, %v10320
      %v10323 = vmul.f32 %v501, %v10320
      %v10324 = vmul.f32 %v502, %v10320
      %v10325 = vmul.f32 %v503, %v10320
      %v10326 = vmul.f32 %v504, %v10320
      %v10327 = vmul.f32 %v505, %v10320
      %v10328 = vmul.f32 %v506, %v10320
      %v10329 = vmul.f32 %v507, %v10320
      %v10330 = vmul.f32 %v508, %v10320
      %v10331 = vmul.f32 %v509, %v10320
      %v10332 = vmul.f32 %v510, %v10320
      %v10333 = vmul.f32 %v511, %v10320
      %v10334 = vmul.f32 %v512, %v10320
      %v10335 = vmul.f32 %v513, %v10320
      %v10336 = vmul.f32 %v514, %v10320
      %v10337 = vmul.f32 %v515, %v10320
      %v10338 = vmul.f32 %v516, %v10320
      %v10339 = vmul.f32 %v517, %v10320
      %v10340 = vmul.f32 %v518, %v10320
      %v10341 = vmul.f32 %v519, %v10320
      %v10342 = vmul.f32 %v520, %v10320
      %v10343 = vmul.f32 %v521, %v10320
      %v10344 = vmul.f32 %v522, %v10320
      %v10345 = vmul.f32 %v523, %v10320
      %v10346 = vmul.f32 %v524, %v10320
      %v10347 = vmul.f32 %v525, %v10320
      %v10348 = vmul.f32 %v526, %v10320
      %v10349 = vmul.f32 %v527, %v10320
      %v10350 = vmul.f32 %v528, %v10320
      %v10351 = vmul.f32 %v529, %v10320
      %v10352 = vmul.f32 %v530, %v10320
      %v10353 = vmul.f32 %v531, %v10320
      %v10354 = vmul.f32 %v532, %v10320
      %v10355 = vmul.f32 %v533, %v10320
      %v10356 = vmul.f32 %v534, %v10320
      %v10357 = vmul.f32 %v535, %v10320
      %v10358 = vmul.f32 %v536, %v10320
      %v10359 = vmul.f32 %v537, %v10320
      %v10360 = vmul.f32 %v538, %v10320
      %v10361 = vmul.f32 %v539, %v10320
      %v10362 = vmul.f32 %v540, %v10320
      %v10363 = vmul.f32 %v541, %v10320
      %v10364 = vmul.f32 %v542, %v10320
      %v10365 = vmul.f32 %v543, %v10320
      %v10366 = vmul.f32 %v544, %v10320
      %v10367 = vmul.f32 %v545, %v10320
      %v10368 = vmul.f32 %v546, %v10320
      %v10417 = vrot.slane %v10321, 6
      %v10418 = vrot.slane %v10322, 6
      %v10419 = vsel %vm9684, %v10417, %v10418
      %v10420 = vrot.slane %v10323, 6
      %v10421 = vsel %vm9684, %v10418, %v10420
      %v10422 = vrot.slane %v10324, 6
      %v10423 = vrot.slane %v10325, 6
      %v10424 = vsel %vm9684, %v10422, %v10423
      %v10425 = vrot.slane %v10326, 6
      %v10426 = vsel %vm9684, %v10423, %v10425
      %v10427 = vrot.slane %v10327, 6
      %v10428 = vrot.slane %v10328, 6
      %v10429 = vsel %vm9684, %v10427, %v10428
      %v10430 = vrot.slane %v10329, 6
      %v10431 = vsel %vm9684, %v10428, %v10430
      %v10432 = vrot.slane %v10330, 6
      %v10433 = vrot.slane %v10331, 6
      %v10434 = vsel %vm9684, %v10432, %v10433
      %v10435 = vrot.slane %v10332, 6
      %v10436 = vsel %vm9684, %v10433, %v10435
      %v10437 = vrot.slane %v10333, 6
      %v10438 = vrot.slane %v10334, 6
      %v10439 = vsel %vm9684, %v10437, %v10438
      %v10440 = vrot.slane %v10335, 6
      %v10441 = vsel %vm9684, %v10438, %v10440
      %v10442 = vrot.slane %v10336, 6
      %v10443 = vrot.slane %v10337, 6
      %v10444 = vsel %vm9684, %v10442, %v10443
      %v10445 = vrot.slane %v10338, 6
      %v10446 = vsel %vm9684, %v10443, %v10445
      %v10447 = vrot.slane %v10339, 6
      %v10448 = vrot.slane %v10340, 6
      %v10449 = vsel %vm9684, %v10447, %v10448
      %v10450 = vrot.slane %v10341, 6
      %v10451 = vsel %vm9684, %v10448, %v10450
      %v10452 = vrot.slane %v10342, 6
      %v10453 = vrot.slane %v10343, 6
      %v10454 = vsel %vm9684, %v10452, %v10453
      %v10455 = vrot.slane %v10344, 6
      %v10456 = vsel %vm9684, %v10453, %v10455
      %v10457 = vrot.slane %v10345, 6
      %v10458 = vrot.slane %v10346, 6
      %v10459 = vsel %vm9684, %v10457, %v10458
      %v10460 = vrot.slane %v10347, 6
      %v10461 = vsel %vm9684, %v10458, %v10460
      %v10462 = vrot.slane %v10348, 6
      %v10463 = vrot.slane %v10349, 6
      %v10464 = vsel %vm9684, %v10462, %v10463
      %v10465 = vrot.slane %v10350, 6
      %v10466 = vsel %vm9684, %v10463, %v10465
      %v10467 = vrot.slane %v10351, 6
      %v10468 = vrot.slane %v10352, 6
      %v10469 = vsel %vm9684, %v10467, %v10468
      %v10470 = vrot.slane %v10353, 6
      %v10471 = vsel %vm9684, %v10468, %v10470
      %v10472 = vrot.slane %v10354, 6
      %v10473 = vrot.slane %v10355, 6
      %v10474 = vsel %vm9684, %v10472, %v10473
      %v10475 = vrot.slane %v10356, 6
      %v10476 = vsel %vm9684, %v10473, %v10475
      %v10477 = vrot.slane %v10357, 6
      %v10478 = vrot.slane %v10358, 6
      %v10479 = vsel %vm9684, %v10477, %v10478
      %v10480 = vrot.slane %v10359, 6
      %v10481 = vsel %vm9684, %v10478, %v10480
      %v10482 = vrot.slane %v10360, 6
      %v10483 = vrot.slane %v10361, 6
      %v10484 = vsel %vm9684, %v10482, %v10483
      %v10485 = vrot.slane %v10362, 6
      %v10486 = vsel %vm9684, %v10483, %v10485
      %v10487 = vrot.slane %v10363, 6
      %v10488 = vrot.slane %v10364, 6
      %v10489 = vsel %vm9684, %v10487, %v10488
      %v10490 = vrot.slane %v10365, 6
      %v10491 = vsel %vm9684, %v10488, %v10490
      %v10492 = vrot.slane %v10366, 6
      %v10493 = vrot.slane %v10367, 6
      %v10494 = vsel %vm9684, %v10492, %v10493
      %v10495 = vrot.slane %v10368, 6
      %v10496 = vsel %vm9684, %v10493, %v10495
      %v10529 = vadd.f32 %v10285, %v10419
      %v10530 = vadd.f32 %v10286, %v10421
      %v10531 = vadd.f32 %v10287, %v10424
      %v10532 = vadd.f32 %v10288, %v10426
      %v10533 = vadd.f32 %v10289, %v10429
      %v10534 = vadd.f32 %v10290, %v10431
      %v10535 = vadd.f32 %v10291, %v10434
      %v10536 = vadd.f32 %v10292, %v10436
      %v10537 = vadd.f32 %v10293, %v10439
      %v10538 = vadd.f32 %v10294, %v10441
      %v10539 = vadd.f32 %v10295, %v10444
      %v10540 = vadd.f32 %v10296, %v10446
      %v10541 = vadd.f32 %v10297, %v10449
      %v10542 = vadd.f32 %v10298, %v10451
      %v10543 = vadd.f32 %v10299, %v10454
      %v10544 = vadd.f32 %v10300, %v10456
      %v10545 = vadd.f32 %v10301, %v10459
      %v10546 = vadd.f32 %v10302, %v10461
      %v10547 = vadd.f32 %v10303, %v10464
      %v10548 = vadd.f32 %v10304, %v10466
      %v10549 = vadd.f32 %v10305, %v10469
      %v10550 = vadd.f32 %v10306, %v10471
      %v10551 = vadd.f32 %v10307, %v10474
      %v10552 = vadd.f32 %v10308, %v10476
      %v10553 = vadd.f32 %v10309, %v10479
      %v10554 = vadd.f32 %v10310, %v10481
      %v10555 = vadd.f32 %v10311, %v10484
      %v10556 = vadd.f32 %v10312, %v10486
      %v10557 = vadd.f32 %v10313, %v10489
      %v10558 = vadd.f32 %v10314, %v10491
      %v10559 = vadd.f32 %v10315, %v10494
      %v10560 = vadd.f32 %v10316, %v10496
      %v10561 = vlaneseq
      %v10562 = vshrl.u32 %v10561, 7
      %v10563 = vsub.s32 2, %v10562
      %v10564 = vrot.slane %v560, %v10563
      %v10565 = vmul.f32 %v502, %v10564
      %v10566 = vmul.f32 %v503, %v10564
      %v10567 = vmul.f32 %v504, %v10564
      %v10568 = vmul.f32 %v505, %v10564
      %v10569 = vmul.f32 %v506, %v10564
      %v10570 = vmul.f32 %v507, %v10564
      %v10571 = vmul.f32 %v508, %v10564
      %v10572 = vmul.f32 %v509, %v10564
      %v10573 = vmul.f32 %v510, %v10564
      %v10574 = vmul.f32 %v511, %v10564
      %v10575 = vmul.f32 %v512, %v10564
      %v10576 = vmul.f32 %v513, %v10564
      %v10577 = vmul.f32 %v514, %v10564
      %v10578 = vmul.f32 %v515, %v10564
      %v10579 = vmul.f32 %v516, %v10564
      %v10580 = vmul.f32 %v517, %v10564
      %v10581 = vmul.f32 %v518, %v10564
      %v10582 = vmul.f32 %v519, %v10564
      %v10583 = vmul.f32 %v520, %v10564
      %v10584 = vmul.f32 %v521, %v10564
      %v10585 = vmul.f32 %v522, %v10564
      %v10586 = vmul.f32 %v523, %v10564
      %v10587 = vmul.f32 %v524, %v10564
      %v10588 = vmul.f32 %v525, %v10564
      %v10589 = vmul.f32 %v526, %v10564
      %v10590 = vmul.f32 %v527, %v10564
      %v10591 = vmul.f32 %v528, %v10564
      %v10592 = vmul.f32 %v529, %v10564
      %v10593 = vmul.f32 %v530, %v10564
      %v10594 = vmul.f32 %v531, %v10564
      %v10595 = vmul.f32 %v532, %v10564
      %v10596 = vmul.f32 %v533, %v10564
      %v10597 = vmul.f32 %v534, %v10564
      %v10598 = vmul.f32 %v535, %v10564
      %v10599 = vmul.f32 %v536, %v10564
      %v10600 = vmul.f32 %v537, %v10564
      %v10601 = vmul.f32 %v538, %v10564
      %v10602 = vmul.f32 %v539, %v10564
      %v10603 = vmul.f32 %v540, %v10564
      %v10604 = vmul.f32 %v541, %v10564
      %v10605 = vmul.f32 %v542, %v10564
      %v10606 = vmul.f32 %v543, %v10564
      %v10607 = vmul.f32 %v544, %v10564
      %v10608 = vmul.f32 %v545, %v10564
      %v10609 = vmul.f32 %v546, %v10564
      %v10610 = vmul.f32 %v547, %v10564
      %v10611 = vmul.f32 %v548, %v10564
      %v10612 = vmul.f32 %v549, %v10564
      %v10661 = vrot.slane %v10565, 6
      %v10662 = vrot.slane %v10566, 6
      %v10663 = vsel %vm9684, %v10661, %v10662
      %v10664 = vrot.slane %v10567, 6
      %v10665 = vsel %vm9684, %v10662, %v10664
      %v10666 = vrot.slane %v10568, 6
      %v10667 = vrot.slane %v10569, 6
      %v10668 = vsel %vm9684, %v10666, %v10667
      %v10669 = vrot.slane %v10570, 6
      %v10670 = vsel %vm9684, %v10667, %v10669
      %v10671 = vrot.slane %v10571, 6
      %v10672 = vrot.slane %v10572, 6
      %v10673 = vsel %vm9684, %v10671, %v10672
      %v10674 = vrot.slane %v10573, 6
      %v10675 = vsel %vm9684, %v10672, %v10674
      %v10676 = vrot.slane %v10574, 6
      %v10677 = vrot.slane %v10575, 6
      %v10678 = vsel %vm9684, %v10676, %v10677
      %v10679 = vrot.slane %v10576, 6
      %v10680 = vsel %vm9684, %v10677, %v10679
      %v10681 = vrot.slane %v10577, 6
      %v10682 = vrot.slane %v10578, 6
      %v10683 = vsel %vm9684, %v10681, %v10682
      %v10684 = vrot.slane %v10579, 6
      %v10685 = vsel %vm9684, %v10682, %v10684
      %v10686 = vrot.slane %v10580, 6
      %v10687 = vrot.slane %v10581, 6
      %v10688 = vsel %vm9684, %v10686, %v10687
      %v10689 = vrot.slane %v10582, 6
      %v10690 = vsel %vm9684, %v10687, %v10689
      %v10691 = vrot.slane %v10583, 6
      %v10692 = vrot.slane %v10584, 6
      %v10693 = vsel %vm9684, %v10691, %v10692
      %v10694 = vrot.slane %v10585, 6
      %v10695 = vsel %vm9684, %v10692, %v10694
      %v10696 = vrot.slane %v10586, 6
      %v10697 = vrot.slane %v10587, 6
      %v10698 = vsel %vm9684, %v10696, %v10697
      %v10699 = vrot.slane %v10588, 6
      %v10700 = vsel %vm9684, %v10697, %v10699
      %v10701 = vrot.slane %v10589, 6
      %v10702 = vrot.slane %v10590, 6
      %v10703 = vsel %vm9684, %v10701, %v10702
      %v10704 = vrot.slane %v10591, 6
      %v10705 = vsel %vm9684, %v10702, %v10704
      %v10706 = vrot.slane %v10592, 6
      %v10707 = vrot.slane %v10593, 6
      %v10708 = vsel %vm9684, %v10706, %v10707
      %v10709 = vrot.slane %v10594, 6
      %v10710 = vsel %vm9684, %v10707, %v10709
      %v10711 = vrot.slane %v10595, 6
      %v10712 = vrot.slane %v10596, 6
      %v10713 = vsel %vm9684, %v10711, %v10712
      %v10714 = vrot.slane %v10597, 6
      %v10715 = vsel %vm9684, %v10712, %v10714
      %v10716 = vrot.slane %v10598, 6
      %v10717 = vrot.slane %v10599, 6
      %v10718 = vsel %vm9684, %v10716, %v10717
      %v10719 = vrot.slane %v10600, 6
      %v10720 = vsel %vm9684, %v10717, %v10719
      %v10721 = vrot.slane %v10601, 6
      %v10722 = vrot.slane %v10602, 6
      %v10723 = vsel %vm9684, %v10721, %v10722
      %v10724 = vrot.slane %v10603, 6
      %v10725 = vsel %vm9684, %v10722, %v10724
      %v10726 = vrot.slane %v10604, 6
      %v10727 = vrot.slane %v10605, 6
      %v10728 = vsel %vm9684, %v10726, %v10727
      %v10729 = vrot.slane %v10606, 6
      %v10730 = vsel %vm9684, %v10727, %v10729
      %v10731 = vrot.slane %v10607, 6
      %v10732 = vrot.slane %v10608, 6
      %v10733 = vsel %vm9684, %v10731, %v10732
      %v10734 = vrot.slane %v10609, 6
      %v10735 = vsel %vm9684, %v10732, %v10734
      %v10736 = vrot.slane %v10610, 6
      %v10737 = vrot.slane %v10611, 6
      %v10738 = vsel %vm9684, %v10736, %v10737
      %v10739 = vrot.slane %v10612, 6
      %v10740 = vsel %vm9684, %v10737, %v10739
      %v10773 = vadd.f32 %v10529, %v10663
      %v10774 = vadd.f32 %v10530, %v10665
      %v10775 = vadd.f32 %v10531, %v10668
      %v10776 = vadd.f32 %v10532, %v10670
      %v10777 = vadd.f32 %v10533, %v10673
      %v10778 = vadd.f32 %v10534, %v10675
      %v10779 = vadd.f32 %v10535, %v10678
      %v10780 = vadd.f32 %v10536, %v10680
      %v10781 = vadd.f32 %v10537, %v10683
      %v10782 = vadd.f32 %v10538, %v10685
      %v10783 = vadd.f32 %v10539, %v10688
      %v10784 = vadd.f32 %v10540, %v10690
      %v10785 = vadd.f32 %v10541, %v10693
      %v10786 = vadd.f32 %v10542, %v10695
      %v10787 = vadd.f32 %v10543, %v10698
      %v10788 = vadd.f32 %v10544, %v10700
      %v10789 = vadd.f32 %v10545, %v10703
      %v10790 = vadd.f32 %v10546, %v10705
      %v10791 = vadd.f32 %v10547, %v10708
      %v10792 = vadd.f32 %v10548, %v10710
      %v10793 = vadd.f32 %v10549, %v10713
      %v10794 = vadd.f32 %v10550, %v10715
      %v10795 = vadd.f32 %v10551, %v10718
      %v10796 = vadd.f32 %v10552, %v10720
      %v10797 = vadd.f32 %v10553, %v10723
      %v10798 = vadd.f32 %v10554, %v10725
      %v10799 = vadd.f32 %v10555, %v10728
      %v10800 = vadd.f32 %v10556, %v10730
      %v10801 = vadd.f32 %v10557, %v10733
      %v10802 = vadd.f32 %v10558, %v10735
      %v10803 = vadd.f32 %v10559, %v10738
      %v10804 = vadd.f32 %v10560, %v10740
      %v10805 = vlaneseq
      %v10806 = vshrl.u32 %v10805, 7
      %v10807 = vsub.s32 1, %v10806
      %v10808 = vrot.slane %v561, %v10807
      %v10809 = vmul.f32 %v505, %v10808
      %v10810 = vmul.f32 %v506, %v10808
      %v10811 = vmul.f32 %v507, %v10808
      %v10812 = vmul.f32 %v508, %v10808
      %v10813 = vmul.f32 %v509, %v10808
      %v10814 = vmul.f32 %v510, %v10808
      %v10815 = vmul.f32 %v511, %v10808
      %v10816 = vmul.f32 %v512, %v10808
      %v10817 = vmul.f32 %v513, %v10808
      %v10818 = vmul.f32 %v514, %v10808
      %v10819 = vmul.f32 %v515, %v10808
      %v10820 = vmul.f32 %v516, %v10808
      %v10821 = vmul.f32 %v517, %v10808
      %v10822 = vmul.f32 %v518, %v10808
      %v10823 = vmul.f32 %v519, %v10808
      %v10824 = vmul.f32 %v520, %v10808
      %v10825 = vmul.f32 %v521, %v10808
      %v10826 = vmul.f32 %v522, %v10808
      %v10827 = vmul.f32 %v523, %v10808
      %v10828 = vmul.f32 %v524, %v10808
      %v10829 = vmul.f32 %v525, %v10808
      %v10830 = vmul.f32 %v526, %v10808
      %v10831 = vmul.f32 %v527, %v10808
      %v10832 = vmul.f32 %v528, %v10808
      %v10833 = vmul.f32 %v529, %v10808
      %v10834 = vmul.f32 %v530, %v10808
      %v10835 = vmul.f32 %v531, %v10808
      %v10836 = vmul.f32 %v532, %v10808
      %v10837 = vmul.f32 %v533, %v10808
      %v10838 = vmul.f32 %v534, %v10808
      %v10839 = vmul.f32 %v535, %v10808
      %v10840 = vmul.f32 %v536, %v10808
      %v10841 = vmul.f32 %v537, %v10808
      %v10842 = vmul.f32 %v538, %v10808
      %v10843 = vmul.f32 %v539, %v10808
      %v10844 = vmul.f32 %v540, %v10808
      %v10845 = vmul.f32 %v541, %v10808
      %v10846 = vmul.f32 %v542, %v10808
      %v10847 = vmul.f32 %v543, %v10808
      %v10848 = vmul.f32 %v544, %v10808
      %v10849 = vmul.f32 %v545, %v10808
      %v10850 = vmul.f32 %v546, %v10808
      %v10851 = vmul.f32 %v547, %v10808
      %v10852 = vmul.f32 %v548, %v10808
      %v10853 = vmul.f32 %v549, %v10808
      %v10854 = vmul.f32 %v550, %v10808
      %v10855 = vmul.f32 %v551, %v10808
      %v10856 = vmul.f32 %v552, %v10808
      %v10905 = vrot.slane %v10809, 6
      %v10906 = vrot.slane %v10810, 6
      %v10907 = vsel %vm9684, %v10905, %v10906
      %v10908 = vrot.slane %v10811, 6
      %v10909 = vsel %vm9684, %v10906, %v10908
      %v10910 = vrot.slane %v10812, 6
      %v10911 = vrot.slane %v10813, 6
      %v10912 = vsel %vm9684, %v10910, %v10911
      %v10913 = vrot.slane %v10814, 6
      %v10914 = vsel %vm9684, %v10911, %v10913
      %v10915 = vrot.slane %v10815, 6
      %v10916 = vrot.slane %v10816, 6
      %v10917 = vsel %vm9684, %v10915, %v10916
      %v10918 = vrot.slane %v10817, 6
      %v10919 = vsel %vm9684, %v10916, %v10918
      %v10920 = vrot.slane %v10818, 6
      %v10921 = vrot.slane %v10819, 6
      %v10922 = vsel %vm9684, %v10920, %v10921
      %v10923 = vrot.slane %v10820, 6
      %v10924 = vsel %vm9684, %v10921, %v10923
      %v10925 = vrot.slane %v10821, 6
      %v10926 = vrot.slane %v10822, 6
      %v10927 = vsel %vm9684, %v10925, %v10926
      %v10928 = vrot.slane %v10823, 6
      %v10929 = vsel %vm9684, %v10926, %v10928
      %v10930 = vrot.slane %v10824, 6
      %v10931 = vrot.slane %v10825, 6
      %v10932 = vsel %vm9684, %v10930, %v10931
      %v10933 = vrot.slane %v10826, 6
      %v10934 = vsel %vm9684, %v10931, %v10933
      %v10935 = vrot.slane %v10827, 6
      %v10936 = vrot.slane %v10828, 6
      %v10937 = vsel %vm9684, %v10935, %v10936
      %v10938 = vrot.slane %v10829, 6
      %v10939 = vsel %vm9684, %v10936, %v10938
      %v10940 = vrot.slane %v10830, 6
      %v10941 = vrot.slane %v10831, 6
      %v10942 = vsel %vm9684, %v10940, %v10941
      %v10943 = vrot.slane %v10832, 6
      %v10944 = vsel %vm9684, %v10941, %v10943
      %v10945 = vrot.slane %v10833, 6
      %v10946 = vrot.slane %v10834, 6
      %v10947 = vsel %vm9684, %v10945, %v10946
      %v10948 = vrot.slane %v10835, 6
      %v10949 = vsel %vm9684, %v10946, %v10948
      %v10950 = vrot.slane %v10836, 6
      %v10951 = vrot.slane %v10837, 6
      %v10952 = vsel %vm9684, %v10950, %v10951
      %v10953 = vrot.slane %v10838, 6
      %v10954 = vsel %vm9684, %v10951, %v10953
      %v10955 = vrot.slane %v10839, 6
      %v10956 = vrot.slane %v10840, 6
      %v10957 = vsel %vm9684, %v10955, %v10956
      %v10958 = vrot.slane %v10841, 6
      %v10959 = vsel %vm9684, %v10956, %v10958
      %v10960 = vrot.slane %v10842, 6
      %v10961 = vrot.slane %v10843, 6
      %v10962 = vsel %vm9684, %v10960, %v10961
      %v10963 = vrot.slane %v10844, 6
      %v10964 = vsel %vm9684, %v10961, %v10963
      %v10965 = vrot.slane %v10845, 6
      %v10966 = vrot.slane %v10846, 6
      %v10967 = vsel %vm9684, %v10965, %v10966
      %v10968 = vrot.slane %v10847, 6
      %v10969 = vsel %vm9684, %v10966, %v10968
      %v10970 = vrot.slane %v10848, 6
      %v10971 = vrot.slane %v10849, 6
      %v10972 = vsel %vm9684, %v10970, %v10971
      %v10973 = vrot.slane %v10850, 6
      %v10974 = vsel %vm9684, %v10971, %v10973
      %v10975 = vrot.slane %v10851, 6
      %v10976 = vrot.slane %v10852, 6
      %v10977 = vsel %vm9684, %v10975, %v10976
      %v10978 = vrot.slane %v10853, 6
      %v10979 = vsel %vm9684, %v10976, %v10978
      %v10980 = vrot.slane %v10854, 6
      %v10981 = vrot.slane %v10855, 6
      %v10982 = vsel %vm9684, %v10980, %v10981
      %v10983 = vrot.slane %v10856, 6
      %v10984 = vsel %vm9684, %v10981, %v10983
      %v11017 = vadd.f32 %v10773, %v10907
      %v11018 = vadd.f32 %v10774, %v10909
      %v11019 = vadd.f32 %v10775, %v10912
      %v11020 = vadd.f32 %v10776, %v10914
      %v11021 = vadd.f32 %v10777, %v10917
      %v11022 = vadd.f32 %v10778, %v10919
      %v11023 = vadd.f32 %v10779, %v10922
      %v11024 = vadd.f32 %v10780, %v10924
      %v11025 = vadd.f32 %v10781, %v10927
      %v11026 = vadd.f32 %v10782, %v10929
      %v11027 = vadd.f32 %v10783, %v10932
      %v11028 = vadd.f32 %v10784, %v10934
      %v11029 = vadd.f32 %v10785, %v10937
      %v11030 = vadd.f32 %v10786, %v10939
      %v11031 = vadd.f32 %v10787, %v10942
      %v11032 = vadd.f32 %v10788, %v10944
      %v11033 = vadd.f32 %v10789, %v10947
      %v11034 = vadd.f32 %v10790, %v10949
      %v11035 = vadd.f32 %v10791, %v10952
      %v11036 = vadd.f32 %v10792, %v10954
      %v11037 = vadd.f32 %v10793, %v10957
      %v11038 = vadd.f32 %v10794, %v10959
      %v11039 = vadd.f32 %v10795, %v10962
      %v11040 = vadd.f32 %v10796, %v10964
      %v11041 = vadd.f32 %v10797, %v10967
      %v11042 = vadd.f32 %v10798, %v10969
      %v11043 = vadd.f32 %v10799, %v10972
      %v11044 = vadd.f32 %v10800, %v10974
      %v11045 = vadd.f32 %v10801, %v10977
      %v11046 = vadd.f32 %v10802, %v10979
      %v11047 = vadd.f32 %v10803, %v10982
      %v11048 = vadd.f32 %v10804, %v10984
      %v11049 = vlaneseq
      %v11050 = vshrl.u32 %v11049, 7
      %v11051 = vsub.s32 0, %v11050
      %v11052 = vrot.slane %v562, %v11051
      %v11053 = vmul.f32 %v508, %v11052
      %v11054 = vmul.f32 %v509, %v11052
      %v11055 = vmul.f32 %v510, %v11052
      %v11056 = vmul.f32 %v511, %v11052
      %v11057 = vmul.f32 %v512, %v11052
      %v11058 = vmul.f32 %v513, %v11052
      %v11059 = vmul.f32 %v514, %v11052
      %v11060 = vmul.f32 %v515, %v11052
      %v11061 = vmul.f32 %v516, %v11052
      %v11062 = vmul.f32 %v517, %v11052
      %v11063 = vmul.f32 %v518, %v11052
      %v11064 = vmul.f32 %v519, %v11052
      %v11065 = vmul.f32 %v520, %v11052
      %v11066 = vmul.f32 %v521, %v11052
      %v11067 = vmul.f32 %v522, %v11052
      %v11068 = vmul.f32 %v523, %v11052
      %v11069 = vmul.f32 %v524, %v11052
      %v11070 = vmul.f32 %v525, %v11052
      %v11071 = vmul.f32 %v526, %v11052
      %v11072 = vmul.f32 %v527, %v11052
      %v11073 = vmul.f32 %v528, %v11052
      %v11074 = vmul.f32 %v529, %v11052
      %v11075 = vmul.f32 %v530, %v11052
      %v11076 = vmul.f32 %v531, %v11052
      %v11077 = vmul.f32 %v532, %v11052
      %v11078 = vmul.f32 %v533, %v11052
      %v11079 = vmul.f32 %v534, %v11052
      %v11080 = vmul.f32 %v535, %v11052
      %v11081 = vmul.f32 %v536, %v11052
      %v11082 = vmul.f32 %v537, %v11052
      %v11083 = vmul.f32 %v538, %v11052
      %v11084 = vmul.f32 %v539, %v11052
      %v11085 = vmul.f32 %v540, %v11052
      %v11086 = vmul.f32 %v541, %v11052
      %v11087 = vmul.f32 %v542, %v11052
      %v11088 = vmul.f32 %v543, %v11052
      %v11089 = vmul.f32 %v544, %v11052
      %v11090 = vmul.f32 %v545, %v11052
      %v11091 = vmul.f32 %v546, %v11052
      %v11092 = vmul.f32 %v547, %v11052
      %v11093 = vmul.f32 %v548, %v11052
      %v11094 = vmul.f32 %v549, %v11052
      %v11095 = vmul.f32 %v550, %v11052
      %v11096 = vmul.f32 %v551, %v11052
      %v11097 = vmul.f32 %v552, %v11052
      %v11098 = vmul.f32 %v553, %v11052
      %v11099 = vmul.f32 %v554, %v11052
      %v11100 = vmul.f32 %v555, %v11052
      %v11149 = vrot.slane %v11053, 6
      %v11150 = vrot.slane %v11054, 6
      %v11151 = vsel %vm9684, %v11149, %v11150
      %v11152 = vrot.slane %v11055, 6
      %v11153 = vsel %vm9684, %v11150, %v11152
      %v11154 = vrot.slane %v11056, 6
      %v11155 = vrot.slane %v11057, 6
      %v11156 = vsel %vm9684, %v11154, %v11155
      %v11157 = vrot.slane %v11058, 6
      %v11158 = vsel %vm9684, %v11155, %v11157
      %v11159 = vrot.slane %v11059, 6
      %v11160 = vrot.slane %v11060, 6
      %v11161 = vsel %vm9684, %v11159, %v11160
      %v11162 = vrot.slane %v11061, 6
      %v11163 = vsel %vm9684, %v11160, %v11162
      %v11164 = vrot.slane %v11062, 6
      %v11165 = vrot.slane %v11063, 6
      %v11166 = vsel %vm9684, %v11164, %v11165
      %v11167 = vrot.slane %v11064, 6
      %v11168 = vsel %vm9684, %v11165, %v11167
      %v11169 = vrot.slane %v11065, 6
      %v11170 = vrot.slane %v11066, 6
      %v11171 = vsel %vm9684, %v11169, %v11170
      %v11172 = vrot.slane %v11067, 6
      %v11173 = vsel %vm9684, %v11170, %v11172
      %v11174 = vrot.slane %v11068, 6
      %v11175 = vrot.slane %v11069, 6
      %v11176 = vsel %vm9684, %v11174, %v11175
      %v11177 = vrot.slane %v11070, 6
      %v11178 = vsel %vm9684, %v11175, %v11177
      %v11179 = vrot.slane %v11071, 6
      %v11180 = vrot.slane %v11072, 6
      %v11181 = vsel %vm9684, %v11179, %v11180
      %v11182 = vrot.slane %v11073, 6
      %v11183 = vsel %vm9684, %v11180, %v11182
      %v11184 = vrot.slane %v11074, 6
      %v11185 = vrot.slane %v11075, 6
      %v11186 = vsel %vm9684, %v11184, %v11185
      %v11187 = vrot.slane %v11076, 6
      %v11188 = vsel %vm9684, %v11185, %v11187
      %v11189 = vrot.slane %v11077, 6
      %v11190 = vrot.slane %v11078, 6
      %v11191 = vsel %vm9684, %v11189, %v11190
      %v11192 = vrot.slane %v11079, 6
      %v11193 = vsel %vm9684, %v11190, %v11192
      %v11194 = vrot.slane %v11080, 6
      %v11195 = vrot.slane %v11081, 6
      %v11196 = vsel %vm9684, %v11194, %v11195
      %v11197 = vrot.slane %v11082, 6
      %v11198 = vsel %vm9684, %v11195, %v11197
      %v11199 = vrot.slane %v11083, 6
      %v11200 = vrot.slane %v11084, 6
      %v11201 = vsel %vm9684, %v11199, %v11200
      %v11202 = vrot.slane %v11085, 6
      %v11203 = vsel %vm9684, %v11200, %v11202
      %v11204 = vrot.slane %v11086, 6
      %v11205 = vrot.slane %v11087, 6
      %v11206 = vsel %vm9684, %v11204, %v11205
      %v11207 = vrot.slane %v11088, 6
      %v11208 = vsel %vm9684, %v11205, %v11207
      %v11209 = vrot.slane %v11089, 6
      %v11210 = vrot.slane %v11090, 6
      %v11211 = vsel %vm9684, %v11209, %v11210
      %v11212 = vrot.slane %v11091, 6
      %v11213 = vsel %vm9684, %v11210, %v11212
      %v11214 = vrot.slane %v11092, 6
      %v11215 = vrot.slane %v11093, 6
      %v11216 = vsel %vm9684, %v11214, %v11215
      %v11217 = vrot.slane %v11094, 6
      %v11218 = vsel %vm9684, %v11215, %v11217
      %v11219 = vrot.slane %v11095, 6
      %v11220 = vrot.slane %v11096, 6
      %v11221 = vsel %vm9684, %v11219, %v11220
      %v11222 = vrot.slane %v11097, 6
      %v11223 = vsel %vm9684, %v11220, %v11222
      %v11224 = vrot.slane %v11098, 6
      %v11225 = vrot.slane %v11099, 6
      %v11226 = vsel %vm9684, %v11224, %v11225
      %v11227 = vrot.slane %v11100, 6
      %v11228 = vsel %vm9684, %v11225, %v11227
      %v11261 = vadd.f32 %v11017, %v11151
      %v11262 = vadd.f32 %v11018, %v11153
      %v11263 = vadd.f32 %v11019, %v11156
      %v11264 = vadd.f32 %v11020, %v11158
      %v11265 = vadd.f32 %v11021, %v11161
      %v11266 = vadd.f32 %v11022, %v11163
      %v11267 = vadd.f32 %v11023, %v11166
      %v11268 = vadd.f32 %v11024, %v11168
      %v11269 = vadd.f32 %v11025, %v11171
      %v11270 = vadd.f32 %v11026, %v11173
      %v11271 = vadd.f32 %v11027, %v11176
      %v11272 = vadd.f32 %v11028, %v11178
      %v11273 = vadd.f32 %v11029, %v11181
      %v11274 = vadd.f32 %v11030, %v11183
      %v11275 = vadd.f32 %v11031, %v11186
      %v11276 = vadd.f32 %v11032, %v11188
      %v11277 = vadd.f32 %v11033, %v11191
      %v11278 = vadd.f32 %v11034, %v11193
      %v11279 = vadd.f32 %v11035, %v11196
      %v11280 = vadd.f32 %v11036, %v11198
      %v11281 = vadd.f32 %v11037, %v11201
      %v11282 = vadd.f32 %v11038, %v11203
      %v11283 = vadd.f32 %v11039, %v11206
      %v11284 = vadd.f32 %v11040, %v11208
      %v11285 = vadd.f32 %v11041, %v11211
      %v11286 = vadd.f32 %v11042, %v11213
      %v11287 = vadd.f32 %v11043, %v11216
      %v11288 = vadd.f32 %v11044, %v11218
      %v11289 = vadd.f32 %v11045, %v11221
      %v11290 = vadd.f32 %v11046, %v11223
      %v11291 = vadd.f32 %v11047, %v11226
      %v11292 = vadd.f32 %v11048, %v11228
      %v11293 = vld [vmem:[%s3] sm:$0x1]
      %v11295 = vlaneseq
      %v11296 = vshrl.u32 %v11295, 7
      %v11297 = vsub.s32 0, %v11296
      %v11298 = vrot.slane %v11293, %v11297
      %v11300 = vadd.f32 %v11261, %v11298
      %v11301 = vadd.f32 %v11262, %v11298
      %v11302 = vadd.f32 %v11263, %v11298
      %v11303 = vadd.f32 %v11264, %v11298
      %v11304 = vadd.f32 %v11265, %v11298
      %v11305 = vadd.f32 %v11266, %v11298
      %v11306 = vadd.f32 %v11267, %v11298
      %v11307 = vadd.f32 %v11268, %v11298
      %v11308 = vadd.f32 %v11269, %v11298
      %v11309 = vadd.f32 %v11270, %v11298
      %v11310 = vadd.f32 %v11271, %v11298
      %v11311 = vadd.f32 %v11272, %v11298
      %v11312 = vadd.f32 %v11273, %v11298
      %v11313 = vadd.f32 %v11274, %v11298
      %v11314 = vadd.f32 %v11275, %v11298
      %v11315 = vadd.f32 %v11276, %v11298
      %v11316 = vadd.f32 %v11277, %v11298
      %v11317 = vadd.f32 %v11278, %v11298
      %v11318 = vadd.f32 %v11279, %v11298
      %v11319 = vadd.f32 %v11280, %v11298
      %v11320 = vadd.f32 %v11281, %v11298
      %v11321 = vadd.f32 %v11282, %v11298
      %v11322 = vadd.f32 %v11283, %v11298
      %v11323 = vadd.f32 %v11284, %v11298
      %v11324 = vadd.f32 %v11285, %v11298
      %v11325 = vadd.f32 %v11286, %v11298
      %v11326 = vadd.f32 %v11287, %v11298
      %v11327 = vadd.f32 %v11288, %v11298
      %v11328 = vadd.f32 %v11289, %v11298
      %v11329 = vadd.f32 %v11290, %v11298
      %v11330 = vadd.f32 %v11291, %v11298
      %v11331 = vadd.f32 %v11292, %v11298
      %vm11332 = vcmask 261120
      %v11333 = vsel %vm11332, %v11300, 0.0
      %11334 = vadd.xlane.f32.xlu0 %v11333
      %v11335 = vpop.xlane.xlu0 %11334
      %v11336 = vsel %vm11332, %v11301, 0.0
      %11337 = vadd.xlane.f32.xlu0 %v11336
      %v11338 = vpop.xlane.xlu0 %11337
      %v11339 = vsel %vm11332, %v11302, 0.0
      %11340 = vadd.xlane.f32.xlu0 %v11339
      %v11341 = vpop.xlane.xlu0 %11340
      %v11342 = vsel %vm11332, %v11303, 0.0
      %11343 = vadd.xlane.f32.xlu0 %v11342
      %v11344 = vpop.xlane.xlu0 %11343
      %v11345 = vsel %vm11332, %v11304, 0.0
      %11346 = vadd.xlane.f32.xlu0 %v11345
      %v11347 = vpop.xlane.xlu0 %11346
      %v11348 = vsel %vm11332, %v11305, 0.0
      %11349 = vadd.xlane.f32.xlu0 %v11348
      %v11350 = vpop.xlane.xlu0 %11349
      %v11351 = vsel %vm11332, %v11306, 0.0
      %11352 = vadd.xlane.f32.xlu0 %v11351
      %v11353 = vpop.xlane.xlu0 %11352
      %v11354 = vsel %vm11332, %v11307, 0.0
      %11355 = vadd.xlane.f32.xlu0 %v11354
      %v11356 = vpop.xlane.xlu0 %11355
      %v11357 = vsel %vm11332, %v11308, 0.0
      %11358 = vadd.xlane.f32.xlu0 %v11357
      %v11359 = vpop.xlane.xlu0 %11358
      %v11360 = vsel %vm11332, %v11309, 0.0
      %11361 = vadd.xlane.f32.xlu0 %v11360
      %v11362 = vpop.xlane.xlu0 %11361
      %v11363 = vsel %vm11332, %v11310, 0.0
      %11364 = vadd.xlane.f32.xlu0 %v11363
      %v11365 = vpop.xlane.xlu0 %11364
      %v11366 = vsel %vm11332, %v11311, 0.0
      %11367 = vadd.xlane.f32.xlu0 %v11366
      %v11368 = vpop.xlane.xlu0 %11367
      %v11369 = vsel %vm11332, %v11312, 0.0
      %11370 = vadd.xlane.f32.xlu0 %v11369
      %v11371 = vpop.xlane.xlu0 %11370
      %v11372 = vsel %vm11332, %v11313, 0.0
      %11373 = vadd.xlane.f32.xlu0 %v11372
      %v11374 = vpop.xlane.xlu0 %11373
      %v11375 = vsel %vm11332, %v11314, 0.0
      %11376 = vadd.xlane.f32.xlu0 %v11375
      %v11377 = vpop.xlane.xlu0 %11376
      %v11378 = vsel %vm11332, %v11315, 0.0
      %11379 = vadd.xlane.f32.xlu0 %v11378
      %v11380 = vpop.xlane.xlu0 %11379
      %v11381 = vsel %vm11332, %v11316, 0.0
      %11382 = vadd.xlane.f32.xlu0 %v11381
      %v11383 = vpop.xlane.xlu0 %11382
      %v11384 = vsel %vm11332, %v11317, 0.0
      %11385 = vadd.xlane.f32.xlu0 %v11384
      %v11386 = vpop.xlane.xlu0 %11385
      %v11387 = vsel %vm11332, %v11318, 0.0
      %11388 = vadd.xlane.f32.xlu0 %v11387
      %v11389 = vpop.xlane.xlu0 %11388
      %v11390 = vsel %vm11332, %v11319, 0.0
      %11391 = vadd.xlane.f32.xlu0 %v11390
      %v11392 = vpop.xlane.xlu0 %11391
      %v11393 = vsel %vm11332, %v11320, 0.0
      %11394 = vadd.xlane.f32.xlu0 %v11393
      %v11395 = vpop.xlane.xlu0 %11394
      %v11396 = vsel %vm11332, %v11321, 0.0
      %11397 = vadd.xlane.f32.xlu0 %v11396
      %v11398 = vpop.xlane.xlu0 %11397
      %v11399 = vsel %vm11332, %v11322, 0.0
      %11400 = vadd.xlane.f32.xlu0 %v11399
      %v11401 = vpop.xlane.xlu0 %11400
      %v11402 = vsel %vm11332, %v11323, 0.0
      %11403 = vadd.xlane.f32.xlu0 %v11402
      %v11404 = vpop.xlane.xlu0 %11403
      %v11405 = vsel %vm11332, %v11324, 0.0
      %11406 = vadd.xlane.f32.xlu0 %v11405
      %v11407 = vpop.xlane.xlu0 %11406
      %v11408 = vsel %vm11332, %v11325, 0.0
      %11409 = vadd.xlane.f32.xlu0 %v11408
      %v11410 = vpop.xlane.xlu0 %11409
      %v11411 = vsel %vm11332, %v11326, 0.0
      %11412 = vadd.xlane.f32.xlu0 %v11411
      %v11413 = vpop.xlane.xlu0 %11412
      %v11414 = vsel %vm11332, %v11327, 0.0
      %11415 = vadd.xlane.f32.xlu0 %v11414
      %v11416 = vpop.xlane.xlu0 %11415
      %v11417 = vsel %vm11332, %v11328, 0.0
      %11418 = vadd.xlane.f32.xlu0 %v11417
      %v11419 = vpop.xlane.xlu0 %11418
      %v11420 = vsel %vm11332, %v11329, 0.0
      %11421 = vadd.xlane.f32.xlu0 %v11420
      %v11422 = vpop.xlane.xlu0 %11421
      %v11423 = vsel %vm11332, %v11330, 0.0
      %11424 = vadd.xlane.f32.xlu0 %v11423
      %v11425 = vpop.xlane.xlu0 %11424
      %v11426 = vsel %vm11332, %v11331, 0.0
      %11427 = vadd.xlane.f32.xlu0 %v11426
      %v11428 = vpop.xlane.xlu0 %11427
      %v11429 = vrcp.pop 32.0
      %v11430 = vmul.f32 %v11335, %v11429
      %v11431 = vmul.f32 %v11338, %v11429
      %v11432 = vmul.f32 %v11341, %v11429
      %v11433 = vmul.f32 %v11344, %v11429
      %v11434 = vmul.f32 %v11347, %v11429
      %v11435 = vmul.f32 %v11350, %v11429
      %v11436 = vmul.f32 %v11353, %v11429
      %v11437 = vmul.f32 %v11356, %v11429
      %v11438 = vmul.f32 %v11359, %v11429
      %v11439 = vmul.f32 %v11362, %v11429
      %v11440 = vmul.f32 %v11365, %v11429
      %v11441 = vmul.f32 %v11368, %v11429
      %v11442 = vmul.f32 %v11371, %v11429
      %v11443 = vmul.f32 %v11374, %v11429
      %v11444 = vmul.f32 %v11377, %v11429
      %v11445 = vmul.f32 %v11380, %v11429
      %v11446 = vmul.f32 %v11383, %v11429
      %v11447 = vmul.f32 %v11386, %v11429
      %v11448 = vmul.f32 %v11389, %v11429
      %v11449 = vmul.f32 %v11392, %v11429
      %v11450 = vmul.f32 %v11395, %v11429
      %v11451 = vmul.f32 %v11398, %v11429
      %v11452 = vmul.f32 %v11401, %v11429
      %v11453 = vmul.f32 %v11404, %v11429
      %v11454 = vmul.f32 %v11407, %v11429
      %v11455 = vmul.f32 %v11410, %v11429
      %v11456 = vmul.f32 %v11413, %v11429
      %v11457 = vmul.f32 %v11416, %v11429
      %v11458 = vmul.f32 %v11419, %v11429
      %v11459 = vmul.f32 %v11422, %v11429
      %v11460 = vmul.f32 %v11425, %v11429
      %v11461 = vmul.f32 %v11428, %v11429
      %v11462 = vsub.f32 %v11300, %v11430
      %v11463 = vsub.f32 %v11301, %v11431
      %v11464 = vsub.f32 %v11302, %v11432
      %v11465 = vsub.f32 %v11303, %v11433
      %v11466 = vsub.f32 %v11304, %v11434
      %v11467 = vsub.f32 %v11305, %v11435
      %v11468 = vsub.f32 %v11306, %v11436
      %v11469 = vsub.f32 %v11307, %v11437
      %v11470 = vsub.f32 %v11308, %v11438
      %v11471 = vsub.f32 %v11309, %v11439
      %v11472 = vsub.f32 %v11310, %v11440
      %v11473 = vsub.f32 %v11311, %v11441
      %v11474 = vsub.f32 %v11312, %v11442
      %v11475 = vsub.f32 %v11313, %v11443
      %v11476 = vsub.f32 %v11314, %v11444
      %v11477 = vsub.f32 %v11315, %v11445
      %v11478 = vsub.f32 %v11316, %v11446
      %v11479 = vsub.f32 %v11317, %v11447
      %v11480 = vsub.f32 %v11318, %v11448
      %v11481 = vsub.f32 %v11319, %v11449
      %v11482 = vsub.f32 %v11320, %v11450
      %v11483 = vsub.f32 %v11321, %v11451
      %v11484 = vsub.f32 %v11322, %v11452
      %v11485 = vsub.f32 %v11323, %v11453
      %v11486 = vsub.f32 %v11324, %v11454
      %v11487 = vsub.f32 %v11325, %v11455
      %v11488 = vsub.f32 %v11326, %v11456
      %v11489 = vsub.f32 %v11327, %v11457
      %v11490 = vsub.f32 %v11328, %v11458
      %v11491 = vsub.f32 %v11329, %v11459
      %v11492 = vsub.f32 %v11330, %v11460
      %v11493 = vsub.f32 %v11331, %v11461
      %v11494 = vmul.f32 %v11462, %v11462
      %v11495 = vmul.f32 %v11463, %v11463
      %v11496 = vmul.f32 %v11464, %v11464
      %v11497 = vmul.f32 %v11465, %v11465
      %v11498 = vmul.f32 %v11466, %v11466
      %v11499 = vmul.f32 %v11467, %v11467
      %v11500 = vmul.f32 %v11468, %v11468
      %v11501 = vmul.f32 %v11469, %v11469
      %v11502 = vmul.f32 %v11470, %v11470
      %v11503 = vmul.f32 %v11471, %v11471
      %v11504 = vmul.f32 %v11472, %v11472
      %v11505 = vmul.f32 %v11473, %v11473
      %v11506 = vmul.f32 %v11474, %v11474
      %v11507 = vmul.f32 %v11475, %v11475
      %v11508 = vmul.f32 %v11476, %v11476
      %v11509 = vmul.f32 %v11477, %v11477
      %v11510 = vmul.f32 %v11478, %v11478
      %v11511 = vmul.f32 %v11479, %v11479
      %v11512 = vmul.f32 %v11480, %v11480
      %v11513 = vmul.f32 %v11481, %v11481
      %v11514 = vmul.f32 %v11482, %v11482
      %v11515 = vmul.f32 %v11483, %v11483
      %v11516 = vmul.f32 %v11484, %v11484
      %v11517 = vmul.f32 %v11485, %v11485
      %v11518 = vmul.f32 %v11486, %v11486
      %v11519 = vmul.f32 %v11487, %v11487
      %v11520 = vmul.f32 %v11488, %v11488
      %v11521 = vmul.f32 %v11489, %v11489
      %v11522 = vmul.f32 %v11490, %v11490
      %v11523 = vmul.f32 %v11491, %v11491
      %v11524 = vmul.f32 %v11492, %v11492
      %v11525 = vmul.f32 %v11493, %v11493
      %v11526 = vsel %vm11332, %v11494, 0.0
      %11527 = vadd.xlane.f32.xlu0 %v11526
      %v11528 = vpop.xlane.xlu0 %11527
      %v11529 = vsel %vm11332, %v11495, 0.0
      %11530 = vadd.xlane.f32.xlu0 %v11529
      %v11531 = vpop.xlane.xlu0 %11530
      %v11532 = vsel %vm11332, %v11496, 0.0
      %11533 = vadd.xlane.f32.xlu0 %v11532
      %v11534 = vpop.xlane.xlu0 %11533
      %v11535 = vsel %vm11332, %v11497, 0.0
      %11536 = vadd.xlane.f32.xlu0 %v11535
      %v11537 = vpop.xlane.xlu0 %11536
      %v11538 = vsel %vm11332, %v11498, 0.0
      %11539 = vadd.xlane.f32.xlu0 %v11538
      %v11540 = vpop.xlane.xlu0 %11539
      %v11541 = vsel %vm11332, %v11499, 0.0
      %11542 = vadd.xlane.f32.xlu0 %v11541
      %v11543 = vpop.xlane.xlu0 %11542
      %v11544 = vsel %vm11332, %v11500, 0.0
      %11545 = vadd.xlane.f32.xlu0 %v11544
      %v11546 = vpop.xlane.xlu0 %11545
      %v11547 = vsel %vm11332, %v11501, 0.0
      %11548 = vadd.xlane.f32.xlu0 %v11547
      %v11549 = vpop.xlane.xlu0 %11548
      %v11550 = vsel %vm11332, %v11502, 0.0
      %11551 = vadd.xlane.f32.xlu0 %v11550
      %v11552 = vpop.xlane.xlu0 %11551
      %v11553 = vsel %vm11332, %v11503, 0.0
      %11554 = vadd.xlane.f32.xlu0 %v11553
      %v11555 = vpop.xlane.xlu0 %11554
      %v11556 = vsel %vm11332, %v11504, 0.0
      %11557 = vadd.xlane.f32.xlu0 %v11556
      %v11558 = vpop.xlane.xlu0 %11557
      %v11559 = vsel %vm11332, %v11505, 0.0
      %11560 = vadd.xlane.f32.xlu0 %v11559
      %v11561 = vpop.xlane.xlu0 %11560
      %v11562 = vsel %vm11332, %v11506, 0.0
      %11563 = vadd.xlane.f32.xlu0 %v11562
      %v11564 = vpop.xlane.xlu0 %11563
      %v11565 = vsel %vm11332, %v11507, 0.0
      %11566 = vadd.xlane.f32.xlu0 %v11565
      %v11567 = vpop.xlane.xlu0 %11566
      %v11568 = vsel %vm11332, %v11508, 0.0
      %11569 = vadd.xlane.f32.xlu0 %v11568
      %v11570 = vpop.xlane.xlu0 %11569
      %v11571 = vsel %vm11332, %v11509, 0.0
      %11572 = vadd.xlane.f32.xlu0 %v11571
      %v11573 = vpop.xlane.xlu0 %11572
      %v11574 = vsel %vm11332, %v11510, 0.0
      %11575 = vadd.xlane.f32.xlu0 %v11574
      %v11576 = vpop.xlane.xlu0 %11575
      %v11577 = vsel %vm11332, %v11511, 0.0
      %11578 = vadd.xlane.f32.xlu0 %v11577
      %v11579 = vpop.xlane.xlu0 %11578
      %v11580 = vsel %vm11332, %v11512, 0.0
      %11581 = vadd.xlane.f32.xlu0 %v11580
      %v11582 = vpop.xlane.xlu0 %11581
      %v11583 = vsel %vm11332, %v11513, 0.0
      %11584 = vadd.xlane.f32.xlu0 %v11583
      %v11585 = vpop.xlane.xlu0 %11584
      %v11586 = vsel %vm11332, %v11514, 0.0
      %11587 = vadd.xlane.f32.xlu0 %v11586
      %v11588 = vpop.xlane.xlu0 %11587
      %v11589 = vsel %vm11332, %v11515, 0.0
      %11590 = vadd.xlane.f32.xlu0 %v11589
      %v11591 = vpop.xlane.xlu0 %11590
      %v11592 = vsel %vm11332, %v11516, 0.0
      %11593 = vadd.xlane.f32.xlu0 %v11592
      %v11594 = vpop.xlane.xlu0 %11593
      %v11595 = vsel %vm11332, %v11517, 0.0
      %11596 = vadd.xlane.f32.xlu0 %v11595
      %v11597 = vpop.xlane.xlu0 %11596
      %v11598 = vsel %vm11332, %v11518, 0.0
      %11599 = vadd.xlane.f32.xlu0 %v11598
      %v11600 = vpop.xlane.xlu0 %11599
      %v11601 = vsel %vm11332, %v11519, 0.0
      %11602 = vadd.xlane.f32.xlu0 %v11601
      %v11603 = vpop.xlane.xlu0 %11602
      %v11604 = vsel %vm11332, %v11520, 0.0
      %11605 = vadd.xlane.f32.xlu0 %v11604
      %v11606 = vpop.xlane.xlu0 %11605
      %v11607 = vsel %vm11332, %v11521, 0.0
      %11608 = vadd.xlane.f32.xlu0 %v11607
      %v11609 = vpop.xlane.xlu0 %11608
      %v11610 = vsel %vm11332, %v11522, 0.0
      %11611 = vadd.xlane.f32.xlu0 %v11610
      %v11612 = vpop.xlane.xlu0 %11611
      %v11613 = vsel %vm11332, %v11523, 0.0
      %11614 = vadd.xlane.f32.xlu0 %v11613
      %v11615 = vpop.xlane.xlu0 %11614
      %v11616 = vsel %vm11332, %v11524, 0.0
      %11617 = vadd.xlane.f32.xlu0 %v11616
      %v11618 = vpop.xlane.xlu0 %11617
      %v11619 = vsel %vm11332, %v11525, 0.0
      %11620 = vadd.xlane.f32.xlu0 %v11619
      %v11621 = vpop.xlane.xlu0 %11620
      %v11622 = vmul.f32 %v11528, %v11429
      %v11623 = vmul.f32 %v11531, %v11429
      %v11624 = vmul.f32 %v11534, %v11429
      %v11625 = vmul.f32 %v11537, %v11429
      %v11626 = vmul.f32 %v11540, %v11429
      %v11627 = vmul.f32 %v11543, %v11429
      %v11628 = vmul.f32 %v11546, %v11429
      %v11629 = vmul.f32 %v11549, %v11429
      %v11630 = vmul.f32 %v11552, %v11429
      %v11631 = vmul.f32 %v11555, %v11429
      %v11632 = vmul.f32 %v11558, %v11429
      %v11633 = vmul.f32 %v11561, %v11429
      %v11634 = vmul.f32 %v11564, %v11429
      %v11635 = vmul.f32 %v11567, %v11429
      %v11636 = vmul.f32 %v11570, %v11429
      %v11637 = vmul.f32 %v11573, %v11429
      %v11638 = vmul.f32 %v11576, %v11429
      %v11639 = vmul.f32 %v11579, %v11429
      %v11640 = vmul.f32 %v11582, %v11429
      %v11641 = vmul.f32 %v11585, %v11429
      %v11642 = vmul.f32 %v11588, %v11429
      %v11643 = vmul.f32 %v11591, %v11429
      %v11644 = vmul.f32 %v11594, %v11429
      %v11645 = vmul.f32 %v11597, %v11429
      %v11646 = vmul.f32 %v11600, %v11429
      %v11647 = vmul.f32 %v11603, %v11429
      %v11648 = vmul.f32 %v11606, %v11429
      %v11649 = vmul.f32 %v11609, %v11429
      %v11650 = vmul.f32 %v11612, %v11429
      %v11651 = vmul.f32 %v11615, %v11429
      %v11652 = vmul.f32 %v11618, %v11429
      %v11653 = vmul.f32 %v11621, %v11429
      %v11654 = vadd.f32 %v11622, 1e-06
      %v11655 = vadd.f32 %v11623, 1e-06
      %v11656 = vadd.f32 %v11624, 1e-06
      %v11657 = vadd.f32 %v11625, 1e-06
      %v11658 = vadd.f32 %v11626, 1e-06
      %v11659 = vadd.f32 %v11627, 1e-06
      %v11660 = vadd.f32 %v11628, 1e-06
      %v11661 = vadd.f32 %v11629, 1e-06
      %v11662 = vadd.f32 %v11630, 1e-06
      %v11663 = vadd.f32 %v11631, 1e-06
      %v11664 = vadd.f32 %v11632, 1e-06
      %v11665 = vadd.f32 %v11633, 1e-06
      %v11666 = vadd.f32 %v11634, 1e-06
      %v11667 = vadd.f32 %v11635, 1e-06
      %v11668 = vadd.f32 %v11636, 1e-06
      %v11669 = vadd.f32 %v11637, 1e-06
      %v11670 = vadd.f32 %v11638, 1e-06
      %v11671 = vadd.f32 %v11639, 1e-06
      %v11672 = vadd.f32 %v11640, 1e-06
      %v11673 = vadd.f32 %v11641, 1e-06
      %v11674 = vadd.f32 %v11642, 1e-06
      %v11675 = vadd.f32 %v11643, 1e-06
      %v11676 = vadd.f32 %v11644, 1e-06
      %v11677 = vadd.f32 %v11645, 1e-06
      %v11678 = vadd.f32 %v11646, 1e-06
      %v11679 = vadd.f32 %v11647, 1e-06
      %v11680 = vadd.f32 %v11648, 1e-06
      %v11681 = vadd.f32 %v11649, 1e-06
      %v11682 = vadd.f32 %v11650, 1e-06
      %v11683 = vadd.f32 %v11651, 1e-06
      %v11684 = vadd.f32 %v11652, 1e-06
      %v11685 = vadd.f32 %v11653, 1e-06
      %v11686 = vrsqrt.pop %v11654
      %v11687 = vrsqrt.pop %v11655
      %v11688 = vrsqrt.pop %v11656
      %v11689 = vrsqrt.pop %v11657
      %v11690 = vrsqrt.pop %v11658
      %v11691 = vrsqrt.pop %v11659
      %v11692 = vrsqrt.pop %v11660
      %v11693 = vrsqrt.pop %v11661
      %v11694 = vrsqrt.pop %v11662
      %v11695 = vrsqrt.pop %v11663
      %v11696 = vrsqrt.pop %v11664
      %v11697 = vrsqrt.pop %v11665
      %v11698 = vrsqrt.pop %v11666
      %v11699 = vrsqrt.pop %v11667
      %v11700 = vrsqrt.pop %v11668
      %v11701 = vrsqrt.pop %v11669
      %v11702 = vrsqrt.pop %v11670
      %v11703 = vrsqrt.pop %v11671
      %v11704 = vrsqrt.pop %v11672
      %v11705 = vrsqrt.pop %v11673
      %v11706 = vrsqrt.pop %v11674
      %v11707 = vrsqrt.pop %v11675
      %v11708 = vrsqrt.pop %v11676
      %v11709 = vrsqrt.pop %v11677
      %v11710 = vrsqrt.pop %v11678
      %v11711 = vrsqrt.pop %v11679
      %v11712 = vrsqrt.pop %v11680
      %v11713 = vrsqrt.pop %v11681
      %v11714 = vrsqrt.pop %v11682
      %v11715 = vrsqrt.pop %v11683
      %v11716 = vrsqrt.pop %v11684
      %v11717 = vrsqrt.pop %v11685
      %v11718 = vmul.f32 %v11462, %v11686
      %v11719 = vmul.f32 %v11463, %v11687
      %v11720 = vmul.f32 %v11464, %v11688
      %v11721 = vmul.f32 %v11465, %v11689
      %v11722 = vmul.f32 %v11466, %v11690
      %v11723 = vmul.f32 %v11467, %v11691
      %v11724 = vmul.f32 %v11468, %v11692
      %v11725 = vmul.f32 %v11469, %v11693
      %v11726 = vmul.f32 %v11470, %v11694
      %v11727 = vmul.f32 %v11471, %v11695
      %v11728 = vmul.f32 %v11472, %v11696
      %v11729 = vmul.f32 %v11473, %v11697
      %v11730 = vmul.f32 %v11474, %v11698
      %v11731 = vmul.f32 %v11475, %v11699
      %v11732 = vmul.f32 %v11476, %v11700
      %v11733 = vmul.f32 %v11477, %v11701
      %v11734 = vmul.f32 %v11478, %v11702
      %v11735 = vmul.f32 %v11479, %v11703
      %v11736 = vmul.f32 %v11480, %v11704
      %v11737 = vmul.f32 %v11481, %v11705
      %v11738 = vmul.f32 %v11482, %v11706
      %v11739 = vmul.f32 %v11483, %v11707
      %v11740 = vmul.f32 %v11484, %v11708
      %v11741 = vmul.f32 %v11485, %v11709
      %v11742 = vmul.f32 %v11486, %v11710
      %v11743 = vmul.f32 %v11487, %v11711
      %v11744 = vmul.f32 %v11488, %v11712
      %v11745 = vmul.f32 %v11489, %v11713
      %v11746 = vmul.f32 %v11490, %v11714
      %v11747 = vmul.f32 %v11491, %v11715
      %v11748 = vmul.f32 %v11492, %v11716
      %v11749 = vmul.f32 %v11493, %v11717
      %v11750 = vld [vmem:[%s4] sm:$0x1]
      %v11752 = vlaneseq
      %v11753 = vshrl.u32 %v11752, 7
      %v11754 = vsub.s32 0, %v11753
      %v11755 = vrot.slane %v11750, %v11754
      %v11757 = vmul.f32 %v11718, %v11755
      %v11758 = vmul.f32 %v11719, %v11755
      %v11759 = vmul.f32 %v11720, %v11755
      %v11760 = vmul.f32 %v11721, %v11755
      %v11761 = vmul.f32 %v11722, %v11755
      %v11762 = vmul.f32 %v11723, %v11755
      %v11763 = vmul.f32 %v11724, %v11755
      %v11764 = vmul.f32 %v11725, %v11755
      %v11765 = vmul.f32 %v11726, %v11755
      %v11766 = vmul.f32 %v11727, %v11755
      %v11767 = vmul.f32 %v11728, %v11755
      %v11768 = vmul.f32 %v11729, %v11755
      %v11769 = vmul.f32 %v11730, %v11755
      %v11770 = vmul.f32 %v11731, %v11755
      %v11771 = vmul.f32 %v11732, %v11755
      %v11772 = vmul.f32 %v11733, %v11755
      %v11773 = vmul.f32 %v11734, %v11755
      %v11774 = vmul.f32 %v11735, %v11755
      %v11775 = vmul.f32 %v11736, %v11755
      %v11776 = vmul.f32 %v11737, %v11755
      %v11777 = vmul.f32 %v11738, %v11755
      %v11778 = vmul.f32 %v11739, %v11755
      %v11779 = vmul.f32 %v11740, %v11755
      %v11780 = vmul.f32 %v11741, %v11755
      %v11781 = vmul.f32 %v11742, %v11755
      %v11782 = vmul.f32 %v11743, %v11755
      %v11783 = vmul.f32 %v11744, %v11755
      %v11784 = vmul.f32 %v11745, %v11755
      %v11785 = vmul.f32 %v11746, %v11755
      %v11786 = vmul.f32 %v11747, %v11755
      %v11787 = vmul.f32 %v11748, %v11755
      %v11788 = vmul.f32 %v11749, %v11755
      %v11789 = vld [vmem:[%s5] sm:$0x1]
      %v11791 = vlaneseq
      %v11792 = vshrl.u32 %v11791, 7
      %v11793 = vsub.s32 0, %v11792
      %v11794 = vrot.slane %v11789, %v11793
      %v11796 = vadd.f32 %v11757, %v11794
      %v11797 = vadd.f32 %v11758, %v11794
      %v11798 = vadd.f32 %v11759, %v11794
      %v11799 = vadd.f32 %v11760, %v11794
      %v11800 = vadd.f32 %v11761, %v11794
      %v11801 = vadd.f32 %v11762, %v11794
      %v11802 = vadd.f32 %v11763, %v11794
      %v11803 = vadd.f32 %v11764, %v11794
      %v11804 = vadd.f32 %v11765, %v11794
      %v11805 = vadd.f32 %v11766, %v11794
      %v11806 = vadd.f32 %v11767, %v11794
      %v11807 = vadd.f32 %v11768, %v11794
      %v11808 = vadd.f32 %v11769, %v11794
      %v11809 = vadd.f32 %v11770, %v11794
      %v11810 = vadd.f32 %v11771, %v11794
      %v11811 = vadd.f32 %v11772, %v11794
      %v11812 = vadd.f32 %v11773, %v11794
      %v11813 = vadd.f32 %v11774, %v11794
      %v11814 = vadd.f32 %v11775, %v11794
      %v11815 = vadd.f32 %v11776, %v11794
      %v11816 = vadd.f32 %v11777, %v11794
      %v11817 = vadd.f32 %v11778, %v11794
      %v11818 = vadd.f32 %v11779, %v11794
      %v11819 = vadd.f32 %v11780, %v11794
      %v11820 = vadd.f32 %v11781, %v11794
      %v11821 = vadd.f32 %v11782, %v11794
      %v11822 = vadd.f32 %v11783, %v11794
      %v11823 = vadd.f32 %v11784, %v11794
      %v11824 = vadd.f32 %v11785, %v11794
      %v11825 = vadd.f32 %v11786, %v11794
      %v11826 = vadd.f32 %v11787, %v11794
      %v11827 = vadd.f32 %v11788, %v11794
      %v11828 = vpack.c.bf16 %v11797, %v11796
      %v11829 = vpack.c.bf16 %v11799, %v11798
      %v11830 = vpack.c.bf16 %v11801, %v11800
      %v11831 = vpack.c.bf16 %v11803, %v11802
      %v11832 = vpack.c.bf16 %v11805, %v11804
      %v11833 = vpack.c.bf16 %v11807, %v11806
      %v11834 = vpack.c.bf16 %v11809, %v11808
      %v11835 = vpack.c.bf16 %v11811, %v11810
      %v11836 = vpack.c.bf16 %v11813, %v11812
      %v11837 = vpack.c.bf16 %v11815, %v11814
      %v11838 = vpack.c.bf16 %v11817, %v11816
      %v11839 = vpack.c.bf16 %v11819, %v11818
      %v11840 = vpack.c.bf16 %v11821, %v11820
      %v11841 = vpack.c.bf16 %v11823, %v11822
      %v11842 = vpack.c.bf16 %v11825, %v11824
      %v11843 = vpack.c.bf16 %v11827, %v11826
      %v11844 = vld [vmem:[%s6] sm:$0xf]
      %v11845 = vld [vmem:[%s6 + $0x4] sm:$0xf]
      %v11846 = vld [vmem:[%s6 + $0x8] sm:$0xf]
      %v11847 = vld [vmem:[%s6 + $0xc] sm:$0xf]
      %v11848 = vld [vmem:[%s7] sm:$0x1]
      %v11850 = vlaneseq
      %v11851 = vshrl.u32 %v11850, 7
      %v11852 = vsub.s32 0, %v11851
      %v11853 = vrot.slane %v11848, %v11852
      %v11859 = vunpack.c.l.b16 %v11844
      %v11860 = vunpack.c.l.b16 %v11845
      %v11861 = vunpack.c.l.b16 %v11846
      %v11862 = vunpack.c.l.b16 %v11847
      %v11863 = vpack.c.b16 %v11860, %v11859
      %v11864 = vpack.c.b16 %v11862, %v11861
      %v11868 = vsel %vm11332, %v11828, 0
      %v11871 = vsel %vm11332, %v11829, 0
      %v11874 = vsel %vm11332, %v11830, 0
      %v11877 = vsel %vm11332, %v11831, 0
      %v11880 = vsel %vm11332, %v11832, 0
      %v11883 = vsel %vm11332, %v11833, 0
      %v11886 = vsel %vm11332, %v11834, 0
      %v11889 = vsel %vm11332, %v11835, 0
      %v11892 = vsel %vm11332, %v11836, 0
      %v11895 = vsel %vm11332, %v11837, 0
      %v11898 = vsel %vm11332, %v11838, 0
      %v11901 = vsel %vm11332, %v11839, 0
      %v11904 = vsel %vm11332, %v11840, 0
      %v11907 = vsel %vm11332, %v11841, 0
      %v11910 = vsel %vm11332, %v11842, 0
      %v11913 = vsel %vm11332, %v11843, 0
      %11915 = vmatprep.subr.bf16.mxu0 0
      %11916 = vmatpush1.bf16.msra.mxu0 %v11863
      %11917 = vmatprep.subr.bf16.mxu0 0
      %11918 = vmatpush1.bf16.msra.mxu0 %v11864
      %11919 = vmatprep.subr.bf16.mxu0 0
      %11920 = vmatpush1.bf16.msra.mxu0 0
      %11921 = vmatprep.subr.bf16.mxu0 0
      %11922 = vmatpush1.bf16.msra.mxu0 0
      %11923 = vmatprep.subr.bf16.mxu0 0
      %11924 = vmatpush1.bf16.msra.mxu0 0
      %11925 = vmatprep.subr.bf16.mxu0 0
      %11926 = vmatpush1.bf16.msra.mxu0 0
      %11927 = vmatprep.subr.bf16.mxu0 0
      %11928 = vmatpush1.bf16.msra.mxu0 0
      %11929 = vmatprep.subr.bf16.mxu0 0
      %11930 = vmatpush1.bf16.msra.mxu0 0
      %11931 = vmatprep.subr.bf16.mxu0 0
      %11932 = vmatpush1.bf16.msra.mxu0 0
      %11933 = vmatprep.subr.bf16.mxu0 0
      %11934 = vmatpush1.bf16.msra.mxu0 0
      %11935 = vmatprep.subr.bf16.mxu0 0
      %11936 = vmatpush1.bf16.msra.mxu0 0
      %11937 = vmatprep.subr.bf16.mxu0 0
      %11938 = vmatpush1.bf16.msra.mxu0 0
      %11939 = vmatprep.subr.bf16.mxu0 0
      %11940 = vmatpush1.bf16.msra.mxu0 0
      %11941 = vmatprep.subr.bf16.mxu0 0
      %11942 = vmatpush1.bf16.msra.mxu0 0
      %11943 = vmatprep.subr.bf16.mxu0 0
      %11944 = vmatpush1.bf16.msra.mxu0 0
      %11945 = vmatprep.subr.bf16.mxu0 0
      %11946 = vmatpush1.bf16.msra.mxu0 0
      %11947 = vmatprep.mubr.bf16.mxu0 0
      %11948 = vmatmul.mubr.bf16.gmra.mrb[0].mxu0 %v11868
      %v11949 = vpop.f32.mrb[0].mxu0
      %v11950 = vadd.f32 %v11853, %v11949
      %v11951 = vpop.f32.mrb[0].mxu0
      %v11952 = vpop.f32.mrb[0].mxu0
      %v11953 = vadd.f32 %v11853, %v11952
      %v11954 = vpop.f32.mrb[0].mxu0
      %11955 = vmatprep.mubr.bf16.mxu0 0
      %11956 = vmatmul.mubr.bf16.gmra.mrb[0].mxu0 %v11871
      %v11957 = vpop.f32.mrb[0].mxu0
      %v11958 = vadd.f32 %v11853, %v11957
      %v11959 = vpop.f32.mrb[0].mxu0
      %v11960 = vpop.f32.mrb[0].mxu0
      %v11961 = vadd.f32 %v11853, %v11960
      %v11962 = vpop.f32.mrb[0].mxu0
      %11963 = vmatprep.mubr.bf16.mxu0 0
      %11964 = vmatmul.mubr.bf16.gmra.mrb[0].mxu0 %v11874
      %v11965 = vpop.f32.mrb[0].mxu0
      %v11966 = vadd.f32 %v11853, %v11965
      %v11967 = vpop.f32.mrb[0].mxu0
      %v11968 = vpop.f32.mrb[0].mxu0
      %v11969 = vadd.f32 %v11853, %v11968
      %v11970 = vpop.f32.mrb[0].mxu0
      %11971 = vmatprep.mubr.bf16.mxu0 0
      %11972 = vmatmul.mubr.bf16.gmra.mrb[0].mxu0 %v11877
      %v11973 = vpop.f32.mrb[0].mxu0
      %v11974 = vadd.f32 %v11853, %v11973
      %v11975 = vpop.f32.mrb[0].mxu0
      %v11976 = vpop.f32.mrb[0].mxu0
      %v11977 = vadd.f32 %v11853, %v11976
      %v11978 = vpop.f32.mrb[0].mxu0
      %11979 = vmatprep.mubr.bf16.mxu0 0
      %11980 = vmatmul.mubr.bf16.gmra.mrb[0].mxu0 %v11880
      %v11981 = vpop.f32.mrb[0].mxu0
      %v11982 = vadd.f32 %v11853, %v11981
      %v11983 = vpop.f32.mrb[0].mxu0
      %v11984 = vpop.f32.mrb[0].mxu0
      %v11985 = vadd.f32 %v11853, %v11984
      %v11986 = vpop.f32.mrb[0].mxu0
      %11987 = vmatprep.mubr.bf16.mxu0 0
      %11988 = vmatmul.mubr.bf16.gmra.mrb[0].mxu0 %v11883
      %v11989 = vpop.f32.mrb[0].mxu0
      %v11990 = vadd.f32 %v11853, %v11989
      %v11991 = vpop.f32.mrb[0].mxu0
      %v11992 = vpop.f32.mrb[0].mxu0
      %v11993 = vadd.f32 %v11853, %v11992
      %v11994 = vpop.f32.mrb[0].mxu0
      %11995 = vmatprep.mubr.bf16.mxu0 0
      %11996 = vmatmul.mubr.bf16.gmra.mrb[0].mxu0 %v11886
      %v11997 = vpop.f32.mrb[0].mxu0
      %v11998 = vadd.f32 %v11853, %v11997
      %v11999 = vpop.f32.mrb[0].mxu0
      %v12000 = vpop.f32.mrb[0].mxu0
      %v12001 = vadd.f32 %v11853, %v12000
      %v12002 = vpop.f32.mrb[0].mxu0
      %12003 = vmatprep.mubr.bf16.mxu0 0
      %12004 = vmatmul.mubr.bf16.gmra.mrb[0].mxu0 %v11889
      %v12005 = vpop.f32.mrb[0].mxu0
      %v12006 = vadd.f32 %v11853, %v12005
      %v12007 = vpop.f32.mrb[0].mxu0
      %v12008 = vpop.f32.mrb[0].mxu0
      %v12009 = vadd.f32 %v11853, %v12008
      %v12010 = vpop.f32.mrb[0].mxu0
      %12011 = vmatprep.mubr.bf16.mxu0 0
      %12012 = vmatmul.mubr.bf16.gmra.mrb[0].mxu0 %v11892
      %v12013 = vpop.f32.mrb[0].mxu0
      %v12014 = vadd.f32 %v11853, %v12013
      %v12015 = vpop.f32.mrb[0].mxu0
      %v12016 = vpop.f32.mrb[0].mxu0
      %v12017 = vadd.f32 %v11853, %v12016
      %v12018 = vpop.f32.mrb[0].mxu0
      %12019 = vmatprep.mubr.bf16.mxu0 0
      %12020 = vmatmul.mubr.bf16.gmra.mrb[0].mxu0 %v11895
      %v12021 = vpop.f32.mrb[0].mxu0
      %v12022 = vadd.f32 %v11853, %v12021
      %v12023 = vpop.f32.mrb[0].mxu0
      %v12024 = vpop.f32.mrb[0].mxu0
      %v12025 = vadd.f32 %v11853, %v12024
      %v12026 = vpop.f32.mrb[0].mxu0
      %12027 = vmatprep.mubr.bf16.mxu0 0
      %12028 = vmatmul.mubr.bf16.gmra.mrb[0].mxu0 %v11898
      %v12029 = vpop.f32.mrb[0].mxu0
      %v12030 = vadd.f32 %v11853, %v12029
      %v12031 = vpop.f32.mrb[0].mxu0
      %v12032 = vpop.f32.mrb[0].mxu0
      %v12033 = vadd.f32 %v11853, %v12032
      %v12034 = vpop.f32.mrb[0].mxu0
      %12035 = vmatprep.mubr.bf16.mxu0 0
      %12036 = vmatmul.mubr.bf16.gmra.mrb[0].mxu0 %v11901
      %v12037 = vpop.f32.mrb[0].mxu0
      %v12038 = vadd.f32 %v11853, %v12037
      %v12039 = vpop.f32.mrb[0].mxu0
      %v12040 = vpop.f32.mrb[0].mxu0
      %v12041 = vadd.f32 %v11853, %v12040
      %v12042 = vpop.f32.mrb[0].mxu0
      %12043 = vmatprep.mubr.bf16.mxu0 0
      %12044 = vmatmul.mubr.bf16.gmra.mrb[0].mxu0 %v11904
      %v12045 = vpop.f32.mrb[0].mxu0
      %v12046 = vadd.f32 %v11853, %v12045
      %v12047 = vpop.f32.mrb[0].mxu0
      %v12048 = vpop.f32.mrb[0].mxu0
      %v12049 = vadd.f32 %v11853, %v12048
      %v12050 = vpop.f32.mrb[0].mxu0
      %12051 = vmatprep.mubr.bf16.mxu0 0
      %12052 = vmatmul.mubr.bf16.gmra.mrb[0].mxu0 %v11907
      %v12053 = vpop.f32.mrb[0].mxu0
      %v12054 = vadd.f32 %v11853, %v12053
      %v12055 = vpop.f32.mrb[0].mxu0
      %v12056 = vpop.f32.mrb[0].mxu0
      %v12057 = vadd.f32 %v11853, %v12056
      %v12058 = vpop.f32.mrb[0].mxu0
      %12059 = vmatprep.mubr.bf16.mxu0 0
      %12060 = vmatmul.mubr.bf16.gmra.mrb[0].mxu0 %v11910
      %v12061 = vpop.f32.mrb[0].mxu0
      %v12062 = vadd.f32 %v11853, %v12061
      %v12063 = vpop.f32.mrb[0].mxu0
      %v12064 = vpop.f32.mrb[0].mxu0
      %v12065 = vadd.f32 %v11853, %v12064
      %v12066 = vpop.f32.mrb[0].mxu0
      %12067 = vmatprep.mubr.bf16.mxu0 0
      %12068 = vmatmul.mubr.bf16.gmra.mrb[0].mxu0 %v11913
      %v12069 = vpop.f32.mrb[0].mxu0
      %v12070 = vadd.f32 %v11853, %v12069
      %v12071 = vpop.f32.mrb[0].mxu0
      %v12072 = vpop.f32.mrb[0].mxu0
      %v12073 = vadd.f32 %v11853, %v12072
      %v12074 = vpop.f32.mrb[0].mxu0
      %12075 = vdwg.mxu0
      %v12076 = vxor.u32 %v11950, 2147483648
      %v12077 = vxor.u32 %v11953, 2147483648
      %v12078 = vxor.u32 %v11958, 2147483648
      %v12079 = vxor.u32 %v11961, 2147483648
      %v12080 = vxor.u32 %v11966, 2147483648
      %v12081 = vxor.u32 %v11969, 2147483648
      %v12082 = vxor.u32 %v11974, 2147483648
      %v12083 = vxor.u32 %v11977, 2147483648
      %v12084 = vxor.u32 %v11982, 2147483648
      %v12085 = vxor.u32 %v11985, 2147483648
      %v12086 = vxor.u32 %v11990, 2147483648
      %v12087 = vxor.u32 %v11993, 2147483648
      %v12088 = vxor.u32 %v11998, 2147483648
      %v12089 = vxor.u32 %v12001, 2147483648
      %v12090 = vxor.u32 %v12006, 2147483648
      %v12091 = vxor.u32 %v12009, 2147483648
      %v12092 = vxor.u32 %v12014, 2147483648
      %v12093 = vxor.u32 %v12017, 2147483648
      %v12094 = vxor.u32 %v12022, 2147483648
      %v12095 = vxor.u32 %v12025, 2147483648
      %v12096 = vxor.u32 %v12030, 2147483648
      %v12097 = vxor.u32 %v12033, 2147483648
      %v12098 = vxor.u32 %v12038, 2147483648
      %v12099 = vxor.u32 %v12041, 2147483648
      %v12100 = vxor.u32 %v12046, 2147483648
      %v12101 = vxor.u32 %v12049, 2147483648
      %v12102 = vxor.u32 %v12054, 2147483648
      %v12103 = vxor.u32 %v12057, 2147483648
      %v12104 = vxor.u32 %v12062, 2147483648
      %v12105 = vxor.u32 %v12065, 2147483648
      %v12106 = vxor.u32 %v12070, 2147483648
      %v12107 = vxor.u32 %v12073, 2147483648
      %v12108 = vmul.f32 %v12076, 1.442695
      %v12109 = vpow.pop %v12108
      %v12110 = vmul.f32 %v12077, 1.442695
      %v12111 = vpow.pop %v12110
      %v12112 = vmul.f32 %v12078, 1.442695
      %v12113 = vpow.pop %v12112
      %v12114 = vmul.f32 %v12079, 1.442695
      %v12115 = vpow.pop %v12114
      %v12116 = vmul.f32 %v12080, 1.442695
      %v12117 = vpow.pop %v12116
      %v12118 = vmul.f32 %v12081, 1.442695
      %v12119 = vpow.pop %v12118
      %v12120 = vmul.f32 %v12082, 1.442695
      %v12121 = vpow.pop %v12120
      %v12122 = vmul.f32 %v12083, 1.442695
      %v12123 = vpow.pop %v12122
      %v12124 = vmul.f32 %v12084, 1.442695
      %v12125 = vpow.pop %v12124
      %v12126 = vmul.f32 %v12085, 1.442695
      %v12127 = vpow.pop %v12126
      %v12128 = vmul.f32 %v12086, 1.442695
      %v12129 = vpow.pop %v12128
      %v12130 = vmul.f32 %v12087, 1.442695
      %v12131 = vpow.pop %v12130
      %v12132 = vmul.f32 %v12088, 1.442695
      %v12133 = vpow.pop %v12132
      %v12134 = vmul.f32 %v12089, 1.442695
      %v12135 = vpow.pop %v12134
      %v12136 = vmul.f32 %v12090, 1.442695
      %v12137 = vpow.pop %v12136
      %v12138 = vmul.f32 %v12091, 1.442695
      %v12139 = vpow.pop %v12138
      %v12140 = vmul.f32 %v12092, 1.442695
      %v12141 = vpow.pop %v12140
      %v12142 = vmul.f32 %v12093, 1.442695
      %v12143 = vpow.pop %v12142
      %v12144 = vmul.f32 %v12094, 1.442695
      %v12145 = vpow.pop %v12144
      %v12146 = vmul.f32 %v12095, 1.442695
      %v12147 = vpow.pop %v12146
      %v12148 = vmul.f32 %v12096, 1.442695
      %v12149 = vpow.pop %v12148
      %v12150 = vmul.f32 %v12097, 1.442695
      %v12151 = vpow.pop %v12150
      %v12152 = vmul.f32 %v12098, 1.442695
      %v12153 = vpow.pop %v12152
      %v12154 = vmul.f32 %v12099, 1.442695
      %v12155 = vpow.pop %v12154
      %v12156 = vmul.f32 %v12100, 1.442695
      %v12157 = vpow.pop %v12156
      %v12158 = vmul.f32 %v12101, 1.442695
      %v12159 = vpow.pop %v12158
      %v12160 = vmul.f32 %v12102, 1.442695
      %v12161 = vpow.pop %v12160
      %v12162 = vmul.f32 %v12103, 1.442695
      %v12163 = vpow.pop %v12162
      %v12164 = vmul.f32 %v12104, 1.442695
      %v12165 = vpow.pop %v12164
      %v12166 = vmul.f32 %v12105, 1.442695
      %v12167 = vpow.pop %v12166
      %v12168 = vmul.f32 %v12106, 1.442695
      %v12169 = vpow.pop %v12168
      %v12170 = vmul.f32 %v12107, 1.442695
      %v12171 = vpow.pop %v12170
      %v12172 = vadd.f32 %v12109, 1.0
      %v12173 = vadd.f32 %v12111, 1.0
      %v12174 = vadd.f32 %v12113, 1.0
      %v12175 = vadd.f32 %v12115, 1.0
      %v12176 = vadd.f32 %v12117, 1.0
      %v12177 = vadd.f32 %v12119, 1.0
      %v12178 = vadd.f32 %v12121, 1.0
      %v12179 = vadd.f32 %v12123, 1.0
      %v12180 = vadd.f32 %v12125, 1.0
      %v12181 = vadd.f32 %v12127, 1.0
      %v12182 = vadd.f32 %v12129, 1.0
      %v12183 = vadd.f32 %v12131, 1.0
      %v12184 = vadd.f32 %v12133, 1.0
      %v12185 = vadd.f32 %v12135, 1.0
      %v12186 = vadd.f32 %v12137, 1.0
      %v12187 = vadd.f32 %v12139, 1.0
      %v12188 = vadd.f32 %v12141, 1.0
      %v12189 = vadd.f32 %v12143, 1.0
      %v12190 = vadd.f32 %v12145, 1.0
      %v12191 = vadd.f32 %v12147, 1.0
      %v12192 = vadd.f32 %v12149, 1.0
      %v12193 = vadd.f32 %v12151, 1.0
      %v12194 = vadd.f32 %v12153, 1.0
      %v12195 = vadd.f32 %v12155, 1.0
      %v12196 = vadd.f32 %v12157, 1.0
      %v12197 = vadd.f32 %v12159, 1.0
      %v12198 = vadd.f32 %v12161, 1.0
      %v12199 = vadd.f32 %v12163, 1.0
      %v12200 = vadd.f32 %v12165, 1.0
      %v12201 = vadd.f32 %v12167, 1.0
      %v12202 = vadd.f32 %v12169, 1.0
      %v12203 = vadd.f32 %v12171, 1.0
      %v12204 = vrcp.pop %v12172
      %v12205 = vmul.f32 1.0, %v12204
      %v12206 = vrcp.pop %v12173
      %v12207 = vmul.f32 1.0, %v12206
      %v12208 = vrcp.pop %v12174
      %v12209 = vmul.f32 1.0, %v12208
      %v12210 = vrcp.pop %v12175
      %v12211 = vmul.f32 1.0, %v12210
      %v12212 = vrcp.pop %v12176
      %v12213 = vmul.f32 1.0, %v12212
      %v12214 = vrcp.pop %v12177
      %v12215 = vmul.f32 1.0, %v12214
      %v12216 = vrcp.pop %v12178
      %v12217 = vmul.f32 1.0, %v12216
      %v12218 = vrcp.pop %v12179
      %v12219 = vmul.f32 1.0, %v12218
      %v12220 = vrcp.pop %v12180
      %v12221 = vmul.f32 1.0, %v12220
      %v12222 = vrcp.pop %v12181
      %v12223 = vmul.f32 1.0, %v12222
      %v12224 = vrcp.pop %v12182
      %v12225 = vmul.f32 1.0, %v12224
      %v12226 = vrcp.pop %v12183
      %v12227 = vmul.f32 1.0, %v12226
      %v12228 = vrcp.pop %v12184
      %v12229 = vmul.f32 1.0, %v12228
      %v12230 = vrcp.pop %v12185
      %v12231 = vmul.f32 1.0, %v12230
      %v12232 = vrcp.pop %v12186
      %v12233 = vmul.f32 1.0, %v12232
      %v12234 = vrcp.pop %v12187
      %v12235 = vmul.f32 1.0, %v12234
      %v12236 = vrcp.pop %v12188
      %v12237 = vmul.f32 1.0, %v12236
      %v12238 = vrcp.pop %v12189
      %v12239 = vmul.f32 1.0, %v12238
      %v12240 = vrcp.pop %v12190
      %v12241 = vmul.f32 1.0, %v12240
      %v12242 = vrcp.pop %v12191
      %v12243 = vmul.f32 1.0, %v12242
      %v12244 = vrcp.pop %v12192
      %v12245 = vmul.f32 1.0, %v12244
      %v12246 = vrcp.pop %v12193
      %v12247 = vmul.f32 1.0, %v12246
      %v12248 = vrcp.pop %v12194
      %v12249 = vmul.f32 1.0, %v12248
      %v12250 = vrcp.pop %v12195
      %v12251 = vmul.f32 1.0, %v12250
      %v12252 = vrcp.pop %v12196
      %v12253 = vmul.f32 1.0, %v12252
      %v12254 = vrcp.pop %v12197
      %v12255 = vmul.f32 1.0, %v12254
      %v12256 = vrcp.pop %v12198
      %v12257 = vmul.f32 1.0, %v12256
      %v12258 = vrcp.pop %v12199
      %v12259 = vmul.f32 1.0, %v12258
      %v12260 = vrcp.pop %v12200
      %v12261 = vmul.f32 1.0, %v12260
      %v12262 = vrcp.pop %v12201
      %v12263 = vmul.f32 1.0, %v12262
      %v12264 = vrcp.pop %v12202
      %v12265 = vmul.f32 1.0, %v12264
      %v12266 = vrcp.pop %v12203
      %v12267 = vmul.f32 1.0, %v12266
      %v12268 = vmul.f32 %v11950, %v12205
      %v12269 = vmul.f32 %v11953, %v12207
      %v12270 = vmul.f32 %v11958, %v12209
      %v12271 = vmul.f32 %v11961, %v12211
      %v12272 = vmul.f32 %v11966, %v12213
      %v12273 = vmul.f32 %v11969, %v12215
      %v12274 = vmul.f32 %v11974, %v12217
      %v12275 = vmul.f32 %v11977, %v12219
      %v12276 = vmul.f32 %v11982, %v12221
      %v12277 = vmul.f32 %v11985, %v12223
      %v12278 = vmul.f32 %v11990, %v12225
      %v12279 = vmul.f32 %v11993, %v12227
      %v12280 = vmul.f32 %v11998, %v12229
      %v12281 = vmul.f32 %v12001, %v12231
      %v12282 = vmul.f32 %v12006, %v12233
      %v12283 = vmul.f32 %v12009, %v12235
      %v12284 = vmul.f32 %v12014, %v12237
      %v12285 = vmul.f32 %v12017, %v12239
      %v12286 = vmul.f32 %v12022, %v12241
      %v12287 = vmul.f32 %v12025, %v12243
      %v12288 = vmul.f32 %v12030, %v12245
      %v12289 = vmul.f32 %v12033, %v12247
      %v12290 = vmul.f32 %v12038, %v12249
      %v12291 = vmul.f32 %v12041, %v12251
      %v12292 = vmul.f32 %v12046, %v12253
      %v12293 = vmul.f32 %v12049, %v12255
      %v12294 = vmul.f32 %v12054, %v12257
      %v12295 = vmul.f32 %v12057, %v12259
      %v12296 = vmul.f32 %v12062, %v12261
      %v12297 = vmul.f32 %v12065, %v12263
      %v12298 = vmul.f32 %v12070, %v12265
      %v12299 = vmul.f32 %v12073, %v12267
      %v12300 = vpack.c.bf16 %v12269, %v12268
      %v12301 = vpack.c.bf16 %v12271, %v12270
      %v12302 = vpack.c.bf16 %v12273, %v12272
      %v12303 = vpack.c.bf16 %v12275, %v12274
      %v12304 = vpack.c.bf16 %v12277, %v12276
      %v12305 = vpack.c.bf16 %v12279, %v12278
      %v12306 = vpack.c.bf16 %v12281, %v12280
      %v12307 = vpack.c.bf16 %v12283, %v12282
      %v12308 = vpack.c.bf16 %v12285, %v12284
      %v12309 = vpack.c.bf16 %v12287, %v12286
      %v12310 = vpack.c.bf16 %v12289, %v12288
      %v12311 = vpack.c.bf16 %v12291, %v12290
      %v12312 = vpack.c.bf16 %v12293, %v12292
      %v12313 = vpack.c.bf16 %v12295, %v12294
      %v12314 = vpack.c.bf16 %v12297, %v12296
      %v12315 = vpack.c.bf16 %v12299, %v12298
      %v12332 = vunpack.c.l.b16 %v12300
      %v12333 = vunpack.c.h.b16 %v12300
      %v12334 = vunpack.c.l.b16 %v12301
      %v12335 = vunpack.c.h.b16 %v12301
      %v12336 = vunpack.c.l.b16 %v12302
      %v12337 = vunpack.c.h.b16 %v12302
      %v12338 = vunpack.c.l.b16 %v12303
      %v12339 = vunpack.c.h.b16 %v12303
      %v12340 = vunpack.c.l.b16 %v12304
      %v12341 = vunpack.c.h.b16 %v12304
      %v12342 = vunpack.c.l.b16 %v12305
      %v12343 = vunpack.c.h.b16 %v12305
      %v12344 = vunpack.c.l.b16 %v12306
      %v12345 = vunpack.c.h.b16 %v12306
      %v12346 = vunpack.c.l.b16 %v12307
      %v12347 = vunpack.c.h.b16 %v12307
      %v12348 = vunpack.c.l.b16 %v12308
      %v12349 = vunpack.c.h.b16 %v12308
      %v12350 = vunpack.c.l.b16 %v12309
      %v12351 = vunpack.c.h.b16 %v12309
      %v12352 = vunpack.c.l.b16 %v12310
      %v12353 = vunpack.c.h.b16 %v12310
      %v12354 = vunpack.c.l.b16 %v12311
      %v12355 = vunpack.c.h.b16 %v12311
      %v12356 = vunpack.c.l.b16 %v12312
      %v12357 = vunpack.c.h.b16 %v12312
      %v12358 = vunpack.c.l.b16 %v12313
      %v12359 = vunpack.c.h.b16 %v12313
      %v12360 = vunpack.c.l.b16 %v12314
      %v12361 = vunpack.c.h.b16 %v12314
      %v12362 = vunpack.c.l.b16 %v12315
      %v12363 = vunpack.c.h.b16 %v12315
      %v12364 = vpack.c.b16 %v12332, %v12332
      %v12365 = vpack.c.b16 %v12333, %v12333
      %v12366 = vpack.c.b16 %v12334, %v12334
      %v12367 = vpack.c.b16 %v12335, %v12335
      %v12368 = vpack.c.b16 %v12336, %v12336
      %v12369 = vpack.c.b16 %v12337, %v12337
      %v12370 = vpack.c.b16 %v12338, %v12338
      %v12371 = vpack.c.b16 %v12339, %v12339
      %v12372 = vpack.c.b16 %v12340, %v12340
      %v12373 = vpack.c.b16 %v12341, %v12341
      %v12374 = vpack.c.b16 %v12342, %v12342
      %v12375 = vpack.c.b16 %v12343, %v12343
      %v12376 = vpack.c.b16 %v12344, %v12344
      %v12377 = vpack.c.b16 %v12345, %v12345
      %v12378 = vpack.c.b16 %v12346, %v12346
      %v12379 = vpack.c.b16 %v12347, %v12347
      %v12380 = vpack.c.b16 %v12348, %v12348
      %v12381 = vpack.c.b16 %v12349, %v12349
      %v12382 = vpack.c.b16 %v12350, %v12350
      %v12383 = vpack.c.b16 %v12351, %v12351
      %v12384 = vpack.c.b16 %v12352, %v12352
      %v12385 = vpack.c.b16 %v12353, %v12353
      %v12386 = vpack.c.b16 %v12354, %v12354
      %v12387 = vpack.c.b16 %v12355, %v12355
      %v12388 = vpack.c.b16 %v12356, %v12356
      %v12389 = vpack.c.b16 %v12357, %v12357
      %v12390 = vpack.c.b16 %v12358, %v12358
      %v12391 = vpack.c.b16 %v12359, %v12359
      %v12392 = vpack.c.b16 %v12360, %v12360
      %v12393 = vpack.c.b16 %v12361, %v12361
      %v12394 = vpack.c.b16 %v12362, %v12362
      %v12395 = vpack.c.b16 %v12363, %v12363
      %12428 = vst [vmem:[%s484] sm:$0xf] %v12364
      %12429 = vst [vmem:[%s484 + $0x4] sm:$0xf] %v12365
      %12430 = vst [vmem:[%s484 + $0x8] sm:$0xf] %v12366
      %12431 = vst [vmem:[%s484 + $0xc] sm:$0xf] %v12367
      %12432 = vst [vmem:[%s484 + $0x10] sm:$0xf] %v12368
      %12433 = vst [vmem:[%s484 + $0x14] sm:$0xf] %v12369
      %12434 = vst [vmem:[%s484 + $0x18] sm:$0xf] %v12370
      %12435 = vst [vmem:[%s484 + $0x1c] sm:$0xf] %v12371
      %12436 = vst [vmem:[%s484 + $0x20] sm:$0xf] %v12372
      %12437 = vst [vmem:[%s484 + $0x24] sm:$0xf] %v12373
      %12438 = vst [vmem:[%s484 + $0x28] sm:$0xf] %v12374
      %12439 = vst [vmem:[%s484 + $0x2c] sm:$0xf] %v12375
      %12440 = vst [vmem:[%s484 + $0x30] sm:$0xf] %v12376
      %12441 = vst [vmem:[%s484 + $0x34] sm:$0xf] %v12377
      %12442 = vst [vmem:[%s484 + $0x38] sm:$0xf] %v12378
      %12443 = vst [vmem:[%s484 + $0x3c] sm:$0xf] %v12379
      %12444 = vst [vmem:[%s484 + $0x40] sm:$0xf] %v12380
      %12445 = vst [vmem:[%s484 + $0x44] sm:$0xf] %v12381
      %12446 = vst [vmem:[%s484 + $0x48] sm:$0xf] %v12382
      %12447 = vst [vmem:[%s484 + $0x4c] sm:$0xf] %v12383
      %12448 = vst [vmem:[%s484 + $0x50] sm:$0xf] %v12384
      %12449 = vst [vmem:[%s484 + $0x54] sm:$0xf] %v12385
      %12450 = vst [vmem:[%s484 + $0x58] sm:$0xf] %v12386
      %12451 = vst [vmem:[%s484 + $0x5c] sm:$0xf] %v12387
      %12452 = vst [vmem:[%s484 + $0x60] sm:$0xf] %v12388
      %12453 = vst [vmem:[%s484 + $0x64] sm:$0xf] %v12389
      %12454 = vst [vmem:[%s484 + $0x68] sm:$0xf] %v12390
      %12455 = vst [vmem:[%s484 + $0x6c] sm:$0xf] %v12391
      %12456 = vst [vmem:[%s484 + $0x70] sm:$0xf] %v12392
      %12457 = vst [vmem:[%s484 + $0x74] sm:$0xf] %v12393
      %12458 = vst [vmem:[%s484 + $0x78] sm:$0xf] %v12394
      %12459 = vst [vmem:[%s484 + $0x7c] sm:$0xf] %v12395
      %p12460 = scmp.eq.s32.totalorder %s27, 0
      // Predicated region
      $region57: #{convnext_v2_block.2} parent=55 // pred_check
        %p12461 = pneg %p12460
      $region58: #{convnext_v2_block.2} parent=55 // pred_check_branch
        %12463 = sbr.rel (%p12461) target = $region60
      $region59: #{convnext_v2_block.2} parent=55 // pred_region
        %12464 = vst [vmem:[#allocation2] sm:$0x1] 0.0
      $region60: #{convnext_v2_block.2} parent=55 // pred_fallthru
        _
      %v12465 = vld [vmem:[#allocation2] sm:$0x1]
      %v12466 = vmul.f32 %v12268, %v12268
      %v12467 = vmul.f32 %v12269, %v12269
      %v12468 = vmul.f32 %v12270, %v12270
      %v12469 = vmul.f32 %v12271, %v12271
      %v12470 = vmul.f32 %v12272, %v12272
      %v12471 = vmul.f32 %v12273, %v12273
      %v12472 = vmul.f32 %v12274, %v12274
      %v12473 = vmul.f32 %v12275, %v12275
      %v12474 = vmul.f32 %v12276, %v12276
      %v12475 = vmul.f32 %v12277, %v12277
      %v12476 = vmul.f32 %v12278, %v12278
      %v12477 = vmul.f32 %v12279, %v12279
      %v12478 = vmul.f32 %v12280, %v12280
      %v12479 = vmul.f32 %v12281, %v12281
      %v12480 = vmul.f32 %v12282, %v12282
      %v12481 = vmul.f32 %v12283, %v12283
      %v12482 = vmul.f32 %v12284, %v12284
      %v12483 = vmul.f32 %v12285, %v12285
      %v12484 = vmul.f32 %v12286, %v12286
      %v12485 = vmul.f32 %v12287, %v12287
      %v12486 = vmul.f32 %v12288, %v12288
      %v12487 = vmul.f32 %v12289, %v12289
      %v12488 = vmul.f32 %v12290, %v12290
      %v12489 = vmul.f32 %v12291, %v12291
      %v12490 = vmul.f32 %v12292, %v12292
      %v12491 = vmul.f32 %v12293, %v12293
      %v12492 = vmul.f32 %v12294, %v12294
      %v12493 = vmul.f32 %v12295, %v12295
      %v12494 = vmul.f32 %v12296, %v12296
      %v12495 = vmul.f32 %v12297, %v12297
      %v12496 = vmul.f32 %v12298, %v12298
      %v12497 = vmul.f32 %v12299, %v12299
      %v12498 = vadd.f32 %v12466, %v12467
      %v12499 = vadd.f32 %v12498, %v12468
      %v12500 = vadd.f32 %v12499, %v12469
      %v12501 = vadd.f32 %v12500, %v12470
      %v12502 = vadd.f32 %v12501, %v12471
      %v12503 = vadd.f32 %v12502, %v12472
      %v12504 = vadd.f32 %v12503, %v12473
      %v12505 = vadd.f32 %v12504, %v12474
      %v12506 = vadd.f32 %v12505, %v12475
      %v12507 = vadd.f32 %v12506, %v12476
      %v12508 = vadd.f32 %v12507, %v12477
      %v12509 = vadd.f32 %v12508, %v12478
      %v12510 = vadd.f32 %v12509, %v12479
      %v12511 = vadd.f32 %v12510, %v12480
      %v12512 = vadd.f32 %v12511, %v12481
      %v12513 = vadd.f32 %v12512, %v12482
      %v12514 = vadd.f32 %v12513, %v12483
      %v12515 = vadd.f32 %v12514, %v12484
      %v12516 = vadd.f32 %v12515, %v12485
      %v12517 = vadd.f32 %v12516, %v12486
      %v12518 = vadd.f32 %v12517, %v12487
      %v12519 = vadd.f32 %v12518, %v12488
      %v12520 = vadd.f32 %v12519, %v12489
      %v12521 = vadd.f32 %v12520, %v12490
      %v12522 = vadd.f32 %v12521, %v12491
      %v12523 = vadd.f32 %v12522, %v12492
      %v12524 = vadd.f32 %v12523, %v12493
      %v12525 = vadd.f32 %v12524, %v12494
      %v12526 = vadd.f32 %v12525, %v12495
      %v12527 = vadd.f32 %v12526, %v12496
      %v12528 = vadd.f32 %v12527, %v12497
      %v12529 = vrot.slane %v12528, 4
      %v12530 = vadd.f32 %v12528, %v12529
      %v12531 = vrot.slane %v12530, 2
      %v12532 = vadd.f32 %v12530, %v12531
      %v12533 = vrot.slane %v12532, 1
      %v12534 = vadd.f32 %v12532, %v12533
      %v12535 = vadd.f32 %v12465, %v12534
      %12536 = vst [vmem:[#allocation2] sm:$0x1] %v12535
      %v12537 = vld [vmem:[#allocation2] sm:$0x1]
      %v12538 = vrsqrt.pop %v12537
      %v12539 = vmul.f32 %v12537, %v12538
      %vm12540 = vcmp.eq.f32.partialorder %v12537, inf
      %v12541 = vsel %vm12540, %v12537, %v12539
      %vm12542 = vcmp.eq.f32.partialorder %v12537, 0.0
      %v12543 = vand.u32 %v12537, 2147483648
      %v12544 = vsel %vm12542, %v12543, %v12541
      %vm12545 = vcmask 1040384
      %v12546 = vsel %vm12545, %v12544, 0.0
      %12547 = vadd.xlane.f32.xlu0 %v12546
      %v12548 = vpop.xlane.xlu0 %12547
      %v12549 = vrcp.pop 128.0
      %v12550 = vmul.f32 %v12548, %v12549
      %v12551 = vadd.f32 %v12550, 1e-06
      %v12552 = vrcp.pop %v12551
      %v12553 = vmul.f32 %v12544, %v12552
      %v12554 = vld [vmem:[%s8] sm:$0x1]
      %v12555 = vmul.f32 %v12554, %v12553
      %v12556 = vadd.f32 %v12555, 1.0
      %12557 = vst [vmem:[%s488] sm:$0x1] %v12556
      %s12558 = smul.u32 32, %s27
      %p12559 = scmp.lt.s32.totalorder %s26, 1
      %s12560 = scalar_select %p12559, %s26, 1
      %p12561 = scmp.lt.s32.totalorder %s12558, 31
      %s12562 = scalar_select %p12561, %s12558, 31
      %s12563 = smul.addr %s12560, 32
      %s12564 = sadd.s32 %s12562, %s12563
      %s12565 = smul.addr %s12564, 4
      %s12566 = scalar_lea.vmem %s9, %s12565
      %p12567 = scmp.lt.s32.totalorder %s26, 1
      %s12568 = scalar_select %p12567, %s26, 1
      %s12569 = scalar_lea.vmem %s10, %s12568
      // Predicated region
      $region61: #{convnext_v2_block.2} parent=55 // pred_check
        %p12570 = pneg %p261
      $region62: #{convnext_v2_block.2} parent=55 // pred_check_branch
        %12572 = sbr.rel (%p12570) target = $region64
      $region63: #{convnext_v2_block.2} parent=55 // pred_region
        %s12573 = smul.u32 32, %s27
      $region64: #{convnext_v2_block.2} parent=55 // pred_fallthru
        _
      // Predicated region
      $region65: #{convnext_v2_block.2} parent=55 // pred_check
        %p12574 = pneg %p287
      $region66: #{convnext_v2_block.2} parent=55 // pred_check_branch
        %12576 = sbr.rel (%p12574) target = $region68
      $region67: #{convnext_v2_block.2} parent=55 // pred_region
        _
      $region68: #{convnext_v2_block.2} parent=55 // pred_fallthru
        _
    $region56: #{convnext_v2_block.2} parent=5 // pred_fallthru
      _
    %p12577 = scmp.le.s32.totalorder 2, %s17
    // Predicated region
    $region69: #{convnext_v2_block.2} parent=5 // pred_check
      %p12578 = pneg %p12577
    $region70: #{convnext_v2_block.2} parent=5 // pred_check_branch
      %12580 = sbr.rel (%p12578) target = $region72
    $region71: #{convnext_v2_block.2} parent=5 // pred_region
      %s12581 = ssub.s32 %s17, 2
      // Predicated region
      $region73: #{convnext_v2_block.2} parent=71 // pred_check
        %p12582 = pneg %p267
      $region74: #{convnext_v2_block.2} parent=71 // pred_check_branch
        %12584 = sbr.rel (%p12582) target = $region76
      $region75: #{convnext_v2_block.2} parent=71 // pred_region
        %s12585 = smul.u32 32, %s29
        %p12586 = scmp.lt.s32.totalorder %s28, 1
        %s12587 = scalar_select %p12586, %s28, 1
        %p12588 = scmp.lt.s32.totalorder %s12585, 31
        %s12589 = scalar_select %p12588, %s12585, 31
        %s12590 = smul.addr %s12587, 32
        %s12591 = sadd.s32 %s12589, %s12590
        %s12592 = smul.addr %s12591, 4
        %s12593 = scalar_lea.vmem %s9, %s12592
      $region76: #{convnext_v2_block.2} parent=71 // pred_fallthru
        _
      // Predicated region
      $region77: #{convnext_v2_block.2} parent=71 // pred_check
        %p12594 = pneg %p293
      $region78: #{convnext_v2_block.2} parent=71 // pred_check_branch
        %12596 = sbr.rel (%p12594) target = $region80
      $region79: #{convnext_v2_block.2} parent=71 // pred_region
        %p12597 = scmp.lt.s32.totalorder %s28, 1
        %s12598 = scalar_select %p12597, %s28, 1
        %s12599 = scalar_lea.vmem %s10, %s12598
      $region80: #{convnext_v2_block.2} parent=71 // pred_fallthru
        _
    $region72: #{convnext_v2_block.2} parent=5 // pred_fallthru
      _
  $region6: #{convnext_v2_block.2} parent=0 // loop_footer
    %s21 = sadd.s32 1, %s17
  $region7: #{convnext_v2_block.2} parent=0 // loop_footer_branch
    %16 = sbr.rel target = $region3
  $region8: #{convnext_v2_block.2} parent=0 // loop_exit
    _

</llo_original>
